<compile_context>
chip_gen: v7x
topology: tpu7x:2x2x1
jax: 0.10.0
libtpu: 0.0.40
codegen_flags: <defaults>
</compile_context>

<pallas_src>
import math

import jax
import jax.numpy as jnp
from jax.experimental import pallas as pl

# ----------------------- small, TPU-friendly config -----------------------
NUM_ITEMS = 100
PAD_ID = NUM_ITEMS + 1            # padding token id
VOCAB = NUM_ITEMS + 2             # 102 real embedding rows
VOCAB_PAD = 128                   # lane-aligned vocab for the one-hot gather
SEQ_LEN = 16
EMB_DIM = 64
NUM_HEADS = 4
NUM_BLOCKS = 2
HEAD_DIM = EMB_DIM // NUM_HEADS   # 16
BATCH = 2
BT = BATCH * SEQ_LEN              # 32 rows: whole batch as one (32, 64) slab
LN_EPS = 1e-5
NEG_INF = -1e30

# rows of the packed (N_VEC, EMB_DIM) vector-parameter slab, per block
_VPB = 10
R_LN1G, R_LN1B, R_BQ, R_BK, R_BV, R_BO, R_LN2G, R_LN2B, R_B1, R_B2 = range(_VPB)
R_SEQG = NUM_BLOCKS * _VPB        # final LayerNorm gamma
R_SEQB = R_SEQG + 1               # final LayerNorm beta
N_VEC = R_SEQB + 1


# ------------------------------ kernel helpers -----------------------------
def _layer_norm(x, g, b):
    mu = jnp.mean(x, axis=-1, keepdims=True)
    xc = x - mu
    var = jnp.mean(xc * xc, axis=-1, keepdims=True)
    return xc * jax.lax.rsqrt(var + LN_EPS) * g + b


# ------------------------------ fused kernel -------------------------------
def gsasrec_fused_kernel(ids_ref, item_emb_ref, pos_emb_ref,
                         wqkv_ref, wo_ref, wffn_ref, vecs_ref,
                         seq_out_ref, attn_out_ref):
    B, T, D, H, dh = BATCH, SEQ_LEN, EMB_DIM, NUM_HEADS, HEAD_DIM

    def vrow(i):                               # (1, D) packed vector parameter
        return vecs_ref[i:i + 1, :]

    def vhead(i, h):                           # (1, dh) per-head bias slice
        return vecs_ref[i:i + 1, h * dh:(h + 1) * dh]

    ids = ids_ref[...]                         # (BT, 1) int32

    # ---- embedding gather as a one-hot MXU matmul (vocab padded to 128 lanes) ----
    vocab_iota = jax.lax.broadcasted_iota(jnp.int32, (BT, VOCAB_PAD), 1)
    onehot = (vocab_iota == ids).astype(jnp.float32)                   # (BT, 128)
    x = jnp.dot(onehot, item_emb_ref[...], preferred_element_type=jnp.float32)

    # ---- positional embeddings + lane-dense padding mask (hoisted once) ----
    x = x + jnp.concatenate([pos_emb_ref[...]] * B, axis=0)            # (BT, D)
    mask = jnp.where(jnp.broadcast_to(ids, (BT, D)) == PAD_ID, 0.0, 1.0)
    # TODO(synk): embeddings_dropout / block dropouts are eval-mode identities.
    x = x * mask

    # additive causal bias, shared across blocks and heads
    r = jax.lax.broadcasted_iota(jnp.int32, (T, T), 0)
    c = jax.lax.broadcasted_iota(jnp.int32, (T, T), 1)
    causal_bias = jnp.where(c <= r, 0.0, NEG_INF).astype(jnp.float32)  # (T, T)

    scale = 1.0 / math.sqrt(dh)

    for l in range(NUM_BLOCKS):                # static unroll over blocks
        vbase = l * _VPB
        queries = _layer_norm(x, vrow(vbase + R_LN1G), vrow(vbase + R_LN1B))
        keys = x                               # gSASRec: pre-norm Q, raw K/V

        attn_out = jnp.zeros((BT, D), jnp.float32)
        attn_acc = jnp.zeros((B, T, T), jnp.float32)
        for h in range(H):                     # static unroll; per-head-split weights,
            # so activations are never lane-sliced and no lane concat is needed.
            q_h = jnp.dot(queries, wqkv_ref[(3 * l + 0) * H + h],
                          preferred_element_type=jnp.float32) + vhead(vbase + R_BQ, h)
            k_h = jnp.dot(keys, wqkv_ref[(3 * l + 1) * H + h],
                          preferred_element_type=jnp.float32) + vhead(vbase + R_BK, h)
            v_h = jnp.dot(keys, wqkv_ref[(3 * l + 2) * H + h],
                          preferred_element_type=jnp.float32) + vhead(vbase + R_BV, h)
            q3 = q_h.reshape(B, T, dh)
            k3 = k_h.reshape(B, T, dh)
            v3 = v_h.reshape(B, T, dh)
            s = jnp.einsum('bqd,bkd->bqk', q3, k3,
                           preferred_element_type=jnp.float32) * scale
            s = s + causal_bias[None, :, :]
            m = jnp.max(s, axis=-1, keepdims=True)
            e = jnp.exp(s - m)
            p = e * pl.reciprocal(jnp.sum(e, axis=-1, keepdims=True), approx=True)
            attn_acc = attn_acc + p
            ctx = jnp.einsum('bqk,bkd->bqd', p, v3,
                             preferred_element_type=jnp.float32)       # (B, T, dh)
            # sum_h ctx_h @ Wo_h  ==  concat(heads) @ Wo
            attn_out = attn_out + jnp.dot(ctx.reshape(BT, dh), wo_ref[l * H + h],
                                          preferred_element_type=jnp.float32)

        attn_out = attn_out + vrow(vbase + R_BO)
        attn_out_ref[l] = attn_acc * (1.0 / H)          # head-averaged attention weights

        y = attn_out + queries
        y = _layer_norm(y, vrow(vbase + R_LN2G), vrow(vbase + R_LN2B))
        resid = y
        y = jnp.maximum(jnp.dot(y, wffn_ref[2 * l + 0],
                                preferred_element_type=jnp.float32) + vrow(vbase + R_B1),
                        0.0)
        y = jnp.dot(y, wffn_ref[2 * l + 1],
                    preferred_element_type=jnp.float32) + vrow(vbase + R_B2)
        x = (y + resid) * mask

    x = _layer_norm(x, vrow(R_SEQG), vrow(R_SEQB))      # final seq_norm
    seq_out_ref[...] = x.reshape(B, T, D)


# --------------------------------- wrapper ----------------------------------
def _fused_forward(ids, item_emb, pos_emb, wqkv, wo, wffn, vecs):
    # Grid-less call: single invocation, whole arrays resident in VMEM
    # (~1 MB total, far under any generation's VMEM limit).
    return pl.pallas_call(
        gsasrec_fused_kernel,
        out_shape=(
            jax.ShapeDtypeStruct((BATCH, SEQ_LEN, EMB_DIM), jnp.float32),
            jax.ShapeDtypeStruct((NUM_BLOCKS, BATCH, SEQ_LEN, SEQ_LEN), jnp.float32),
        ),
    )(ids, item_emb, pos_emb, wqkv, wo, wffn, vecs)


@jax.jit
def gsasrec_forward(params, input_ids):
    ids = input_ids.reshape(BT, 1).astype(jnp.int32)
    seq_emb, attn_all = _fused_forward(
        ids, params['item_emb'], params['pos_emb'],
        params['wqkv'], params['wo'], params['wffn'], params['vecs'])
    attentions = [attn_all[l] for l in range(NUM_BLOCKS)]
    return seq_emb, attentions


# ------------------------------ parameter init ------------------------------
def trunc_normal(key, shape, std=0.02):
    # matches torch.nn.init.trunc_normal_(std=0.02, a=-0.04, b=0.04)
    return std * jax.random.truncated_normal(key, -2.0, 2.0, shape, jnp.float32)


def init_params(key):
    D, H, dh, L = EMB_DIM, NUM_HEADS, HEAD_DIM, NUM_BLOCKS
    keys = iter(jax.random.split(key, 2 + 6 * L))

    item_emb = jnp.zeros((VOCAB_PAD, D), jnp.float32)
    item_emb = item_emb.at[:VOCAB].set(trunc_normal(next(keys), (VOCAB, D)))
    pos_emb = trunc_normal(next(keys), (SEQ_LEN, D))

    wqkv_heads, wo_heads, ffn_mats, vec_rows = [], [], [], []
    ones = jnp.ones((D,), jnp.float32)
    zeros = jnp.zeros((D,), jnp.float32)
    for _ in range(L):
        # projection weights stored pre-transposed: kernel computes x @ W
        wq = trunc_normal(next(keys), (D, D))
        wk = trunc_normal(next(keys), (D, D))
        wv = trunc_normal(next(keys), (D, D))
        wo = trunc_normal(next(keys), (D, D))
        w1 = trunc_normal(next(keys), (D, D))
        w2 = trunc_normal(next(keys), (D, D))
        for w in (wq, wk, wv):                  # split heads at init time
            wqkv_heads += [w[:, h * dh:(h + 1) * dh] for h in range(H)]   # (D, dh)
        wo_heads += [wo[h * dh:(h + 1) * dh, :] for h in range(H)]        # (dh, D)
        ffn_mats += [w1, w2]
        vec_rows += [ones, zeros,               # ln1 gamma / beta
                     zeros, zeros, zeros,       # bq bk bv
                     zeros,                     # bo
                     ones, zeros,               # ln2 gamma / beta
                     zeros, zeros]              # b1 b2
    vec_rows += [ones, zeros]                   # final seq_norm gamma / beta

    return {
        'item_emb': item_emb,                   # (128, D)  rows >= VOCAB are zero
        'pos_emb': pos_emb,                     # (T, D)
        'wqkv': jnp.stack(wqkv_heads),          # (L*3*H, D, dh)
        'wo': jnp.stack(wo_heads),              # (L*H, dh, D)
        'wffn': jnp.stack(ffn_mats),            # (L*2, D, D)
        'vecs': jnp.stack(vec_rows),            # (N_VEC, D)
    }


# ----------------------------------- main ------------------------------------
if __name__ == "__main__":
    key = jax.random.PRNGKey(0)
    k_param, k_input = jax.random.split(key)

    params = init_params(k_param)
    input_ids = jax.random.randint(k_input, (BATCH, SEQ_LEN), 0, VOCAB,
                                   dtype=jnp.int32)

    seq_emb, attentions = gsasrec_forward(params, input_ids)
    seq_emb = jax.block_until_ready(seq_emb)
    for a in attentions:
        jax.block_until_ready(a)

    assert seq_emb.shape == (BATCH, SEQ_LEN, EMB_DIM)
    assert len(attentions) == NUM_BLOCKS
    assert attentions[0].shape == (BATCH, SEQ_LEN, SEQ_LEN)
    assert bool(jnp.all(jnp.isfinite(seq_emb)))
    assert bool(jnp.all(jnp.isfinite(attentions[0])))
    print("KERNEL_OK")
</pallas_src>

<mosaic_0001>
module attributes {stable_mosaic.version = 11 : i64} {
  func.func @gsasrec_fused_kernel(%arg0: memref<32x1xi32, #tpu.memory_space<vmem>>, %arg1: memref<128x64xf32, #tpu.memory_space<vmem>>, %arg2: memref<16x64xf32, #tpu.memory_space<vmem>>, %arg3: memref<24x64x16xf32, #tpu.memory_space<vmem>>, %arg4: memref<8x16x64xf32, #tpu.memory_space<vmem>>, %arg5: memref<4x64x64xf32, #tpu.memory_space<vmem>>, %arg6: memref<22x64xf32, #tpu.memory_space<vmem>>, %arg7: memref<2x16x64xf32, #tpu.memory_space<vmem>>, %arg8: memref<2x2x16x16xf32, #tpu.memory_space<vmem>>) attributes {dimension_semantics = [], scalar_prefetch = 0 : i64, scratch_operands = 0 : i64, tpu.core_type = #tpu.core_type<tc>} {
    %c0 = arith.constant 0 : index
    %c0_0 = arith.constant 0 : index
    %0 = vector.load %arg0[%c0, %c0_0] : memref<32x1xi32, #tpu.memory_space<vmem>>, vector<32x1xi32>
    %1 = tpu.iota {dimensions = array<i32: 1>} : vector<32x128xi32>
    %2 = vector.broadcast %0 : vector<32x1xi32> to vector<32x128xi32>
    %3 = arith.cmpi eq, %1, %2 : vector<32x128xi32>
    %4 = arith.extui %3 : vector<32x128xi1> to vector<32x128xi32>
    %5 = arith.sitofp %4 : vector<32x128xi32> to vector<32x128xf32>
    %c0_1 = arith.constant 0 : index
    %c0_2 = arith.constant 0 : index
    %6 = vector.load %arg1[%c0_1, %c0_2] : memref<128x64xf32, #tpu.memory_space<vmem>>, vector<128x64xf32>
    %cst = arith.constant dense<0.000000e+00> : vector<32x64xf32>
    %7 = tpu.matmul %5, %6, %cst {dimension_numbers = #tpu.dot_dimension_numbers<[1], [0], [0], [1], [0, 0, 1, 1], [], []>} : vector<32x128xf32>, vector<128x64xf32>, vector<32x64xf32> -> vector<32x64xf32>
    %c0_3 = arith.constant 0 : index
    %c0_4 = arith.constant 0 : index
    %8 = vector.load %arg2[%c0_3, %c0_4] : memref<16x64xf32, #tpu.memory_space<vmem>>, vector<16x64xf32>
    %9 = tpu.concatenate %8, %8 in 0 : vector<16x64xf32>, vector<16x64xf32> -> vector<32x64xf32>
    %10 = arith.addf %7, %9 : vector<32x64xf32>
    %11 = vector.shape_cast %0 : vector<32x1xi32> to vector<32x1xi32>
    %12 = vector.broadcast %11 : vector<32x1xi32> to vector<32x64xi32>
    %c101_i32 = arith.constant 101 : i32
    %13 = vector.broadcast %c101_i32 : i32 to vector<32x64xi32>
    %14 = arith.cmpi eq, %12, %13 : vector<32x64xi32>
    %cst_5 = arith.constant 0.000000e+00 : f32
    %cst_6 = arith.constant 1.000000e+00 : f32
    %15 = vector.broadcast %cst_5 : f32 to vector<32x64xf32>
    %16 = vector.broadcast %cst_6 : f32 to vector<32x64xf32>
    %17 = arith.select %14, %15, %16 : vector<32x64xi1>, vector<32x64xf32>
    %18 = arith.mulf %10, %17 : vector<32x64xf32>
    %19 = tpu.iota {dimensions = array<i32: 0>} : vector<16x16xi32>
    %20 = tpu.iota {dimensions = array<i32: 1>} : vector<16x16xi32>
    %21 = arith.cmpi sle, %20, %19 : vector<16x16xi32>
    %cst_7 = arith.constant 0.000000e+00 : f32
    %cst_8 = arith.constant -1.000000e+30 : f32
    %22 = vector.broadcast %cst_7 : f32 to vector<16x16xf32>
    %23 = vector.broadcast %cst_8 : f32 to vector<16x16xf32>
    %24 = arith.select %21, %22, %23 : vector<16x16xi1>, vector<16x16xf32>
    %c0_9 = arith.constant 0 : index
    %c0_10 = arith.constant 0 : index
    %25 = vector.load %arg6[%c0_9, %c0_10] : memref<22x64xf32, #tpu.memory_space<vmem>>, vector<1x64xf32>
    %c1 = arith.constant 1 : index
    %c0_11 = arith.constant 0 : index
    %26 = vector.load %arg6[%c1, %c0_11] : memref<22x64xf32, #tpu.memory_space<vmem>>, vector<1x64xf32>
    %cst_12 = arith.constant dense<0.000000e+00> : vector<32xf32>
    %27 = vector.multi_reduction <add>, %18, %cst_12 [1] : vector<32x64xf32> to vector<32xf32>
    %28 = vector.shape_cast %27 : vector<32xf32> to vector<32x1xf32>
    %cst_13 = arith.constant 6.400000e+01 : f32
    %29 = vector.broadcast %cst_13 : f32 to vector<32x1xf32>
    %30 = arith.divf %28, %29 : vector<32x1xf32>
    %31 = vector.broadcast %30 : vector<32x1xf32> to vector<32x64xf32>
    %32 = arith.subf %18, %31 : vector<32x64xf32>
    %33 = arith.mulf %32, %32 : vector<32x64xf32>
    %cst_14 = arith.constant dense<0.000000e+00> : vector<32xf32>
    %34 = vector.multi_reduction <add>, %33, %cst_14 [1] : vector<32x64xf32> to vector<32xf32>
    %35 = vector.shape_cast %34 : vector<32xf32> to vector<32x1xf32>
    %cst_15 = arith.constant 6.400000e+01 : f32
    %36 = vector.broadcast %cst_15 : f32 to vector<32x1xf32>
    %37 = arith.divf %35, %36 : vector<32x1xf32>
    %cst_16 = arith.constant 9.99999974E-6 : f32
    %38 = vector.broadcast %cst_16 : f32 to vector<32x1xf32>
    %39 = arith.addf %37, %38 : vector<32x1xf32>
    %40 = math.rsqrt %39 : vector<32x1xf32>
    %41 = vector.broadcast %40 : vector<32x1xf32> to vector<32x64xf32>
    %42 = arith.mulf %32, %41 : vector<32x64xf32>
    %43 = vector.broadcast %25 : vector<1x64xf32> to vector<32x64xf32>
    %44 = arith.mulf %42, %43 : vector<32x64xf32>
    %45 = vector.broadcast %26 : vector<1x64xf32> to vector<32x64xf32>
    %46 = arith.addf %44, %45 : vector<32x64xf32>
    %cst_17 = arith.constant 0.000000e+00 : f32
    %47 = vector.broadcast %cst_17 : f32 to vector<32x64xf32>
    %cst_18 = arith.constant 0.000000e+00 : f32
    %48 = vector.broadcast %cst_18 : f32 to vector<2x16x16xf32>
    %c0_19 = arith.constant 0 : index
    %c0_20 = arith.constant 0 : index
    %c0_21 = arith.constant 0 : index
    %49 = vector.load %arg3[%c0_19, %c0_20, %c0_21] : memref<24x64x16xf32, #tpu.memory_space<vmem>>, vector<1x64x16xf32>
    %50 = vector.shape_cast %49 : vector<1x64x16xf32> to vector<64x16xf32>
    %cst_22 = arith.constant dense<0.000000e+00> : vector<32x16xf32>
    %51 = tpu.matmul %46, %50, %cst_22 {dimension_numbers = #tpu.dot_dimension_numbers<[1], [0], [0], [1], [0, 0, 1, 1], [], []>} : vector<32x64xf32>, vector<64x16xf32>, vector<32x16xf32> -> vector<32x16xf32>
    %c2 = arith.constant 2 : index
    %c0_23 = arith.constant 0 : index
    %52 = vector.load %arg6[%c2, %c0_23] : memref<22x64xf32, #tpu.memory_space<vmem>>, vector<1x16xf32>
    %53 = vector.broadcast %52 : vector<1x16xf32> to vector<32x16xf32>
    %54 = arith.addf %51, %53 : vector<32x16xf32>
    %c4 = arith.constant 4 : index
    %c0_24 = arith.constant 0 : index
    %c0_25 = arith.constant 0 : index
    %55 = vector.load %arg3[%c4, %c0_24, %c0_25] : memref<24x64x16xf32, #tpu.memory_space<vmem>>, vector<1x64x16xf32>
    %56 = vector.shape_cast %55 : vector<1x64x16xf32> to vector<64x16xf32>
    %cst_26 = arith.constant dense<0.000000e+00> : vector<32x16xf32>
    %57 = tpu.matmul %18, %56, %cst_26 {dimension_numbers = #tpu.dot_dimension_numbers<[1], [0], [0], [1], [0, 0, 1, 1], [], []>} : vector<32x64xf32>, vector<64x16xf32>, vector<32x16xf32> -> vector<32x16xf32>
    %c3 = arith.constant 3 : index
    %c0_27 = arith.constant 0 : index
    %58 = vector.load %arg6[%c3, %c0_27] : memref<22x64xf32, #tpu.memory_space<vmem>>, vector<1x16xf32>
    %59 = vector.broadcast %58 : vector<1x16xf32> to vector<32x16xf32>
    %60 = arith.addf %57, %59 : vector<32x16xf32>
    %c8 = arith.constant 8 : index
    %c0_28 = arith.constant 0 : index
    %c0_29 = arith.constant 0 : index
    %61 = vector.load %arg3[%c8, %c0_28, %c0_29] : memref<24x64x16xf32, #tpu.memory_space<vmem>>, vector<1x64x16xf32>
    %62 = vector.shape_cast %61 : vector<1x64x16xf32> to vector<64x16xf32>
    %cst_30 = arith.constant dense<0.000000e+00> : vector<32x16xf32>
    %63 = tpu.matmul %18, %62, %cst_30 {dimension_numbers = #tpu.dot_dimension_numbers<[1], [0], [0], [1], [0, 0, 1, 1], [], []>} : vector<32x64xf32>, vector<64x16xf32>, vector<32x16xf32> -> vector<32x16xf32>
    %c4_31 = arith.constant 4 : index
    %c0_32 = arith.constant 0 : index
    %64 = vector.load %arg6[%c4_31, %c0_32] : memref<22x64xf32, #tpu.memory_space<vmem>>, vector<1x16xf32>
    %65 = vector.broadcast %64 : vector<1x16xf32> to vector<32x16xf32>
    %66 = arith.addf %63, %65 : vector<32x16xf32>
    %67 = vector.shape_cast %54 : vector<32x16xf32> to vector<2x16x16xf32>
    %68 = vector.shape_cast %60 : vector<32x16xf32> to vector<2x16x16xf32>
    %69 = vector.shape_cast %66 : vector<32x16xf32> to vector<2x16x16xf32>
    "tpu.trace_start"() <{level = 10 : i32, message = "bqd,bkd->bqk"}> : () -> ()
    %cst_33 = arith.constant dense<0.000000e+00> : vector<2x16x16xf32>
    %70 = tpu.matmul %67, %68, %cst_33 {dimension_numbers = #tpu.dot_dimension_numbers<[2], [2], [1], [1], [0, 0, 0, 1, 1, 1], [0], [0]>} : vector<2x16x16xf32>, vector<2x16x16xf32>, vector<2x16x16xf32> -> vector<2x16x16xf32>
    "tpu.trace_stop"() : () -> ()
    %cst_34 = arith.constant 2.500000e-01 : f32
    %71 = vector.broadcast %cst_34 : f32 to vector<2x16x16xf32>
    %72 = arith.mulf %70, %71 : vector<2x16x16xf32>
    %73 = vector.shape_cast %24 : vector<16x16xf32> to vector<1x16x16xf32>
    %74 = vector.broadcast %73 : vector<1x16x16xf32> to vector<2x16x16xf32>
    %75 = arith.addf %72, %74 : vector<2x16x16xf32>
    %cst_35 = arith.constant dense<0xFF800000> : vector<2x16xf32>
    %76 = vector.multi_reduction <maximumf>, %75, %cst_35 [2] : vector<2x16x16xf32> to vector<2x16xf32>
    %77 = vector.shape_cast %76 : vector<2x16xf32> to vector<2x16x1xf32>
    %78 = vector.broadcast %77 : vector<2x16x1xf32> to vector<2x16x16xf32>
    %79 = arith.subf %75, %78 : vector<2x16x16xf32>
    %80 = math.exp %79 : vector<2x16x16xf32>
    %cst_36 = arith.constant dense<0.000000e+00> : vector<2x16xf32>
    %81 = vector.multi_reduction <add>, %80, %cst_36 [2] : vector<2x16x16xf32> to vector<2x16xf32>
    %82 = vector.shape_cast %81 : vector<2x16xf32> to vector<2x16x1xf32>
    %83 = tpu.reciprocal %82 {approx = true} : vector<2x16x1xf32> -> vector<2x16x1xf32>
    %84 = vector.broadcast %83 : vector<2x16x1xf32> to vector<2x16x16xf32>
    %85 = arith.mulf %80, %84 : vector<2x16x16xf32>
    %86 = arith.addf %48, %85 : vector<2x16x16xf32>
    "tpu.trace_start"() <{level = 10 : i32, message = "bqk,bkd->bqd"}> : () -> ()
    %cst_37 = arith.constant dense<0.000000e+00> : vector<2x16x16xf32>
    %87 = tpu.matmul %85, %69, %cst_37 {dimension_numbers = #tpu.dot_dimension_numbers<[2], [1], [1], [2], [0, 0, 0, 1, 1, 2], [0], [0]>} : vector<2x16x16xf32>, vector<2x16x16xf32>, vector<2x16x16xf32> -> vector<2x16x16xf32>
    "tpu.trace_stop"() : () -> ()
    %88 = vector.shape_cast %87 : vector<2x16x16xf32> to vector<32x16xf32>
    %c0_38 = arith.constant 0 : index
    %c0_39 = arith.constant 0 : index
    %c0_40 = arith.constant 0 : index
    %89 = vector.load %arg4[%c0_38, %c0_39, %c0_40] : memref<8x16x64xf32, #tpu.memory_space<vmem>>, vector<1x16x64xf32>
    %90 = vector.shape_cast %89 : vector<1x16x64xf32> to vector<16x64xf32>
    %cst_41 = arith.constant dense<0.000000e+00> : vector<32x64xf32>
    %91 = tpu.matmul %88, %90, %cst_41 {dimension_numbers = #tpu.dot_dimension_numbers<[1], [0], [0], [1], [0, 0, 1, 1], [], []>} : vector<32x16xf32>, vector<16x64xf32>, vector<32x64xf32> -> vector<32x64xf32>
    %92 = arith.addf %47, %91 : vector<32x64xf32>
    %c1_42 = arith.constant 1 : index
    %c0_43 = arith.constant 0 : index
    %c0_44 = arith.constant 0 : index
    %93 = vector.load %arg3[%c1_42, %c0_43, %c0_44] : memref<24x64x16xf32, #tpu.memory_space<vmem>>, vector<1x64x16xf32>
    %94 = vector.shape_cast %93 : vector<1x64x16xf32> to vector<64x16xf32>
    %cst_45 = arith.constant dense<0.000000e+00> : vector<32x16xf32>
    %95 = tpu.matmul %46, %94, %cst_45 {dimension_numbers = #tpu.dot_dimension_numbers<[1], [0], [0], [1], [0, 0, 1, 1], [], []>} : vector<32x64xf32>, vector<64x16xf32>, vector<32x16xf32> -> vector<32x16xf32>
    %c2_46 = arith.constant 2 : index
    %c16 = arith.constant 16 : index
    %96 = vector.load %arg6[%c2_46, %c16] : memref<22x64xf32, #tpu.memory_space<vmem>>, vector<1x16xf32>
    %97 = vector.broadcast %96 : vector<1x16xf32> to vector<32x16xf32>
    %98 = arith.addf %95, %97 : vector<32x16xf32>
    %c5 = arith.constant 5 : index
    %c0_47 = arith.constant 0 : index
    %c0_48 = arith.constant 0 : index
    %99 = vector.load %arg3[%c5, %c0_47, %c0_48] : memref<24x64x16xf32, #tpu.memory_space<vmem>>, vector<1x64x16xf32>
    %100 = vector.shape_cast %99 : vector<1x64x16xf32> to vector<64x16xf32>
    %cst_49 = arith.constant dense<0.000000e+00> : vector<32x16xf32>
    %101 = tpu.matmul %18, %100, %cst_49 {dimension_numbers = #tpu.dot_dimension_numbers<[1], [0], [0], [1], [0, 0, 1, 1], [], []>} : vector<32x64xf32>, vector<64x16xf32>, vector<32x16xf32> -> vector<32x16xf32>
    %c3_50 = arith.constant 3 : index
    %c16_51 = arith.constant 16 : index
    %102 = vector.load %arg6[%c3_50, %c16_51] : memref<22x64xf32, #tpu.memory_space<vmem>>, vector<1x16xf32>
    %103 = vector.broadcast %102 : vector<1x16xf32> to vector<32x16xf32>
    %104 = arith.addf %101, %103 : vector<32x16xf32>
    %c9 = arith.constant 9 : index
    %c0_52 = arith.constant 0 : index
    %c0_53 = arith.constant 0 : index
    %105 = vector.load %arg3[%c9, %c0_52, %c0_53] : memref<24x64x16xf32, #tpu.memory_space<vmem>>, vector<1x64x16xf32>
    %106 = vector.shape_cast %105 : vector<1x64x16xf32> to vector<64x16xf32>
    %cst_54 = arith.constant dense<0.000000e+00> : vector<32x16xf32>
    %107 = tpu.matmul %18, %106, %cst_54 {dimension_numbers = #tpu.dot_dimension_numbers<[1], [0], [0], [1], [0, 0, 1, 1], [], []>} : vector<32x64xf32>, vector<64x16xf32>, vector<32x16xf32> -> vector<32x16xf32>
    %c4_55 = arith.constant 4 : index
    %c16_56 = arith.constant 16 : index
    %108 = vector.load %arg6[%c4_55, %c16_56] : memref<22x64xf32, #tpu.memory_space<vmem>>, vector<1x16xf32>
    %109 = vector.broadcast %108 : vector<1x16xf32> to vector<32x16xf32>
    %110 = arith.addf %107, %109 : vector<32x16xf32>
    %111 = vector.shape_cast %98 : vector<32x16xf32> to vector<2x16x16xf32>
    %112 = vector.shape_cast %104 : vector<32x16xf32> to vector<2x16x16xf32>
    %113 = vector.shape_cast %110 : vector<32x16xf32> to vector<2x16x16xf32>
    "tpu.trace_start"() <{level = 10 : i32, message = "bqd,bkd->bqk"}> : () -> ()
    %cst_57 = arith.constant dense<0.000000e+00> : vector<2x16x16xf32>
    %114 = tpu.matmul %111, %112, %cst_57 {dimension_numbers = #tpu.dot_dimension_numbers<[2], [2], [1], [1], [0, 0, 0, 1, 1, 1], [0], [0]>} : vector<2x16x16xf32>, vector<2x16x16xf32>, vector<2x16x16xf32> -> vector<2x16x16xf32>
    "tpu.trace_stop"() : () -> ()
    %cst_58 = arith.constant 2.500000e-01 : f32
    %115 = vector.broadcast %cst_58 : f32 to vector<2x16x16xf32>
    %116 = arith.mulf %114, %115 : vector<2x16x16xf32>
    %117 = vector.shape_cast %24 : vector<16x16xf32> to vector<1x16x16xf32>
    %118 = vector.broadcast %117 : vector<1x16x16xf32> to vector<2x16x16xf32>
    %119 = arith.addf %116, %118 : vector<2x16x16xf32>
    %cst_59 = arith.constant dense<0xFF800000> : vector<2x16xf32>
    %120 = vector.multi_reduction <maximumf>, %119, %cst_59 [2] : vector<2x16x16xf32> to vector<2x16xf32>
    %121 = vector.shape_cast %120 : vector<2x16xf32> to vector<2x16x1xf32>
    %122 = vector.broadcast %121 : vector<2x16x1xf32> to vector<2x16x16xf32>
    %123 = arith.subf %119, %122 : vector<2x16x16xf32>
    %124 = math.exp %123 : vector<2x16x16xf32>
    %cst_60 = arith.constant dense<0.000000e+00> : vector<2x16xf32>
    %125 = vector.multi_reduction <add>, %124, %cst_60 [2] : vector<2x16x16xf32> to vector<2x16xf32>
    %126 = vector.shape_cast %125 : vector<2x16xf32> to vector<2x16x1xf32>
    %127 = tpu.reciprocal %126 {approx = true} : vector<2x16x1xf32> -> vector<2x16x1xf32>
    %128 = vector.broadcast %127 : vector<2x16x1xf32> to vector<2x16x16xf32>
    %129 = arith.mulf %124, %128 : vector<2x16x16xf32>
    %130 = arith.addf %86, %129 : vector<2x16x16xf32>
    "tpu.trace_start"() <{level = 10 : i32, message = "bqk,bkd->bqd"}> : () -> ()
    %cst_61 = arith.constant dense<0.000000e+00> : vector<2x16x16xf32>
    %131 = tpu.matmul %129, %113, %cst_61 {dimension_numbers = #tpu.dot_dimension_numbers<[2], [1], [1], [2], [0, 0, 0, 1, 1, 2], [0], [0]>} : vector<2x16x16xf32>, vector<2x16x16xf32>, vector<2x16x16xf32> -> vector<2x16x16xf32>
    "tpu.trace_stop"() : () -> ()
    %132 = vector.shape_cast %131 : vector<2x16x16xf32> to vector<32x16xf32>
    %c1_62 = arith.constant 1 : index
    %c0_63 = arith.constant 0 : index
    %c0_64 = arith.constant 0 : index
    %133 = vector.load %arg4[%c1_62, %c0_63, %c0_64] : memref<8x16x64xf32, #tpu.memory_space<vmem>>, vector<1x16x64xf32>
    %134 = vector.shape_cast %133 : vector<1x16x64xf32> to vector<16x64xf32>
    %cst_65 = arith.constant dense<0.000000e+00> : vector<32x64xf32>
    %135 = tpu.matmul %132, %134, %cst_65 {dimension_numbers = #tpu.dot_dimension_numbers<[1], [0], [0], [1], [0, 0, 1, 1], [], []>} : vector<32x16xf32>, vector<16x64xf32>, vector<32x64xf32> -> vector<32x64xf32>
    %136 = arith.addf %92, %135 : vector<32x64xf32>
    %c2_66 = arith.constant 2 : index
    %c0_67 = arith.constant 0 : index
    %c0_68 = arith.constant 0 : index
    %137 = vector.load %arg3[%c2_66, %c0_67, %c0_68] : memref<24x64x16xf32, #tpu.memory_space<vmem>>, vector<1x64x16xf32>
    %138 = vector.shape_cast %137 : vector<1x64x16xf32> to vector<64x16xf32>
    %cst_69 = arith.constant dense<0.000000e+00> : vector<32x16xf32>
    %139 = tpu.matmul %46, %138, %cst_69 {dimension_numbers = #tpu.dot_dimension_numbers<[1], [0], [0], [1], [0, 0, 1, 1], [], []>} : vector<32x64xf32>, vector<64x16xf32>, vector<32x16xf32> -> vector<32x16xf32>
    %c2_70 = arith.constant 2 : index
    %c32 = arith.constant 32 : index
    %140 = vector.load %arg6[%c2_70, %c32] : memref<22x64xf32, #tpu.memory_space<vmem>>, vector<1x16xf32>
    %141 = vector.broadcast %140 : vector<1x16xf32> to vector<32x16xf32>
    %142 = arith.addf %139, %141 : vector<32x16xf32>
    %c6 = arith.constant 6 : index
    %c0_71 = arith.constant 0 : index
    %c0_72 = arith.constant 0 : index
    %143 = vector.load %arg3[%c6, %c0_71, %c0_72] : memref<24x64x16xf32, #tpu.memory_space<vmem>>, vector<1x64x16xf32>
    %144 = vector.shape_cast %143 : vector<1x64x16xf32> to vector<64x16xf32>
    %cst_73 = arith.constant dense<0.000000e+00> : vector<32x16xf32>
    %145 = tpu.matmul %18, %144, %cst_73 {dimension_numbers = #tpu.dot_dimension_numbers<[1], [0], [0], [1], [0, 0, 1, 1], [], []>} : vector<32x64xf32>, vector<64x16xf32>, vector<32x16xf32> -> vector<32x16xf32>
    %c3_74 = arith.constant 3 : index
    %c32_75 = arith.constant 32 : index
    %146 = vector.load %arg6[%c3_74, %c32_75] : memref<22x64xf32, #tpu.memory_space<vmem>>, vector<1x16xf32>
    %147 = vector.broadcast %146 : vector<1x16xf32> to vector<32x16xf32>
    %148 = arith.addf %145, %147 : vector<32x16xf32>
    %c10 = arith.constant 10 : index
    %c0_76 = arith.constant 0 : index
    %c0_77 = arith.constant 0 : index
    %149 = vector.load %arg3[%c10, %c0_76, %c0_77] : memref<24x64x16xf32, #tpu.memory_space<vmem>>, vector<1x64x16xf32>
    %150 = vector.shape_cast %149 : vector<1x64x16xf32> to vector<64x16xf32>
    %cst_78 = arith.constant dense<0.000000e+00> : vector<32x16xf32>
    %151 = tpu.matmul %18, %150, %cst_78 {dimension_numbers = #tpu.dot_dimension_numbers<[1], [0], [0], [1], [0, 0, 1, 1], [], []>} : vector<32x64xf32>, vector<64x16xf32>, vector<32x16xf32> -> vector<32x16xf32>
    %c4_79 = arith.constant 4 : index
    %c32_80 = arith.constant 32 : index
    %152 = vector.load %arg6[%c4_79, %c32_80] : memref<22x64xf32, #tpu.memory_space<vmem>>, vector<1x16xf32>
    %153 = vector.broadcast %152 : vector<1x16xf32> to vector<32x16xf32>
    %154 = arith.addf %151, %153 : vector<32x16xf32>
    %155 = vector.shape_cast %142 : vector<32x16xf32> to vector<2x16x16xf32>
    %156 = vector.shape_cast %148 : vector<32x16xf32> to vector<2x16x16xf32>
    %157 = vector.shape_cast %154 : vector<32x16xf32> to vector<2x16x16xf32>
    "tpu.trace_start"() <{level = 10 : i32, message = "bqd,bkd->bqk"}> : () -> ()
    %cst_81 = arith.constant dense<0.000000e+00> : vector<2x16x16xf32>
    %158 = tpu.matmul %155, %156, %cst_81 {dimension_numbers = #tpu.dot_dimension_numbers<[2], [2], [1], [1], [0, 0, 0, 1, 1, 1], [0], [0]>} : vector<2x16x16xf32>, vector<2x16x16xf32>, vector<2x16x16xf32> -> vector<2x16x16xf32>
    "tpu.trace_stop"() : () -> ()
    %cst_82 = arith.constant 2.500000e-01 : f32
    %159 = vector.broadcast %cst_82 : f32 to vector<2x16x16xf32>
    %160 = arith.mulf %158, %159 : vector<2x16x16xf32>
    %161 = vector.shape_cast %24 : vector<16x16xf32> to vector<1x16x16xf32>
    %162 = vector.broadcast %161 : vector<1x16x16xf32> to vector<2x16x16xf32>
    %163 = arith.addf %160, %162 : vector<2x16x16xf32>
    %cst_83 = arith.constant dense<0xFF800000> : vector<2x16xf32>
    %164 = vector.multi_reduction <maximumf>, %163, %cst_83 [2] : vector<2x16x16xf32> to vector<2x16xf32>
    %165 = vector.shape_cast %164 : vector<2x16xf32> to vector<2x16x1xf32>
    %166 = vector.broadcast %165 : vector<2x16x1xf32> to vector<2x16x16xf32>
    %167 = arith.subf %163, %166 : vector<2x16x16xf32>
    %168 = math.exp %167 : vector<2x16x16xf32>
    %cst_84 = arith.constant dense<0.000000e+00> : vector<2x16xf32>
    %169 = vector.multi_reduction <add>, %168, %cst_84 [2] : vector<2x16x16xf32> to vector<2x16xf32>
    %170 = vector.shape_cast %169 : vector<2x16xf32> to vector<2x16x1xf32>
    %171 = tpu.reciprocal %170 {approx = true} : vector<2x16x1xf32> -> vector<2x16x1xf32>
    %172 = vector.broadcast %171 : vector<2x16x1xf32> to vector<2x16x16xf32>
    %173 = arith.mulf %168, %172 : vector<2x16x16xf32>
    %174 = arith.addf %130, %173 : vector<2x16x16xf32>
    "tpu.trace_start"() <{level = 10 : i32, message = "bqk,bkd->bqd"}> : () -> ()
    %cst_85 = arith.constant dense<0.000000e+00> : vector<2x16x16xf32>
    %175 = tpu.matmul %173, %157, %cst_85 {dimension_numbers = #tpu.dot_dimension_numbers<[2], [1], [1], [2], [0, 0, 0, 1, 1, 2], [0], [0]>} : vector<2x16x16xf32>, vector<2x16x16xf32>, vector<2x16x16xf32> -> vector<2x16x16xf32>
    "tpu.trace_stop"() : () -> ()
    %176 = vector.shape_cast %175 : vector<2x16x16xf32> to vector<32x16xf32>
    %c2_86 = arith.constant 2 : index
    %c0_87 = arith.constant 0 : index
    %c0_88 = arith.constant 0 : index
    %177 = vector.load %arg4[%c2_86, %c0_87, %c0_88] : memref<8x16x64xf32, #tpu.memory_space<vmem>>, vector<1x16x64xf32>
    %178 = vector.shape_cast %177 : vector<1x16x64xf32> to vector<16x64xf32>
    %cst_89 = arith.constant dense<0.000000e+00> : vector<32x64xf32>
    %179 = tpu.matmul %176, %178, %cst_89 {dimension_numbers = #tpu.dot_dimension_numbers<[1], [0], [0], [1], [0, 0, 1, 1], [], []>} : vector<32x16xf32>, vector<16x64xf32>, vector<32x64xf32> -> vector<32x64xf32>
    %180 = arith.addf %136, %179 : vector<32x64xf32>
    %c3_90 = arith.constant 3 : index
    %c0_91 = arith.constant 0 : index
    %c0_92 = arith.constant 0 : index
    %181 = vector.load %arg3[%c3_90, %c0_91, %c0_92] : memref<24x64x16xf32, #tpu.memory_space<vmem>>, vector<1x64x16xf32>
    %182 = vector.shape_cast %181 : vector<1x64x16xf32> to vector<64x16xf32>
    %cst_93 = arith.constant dense<0.000000e+00> : vector<32x16xf32>
    %183 = tpu.matmul %46, %182, %cst_93 {dimension_numbers = #tpu.dot_dimension_numbers<[1], [0], [0], [1], [0, 0, 1, 1], [], []>} : vector<32x64xf32>, vector<64x16xf32>, vector<32x16xf32> -> vector<32x16xf32>
    %c2_94 = arith.constant 2 : index
    %c48 = arith.constant 48 : index
    %184 = vector.load %arg6[%c2_94, %c48] : memref<22x64xf32, #tpu.memory_space<vmem>>, vector<1x16xf32>
    %185 = vector.broadcast %184 : vector<1x16xf32> to vector<32x16xf32>
    %186 = arith.addf %183, %185 : vector<32x16xf32>
    %c7 = arith.constant 7 : index
    %c0_95 = arith.constant 0 : index
    %c0_96 = arith.constant 0 : index
    %187 = vector.load %arg3[%c7, %c0_95, %c0_96] : memref<24x64x16xf32, #tpu.memory_space<vmem>>, vector<1x64x16xf32>
    %188 = vector.shape_cast %187 : vector<1x64x16xf32> to vector<64x16xf32>
    %cst_97 = arith.constant dense<0.000000e+00> : vector<32x16xf32>
    %189 = tpu.matmul %18, %188, %cst_97 {dimension_numbers = #tpu.dot_dimension_numbers<[1], [0], [0], [1], [0, 0, 1, 1], [], []>} : vector<32x64xf32>, vector<64x16xf32>, vector<32x16xf32> -> vector<32x16xf32>
    %c3_98 = arith.constant 3 : index
    %c48_99 = arith.constant 48 : index
    %190 = vector.load %arg6[%c3_98, %c48_99] : memref<22x64xf32, #tpu.memory_space<vmem>>, vector<1x16xf32>
    %191 = vector.broadcast %190 : vector<1x16xf32> to vector<32x16xf32>
    %192 = arith.addf %189, %191 : vector<32x16xf32>
    %c11 = arith.constant 11 : index
    %c0_100 = arith.constant 0 : index
    %c0_101 = arith.constant 0 : index
    %193 = vector.load %arg3[%c11, %c0_100, %c0_101] : memref<24x64x16xf32, #tpu.memory_space<vmem>>, vector<1x64x16xf32>
    %194 = vector.shape_cast %193 : vector<1x64x16xf32> to vector<64x16xf32>
    %cst_102 = arith.constant dense<0.000000e+00> : vector<32x16xf32>
    %195 = tpu.matmul %18, %194, %cst_102 {dimension_numbers = #tpu.dot_dimension_numbers<[1], [0], [0], [1], [0, 0, 1, 1], [], []>} : vector<32x64xf32>, vector<64x16xf32>, vector<32x16xf32> -> vector<32x16xf32>
    %c4_103 = arith.constant 4 : index
    %c48_104 = arith.constant 48 : index
    %196 = vector.load %arg6[%c4_103, %c48_104] : memref<22x64xf32, #tpu.memory_space<vmem>>, vector<1x16xf32>
    %197 = vector.broadcast %196 : vector<1x16xf32> to vector<32x16xf32>
    %198 = arith.addf %195, %197 : vector<32x16xf32>
    %199 = vector.shape_cast %186 : vector<32x16xf32> to vector<2x16x16xf32>
    %200 = vector.shape_cast %192 : vector<32x16xf32> to vector<2x16x16xf32>
    %201 = vector.shape_cast %198 : vector<32x16xf32> to vector<2x16x16xf32>
    "tpu.trace_start"() <{level = 10 : i32, message = "bqd,bkd->bqk"}> : () -> ()
    %cst_105 = arith.constant dense<0.000000e+00> : vector<2x16x16xf32>
    %202 = tpu.matmul %199, %200, %cst_105 {dimension_numbers = #tpu.dot_dimension_numbers<[2], [2], [1], [1], [0, 0, 0, 1, 1, 1], [0], [0]>} : vector<2x16x16xf32>, vector<2x16x16xf32>, vector<2x16x16xf32> -> vector<2x16x16xf32>
    "tpu.trace_stop"() : () -> ()
    %cst_106 = arith.constant 2.500000e-01 : f32
    %203 = vector.broadcast %cst_106 : f32 to vector<2x16x16xf32>
    %204 = arith.mulf %202, %203 : vector<2x16x16xf32>
    %205 = vector.shape_cast %24 : vector<16x16xf32> to vector<1x16x16xf32>
    %206 = vector.broadcast %205 : vector<1x16x16xf32> to vector<2x16x16xf32>
    %207 = arith.addf %204, %206 : vector<2x16x16xf32>
    %cst_107 = arith.constant dense<0xFF800000> : vector<2x16xf32>
    %208 = vector.multi_reduction <maximumf>, %207, %cst_107 [2] : vector<2x16x16xf32> to vector<2x16xf32>
    %209 = vector.shape_cast %208 : vector<2x16xf32> to vector<2x16x1xf32>
    %210 = vector.broadcast %209 : vector<2x16x1xf32> to vector<2x16x16xf32>
    %211 = arith.subf %207, %210 : vector<2x16x16xf32>
    %212 = math.exp %211 : vector<2x16x16xf32>
    %cst_108 = arith.constant dense<0.000000e+00> : vector<2x16xf32>
    %213 = vector.multi_reduction <add>, %212, %cst_108 [2] : vector<2x16x16xf32> to vector<2x16xf32>
    %214 = vector.shape_cast %213 : vector<2x16xf32> to vector<2x16x1xf32>
    %215 = tpu.reciprocal %214 {approx = true} : vector<2x16x1xf32> -> vector<2x16x1xf32>
    %216 = vector.broadcast %215 : vector<2x16x1xf32> to vector<2x16x16xf32>
    %217 = arith.mulf %212, %216 : vector<2x16x16xf32>
    %218 = arith.addf %174, %217 : vector<2x16x16xf32>
    "tpu.trace_start"() <{level = 10 : i32, message = "bqk,bkd->bqd"}> : () -> ()
    %cst_109 = arith.constant dense<0.000000e+00> : vector<2x16x16xf32>
    %219 = tpu.matmul %217, %201, %cst_109 {dimension_numbers = #tpu.dot_dimension_numbers<[2], [1], [1], [2], [0, 0, 0, 1, 1, 2], [0], [0]>} : vector<2x16x16xf32>, vector<2x16x16xf32>, vector<2x16x16xf32> -> vector<2x16x16xf32>
    "tpu.trace_stop"() : () -> ()
    %220 = vector.shape_cast %219 : vector<2x16x16xf32> to vector<32x16xf32>
    %c3_110 = arith.constant 3 : index
    %c0_111 = arith.constant 0 : index
    %c0_112 = arith.constant 0 : index
    %221 = vector.load %arg4[%c3_110, %c0_111, %c0_112] : memref<8x16x64xf32, #tpu.memory_space<vmem>>, vector<1x16x64xf32>
    %222 = vector.shape_cast %221 : vector<1x16x64xf32> to vector<16x64xf32>
    %cst_113 = arith.constant dense<0.000000e+00> : vector<32x64xf32>
    %223 = tpu.matmul %220, %222, %cst_113 {dimension_numbers = #tpu.dot_dimension_numbers<[1], [0], [0], [1], [0, 0, 1, 1], [], []>} : vector<32x16xf32>, vector<16x64xf32>, vector<32x64xf32> -> vector<32x64xf32>
    %224 = arith.addf %180, %223 : vector<32x64xf32>
    %c5_114 = arith.constant 5 : index
    %c0_115 = arith.constant 0 : index
    %225 = vector.load %arg6[%c5_114, %c0_115] : memref<22x64xf32, #tpu.memory_space<vmem>>, vector<1x64xf32>
    %226 = vector.broadcast %225 : vector<1x64xf32> to vector<32x64xf32>
    %227 = arith.addf %224, %226 : vector<32x64xf32>
    %cst_116 = arith.constant 2.500000e-01 : f32
    %228 = vector.broadcast %cst_116 : f32 to vector<2x16x16xf32>
    %229 = arith.mulf %218, %228 : vector<2x16x16xf32>
    %c0_117 = arith.constant 0 : index
    %c0_118 = arith.constant 0 : index
    %c0_119 = arith.constant 0 : index
    %c0_120 = arith.constant 0 : index
    %230 = vector.load %arg8[%c0_117, %c0_118, %c0_119, %c0_120] : memref<2x2x16x16xf32, #tpu.memory_space<vmem>>, vector<1x2x16x16xf32>
    %231 = vector.shape_cast %230 : vector<1x2x16x16xf32> to vector<2x16x16xf32>
    %232 = vector.shape_cast %229 : vector<2x16x16xf32> to vector<1x2x16x16xf32>
    tpu.vector_store %arg8[%c0_117, %c0_118, %c0_119, %c0_120], %232 {strides = array<i32>} : memref<2x2x16x16xf32, #tpu.memory_space<vmem>>, vector<1x2x16x16xf32>,
    %233 = arith.addf %227, %46 : vector<32x64xf32>
    %c6_121 = arith.constant 6 : index
    %c0_122 = arith.constant 0 : index
    %234 = vector.load %arg6[%c6_121, %c0_122] : memref<22x64xf32, #tpu.memory_space<vmem>>, vector<1x64xf32>
    %c7_123 = arith.constant 7 : index
    %c0_124 = arith.constant 0 : index
    %235 = vector.load %arg6[%c7_123, %c0_124] : memref<22x64xf32, #tpu.memory_space<vmem>>, vector<1x64xf32>
    %cst_125 = arith.constant dense<0.000000e+00> : vector<32xf32>
    %236 = vector.multi_reduction <add>, %233, %cst_125 [1] : vector<32x64xf32> to vector<32xf32>
    %237 = vector.shape_cast %236 : vector<32xf32> to vector<32x1xf32>
    %cst_126 = arith.constant 6.400000e+01 : f32
    %238 = vector.broadcast %cst_126 : f32 to vector<32x1xf32>
    %239 = arith.divf %237, %238 : vector<32x1xf32>
    %240 = vector.broadcast %239 : vector<32x1xf32> to vector<32x64xf32>
    %241 = arith.subf %233, %240 : vector<32x64xf32>
    %242 = arith.mulf %241, %241 : vector<32x64xf32>
    %cst_127 = arith.constant dense<0.000000e+00> : vector<32xf32>
    %243 = vector.multi_reduction <add>, %242, %cst_127 [1] : vector<32x64xf32> to vector<32xf32>
    %244 = vector.shape_cast %243 : vector<32xf32> to vector<32x1xf32>
    %cst_128 = arith.constant 6.400000e+01 : f32
    %245 = vector.broadcast %cst_128 : f32 to vector<32x1xf32>
    %246 = arith.divf %244, %245 : vector<32x1xf32>
    %cst_129 = arith.constant 9.99999974E-6 : f32
    %247 = vector.broadcast %cst_129 : f32 to vector<32x1xf32>
    %248 = arith.addf %246, %247 : vector<32x1xf32>
    %249 = math.rsqrt %248 : vector<32x1xf32>
    %250 = vector.broadcast %249 : vector<32x1xf32> to vector<32x64xf32>
    %251 = arith.mulf %241, %250 : vector<32x64xf32>
    %252 = vector.broadcast %234 : vector<1x64xf32> to vector<32x64xf32>
    %253 = arith.mulf %251, %252 : vector<32x64xf32>
    %254 = vector.broadcast %235 : vector<1x64xf32> to vector<32x64xf32>
    %255 = arith.addf %253, %254 : vector<32x64xf32>
    %c0_130 = arith.constant 0 : index
    %c0_131 = arith.constant 0 : index
    %c0_132 = arith.constant 0 : index
    %256 = vector.load %arg5[%c0_130, %c0_131, %c0_132] : memref<4x64x64xf32, #tpu.memory_space<vmem>>, vector<1x64x64xf32>
    %257 = vector.shape_cast %256 : vector<1x64x64xf32> to vector<64x64xf32>
    %cst_133 = arith.constant dense<0.000000e+00> : vector<32x64xf32>
    %258 = tpu.matmul %255, %257, %cst_133 {dimension_numbers = #tpu.dot_dimension_numbers<[1], [0], [0], [1], [0, 0, 1, 1], [], []>} : vector<32x64xf32>, vector<64x64xf32>, vector<32x64xf32> -> vector<32x64xf32>
    %c8_134 = arith.constant 8 : index
    %c0_135 = arith.constant 0 : index
    %259 = vector.load %arg6[%c8_134, %c0_135] : memref<22x64xf32, #tpu.memory_space<vmem>>, vector<1x64xf32>
    %260 = vector.broadcast %259 : vector<1x64xf32> to vector<32x64xf32>
    %261 = arith.addf %258, %260 : vector<32x64xf32>
    %cst_136 = arith.constant 0.000000e+00 : f32
    %262 = vector.broadcast %cst_136 : f32 to vector<32x64xf32>
    %263 = arith.maximumf %261, %262 : vector<32x64xf32>
    %c1_137 = arith.constant 1 : index
    %c0_138 = arith.constant 0 : index
    %c0_139 = arith.constant 0 : index
    %264 = vector.load %arg5[%c1_137, %c0_138, %c0_139] : memref<4x64x64xf32, #tpu.memory_space<vmem>>, vector<1x64x64xf32>
    %265 = vector.shape_cast %264 : vector<1x64x64xf32> to vector<64x64xf32>
    %cst_140 = arith.constant dense<0.000000e+00> : vector<32x64xf32>
    %266 = tpu.matmul %263, %265, %cst_140 {dimension_numbers = #tpu.dot_dimension_numbers<[1], [0], [0], [1], [0, 0, 1, 1], [], []>} : vector<32x64xf32>, vector<64x64xf32>, vector<32x64xf32> -> vector<32x64xf32>
    %c9_141 = arith.constant 9 : index
    %c0_142 = arith.constant 0 : index
    %267 = vector.load %arg6[%c9_141, %c0_142] : memref<22x64xf32, #tpu.memory_space<vmem>>, vector<1x64xf32>
    %268 = vector.broadcast %267 : vector<1x64xf32> to vector<32x64xf32>
    %269 = arith.addf %266, %268 : vector<32x64xf32>
    %270 = arith.addf %269, %255 : vector<32x64xf32>
    %271 = arith.mulf %270, %17 : vector<32x64xf32>
    %c10_143 = arith.constant 10 : index
    %c0_144 = arith.constant 0 : index
    %272 = vector.load %arg6[%c10_143, %c0_144] : memref<22x64xf32, #tpu.memory_space<vmem>>, vector<1x64xf32>
    %c11_145 = arith.constant 11 : index
    %c0_146 = arith.constant 0 : index
    %273 = vector.load %arg6[%c11_145, %c0_146] : memref<22x64xf32, #tpu.memory_space<vmem>>, vector<1x64xf32>
    %cst_147 = arith.constant dense<0.000000e+00> : vector<32xf32>
    %274 = vector.multi_reduction <add>, %271, %cst_147 [1] : vector<32x64xf32> to vector<32xf32>
    %275 = vector.shape_cast %274 : vector<32xf32> to vector<32x1xf32>
    %cst_148 = arith.constant 6.400000e+01 : f32
    %276 = vector.broadcast %cst_148 : f32 to vector<32x1xf32>
    %277 = arith.divf %275, %276 : vector<32x1xf32>
    %278 = vector.broadcast %277 : vector<32x1xf32> to vector<32x64xf32>
    %279 = arith.subf %271, %278 : vector<32x64xf32>
    %280 = arith.mulf %279, %279 : vector<32x64xf32>
    %cst_149 = arith.constant dense<0.000000e+00> : vector<32xf32>
    %281 = vector.multi_reduction <add>, %280, %cst_149 [1] : vector<32x64xf32> to vector<32xf32>
    %282 = vector.shape_cast %281 : vector<32xf32> to vector<32x1xf32>
    %cst_150 = arith.constant 6.400000e+01 : f32
    %283 = vector.broadcast %cst_150 : f32 to vector<32x1xf32>
    %284 = arith.divf %282, %283 : vector<32x1xf32>
    %cst_151 = arith.constant 9.99999974E-6 : f32
    %285 = vector.broadcast %cst_151 : f32 to vector<32x1xf32>
    %286 = arith.addf %284, %285 : vector<32x1xf32>
    %287 = math.rsqrt %286 : vector<32x1xf32>
    %288 = vector.broadcast %287 : vector<32x1xf32> to vector<32x64xf32>
    %289 = arith.mulf %279, %288 : vector<32x64xf32>
    %290 = vector.broadcast %272 : vector<1x64xf32> to vector<32x64xf32>
    %291 = arith.mulf %289, %290 : vector<32x64xf32>
    %292 = vector.broadcast %273 : vector<1x64xf32> to vector<32x64xf32>
    %293 = arith.addf %291, %292 : vector<32x64xf32>
    %cst_152 = arith.constant 0.000000e+00 : f32
    %294 = vector.broadcast %cst_152 : f32 to vector<32x64xf32>
    %cst_153 = arith.constant 0.000000e+00 : f32
    %295 = vector.broadcast %cst_153 : f32 to vector<2x16x16xf32>
    %c12 = arith.constant 12 : index
    %c0_154 = arith.constant 0 : index
    %c0_155 = arith.constant 0 : index
    %296 = vector.load %arg3[%c12, %c0_154, %c0_155] : memref<24x64x16xf32, #tpu.memory_space<vmem>>, vector<1x64x16xf32>
    %297 = vector.shape_cast %296 : vector<1x64x16xf32> to vector<64x16xf32>
    %cst_156 = arith.constant dense<0.000000e+00> : vector<32x16xf32>
    %298 = tpu.matmul %293, %297, %cst_156 {dimension_numbers = #tpu.dot_dimension_numbers<[1], [0], [0], [1], [0, 0, 1, 1], [], []>} : vector<32x64xf32>, vector<64x16xf32>, vector<32x16xf32> -> vector<32x16xf32>
    %c12_157 = arith.constant 12 : index
    %c0_158 = arith.constant 0 : index
    %299 = vector.load %arg6[%c12_157, %c0_158] : memref<22x64xf32, #tpu.memory_space<vmem>>, vector<1x16xf32>
    %300 = vector.broadcast %299 : vector<1x16xf32> to vector<32x16xf32>
    %301 = arith.addf %298, %300 : vector<32x16xf32>
    %c16_159 = arith.constant 16 : index
    %c0_160 = arith.constant 0 : index
    %c0_161 = arith.constant 0 : index
    %302 = vector.load %arg3[%c16_159, %c0_160, %c0_161] : memref<24x64x16xf32, #tpu.memory_space<vmem>>, vector<1x64x16xf32>
    %303 = vector.shape_cast %302 : vector<1x64x16xf32> to vector<64x16xf32>
    %cst_162 = arith.constant dense<0.000000e+00> : vector<32x16xf32>
    %304 = tpu.matmul %271, %303, %cst_162 {dimension_numbers = #tpu.dot_dimension_numbers<[1], [0], [0], [1], [0, 0, 1, 1], [], []>} : vector<32x64xf32>, vector<64x16xf32>, vector<32x16xf32> -> vector<32x16xf32>
    %c13 = arith.constant 13 : index
    %c0_163 = arith.constant 0 : index
    %305 = vector.load %arg6[%c13, %c0_163] : memref<22x64xf32, #tpu.memory_space<vmem>>, vector<1x16xf32>
    %306 = vector.broadcast %305 : vector<1x16xf32> to vector<32x16xf32>
    %307 = arith.addf %304, %306 : vector<32x16xf32>
    %c20 = arith.constant 20 : index
    %c0_164 = arith.constant 0 : index
    %c0_165 = arith.constant 0 : index
    %308 = vector.load %arg3[%c20, %c0_164, %c0_165] : memref<24x64x16xf32, #tpu.memory_space<vmem>>, vector<1x64x16xf32>
    %309 = vector.shape_cast %308 : vector<1x64x16xf32> to vector<64x16xf32>
    %cst_166 = arith.constant dense<0.000000e+00> : vector<32x16xf32>
    %310 = tpu.matmul %271, %309, %cst_166 {dimension_numbers = #tpu.dot_dimension_numbers<[1], [0], [0], [1], [0, 0, 1, 1], [], []>} : vector<32x64xf32>, vector<64x16xf32>, vector<32x16xf32> -> vector<32x16xf32>
    %c14 = arith.constant 14 : index
    %c0_167 = arith.constant 0 : index
    %311 = vector.load %arg6[%c14, %c0_167] : memref<22x64xf32, #tpu.memory_space<vmem>>, vector<1x16xf32>
    %312 = vector.broadcast %311 : vector<1x16xf32> to vector<32x16xf32>
    %313 = arith.addf %310, %312 : vector<32x16xf32>
    %314 = vector.shape_cast %301 : vector<32x16xf32> to vector<2x16x16xf32>
    %315 = vector.shape_cast %307 : vector<32x16xf32> to vector<2x16x16xf32>
    %316 = vector.shape_cast %313 : vector<32x16xf32> to vector<2x16x16xf32>
    "tpu.trace_start"() <{level = 10 : i32, message = "bqd,bkd->bqk"}> : () -> ()
    %cst_168 = arith.constant dense<0.000000e+00> : vector<2x16x16xf32>
    %317 = tpu.matmul %314, %315, %cst_168 {dimension_numbers = #tpu.dot_dimension_numbers<[2], [2], [1], [1], [0, 0, 0, 1, 1, 1], [0], [0]>} : vector<2x16x16xf32>, vector<2x16x16xf32>, vector<2x16x16xf32> -> vector<2x16x16xf32>
    "tpu.trace_stop"() : () -> ()
    %cst_169 = arith.constant 2.500000e-01 : f32
    %318 = vector.broadcast %cst_169 : f32 to vector<2x16x16xf32>
    %319 = arith.mulf %317, %318 : vector<2x16x16xf32>
    %320 = vector.shape_cast %24 : vector<16x16xf32> to vector<1x16x16xf32>
    %321 = vector.broadcast %320 : vector<1x16x16xf32> to vector<2x16x16xf32>
    %322 = arith.addf %319, %321 : vector<2x16x16xf32>
    %cst_170 = arith.constant dense<0xFF800000> : vector<2x16xf32>
    %323 = vector.multi_reduction <maximumf>, %322, %cst_170 [2] : vector<2x16x16xf32> to vector<2x16xf32>
    %324 = vector.shape_cast %323 : vector<2x16xf32> to vector<2x16x1xf32>
    %325 = vector.broadcast %324 : vector<2x16x1xf32> to vector<2x16x16xf32>
    %326 = arith.subf %322, %325 : vector<2x16x16xf32>
    %327 = math.exp %326 : vector<2x16x16xf32>
    %cst_171 = arith.constant dense<0.000000e+00> : vector<2x16xf32>
    %328 = vector.multi_reduction <add>, %327, %cst_171 [2] : vector<2x16x16xf32> to vector<2x16xf32>
    %329 = vector.shape_cast %328 : vector<2x16xf32> to vector<2x16x1xf32>
    %330 = tpu.reciprocal %329 {approx = true} : vector<2x16x1xf32> -> vector<2x16x1xf32>
    %331 = vector.broadcast %330 : vector<2x16x1xf32> to vector<2x16x16xf32>
    %332 = arith.mulf %327, %331 : vector<2x16x16xf32>
    %333 = arith.addf %295, %332 : vector<2x16x16xf32>
    "tpu.trace_start"() <{level = 10 : i32, message = "bqk,bkd->bqd"}> : () -> ()
    %cst_172 = arith.constant dense<0.000000e+00> : vector<2x16x16xf32>
    %334 = tpu.matmul %332, %316, %cst_172 {dimension_numbers = #tpu.dot_dimension_numbers<[2], [1], [1], [2], [0, 0, 0, 1, 1, 2], [0], [0]>} : vector<2x16x16xf32>, vector<2x16x16xf32>, vector<2x16x16xf32> -> vector<2x16x16xf32>
    "tpu.trace_stop"() : () -> ()
    %335 = vector.shape_cast %334 : vector<2x16x16xf32> to vector<32x16xf32>
    %c4_173 = arith.constant 4 : index
    %c0_174 = arith.constant 0 : index
    %c0_175 = arith.constant 0 : index
    %336 = vector.load %arg4[%c4_173, %c0_174, %c0_175] : memref<8x16x64xf32, #tpu.memory_space<vmem>>, vector<1x16x64xf32>
    %337 = vector.shape_cast %336 : vector<1x16x64xf32> to vector<16x64xf32>
    %cst_176 = arith.constant dense<0.000000e+00> : vector<32x64xf32>
    %338 = tpu.matmul %335, %337, %cst_176 {dimension_numbers = #tpu.dot_dimension_numbers<[1], [0], [0], [1], [0, 0, 1, 1], [], []>} : vector<32x16xf32>, vector<16x64xf32>, vector<32x64xf32> -> vector<32x64xf32>
    %339 = arith.addf %294, %338 : vector<32x64xf32>
    %c13_177 = arith.constant 13 : index
    %c0_178 = arith.constant 0 : index
    %c0_179 = arith.constant 0 : index
    %340 = vector.load %arg3[%c13_177, %c0_178, %c0_179] : memref<24x64x16xf32, #tpu.memory_space<vmem>>, vector<1x64x16xf32>
    %341 = vector.shape_cast %340 : vector<1x64x16xf32> to vector<64x16xf32>
    %cst_180 = arith.constant dense<0.000000e+00> : vector<32x16xf32>
    %342 = tpu.matmul %293, %341, %cst_180 {dimension_numbers = #tpu.dot_dimension_numbers<[1], [0], [0], [1], [0, 0, 1, 1], [], []>} : vector<32x64xf32>, vector<64x16xf32>, vector<32x16xf32> -> vector<32x16xf32>
    %c12_181 = arith.constant 12 : index
    %c16_182 = arith.constant 16 : index
    %343 = vector.load %arg6[%c12_181, %c16_182] : memref<22x64xf32, #tpu.memory_space<vmem>>, vector<1x16xf32>
    %344 = vector.broadcast %343 : vector<1x16xf32> to vector<32x16xf32>
    %345 = arith.addf %342, %344 : vector<32x16xf32>
    %c17 = arith.constant 17 : index
    %c0_183 = arith.constant 0 : index
    %c0_184 = arith.constant 0 : index
    %346 = vector.load %arg3[%c17, %c0_183, %c0_184] : memref<24x64x16xf32, #tpu.memory_space<vmem>>, vector<1x64x16xf32>
    %347 = vector.shape_cast %346 : vector<1x64x16xf32> to vector<64x16xf32>
    %cst_185 = arith.constant dense<0.000000e+00> : vector<32x16xf32>
    %348 = tpu.matmul %271, %347, %cst_185 {dimension_numbers = #tpu.dot_dimension_numbers<[1], [0], [0], [1], [0, 0, 1, 1], [], []>} : vector<32x64xf32>, vector<64x16xf32>, vector<32x16xf32> -> vector<32x16xf32>
    %c13_186 = arith.constant 13 : index
    %c16_187 = arith.constant 16 : index
    %349 = vector.load %arg6[%c13_186, %c16_187] : memref<22x64xf32, #tpu.memory_space<vmem>>, vector<1x16xf32>
    %350 = vector.broadcast %349 : vector<1x16xf32> to vector<32x16xf32>
    %351 = arith.addf %348, %350 : vector<32x16xf32>
    %c21 = arith.constant 21 : index
    %c0_188 = arith.constant 0 : index
    %c0_189 = arith.constant 0 : index
    %352 = vector.load %arg3[%c21, %c0_188, %c0_189] : memref<24x64x16xf32, #tpu.memory_space<vmem>>, vector<1x64x16xf32>
    %353 = vector.shape_cast %352 : vector<1x64x16xf32> to vector<64x16xf32>
    %cst_190 = arith.constant dense<0.000000e+00> : vector<32x16xf32>
    %354 = tpu.matmul %271, %353, %cst_190 {dimension_numbers = #tpu.dot_dimension_numbers<[1], [0], [0], [1], [0, 0, 1, 1], [], []>} : vector<32x64xf32>, vector<64x16xf32>, vector<32x16xf32> -> vector<32x16xf32>
    %c14_191 = arith.constant 14 : index
    %c16_192 = arith.constant 16 : index
    %355 = vector.load %arg6[%c14_191, %c16_192] : memref<22x64xf32, #tpu.memory_space<vmem>>, vector<1x16xf32>
    %356 = vector.broadcast %355 : vector<1x16xf32> to vector<32x16xf32>
    %357 = arith.addf %354, %356 : vector<32x16xf32>
    %358 = vector.shape_cast %345 : vector<32x16xf32> to vector<2x16x16xf32>
    %359 = vector.shape_cast %351 : vector<32x16xf32> to vector<2x16x16xf32>
    %360 = vector.shape_cast %357 : vector<32x16xf32> to vector<2x16x16xf32>
    "tpu.trace_start"() <{level = 10 : i32, message = "bqd,bkd->bqk"}> : () -> ()
    %cst_193 = arith.constant dense<0.000000e+00> : vector<2x16x16xf32>
    %361 = tpu.matmul %358, %359, %cst_193 {dimension_numbers = #tpu.dot_dimension_numbers<[2], [2], [1], [1], [0, 0, 0, 1, 1, 1], [0], [0]>} : vector<2x16x16xf32>, vector<2x16x16xf32>, vector<2x16x16xf32> -> vector<2x16x16xf32>
    "tpu.trace_stop"() : () -> ()
    %cst_194 = arith.constant 2.500000e-01 : f32
    %362 = vector.broadcast %cst_194 : f32 to vector<2x16x16xf32>
    %363 = arith.mulf %361, %362 : vector<2x16x16xf32>
    %364 = vector.shape_cast %24 : vector<16x16xf32> to vector<1x16x16xf32>
    %365 = vector.broadcast %364 : vector<1x16x16xf32> to vector<2x16x16xf32>
    %366 = arith.addf %363, %365 : vector<2x16x16xf32>
    %cst_195 = arith.constant dense<0xFF800000> : vector<2x16xf32>
    %367 = vector.multi_reduction <maximumf>, %366, %cst_195 [2] : vector<2x16x16xf32> to vector<2x16xf32>
    %368 = vector.shape_cast %367 : vector<2x16xf32> to vector<2x16x1xf32>
    %369 = vector.broadcast %368 : vector<2x16x1xf32> to vector<2x16x16xf32>
    %370 = arith.subf %366, %369 : vector<2x16x16xf32>
    %371 = math.exp %370 : vector<2x16x16xf32>
    %cst_196 = arith.constant dense<0.000000e+00> : vector<2x16xf32>
    %372 = vector.multi_reduction <add>, %371, %cst_196 [2] : vector<2x16x16xf32> to vector<2x16xf32>
    %373 = vector.shape_cast %372 : vector<2x16xf32> to vector<2x16x1xf32>
    %374 = tpu.reciprocal %373 {approx = true} : vector<2x16x1xf32> -> vector<2x16x1xf32>
    %375 = vector.broadcast %374 : vector<2x16x1xf32> to vector<2x16x16xf32>
    %376 = arith.mulf %371, %375 : vector<2x16x16xf32>
    %377 = arith.addf %333, %376 : vector<2x16x16xf32>
    "tpu.trace_start"() <{level = 10 : i32, message = "bqk,bkd->bqd"}> : () -> ()
    %cst_197 = arith.constant dense<0.000000e+00> : vector<2x16x16xf32>
    %378 = tpu.matmul %376, %360, %cst_197 {dimension_numbers = #tpu.dot_dimension_numbers<[2], [1], [1], [2], [0, 0, 0, 1, 1, 2], [0], [0]>} : vector<2x16x16xf32>, vector<2x16x16xf32>, vector<2x16x16xf32> -> vector<2x16x16xf32>
    "tpu.trace_stop"() : () -> ()
    %379 = vector.shape_cast %378 : vector<2x16x16xf32> to vector<32x16xf32>
    %c5_198 = arith.constant 5 : index
    %c0_199 = arith.constant 0 : index
    %c0_200 = arith.constant 0 : index
    %380 = vector.load %arg4[%c5_198, %c0_199, %c0_200] : memref<8x16x64xf32, #tpu.memory_space<vmem>>, vector<1x16x64xf32>
    %381 = vector.shape_cast %380 : vector<1x16x64xf32> to vector<16x64xf32>
    %cst_201 = arith.constant dense<0.000000e+00> : vector<32x64xf32>
    %382 = tpu.matmul %379, %381, %cst_201 {dimension_numbers = #tpu.dot_dimension_numbers<[1], [0], [0], [1], [0, 0, 1, 1], [], []>} : vector<32x16xf32>, vector<16x64xf32>, vector<32x64xf32> -> vector<32x64xf32>
    %383 = arith.addf %339, %382 : vector<32x64xf32>
    %c14_202 = arith.constant 14 : index
    %c0_203 = arith.constant 0 : index
    %c0_204 = arith.constant 0 : index
    %384 = vector.load %arg3[%c14_202, %c0_203, %c0_204] : memref<24x64x16xf32, #tpu.memory_space<vmem>>, vector<1x64x16xf32>
    %385 = vector.shape_cast %384 : vector<1x64x16xf32> to vector<64x16xf32>
    %cst_205 = arith.constant dense<0.000000e+00> : vector<32x16xf32>
    %386 = tpu.matmul %293, %385, %cst_205 {dimension_numbers = #tpu.dot_dimension_numbers<[1], [0], [0], [1], [0, 0, 1, 1], [], []>} : vector<32x64xf32>, vector<64x16xf32>, vector<32x16xf32> -> vector<32x16xf32>
    %c12_206 = arith.constant 12 : index
    %c32_207 = arith.constant 32 : index
    %387 = vector.load %arg6[%c12_206, %c32_207] : memref<22x64xf32, #tpu.memory_space<vmem>>, vector<1x16xf32>
    %388 = vector.broadcast %387 : vector<1x16xf32> to vector<32x16xf32>
    %389 = arith.addf %386, %388 : vector<32x16xf32>
    %c18 = arith.constant 18 : index
    %c0_208 = arith.constant 0 : index
    %c0_209 = arith.constant 0 : index
    %390 = vector.load %arg3[%c18, %c0_208, %c0_209] : memref<24x64x16xf32, #tpu.memory_space<vmem>>, vector<1x64x16xf32>
    %391 = vector.shape_cast %390 : vector<1x64x16xf32> to vector<64x16xf32>
    %cst_210 = arith.constant dense<0.000000e+00> : vector<32x16xf32>
    %392 = tpu.matmul %271, %391, %cst_210 {dimension_numbers = #tpu.dot_dimension_numbers<[1], [0], [0], [1], [0, 0, 1, 1], [], []>} : vector<32x64xf32>, vector<64x16xf32>, vector<32x16xf32> -> vector<32x16xf32>
    %c13_211 = arith.constant 13 : index
    %c32_212 = arith.constant 32 : index
    %393 = vector.load %arg6[%c13_211, %c32_212] : memref<22x64xf32, #tpu.memory_space<vmem>>, vector<1x16xf32>
    %394 = vector.broadcast %393 : vector<1x16xf32> to vector<32x16xf32>
    %395 = arith.addf %392, %394 : vector<32x16xf32>
    %c22 = arith.constant 22 : index
    %c0_213 = arith.constant 0 : index
    %c0_214 = arith.constant 0 : index
    %396 = vector.load %arg3[%c22, %c0_213, %c0_214] : memref<24x64x16xf32, #tpu.memory_space<vmem>>, vector<1x64x16xf32>
    %397 = vector.shape_cast %396 : vector<1x64x16xf32> to vector<64x16xf32>
    %cst_215 = arith.constant dense<0.000000e+00> : vector<32x16xf32>
    %398 = tpu.matmul %271, %397, %cst_215 {dimension_numbers = #tpu.dot_dimension_numbers<[1], [0], [0], [1], [0, 0, 1, 1], [], []>} : vector<32x64xf32>, vector<64x16xf32>, vector<32x16xf32> -> vector<32x16xf32>
    %c14_216 = arith.constant 14 : index
    %c32_217 = arith.constant 32 : index
    %399 = vector.load %arg6[%c14_216, %c32_217] : memref<22x64xf32, #tpu.memory_space<vmem>>, vector<1x16xf32>
    %400 = vector.broadcast %399 : vector<1x16xf32> to vector<32x16xf32>
    %401 = arith.addf %398, %400 : vector<32x16xf32>
    %402 = vector.shape_cast %389 : vector<32x16xf32> to vector<2x16x16xf32>
    %403 = vector.shape_cast %395 : vector<32x16xf32> to vector<2x16x16xf32>
    %404 = vector.shape_cast %401 : vector<32x16xf32> to vector<2x16x16xf32>
    "tpu.trace_start"() <{level = 10 : i32, message = "bqd,bkd->bqk"}> : () -> ()
    %cst_218 = arith.constant dense<0.000000e+00> : vector<2x16x16xf32>
    %405 = tpu.matmul %402, %403, %cst_218 {dimension_numbers = #tpu.dot_dimension_numbers<[2], [2], [1], [1], [0, 0, 0, 1, 1, 1], [0], [0]>} : vector<2x16x16xf32>, vector<2x16x16xf32>, vector<2x16x16xf32> -> vector<2x16x16xf32>
    "tpu.trace_stop"() : () -> ()
    %cst_219 = arith.constant 2.500000e-01 : f32
    %406 = vector.broadcast %cst_219 : f32 to vector<2x16x16xf32>
    %407 = arith.mulf %405, %406 : vector<2x16x16xf32>
    %408 = vector.shape_cast %24 : vector<16x16xf32> to vector<1x16x16xf32>
    %409 = vector.broadcast %408 : vector<1x16x16xf32> to vector<2x16x16xf32>
    %410 = arith.addf %407, %409 : vector<2x16x16xf32>
    %cst_220 = arith.constant dense<0xFF800000> : vector<2x16xf32>
    %411 = vector.multi_reduction <maximumf>, %410, %cst_220 [2] : vector<2x16x16xf32> to vector<2x16xf32>
    %412 = vector.shape_cast %411 : vector<2x16xf32> to vector<2x16x1xf32>
    %413 = vector.broadcast %412 : vector<2x16x1xf32> to vector<2x16x16xf32>
    %414 = arith.subf %410, %413 : vector<2x16x16xf32>
    %415 = math.exp %414 : vector<2x16x16xf32>
    %cst_221 = arith.constant dense<0.000000e+00> : vector<2x16xf32>
    %416 = vector.multi_reduction <add>, %415, %cst_221 [2] : vector<2x16x16xf32> to vector<2x16xf32>
    %417 = vector.shape_cast %416 : vector<2x16xf32> to vector<2x16x1xf32>
    %418 = tpu.reciprocal %417 {approx = true} : vector<2x16x1xf32> -> vector<2x16x1xf32>
    %419 = vector.broadcast %418 : vector<2x16x1xf32> to vector<2x16x16xf32>
    %420 = arith.mulf %415, %419 : vector<2x16x16xf32>
    %421 = arith.addf %377, %420 : vector<2x16x16xf32>
    "tpu.trace_start"() <{level = 10 : i32, message = "bqk,bkd->bqd"}> : () -> ()
    %cst_222 = arith.constant dense<0.000000e+00> : vector<2x16x16xf32>
    %422 = tpu.matmul %420, %404, %cst_222 {dimension_numbers = #tpu.dot_dimension_numbers<[2], [1], [1], [2], [0, 0, 0, 1, 1, 2], [0], [0]>} : vector<2x16x16xf32>, vector<2x16x16xf32>, vector<2x16x16xf32> -> vector<2x16x16xf32>
    "tpu.trace_stop"() : () -> ()
    %423 = vector.shape_cast %422 : vector<2x16x16xf32> to vector<32x16xf32>
    %c6_223 = arith.constant 6 : index
    %c0_224 = arith.constant 0 : index
    %c0_225 = arith.constant 0 : index
    %424 = vector.load %arg4[%c6_223, %c0_224, %c0_225] : memref<8x16x64xf32, #tpu.memory_space<vmem>>, vector<1x16x64xf32>
    %425 = vector.shape_cast %424 : vector<1x16x64xf32> to vector<16x64xf32>
    %cst_226 = arith.constant dense<0.000000e+00> : vector<32x64xf32>
    %426 = tpu.matmul %423, %425, %cst_226 {dimension_numbers = #tpu.dot_dimension_numbers<[1], [0], [0], [1], [0, 0, 1, 1], [], []>} : vector<32x16xf32>, vector<16x64xf32>, vector<32x64xf32> -> vector<32x64xf32>
    %427 = arith.addf %383, %426 : vector<32x64xf32>
    %c15 = arith.constant 15 : index
    %c0_227 = arith.constant 0 : index
    %c0_228 = arith.constant 0 : index
    %428 = vector.load %arg3[%c15, %c0_227, %c0_228] : memref<24x64x16xf32, #tpu.memory_space<vmem>>, vector<1x64x16xf32>
    %429 = vector.shape_cast %428 : vector<1x64x16xf32> to vector<64x16xf32>
    %cst_229 = arith.constant dense<0.000000e+00> : vector<32x16xf32>
    %430 = tpu.matmul %293, %429, %cst_229 {dimension_numbers = #tpu.dot_dimension_numbers<[1], [0], [0], [1], [0, 0, 1, 1], [], []>} : vector<32x64xf32>, vector<64x16xf32>, vector<32x16xf32> -> vector<32x16xf32>
    %c12_230 = arith.constant 12 : index
    %c48_231 = arith.constant 48 : index
    %431 = vector.load %arg6[%c12_230, %c48_231] : memref<22x64xf32, #tpu.memory_space<vmem>>, vector<1x16xf32>
    %432 = vector.broadcast %431 : vector<1x16xf32> to vector<32x16xf32>
    %433 = arith.addf %430, %432 : vector<32x16xf32>
    %c19 = arith.constant 19 : index
    %c0_232 = arith.constant 0 : index
    %c0_233 = arith.constant 0 : index
    %434 = vector.load %arg3[%c19, %c0_232, %c0_233] : memref<24x64x16xf32, #tpu.memory_space<vmem>>, vector<1x64x16xf32>
    %435 = vector.shape_cast %434 : vector<1x64x16xf32> to vector<64x16xf32>
    %cst_234 = arith.constant dense<0.000000e+00> : vector<32x16xf32>
    %436 = tpu.matmul %271, %435, %cst_234 {dimension_numbers = #tpu.dot_dimension_numbers<[1], [0], [0], [1], [0, 0, 1, 1], [], []>} : vector<32x64xf32>, vector<64x16xf32>, vector<32x16xf32> -> vector<32x16xf32>
    %c13_235 = arith.constant 13 : index
    %c48_236 = arith.constant 48 : index
    %437 = vector.load %arg6[%c13_235, %c48_236] : memref<22x64xf32, #tpu.memory_space<vmem>>, vector<1x16xf32>
    %438 = vector.broadcast %437 : vector<1x16xf32> to vector<32x16xf32>
    %439 = arith.addf %436, %438 : vector<32x16xf32>
    %c23 = arith.constant 23 : index
    %c0_237 = arith.constant 0 : index
    %c0_238 = arith.constant 0 : index
    %440 = vector.load %arg3[%c23, %c0_237, %c0_238] : memref<24x64x16xf32, #tpu.memory_space<vmem>>, vector<1x64x16xf32>
    %441 = vector.shape_cast %440 : vector<1x64x16xf32> to vector<64x16xf32>
    %cst_239 = arith.constant dense<0.000000e+00> : vector<32x16xf32>
    %442 = tpu.matmul %271, %441, %cst_239 {dimension_numbers = #tpu.dot_dimension_numbers<[1], [0], [0], [1], [0, 0, 1, 1], [], []>} : vector<32x64xf32>, vector<64x16xf32>, vector<32x16xf32> -> vector<32x16xf32>
    %c14_240 = arith.constant 14 : index
    %c48_241 = arith.constant 48 : index
    %443 = vector.load %arg6[%c14_240, %c48_241] : memref<22x64xf32, #tpu.memory_space<vmem>>, vector<1x16xf32>
    %444 = vector.broadcast %443 : vector<1x16xf32> to vector<32x16xf32>
    %445 = arith.addf %442, %444 : vector<32x16xf32>
    %446 = vector.shape_cast %433 : vector<32x16xf32> to vector<2x16x16xf32>
    %447 = vector.shape_cast %439 : vector<32x16xf32> to vector<2x16x16xf32>
    %448 = vector.shape_cast %445 : vector<32x16xf32> to vector<2x16x16xf32>
    "tpu.trace_start"() <{level = 10 : i32, message = "bqd,bkd->bqk"}> : () -> ()
    %cst_242 = arith.constant dense<0.000000e+00> : vector<2x16x16xf32>
    %449 = tpu.matmul %446, %447, %cst_242 {dimension_numbers = #tpu.dot_dimension_numbers<[2], [2], [1], [1], [0, 0, 0, 1, 1, 1], [0], [0]>} : vector<2x16x16xf32>, vector<2x16x16xf32>, vector<2x16x16xf32> -> vector<2x16x16xf32>
    "tpu.trace_stop"() : () -> ()
    %cst_243 = arith.constant 2.500000e-01 : f32
    %450 = vector.broadcast %cst_243 : f32 to vector<2x16x16xf32>
    %451 = arith.mulf %449, %450 : vector<2x16x16xf32>
    %452 = vector.shape_cast %24 : vector<16x16xf32> to vector<1x16x16xf32>
    %453 = vector.broadcast %452 : vector<1x16x16xf32> to vector<2x16x16xf32>
    %454 = arith.addf %451, %453 : vector<2x16x16xf32>
    %cst_244 = arith.constant dense<0xFF800000> : vector<2x16xf32>
    %455 = vector.multi_reduction <maximumf>, %454, %cst_244 [2] : vector<2x16x16xf32> to vector<2x16xf32>
    %456 = vector.shape_cast %455 : vector<2x16xf32> to vector<2x16x1xf32>
    %457 = vector.broadcast %456 : vector<2x16x1xf32> to vector<2x16x16xf32>
    %458 = arith.subf %454, %457 : vector<2x16x16xf32>
    %459 = math.exp %458 : vector<2x16x16xf32>
    %cst_245 = arith.constant dense<0.000000e+00> : vector<2x16xf32>
    %460 = vector.multi_reduction <add>, %459, %cst_245 [2] : vector<2x16x16xf32> to vector<2x16xf32>
    %461 = vector.shape_cast %460 : vector<2x16xf32> to vector<2x16x1xf32>
    %462 = tpu.reciprocal %461 {approx = true} : vector<2x16x1xf32> -> vector<2x16x1xf32>
    %463 = vector.broadcast %462 : vector<2x16x1xf32> to vector<2x16x16xf32>
    %464 = arith.mulf %459, %463 : vector<2x16x16xf32>
    %465 = arith.addf %421, %464 : vector<2x16x16xf32>
    "tpu.trace_start"() <{level = 10 : i32, message = "bqk,bkd->bqd"}> : () -> ()
    %cst_246 = arith.constant dense<0.000000e+00> : vector<2x16x16xf32>
    %466 = tpu.matmul %464, %448, %cst_246 {dimension_numbers = #tpu.dot_dimension_numbers<[2], [1], [1], [2], [0, 0, 0, 1, 1, 2], [0], [0]>} : vector<2x16x16xf32>, vector<2x16x16xf32>, vector<2x16x16xf32> -> vector<2x16x16xf32>
    "tpu.trace_stop"() : () -> ()
    %467 = vector.shape_cast %466 : vector<2x16x16xf32> to vector<32x16xf32>
    %c7_247 = arith.constant 7 : index
    %c0_248 = arith.constant 0 : index
    %c0_249 = arith.constant 0 : index
    %468 = vector.load %arg4[%c7_247, %c0_248, %c0_249] : memref<8x16x64xf32, #tpu.memory_space<vmem>>, vector<1x16x64xf32>
    %469 = vector.shape_cast %468 : vector<1x16x64xf32> to vector<16x64xf32>
    %cst_250 = arith.constant dense<0.000000e+00> : vector<32x64xf32>
    %470 = tpu.matmul %467, %469, %cst_250 {dimension_numbers = #tpu.dot_dimension_numbers<[1], [0], [0], [1], [0, 0, 1, 1], [], []>} : vector<32x16xf32>, vector<16x64xf32>, vector<32x64xf32> -> vector<32x64xf32>
    %471 = arith.addf %427, %470 : vector<32x64xf32>
    %c15_251 = arith.constant 15 : index
    %c0_252 = arith.constant 0 : index
    %472 = vector.load %arg6[%c15_251, %c0_252] : memref<22x64xf32, #tpu.memory_space<vmem>>, vector<1x64xf32>
    %473 = vector.broadcast %472 : vector<1x64xf32> to vector<32x64xf32>
    %474 = arith.addf %471, %473 : vector<32x64xf32>
    %cst_253 = arith.constant 2.500000e-01 : f32
    %475 = vector.broadcast %cst_253 : f32 to vector<2x16x16xf32>
    %476 = arith.mulf %465, %475 : vector<2x16x16xf32>
    %c1_254 = arith.constant 1 : index
    %c0_255 = arith.constant 0 : index
    %c0_256 = arith.constant 0 : index
    %c0_257 = arith.constant 0 : index
    %477 = vector.load %arg8[%c1_254, %c0_255, %c0_256, %c0_257] : memref<2x2x16x16xf32, #tpu.memory_space<vmem>>, vector<1x2x16x16xf32>
    %478 = vector.shape_cast %477 : vector<1x2x16x16xf32> to vector<2x16x16xf32>
    %479 = vector.shape_cast %476 : vector<2x16x16xf32> to vector<1x2x16x16xf32>
    tpu.vector_store %arg8[%c1_254, %c0_255, %c0_256, %c0_257], %479 {strides = array<i32>} : memref<2x2x16x16xf32, #tpu.memory_space<vmem>>, vector<1x2x16x16xf32>,
    %480 = arith.addf %474, %293 : vector<32x64xf32>
    %c16_258 = arith.constant 16 : index
    %c0_259 = arith.constant 0 : index
    %481 = vector.load %arg6[%c16_258, %c0_259] : memref<22x64xf32, #tpu.memory_space<vmem>>, vector<1x64xf32>
    %c17_260 = arith.constant 17 : index
    %c0_261 = arith.constant 0 : index
    %482 = vector.load %arg6[%c17_260, %c0_261] : memref<22x64xf32, #tpu.memory_space<vmem>>, vector<1x64xf32>
    %cst_262 = arith.constant dense<0.000000e+00> : vector<32xf32>
    %483 = vector.multi_reduction <add>, %480, %cst_262 [1] : vector<32x64xf32> to vector<32xf32>
    %484 = vector.shape_cast %483 : vector<32xf32> to vector<32x1xf32>
    %cst_263 = arith.constant 6.400000e+01 : f32
    %485 = vector.broadcast %cst_263 : f32 to vector<32x1xf32>
    %486 = arith.divf %484, %485 : vector<32x1xf32>
    %487 = vector.broadcast %486 : vector<32x1xf32> to vector<32x64xf32>
    %488 = arith.subf %480, %487 : vector<32x64xf32>
    %489 = arith.mulf %488, %488 : vector<32x64xf32>
    %cst_264 = arith.constant dense<0.000000e+00> : vector<32xf32>
    %490 = vector.multi_reduction <add>, %489, %cst_264 [1] : vector<32x64xf32> to vector<32xf32>
    %491 = vector.shape_cast %490 : vector<32xf32> to vector<32x1xf32>
    %cst_265 = arith.constant 6.400000e+01 : f32
    %492 = vector.broadcast %cst_265 : f32 to vector<32x1xf32>
    %493 = arith.divf %491, %492 : vector<32x1xf32>
    %cst_266 = arith.constant 9.99999974E-6 : f32
    %494 = vector.broadcast %cst_266 : f32 to vector<32x1xf32>
    %495 = arith.addf %493, %494 : vector<32x1xf32>
    %496 = math.rsqrt %495 : vector<32x1xf32>
    %497 = vector.broadcast %496 : vector<32x1xf32> to vector<32x64xf32>
    %498 = arith.mulf %488, %497 : vector<32x64xf32>
    %499 = vector.broadcast %481 : vector<1x64xf32> to vector<32x64xf32>
    %500 = arith.mulf %498, %499 : vector<32x64xf32>
    %501 = vector.broadcast %482 : vector<1x64xf32> to vector<32x64xf32>
    %502 = arith.addf %500, %501 : vector<32x64xf32>
    %c2_267 = arith.constant 2 : index
    %c0_268 = arith.constant 0 : index
    %c0_269 = arith.constant 0 : index
    %503 = vector.load %arg5[%c2_267, %c0_268, %c0_269] : memref<4x64x64xf32, #tpu.memory_space<vmem>>, vector<1x64x64xf32>
    %504 = vector.shape_cast %503 : vector<1x64x64xf32> to vector<64x64xf32>
    %cst_270 = arith.constant dense<0.000000e+00> : vector<32x64xf32>
    %505 = tpu.matmul %502, %504, %cst_270 {dimension_numbers = #tpu.dot_dimension_numbers<[1], [0], [0], [1], [0, 0, 1, 1], [], []>} : vector<32x64xf32>, vector<64x64xf32>, vector<32x64xf32> -> vector<32x64xf32>
    %c18_271 = arith.constant 18 : index
    %c0_272 = arith.constant 0 : index
    %506 = vector.load %arg6[%c18_271, %c0_272] : memref<22x64xf32, #tpu.memory_space<vmem>>, vector<1x64xf32>
    %507 = vector.broadcast %506 : vector<1x64xf32> to vector<32x64xf32>
    %508 = arith.addf %505, %507 : vector<32x64xf32>
    %cst_273 = arith.constant 0.000000e+00 : f32
    %509 = vector.broadcast %cst_273 : f32 to vector<32x64xf32>
    %510 = arith.maximumf %508, %509 : vector<32x64xf32>
    %c3_274 = arith.constant 3 : index
    %c0_275 = arith.constant 0 : index
    %c0_276 = arith.constant 0 : index
    %511 = vector.load %arg5[%c3_274, %c0_275, %c0_276] : memref<4x64x64xf32, #tpu.memory_space<vmem>>, vector<1x64x64xf32>
    %512 = vector.shape_cast %511 : vector<1x64x64xf32> to vector<64x64xf32>
    %cst_277 = arith.constant dense<0.000000e+00> : vector<32x64xf32>
    %513 = tpu.matmul %510, %512, %cst_277 {dimension_numbers = #tpu.dot_dimension_numbers<[1], [0], [0], [1], [0, 0, 1, 1], [], []>} : vector<32x64xf32>, vector<64x64xf32>, vector<32x64xf32> -> vector<32x64xf32>
    %c19_278 = arith.constant 19 : index
    %c0_279 = arith.constant 0 : index
    %514 = vector.load %arg6[%c19_278, %c0_279] : memref<22x64xf32, #tpu.memory_space<vmem>>, vector<1x64xf32>
    %515 = vector.broadcast %514 : vector<1x64xf32> to vector<32x64xf32>
    %516 = arith.addf %513, %515 : vector<32x64xf32>
    %517 = arith.addf %516, %502 : vector<32x64xf32>
    %518 = arith.mulf %517, %17 : vector<32x64xf32>
    %c20_280 = arith.constant 20 : index
    %c0_281 = arith.constant 0 : index
    %519 = vector.load %arg6[%c20_280, %c0_281] : memref<22x64xf32, #tpu.memory_space<vmem>>, vector<1x64xf32>
    %c21_282 = arith.constant 21 : index
    %c0_283 = arith.constant 0 : index
    %520 = vector.load %arg6[%c21_282, %c0_283] : memref<22x64xf32, #tpu.memory_space<vmem>>, vector<1x64xf32>
    %cst_284 = arith.constant dense<0.000000e+00> : vector<32xf32>
    %521 = vector.multi_reduction <add>, %518, %cst_284 [1] : vector<32x64xf32> to vector<32xf32>
    %522 = vector.shape_cast %521 : vector<32xf32> to vector<32x1xf32>
    %cst_285 = arith.constant 6.400000e+01 : f32
    %523 = vector.broadcast %cst_285 : f32 to vector<32x1xf32>
    %524 = arith.divf %522, %523 : vector<32x1xf32>
    %525 = vector.broadcast %524 : vector<32x1xf32> to vector<32x64xf32>
    %526 = arith.subf %518, %525 : vector<32x64xf32>
    %527 = arith.mulf %526, %526 : vector<32x64xf32>
    %cst_286 = arith.constant dense<0.000000e+00> : vector<32xf32>
    %528 = vector.multi_reduction <add>, %527, %cst_286 [1] : vector<32x64xf32> to vector<32xf32>
    %529 = vector.shape_cast %528 : vector<32xf32> to vector<32x1xf32>
    %cst_287 = arith.constant 6.400000e+01 : f32
    %530 = vector.broadcast %cst_287 : f32 to vector<32x1xf32>
    %531 = arith.divf %529, %530 : vector<32x1xf32>
    %cst_288 = arith.constant 9.99999974E-6 : f32
    %532 = vector.broadcast %cst_288 : f32 to vector<32x1xf32>
    %533 = arith.addf %531, %532 : vector<32x1xf32>
    %534 = math.rsqrt %533 : vector<32x1xf32>
    %535 = vector.broadcast %534 : vector<32x1xf32> to vector<32x64xf32>
    %536 = arith.mulf %526, %535 : vector<32x64xf32>
    %537 = vector.broadcast %519 : vector<1x64xf32> to vector<32x64xf32>
    %538 = arith.mulf %536, %537 : vector<32x64xf32>
    %539 = vector.broadcast %520 : vector<1x64xf32> to vector<32x64xf32>
    %540 = arith.addf %538, %539 : vector<32x64xf32>
    %541 = vector.shape_cast %540 : vector<32x64xf32> to vector<2x16x64xf32>
    %c0_289 = arith.constant 0 : index
    %c0_290 = arith.constant 0 : index
    %c0_291 = arith.constant 0 : index
    %542 = vector.load %arg7[%c0_289, %c0_290, %c0_291] : memref<2x16x64xf32, #tpu.memory_space<vmem>>, vector<2x16x64xf32>
    tpu.vector_store %arg7[%c0_289, %c0_290, %c0_291], %541 {strides = array<i32>} : memref<2x16x64xf32, #tpu.memory_space<vmem>>, vector<2x16x64xf32>,
    return
  }
}

</mosaic_0001>

<llo_original>
// kernel: gsasrec_forward.1
$region0: #{gsasrec_forward.1}
  #allocation0 [shape = 'u32[]', space=smem, size = 0x4, offset = 0x4, fixed_abs, tag = 'smem constant byte address 0x4 - core index']
  #allocation1 [shape = 'u32[144,128]{1,0:T(1,128)}', space=vmem, size = 0x12000, scoped, tag = 'internal scratch']
  %s0 = inlined_call_operand.vmem [shape: s32[32,1], index: 0, kind: input, shape index: {}]
  %s1 = inlined_call_operand.vmem [shape: f32[128,64], index: 1, kind: input, shape index: {}]
  %s2 = inlined_call_operand.vmem [shape: f32[16,64], index: 2, kind: input, shape index: {}]
  %s3 = inlined_call_operand.vmem [shape: f32[24,64,16], index: 3, kind: input, shape index: {}]
  %s4 = inlined_call_operand.vmem [shape: f32[8,16,64], index: 4, kind: input, shape index: {}]
  %s5 = inlined_call_operand.vmem [shape: f32[4,64,64], index: 5, kind: input, shape index: {}]
  %s6 = inlined_call_operand.vmem [shape: f32[22,64], index: 6, kind: input, shape index: {}]
  %s7 = inlined_call_operand.hbm [shape: f32[2,16,64], index: 7, kind: output, shape index: {0}]
  %s8 = inlined_call_operand.vmem [shape: f32[2,2,16,16], index: 8, kind: output, shape index: {1}]
  %9 = xla_tuple %s7, %s8
  %s10 = sld [smem:[#allocation0]]
  $region46: #{gsasrec_forward.1} parent=0
    _
  %s12 = ssub.s32 1, %s10
  %s13 = scalar_select 0, %s12, %s10
  $region1: #{gsasrec_forward.1} parent=0
    #allocation2 [shape = 'u8[16384]{0}', space=vmem, size = 0x4000, scoped, tag = 'output window, operand 0, single buffered']
    #allocation3 [shape = 's32[1]{0}', space=sflag, size = 0x4, scoped, tag = 'scoped memory for gsasrec_forward.1']
    %14 = vsyncpa [#allocation3], 0
    // Predicated region
    $region2: #{gsasrec_forward.1} parent=1 // pred_check
      _
    $region3: #{gsasrec_forward.1} parent=1 // pred_check_branch
      %16 = sbr.rel (0) target = $region5
    $region4: #{gsasrec_forward.1} parent=1 // pred_region
      _
    $region5: #{gsasrec_forward.1} parent=1 // pred_fallthru
      _
    // Predicated region
    $region6: #{gsasrec_forward.1} parent=1 // pred_check
      _
    $region7: #{gsasrec_forward.1} parent=1 // pred_check_branch
      %18 = sbr.rel (0) target = $region9
    $region8: #{gsasrec_forward.1} parent=1 // pred_region
      _
    $region9: #{gsasrec_forward.1} parent=1 // pred_fallthru
      _
    // Predicated region
    $region10: #{gsasrec_forward.1} parent=1 // pred_check
      _
    $region11: #{gsasrec_forward.1} parent=1 // pred_check_branch
      %20 = sbr.rel (0) target = $region13
    $region12: #{gsasrec_forward.1} parent=1 // pred_region
      _
    $region13: #{gsasrec_forward.1} parent=1 // pred_fallthru
      _
    // Predicated region
    $region14: #{gsasrec_forward.1} parent=1 // pred_check
      _
    $region15: #{gsasrec_forward.1} parent=1 // pred_check_branch
      %22 = sbr.rel (0) target = $region17
    $region16: #{gsasrec_forward.1} parent=1 // pred_region
      _
    $region17: #{gsasrec_forward.1} parent=1 // pred_fallthru
      _
    // Predicated region
    $region18: #{gsasrec_forward.1} parent=1 // pred_check
      _
    $region19: #{gsasrec_forward.1} parent=1 // pred_check_branch
      %24 = sbr.rel (0) target = $region21
    $region20: #{gsasrec_forward.1} parent=1 // pred_region
      _
    $region21: #{gsasrec_forward.1} parent=1 // pred_fallthru
      _
    // Predicated region
    $region22: #{gsasrec_forward.1} parent=1 // pred_check
      _
    $region23: #{gsasrec_forward.1} parent=1 // pred_check_branch
      %26 = sbr.rel (0) target = $region25
    $region24: #{gsasrec_forward.1} parent=1 // pred_region
      _
    $region25: #{gsasrec_forward.1} parent=1 // pred_fallthru
      _
    // Predicated region
    $region26: #{gsasrec_forward.1} parent=1 // pred_check
      _
    $region27: #{gsasrec_forward.1} parent=1 // pred_check_branch
      %28 = sbr.rel (0) target = $region29
    $region28: #{gsasrec_forward.1} parent=1 // pred_region
      _
    $region29: #{gsasrec_forward.1} parent=1 // pred_fallthru
      _
    %v29 = vld [vmem:[%s0] sm:$0xff]
    %v30 = vld [vmem:[%s0 + $0x8] sm:$0xff]
    %v31 = vld [vmem:[%s0 + $0x10] sm:$0xff]
    %v32 = vld [vmem:[%s0 + $0x18] sm:$0xff]
    %v33 = vlaneseq
    %v34 = vand.u32 %v33, 127
    %35 = vset.pattern.permute.xlu0 0
    %36 = vperm.xlu0 %35, %v29
    %v37 = vpop.permute.xlu0 %36
    %38 = vset.pattern.permute.xlu0 0
    %39 = vperm.xlu0 %38, %v30
    %v40 = vpop.permute.xlu0 %39
    %41 = vset.pattern.permute.xlu0 0
    %42 = vperm.xlu0 %41, %v31
    %v43 = vpop.permute.xlu0 %42
    %44 = vset.pattern.permute.xlu0 0
    %45 = vperm.xlu0 %44, %v32
    %v46 = vpop.permute.xlu0 %45
    %vm47 = vcmp.eq.s32.totalorder %v34, %v37
    %vm48 = vcmp.eq.s32.totalorder %v34, %v40
    %vm49 = vcmp.eq.s32.totalorder %v34, %v43
    %vm50 = vcmp.eq.s32.totalorder %v34, %v46
    %v51 = vsel %vm47, 1, 0
    %v52 = vsel %vm48, 1, 0
    %v53 = vsel %vm49, 1, 0
    %v54 = vsel %vm50, 1, 0
    %v55 = vcvt.s32.f32 %v51
    %v56 = vcvt.s32.f32 %v52
    %v57 = vcvt.s32.f32 %v53
    %v58 = vcvt.s32.f32 %v54
    %v59 = vld [vmem:[%s1] sm:$0xff]
    %v60 = vld [vmem:[%s1 + $0x8] sm:$0xff]
    %v61 = vld [vmem:[%s1 + $0x10] sm:$0xff]
    %v62 = vld [vmem:[%s1 + $0x18] sm:$0xff]
    %v63 = vld [vmem:[%s1 + $0x20] sm:$0xff]
    %v64 = vld [vmem:[%s1 + $0x28] sm:$0xff]
    %v65 = vld [vmem:[%s1 + $0x30] sm:$0xff]
    %v66 = vld [vmem:[%s1 + $0x38] sm:$0xff]
    %v67 = vld [vmem:[%s1 + $0x40] sm:$0xff]
    %v68 = vld [vmem:[%s1 + $0x48] sm:$0xff]
    %v69 = vld [vmem:[%s1 + $0x50] sm:$0xff]
    %v70 = vld [vmem:[%s1 + $0x58] sm:$0xff]
    %v71 = vld [vmem:[%s1 + $0x60] sm:$0xff]
    %v72 = vld [vmem:[%s1 + $0x68] sm:$0xff]
    %v73 = vld [vmem:[%s1 + $0x70] sm:$0xff]
    %v74 = vld [vmem:[%s1 + $0x78] sm:$0xff]
    %v75 = vld [vmem:[%s2] sm:$0xff]
    %v76 = vld [vmem:[%s2 + $0x8] sm:$0xff]
    %77 = vmatprep.subr.mxu0 0.0
    %78 = vmatpush1.msra.mxu0 %v59
    %79 = vmatprep.subr.mxu0 0.0
    %80 = vmatpush1.msra.mxu0 %v60
    %81 = vmatprep.subr.mxu0 0.0
    %82 = vmatpush1.msra.mxu0 %v61
    %83 = vmatprep.subr.mxu0 0.0
    %84 = vmatpush1.msra.mxu0 %v62
    %85 = vmatprep.subr.mxu0 0.0
    %86 = vmatpush1.msra.mxu0 %v63
    %87 = vmatprep.subr.mxu0 0.0
    %88 = vmatpush1.msra.mxu0 %v64
    %89 = vmatprep.subr.mxu0 0.0
    %90 = vmatpush1.msra.mxu0 %v65
    %91 = vmatprep.subr.mxu0 0.0
    %92 = vmatpush1.msra.mxu0 %v66
    %93 = vmatprep.subr.mxu0 0.0
    %94 = vmatpush1.msra.mxu0 %v67
    %95 = vmatprep.subr.mxu0 0.0
    %96 = vmatpush1.msra.mxu0 %v68
    %97 = vmatprep.subr.mxu0 0.0
    %98 = vmatpush1.msra.mxu0 %v69
    %99 = vmatprep.subr.mxu0 0.0
    %100 = vmatpush1.msra.mxu0 %v70
    %101 = vmatprep.subr.mxu0 0.0
    %102 = vmatpush1.msra.mxu0 %v71
    %103 = vmatprep.subr.mxu0 0.0
    %104 = vmatpush1.msra.mxu0 %v72
    %105 = vmatprep.subr.mxu0 0.0
    %106 = vmatpush1.msra.mxu0 %v73
    %107 = vmatprep.subr.mxu0 0.0
    %108 = vmatpush1.msra.mxu0 %v74
    %109 = vmatprep.subr.mxu0 0.0
    %110 = vmatpush1.msra.mxu0 0.0
    %111 = vmatprep.subr.mxu0 0.0
    %112 = vmatpush1.msra.mxu0 0.0
    %113 = vmatprep.subr.mxu0 0.0
    %114 = vmatpush1.msra.mxu0 0.0
    %115 = vmatprep.subr.mxu0 0.0
    %116 = vmatpush1.msra.mxu0 0.0
    %117 = vmatprep.subr.mxu0 0.0
    %118 = vmatpush1.msra.mxu0 0.0
    %119 = vmatprep.subr.mxu0 0.0
    %120 = vmatpush1.msra.mxu0 0.0
    %121 = vmatprep.subr.mxu0 0.0
    %122 = vmatpush1.msra.mxu0 0.0
    %123 = vmatprep.subr.mxu0 0.0
    %124 = vmatpush1.msra.mxu0 0.0
    %125 = vmatprep.subr.mxu0 0.0
    %126 = vmatpush1.msra.mxu0 0.0
    %127 = vmatprep.subr.mxu0 0.0
    %128 = vmatpush1.msra.mxu0 0.0
    %129 = vmatprep.subr.mxu0 0.0
    %130 = vmatpush1.msra.mxu0 0.0
    %131 = vmatprep.subr.mxu0 0.0
    %132 = vmatpush1.msra.mxu0 0.0
    %133 = vmatprep.subr.mxu0 0.0
    %134 = vmatpush1.msra.mxu0 0.0
    %135 = vmatprep.subr.mxu0 0.0
    %136 = vmatpush1.msra.mxu0 0.0
    %137 = vmatprep.subr.mxu0 0.0
    %138 = vmatpush1.msra.mxu0 0.0
    %139 = vmatprep.subr.mxu0 0.0
    %140 = vmatpush1.msra.mxu0 0.0
    %141 = vmatprep.mubr.f32.mxu0 0.0
    %142 = vmatmul.mubr.f32.gmra.mrb[0].mxu0 %v55
    %v143 = vpop.f32.mrb[0].mxu0
    %v144 = vadd.f32 %v75, %v143
    %v145 = vpop.f32.mrb[0].mxu0
    %146 = vmatprep.mubr.f32.mxu0 0.0
    %147 = vmatmul.mubr.f32.gmra.mrb[0].mxu0 %v56
    %v148 = vpop.f32.mrb[0].mxu0
    %v149 = vadd.f32 %v76, %v148
    %v150 = vpop.f32.mrb[0].mxu0
    %151 = vmatprep.mubr.f32.mxu0 0.0
    %152 = vmatmul.mubr.f32.gmra.mrb[0].mxu0 %v57
    %v153 = vpop.f32.mrb[0].mxu0
    %v154 = vadd.f32 %v75, %v153
    %v155 = vpop.f32.mrb[0].mxu0
    %156 = vmatprep.mubr.f32.mxu0 0.0
    %157 = vmatmul.mubr.f32.gmra.mrb[0].mxu0 %v58
    %v158 = vpop.f32.mrb[0].mxu0
    %v159 = vadd.f32 %v76, %v158
    %v160 = vpop.f32.mrb[0].mxu0
    %161 = vdwg.mxu0
    %vm162 = vcmp.eq.s32.totalorder %v37, 101
    %vm163 = vcmp.eq.s32.totalorder %v40, 101
    %vm164 = vcmp.eq.s32.totalorder %v43, 101
    %vm165 = vcmp.eq.s32.totalorder %v46, 101
    %v166 = vsel %vm162, 0.0, 1.0
    %v167 = vsel %vm163, 0.0, 1.0
    %v168 = vsel %vm164, 0.0, 1.0
    %v169 = vsel %vm165, 0.0, 1.0
    %v170 = vmul.f32 %v144, %v166
    %v171 = vmul.f32 %v149, %v167
    %v172 = vmul.f32 %v154, %v168
    %v173 = vmul.f32 %v159, %v169
    %v174 = vlaneseq
    %v175 = vshrl.u32 %v174, 7
    %v176 = vadd.s32 %v175, 8
    %vm177 = vcmp.le.s32.totalorder %v34, %v175
    %vm178 = vcmp.le.s32.totalorder %v34, %v176
    %v179 = vsel %vm177, 0.0, -1e+30
    %v180 = vsel %vm178, 0.0, -1e+30
    %v181 = vld [vmem:[%s6] sm:$0x1]
    %v182 = vld [vmem:[%s6 + $0x1] sm:$0x1]
    %vm183 = vcmask 523264
    %v184 = vsel %vm183, %v170, 0.0
    %185 = vadd.xlane.f32.xlu0 %v184
    %v186 = vpop.xlane.xlu0 %185
    %v187 = vsel %vm183, %v171, 0.0
    %188 = vadd.xlane.f32.xlu0 %v187
    %v189 = vpop.xlane.xlu0 %188
    %v190 = vsel %vm183, %v172, 0.0
    %191 = vadd.xlane.f32.xlu0 %v190
    %v192 = vpop.xlane.xlu0 %191
    %v193 = vsel %vm183, %v173, 0.0
    %194 = vadd.xlane.f32.xlu0 %v193
    %v195 = vpop.xlane.xlu0 %194
    %v196 = vrcp.pop 64.0
    %v197 = vmul.f32 %v186, %v196
    %v198 = vmul.f32 %v189, %v196
    %v199 = vmul.f32 %v192, %v196
    %v200 = vmul.f32 %v195, %v196
    %v201 = vsub.f32 %v170, %v197
    %v202 = vsub.f32 %v171, %v198
    %v203 = vsub.f32 %v172, %v199
    %v204 = vsub.f32 %v173, %v200
    %v205 = vmul.f32 %v201, %v201
    %v206 = vmul.f32 %v202, %v202
    %v207 = vmul.f32 %v203, %v203
    %v208 = vmul.f32 %v204, %v204
    %v209 = vsel %vm183, %v205, 0.0
    %210 = vadd.xlane.f32.xlu0 %v209
    %v211 = vpop.xlane.xlu0 %210
    %v212 = vsel %vm183, %v206, 0.0
    %213 = vadd.xlane.f32.xlu0 %v212
    %v214 = vpop.xlane.xlu0 %213
    %v215 = vsel %vm183, %v207, 0.0
    %216 = vadd.xlane.f32.xlu0 %v215
    %v217 = vpop.xlane.xlu0 %216
    %v218 = vsel %vm183, %v208, 0.0
    %219 = vadd.xlane.f32.xlu0 %v218
    %v220 = vpop.xlane.xlu0 %219
    %v221 = vmul.f32 %v211, %v196
    %v222 = vmul.f32 %v214, %v196
    %v223 = vmul.f32 %v217, %v196
    %v224 = vmul.f32 %v220, %v196
    %v225 = vadd.f32 %v221, 1e-05
    %v226 = vadd.f32 %v222, 1e-05
    %v227 = vadd.f32 %v223, 1e-05
    %v228 = vadd.f32 %v224, 1e-05
    %v229 = vrsqrt.pop %v225
    %v230 = vrsqrt.pop %v226
    %v231 = vrsqrt.pop %v227
    %v232 = vrsqrt.pop %v228
    %v233 = vmul.f32 %v201, %v229
    %v234 = vmul.f32 %v202, %v230
    %v235 = vmul.f32 %v203, %v231
    %v236 = vmul.f32 %v204, %v232
    %v237 = vlaneseq
    %v238 = vshrl.u32 %v237, 7
    %v239 = vsub.s32 0, %v238
    %v240 = vrot.slane %v181, %v239
    %v241 = vmul.f32 %v233, %v240
    %v242 = vmul.f32 %v234, %v240
    %v243 = vmul.f32 %v235, %v240
    %v244 = vmul.f32 %v236, %v240
    %v245 = vlaneseq
    %v246 = vshrl.u32 %v245, 7
    %v247 = vsub.s32 0, %v246
    %v248 = vrot.slane %v182, %v247
    %v249 = vadd.f32 %v241, %v248
    %v250 = vadd.f32 %v242, %v248
    %v251 = vadd.f32 %v243, %v248
    %v252 = vadd.f32 %v244, %v248
    %v253 = vld [vmem:[%s3] sm:$0xff]
    %v254 = vld [vmem:[%s3 + $0x8] sm:$0xff]
    %v255 = vld [vmem:[%s3 + $0x10] sm:$0xff]
    %v256 = vld [vmem:[%s3 + $0x18] sm:$0xff]
    %v257 = vld [vmem:[%s3 + $0x20] sm:$0xff]
    %v258 = vld [vmem:[%s3 + $0x28] sm:$0xff]
    %v259 = vld [vmem:[%s3 + $0x30] sm:$0xff]
    %v260 = vld [vmem:[%s3 + $0x38] sm:$0xff]
    %v261 = vld [vmem:[%s6 + $0x2] sm:$0x1]
    %v262 = vlaneseq
    %v263 = vshrl.u32 %v262, 7
    %v264 = vsub.s32 0, %v263
    %v265 = vrot.slane %v261, %v264
    %v267 = vsel %vm183, %v249, 0
    %v270 = vsel %vm183, %v250, 0
    %v273 = vsel %vm183, %v251, 0
    %v276 = vsel %vm183, %v252, 0
    %278 = vmatprep.subr.mxu0 0.0
    %279 = vmatpush1.msra.mxu0 %v253
    %280 = vmatprep.subr.mxu0 0.0
    %281 = vmatpush1.msra.mxu0 %v254
    %282 = vmatprep.subr.mxu0 0.0
    %283 = vmatpush1.msra.mxu0 %v255
    %284 = vmatprep.subr.mxu0 0.0
    %285 = vmatpush1.msra.mxu0 %v256
    %286 = vmatprep.subr.mxu0 0.0
    %287 = vmatpush1.msra.mxu0 %v257
    %288 = vmatprep.subr.mxu0 0.0
    %289 = vmatpush1.msra.mxu0 %v258
    %290 = vmatprep.subr.mxu0 0.0
    %291 = vmatpush1.msra.mxu0 %v259
    %292 = vmatprep.subr.mxu0 0.0
    %293 = vmatpush1.msra.mxu0 %v260
    %294 = vmatprep.subr.mxu0 0.0
    %295 = vmatpush1.msra.mxu0 0.0
    %296 = vmatprep.subr.mxu0 0.0
    %297 = vmatpush1.msra.mxu0 0.0
    %298 = vmatprep.subr.mxu0 0.0
    %299 = vmatpush1.msra.mxu0 0.0
    %300 = vmatprep.subr.mxu0 0.0
    %301 = vmatpush1.msra.mxu0 0.0
    %302 = vmatprep.subr.mxu0 0.0
    %303 = vmatpush1.msra.mxu0 0.0
    %304 = vmatprep.subr.mxu0 0.0
    %305 = vmatpush1.msra.mxu0 0.0
    %306 = vmatprep.subr.mxu0 0.0
    %307 = vmatpush1.msra.mxu0 0.0
    %308 = vmatprep.subr.mxu0 0.0
    %309 = vmatpush1.msra.mxu0 0.0
    %310 = vmatprep.subr.mxu0 0.0
    %311 = vmatpush1.msra.mxu0 0.0
    %312 = vmatprep.subr.mxu0 0.0
    %313 = vmatpush1.msra.mxu0 0.0
    %314 = vmatprep.subr.mxu0 0.0
    %315 = vmatpush1.msra.mxu0 0.0
    %316 = vmatprep.subr.mxu0 0.0
    %317 = vmatpush1.msra.mxu0 0.0
    %318 = vmatprep.subr.mxu0 0.0
    %319 = vmatpush1.msra.mxu0 0.0
    %320 = vmatprep.subr.mxu0 0.0
    %321 = vmatpush1.msra.mxu0 0.0
    %322 = vmatprep.subr.mxu0 0.0
    %323 = vmatpush1.msra.mxu0 0.0
    %324 = vmatprep.subr.mxu0 0.0
    %325 = vmatpush1.msra.mxu0 0.0
    %326 = vmatprep.subr.mxu0 0.0
    %327 = vmatpush1.msra.mxu0 0.0
    %328 = vmatprep.subr.mxu0 0.0
    %329 = vmatpush1.msra.mxu0 0.0
    %330 = vmatprep.subr.mxu0 0.0
    %331 = vmatpush1.msra.mxu0 0.0
    %332 = vmatprep.subr.mxu0 0.0
    %333 = vmatpush1.msra.mxu0 0.0
    %334 = vmatprep.subr.mxu0 0.0
    %335 = vmatpush1.msra.mxu0 0.0
    %336 = vmatprep.subr.mxu0 0.0
    %337 = vmatpush1.msra.mxu0 0.0
    %338 = vmatprep.subr.mxu0 0.0
    %339 = vmatpush1.msra.mxu0 0.0
    %340 = vmatprep.subr.mxu0 0.0
    %341 = vmatpush1.msra.mxu0 0.0
    %342 = vmatprep.mubr.f32.mxu0 0.0
    %343 = vmatmul.mubr.f32.gmra.mrb[0].mxu0 %v267
    %v344 = vpop.f32.mrb[0].mxu0
    %v345 = vadd.f32 %v265, %v344
    %v346 = vpop.f32.mrb[0].mxu0
    %347 = vmatprep.mubr.f32.mxu0 0.0
    %348 = vmatmul.mubr.f32.gmra.mrb[0].mxu0 %v270
    %v349 = vpop.f32.mrb[0].mxu0
    %v350 = vadd.f32 %v265, %v349
    %v351 = vpop.f32.mrb[0].mxu0
    %352 = vmatprep.mubr.f32.mxu0 0.0
    %353 = vmatmul.mubr.f32.gmra.mrb[0].mxu0 %v273
    %v354 = vpop.f32.mrb[0].mxu0
    %v355 = vadd.f32 %v265, %v354
    %v356 = vpop.f32.mrb[0].mxu0
    %357 = vmatprep.mubr.f32.mxu0 0.0
    %358 = vmatmul.mubr.f32.gmra.mrb[0].mxu0 %v276
    %v359 = vpop.f32.mrb[0].mxu0
    %v360 = vadd.f32 %v265, %v359
    %v361 = vpop.f32.mrb[0].mxu0
    %362 = vdwg.mxu0
    %s363 = scalar_lea.vmem %s3, 256
    %v364 = vld [vmem:[%s363] sm:$0xff]
    %v365 = vld [vmem:[%s363 + $0x8] sm:$0xff]
    %v366 = vld [vmem:[%s363 + $0x10] sm:$0xff]
    %v367 = vld [vmem:[%s363 + $0x18] sm:$0xff]
    %v368 = vld [vmem:[%s363 + $0x20] sm:$0xff]
    %v369 = vld [vmem:[%s363 + $0x28] sm:$0xff]
    %v370 = vld [vmem:[%s363 + $0x30] sm:$0xff]
    %v371 = vld [vmem:[%s363 + $0x38] sm:$0xff]
    %v372 = vld [vmem:[%s6 + $0x3] sm:$0x1]
    %v373 = vlaneseq
    %v374 = vshrl.u32 %v373, 7
    %v375 = vsub.s32 0, %v374
    %v376 = vrot.slane %v372, %v375
    %v378 = vsel %vm183, %v170, 0
    %v381 = vsel %vm183, %v171, 0
    %v384 = vsel %vm183, %v172, 0
    %v387 = vsel %vm183, %v173, 0
    %389 = vmatprep.subr.mxu0 0.0
    %390 = vmatpush1.msra.mxu0 %v364
    %391 = vmatprep.subr.mxu0 0.0
    %392 = vmatpush1.msra.mxu0 %v365
    %393 = vmatprep.subr.mxu0 0.0
    %394 = vmatpush1.msra.mxu0 %v366
    %395 = vmatprep.subr.mxu0 0.0
    %396 = vmatpush1.msra.mxu0 %v367
    %397 = vmatprep.subr.mxu0 0.0
    %398 = vmatpush1.msra.mxu0 %v368
    %399 = vmatprep.subr.mxu0 0.0
    %400 = vmatpush1.msra.mxu0 %v369
    %401 = vmatprep.subr.mxu0 0.0
    %402 = vmatpush1.msra.mxu0 %v370
    %403 = vmatprep.subr.mxu0 0.0
    %404 = vmatpush1.msra.mxu0 %v371
    %405 = vmatprep.subr.mxu0 0.0
    %406 = vmatpush1.msra.mxu0 0.0
    %407 = vmatprep.subr.mxu0 0.0
    %408 = vmatpush1.msra.mxu0 0.0
    %409 = vmatprep.subr.mxu0 0.0
    %410 = vmatpush1.msra.mxu0 0.0
    %411 = vmatprep.subr.mxu0 0.0
    %412 = vmatpush1.msra.mxu0 0.0
    %413 = vmatprep.subr.mxu0 0.0
    %414 = vmatpush1.msra.mxu0 0.0
    %415 = vmatprep.subr.mxu0 0.0
    %416 = vmatpush1.msra.mxu0 0.0
    %417 = vmatprep.subr.mxu0 0.0
    %418 = vmatpush1.msra.mxu0 0.0
    %419 = vmatprep.subr.mxu0 0.0
    %420 = vmatpush1.msra.mxu0 0.0
    %421 = vmatprep.subr.mxu0 0.0
    %422 = vmatpush1.msra.mxu0 0.0
    %423 = vmatprep.subr.mxu0 0.0
    %424 = vmatpush1.msra.mxu0 0.0
    %425 = vmatprep.subr.mxu0 0.0
    %426 = vmatpush1.msra.mxu0 0.0
    %427 = vmatprep.subr.mxu0 0.0
    %428 = vmatpush1.msra.mxu0 0.0
    %429 = vmatprep.subr.mxu0 0.0
    %430 = vmatpush1.msra.mxu0 0.0
    %431 = vmatprep.subr.mxu0 0.0
    %432 = vmatpush1.msra.mxu0 0.0
    %433 = vmatprep.subr.mxu0 0.0
    %434 = vmatpush1.msra.mxu0 0.0
    %435 = vmatprep.subr.mxu0 0.0
    %436 = vmatpush1.msra.mxu0 0.0
    %437 = vmatprep.subr.mxu0 0.0
    %438 = vmatpush1.msra.mxu0 0.0
    %439 = vmatprep.subr.mxu0 0.0
    %440 = vmatpush1.msra.mxu0 0.0
    %441 = vmatprep.subr.mxu0 0.0
    %442 = vmatpush1.msra.mxu0 0.0
    %443 = vmatprep.subr.mxu0 0.0
    %444 = vmatpush1.msra.mxu0 0.0
    %445 = vmatprep.subr.mxu0 0.0
    %446 = vmatpush1.msra.mxu0 0.0
    %447 = vmatprep.subr.mxu0 0.0
    %448 = vmatpush1.msra.mxu0 0.0
    %449 = vmatprep.subr.mxu0 0.0
    %450 = vmatpush1.msra.mxu0 0.0
    %451 = vmatprep.subr.mxu0 0.0
    %452 = vmatpush1.msra.mxu0 0.0
    %453 = vmatprep.mubr.f32.mxu0 0.0
    %454 = vmatmul.mubr.f32.gmra.mrb[0].mxu0 %v378
    %v455 = vpop.f32.mrb[0].mxu0
    %v456 = vadd.f32 %v376, %v455
    %v457 = vpop.f32.mrb[0].mxu0
    %458 = vmatprep.mubr.f32.mxu0 0.0
    %459 = vmatmul.mubr.f32.gmra.mrb[0].mxu0 %v381
    %v460 = vpop.f32.mrb[0].mxu0
    %v461 = vadd.f32 %v376, %v460
    %v462 = vpop.f32.mrb[0].mxu0
    %463 = vmatprep.mubr.f32.mxu0 0.0
    %464 = vmatmul.mubr.f32.gmra.mrb[0].mxu0 %v384
    %v465 = vpop.f32.mrb[0].mxu0
    %v466 = vadd.f32 %v376, %v465
    %v467 = vpop.f32.mrb[0].mxu0
    %468 = vmatprep.mubr.f32.mxu0 0.0
    %469 = vmatmul.mubr.f32.gmra.mrb[0].mxu0 %v387
    %v470 = vpop.f32.mrb[0].mxu0
    %v471 = vadd.f32 %v376, %v470
    %v472 = vpop.f32.mrb[0].mxu0
    %473 = vdwg.mxu0
    %s474 = scalar_lea.vmem %s3, 512
    %v475 = vld [vmem:[%s474] sm:$0xff]
    %v476 = vld [vmem:[%s474 + $0x8] sm:$0xff]
    %v477 = vld [vmem:[%s474 + $0x10] sm:$0xff]
    %v478 = vld [vmem:[%s474 + $0x18] sm:$0xff]
    %v479 = vld [vmem:[%s474 + $0x20] sm:$0xff]
    %v480 = vld [vmem:[%s474 + $0x28] sm:$0xff]
    %v481 = vld [vmem:[%s474 + $0x30] sm:$0xff]
    %v482 = vld [vmem:[%s474 + $0x38] sm:$0xff]
    %v483 = vld [vmem:[%s6 + $0x4] sm:$0x1]
    %v484 = vlaneseq
    %v485 = vshrl.u32 %v484, 7
    %v486 = vsub.s32 0, %v485
    %v487 = vrot.slane %v483, %v486
    %488 = vmatprep.subr.mxu0 0.0
    %489 = vmatpush1.msra.mxu0 %v475
    %490 = vmatprep.subr.mxu0 0.0
    %491 = vmatpush1.msra.mxu0 %v476
    %492 = vmatprep.subr.mxu0 0.0
    %493 = vmatpush1.msra.mxu0 %v477
    %494 = vmatprep.subr.mxu0 0.0
    %495 = vmatpush1.msra.mxu0 %v478
    %496 = vmatprep.subr.mxu0 0.0
    %497 = vmatpush1.msra.mxu0 %v479
    %498 = vmatprep.subr.mxu0 0.0
    %499 = vmatpush1.msra.mxu0 %v480
    %500 = vmatprep.subr.mxu0 0.0
    %501 = vmatpush1.msra.mxu0 %v481
    %502 = vmatprep.subr.mxu0 0.0
    %503 = vmatpush1.msra.mxu0 %v482
    %504 = vmatprep.subr.mxu0 0.0
    %505 = vmatpush1.msra.mxu0 0.0
    %506 = vmatprep.subr.mxu0 0.0
    %507 = vmatpush1.msra.mxu0 0.0
    %508 = vmatprep.subr.mxu0 0.0
    %509 = vmatpush1.msra.mxu0 0.0
    %510 = vmatprep.subr.mxu0 0.0
    %511 = vmatpush1.msra.mxu0 0.0
    %512 = vmatprep.subr.mxu0 0.0
    %513 = vmatpush1.msra.mxu0 0.0
    %514 = vmatprep.subr.mxu0 0.0
    %515 = vmatpush1.msra.mxu0 0.0
    %516 = vmatprep.subr.mxu0 0.0
    %517 = vmatpush1.msra.mxu0 0.0
    %518 = vmatprep.subr.mxu0 0.0
    %519 = vmatpush1.msra.mxu0 0.0
    %520 = vmatprep.subr.mxu0 0.0
    %521 = vmatpush1.msra.mxu0 0.0
    %522 = vmatprep.subr.mxu0 0.0
    %523 = vmatpush1.msra.mxu0 0.0
    %524 = vmatprep.subr.mxu0 0.0
    %525 = vmatpush1.msra.mxu0 0.0
    %526 = vmatprep.subr.mxu0 0.0
    %527 = vmatpush1.msra.mxu0 0.0
    %528 = vmatprep.subr.mxu0 0.0
    %529 = vmatpush1.msra.mxu0 0.0
    %530 = vmatprep.subr.mxu0 0.0
    %531 = vmatpush1.msra.mxu0 0.0
    %532 = vmatprep.subr.mxu0 0.0
    %533 = vmatpush1.msra.mxu0 0.0
    %534 = vmatprep.subr.mxu0 0.0
    %535 = vmatpush1.msra.mxu0 0.0
    %536 = vmatprep.subr.mxu0 0.0
    %537 = vmatpush1.msra.mxu0 0.0
    %538 = vmatprep.subr.mxu0 0.0
    %539 = vmatpush1.msra.mxu0 0.0
    %540 = vmatprep.subr.mxu0 0.0
    %541 = vmatpush1.msra.mxu0 0.0
    %542 = vmatprep.subr.mxu0 0.0
    %543 = vmatpush1.msra.mxu0 0.0
    %544 = vmatprep.subr.mxu0 0.0
    %545 = vmatpush1.msra.mxu0 0.0
    %546 = vmatprep.subr.mxu0 0.0
    %547 = vmatpush1.msra.mxu0 0.0
    %548 = vmatprep.subr.mxu0 0.0
    %549 = vmatpush1.msra.mxu0 0.0
    %550 = vmatprep.subr.mxu0 0.0
    %551 = vmatpush1.msra.mxu0 0.0
    %552 = vmatprep.mubr.f32.mxu0 0.0
    %553 = vmatmul.mubr.f32.gmra.mrb[0].mxu0 %v378
    %v554 = vpop.f32.mrb[0].mxu0
    %v555 = vadd.f32 %v487, %v554
    %v556 = vpop.f32.mrb[0].mxu0
    %557 = vmatprep.mubr.f32.mxu0 0.0
    %558 = vmatmul.mubr.f32.gmra.mrb[0].mxu0 %v381
    %v559 = vpop.f32.mrb[0].mxu0
    %v560 = vadd.f32 %v487, %v559
    %v561 = vpop.f32.mrb[0].mxu0
    %562 = vmatprep.mubr.f32.mxu0 0.0
    %563 = vmatmul.mubr.f32.gmra.mrb[0].mxu0 %v384
    %v564 = vpop.f32.mrb[0].mxu0
    %v565 = vadd.f32 %v487, %v564
    %v566 = vpop.f32.mrb[0].mxu0
    %567 = vmatprep.mubr.f32.mxu0 0.0
    %568 = vmatmul.mubr.f32.gmra.mrb[0].mxu0 %v387
    %v569 = vpop.f32.mrb[0].mxu0
    %v570 = vadd.f32 %v487, %v569
    %v571 = vpop.f32.mrb[0].mxu0
    %572 = vdwg.mxu0
    %vm573 = vcmask 130048
    %v575 = vsel %vm573, %v345, 0
    %v578 = vsel %vm573, %v350, 0
    %v581 = vsel %vm573, %v456, 0
    %v584 = vsel %vm573, %v461, 0
    %586 = vmatprep.subr.mxu0 0.0
    %587 = vmatpush1.xpose.msra.mxu0 %v581
    %588 = vmatprep.subr.mxu0 0.0
    %589 = vmatpush1.xpose.msra.mxu0 %v584
    %590 = vmatprep.subr.mxu0 0.0
    %591 = vmatpush1.xpose.msra.mxu0 0.0
    %592 = vmatprep.subr.mxu0 0.0
    %593 = vmatpush1.xpose.msra.mxu0 0.0
    %594 = vmatprep.subr.mxu0 0.0
    %595 = vmatpush1.xpose.msra.mxu0 0.0
    %596 = vmatprep.subr.mxu0 0.0
    %597 = vmatpush1.xpose.msra.mxu0 0.0
    %598 = vmatprep.subr.mxu0 0.0
    %599 = vmatpush1.xpose.msra.mxu0 0.0
    %600 = vmatprep.subr.mxu0 0.0
    %601 = vmatpush1.xpose.msra.mxu0 0.0
    %602 = vmatprep.subr.mxu0 0.0
    %603 = vmatpush1.xpose.msra.mxu0 0.0
    %604 = vmatprep.subr.mxu0 0.0
    %605 = vmatpush1.xpose.msra.mxu0 0.0
    %606 = vmatprep.subr.mxu0 0.0
    %607 = vmatpush1.xpose.msra.mxu0 0.0
    %608 = vmatprep.subr.mxu0 0.0
    %609 = vmatpush1.xpose.msra.mxu0 0.0
    %610 = vmatprep.subr.mxu0 0.0
    %611 = vmatpush1.xpose.msra.mxu0 0.0
    %612 = vmatprep.subr.mxu0 0.0
    %613 = vmatpush1.xpose.msra.mxu0 0.0
    %614 = vmatprep.subr.mxu0 0.0
    %615 = vmatpush1.xpose.msra.mxu0 0.0
    %616 = vmatprep.subr.mxu0 0.0
    %617 = vmatpush1.xpose.msra.mxu0 0.0
    %618 = vmatprep.subr.mxu0 0.0
    %619 = vmatpush1.xpose.msra.mxu0 0.0
    %620 = vmatprep.subr.mxu0 0.0
    %621 = vmatpush1.xpose.msra.mxu0 0.0
    %622 = vmatprep.subr.mxu0 0.0
    %623 = vmatpush1.xpose.msra.mxu0 0.0
    %624 = vmatprep.subr.mxu0 0.0
    %625 = vmatpush1.xpose.msra.mxu0 0.0
    %626 = vmatprep.subr.mxu0 0.0
    %627 = vmatpush1.xpose.msra.mxu0 0.0
    %628 = vmatprep.subr.mxu0 0.0
    %629 = vmatpush1.xpose.msra.mxu0 0.0
    %630 = vmatprep.subr.mxu0 0.0
    %631 = vmatpush1.xpose.msra.mxu0 0.0
    %632 = vmatprep.subr.mxu0 0.0
    %633 = vmatpush1.xpose.msra.mxu0 0.0
    %634 = vmatprep.subr.mxu0 0.0
    %635 = vmatpush1.xpose.msra.mxu0 0.0
    %636 = vmatprep.subr.mxu0 0.0
    %637 = vmatpush1.xpose.msra.mxu0 0.0
    %638 = vmatprep.subr.mxu0 0.0
    %639 = vmatpush1.xpose.msra.mxu0 0.0
    %640 = vmatprep.subr.mxu0 0.0
    %641 = vmatpush1.xpose.msra.mxu0 0.0
    %642 = vmatprep.subr.mxu0 0.0
    %643 = vmatpush1.xpose.msra.mxu0 0.0
    %644 = vmatprep.subr.mxu0 0.0
    %645 = vmatpush1.xpose.msra.mxu0 0.0
    %646 = vmatprep.subr.mxu0 0.0
    %647 = vmatpush1.xpose.msra.mxu0 0.0
    %648 = vmatprep.subr.mxu0 0.0
    %649 = vmatpush1.xpose.msra.mxu0 0.0
    %650 = vmatprep.mubr.f32.mxu0 0.0
    %651 = vmatmul.mubr.f32.gmra.mrb[0].mxu0 %v575
    %v652 = vpop.f32.mrb[0].mxu0
    %v653 = vadd.f32 0.0, %v652
    %v654 = vpop.f32.mrb[0].mxu0
    %655 = vmatprep.mubr.f32.mxu0 0.0
    %656 = vmatmul.mubr.f32.gmra.mrb[0].mxu0 %v578
    %v657 = vpop.f32.mrb[0].mxu0
    %v658 = vadd.f32 0.0, %v657
    %v659 = vpop.f32.mrb[0].mxu0
    %660 = vdwg.mxu0
    %v662 = vsel %vm573, %v355, 0
    %v665 = vsel %vm573, %v360, 0
    %v668 = vsel %vm573, %v466, 0
    %v671 = vsel %vm573, %v471, 0
    %673 = vmatprep.subr.mxu0 0.0
    %674 = vmatpush1.xpose.msra.mxu0 %v668
    %675 = vmatprep.subr.mxu0 0.0
    %676 = vmatpush1.xpose.msra.mxu0 %v671
    %677 = vmatprep.subr.mxu0 0.0
    %678 = vmatpush1.xpose.msra.mxu0 0.0
    %679 = vmatprep.subr.mxu0 0.0
    %680 = vmatpush1.xpose.msra.mxu0 0.0
    %681 = vmatprep.subr.mxu0 0.0
    %682 = vmatpush1.xpose.msra.mxu0 0.0
    %683 = vmatprep.subr.mxu0 0.0
    %684 = vmatpush1.xpose.msra.mxu0 0.0
    %685 = vmatprep.subr.mxu0 0.0
    %686 = vmatpush1.xpose.msra.mxu0 0.0
    %687 = vmatprep.subr.mxu0 0.0
    %688 = vmatpush1.xpose.msra.mxu0 0.0
    %689 = vmatprep.subr.mxu0 0.0
    %690 = vmatpush1.xpose.msra.mxu0 0.0
    %691 = vmatprep.subr.mxu0 0.0
    %692 = vmatpush1.xpose.msra.mxu0 0.0
    %693 = vmatprep.subr.mxu0 0.0
    %694 = vmatpush1.xpose.msra.mxu0 0.0
    %695 = vmatprep.subr.mxu0 0.0
    %696 = vmatpush1.xpose.msra.mxu0 0.0
    %697 = vmatprep.subr.mxu0 0.0
    %698 = vmatpush1.xpose.msra.mxu0 0.0
    %699 = vmatprep.subr.mxu0 0.0
    %700 = vmatpush1.xpose.msra.mxu0 0.0
    %701 = vmatprep.subr.mxu0 0.0
    %702 = vmatpush1.xpose.msra.mxu0 0.0
    %703 = vmatprep.subr.mxu0 0.0
    %704 = vmatpush1.xpose.msra.mxu0 0.0
    %705 = vmatprep.subr.mxu0 0.0
    %706 = vmatpush1.xpose.msra.mxu0 0.0
    %707 = vmatprep.subr.mxu0 0.0
    %708 = vmatpush1.xpose.msra.mxu0 0.0
    %709 = vmatprep.subr.mxu0 0.0
    %710 = vmatpush1.xpose.msra.mxu0 0.0
    %711 = vmatprep.subr.mxu0 0.0
    %712 = vmatpush1.xpose.msra.mxu0 0.0
    %713 = vmatprep.subr.mxu0 0.0
    %714 = vmatpush1.xpose.msra.mxu0 0.0
    %715 = vmatprep.subr.mxu0 0.0
    %716 = vmatpush1.xpose.msra.mxu0 0.0
    %717 = vmatprep.subr.mxu0 0.0
    %718 = vmatpush1.xpose.msra.mxu0 0.0
    %719 = vmatprep.subr.mxu0 0.0
    %720 = vmatpush1.xpose.msra.mxu0 0.0
    %721 = vmatprep.subr.mxu0 0.0
    %722 = vmatpush1.xpose.msra.mxu0 0.0
    %723 = vmatprep.subr.mxu0 0.0
    %724 = vmatpush1.xpose.msra.mxu0 0.0
    %725 = vmatprep.subr.mxu0 0.0
    %726 = vmatpush1.xpose.msra.mxu0 0.0
    %727 = vmatprep.subr.mxu0 0.0
    %728 = vmatpush1.xpose.msra.mxu0 0.0
    %729 = vmatprep.subr.mxu0 0.0
    %730 = vmatpush1.xpose.msra.mxu0 0.0
    %731 = vmatprep.subr.mxu0 0.0
    %732 = vmatpush1.xpose.msra.mxu0 0.0
    %733 = vmatprep.subr.mxu0 0.0
    %734 = vmatpush1.xpose.msra.mxu0 0.0
    %735 = vmatprep.subr.mxu0 0.0
    %736 = vmatpush1.xpose.msra.mxu0 0.0
    %737 = vmatprep.mubr.f32.mxu0 0.0
    %738 = vmatmul.mubr.f32.gmra.mrb[0].mxu0 %v662
    %v739 = vpop.f32.mrb[0].mxu0
    %v740 = vadd.f32 0.0, %v739
    %v741 = vpop.f32.mrb[0].mxu0
    %742 = vmatprep.mubr.f32.mxu0 0.0
    %743 = vmatmul.mubr.f32.gmra.mrb[0].mxu0 %v665
    %v744 = vpop.f32.mrb[0].mxu0
    %v745 = vadd.f32 0.0, %v744
    %v746 = vpop.f32.mrb[0].mxu0
    %747 = vdwg.mxu0
    %v748 = vmul.f32 %v653, 0.25
    %v749 = vmul.f32 %v658, 0.25
    %v750 = vmul.f32 %v740, 0.25
    %v751 = vmul.f32 %v745, 0.25
    %v752 = vadd.f32 %v748, %v179
    %v753 = vadd.f32 %v749, %v180
    %v754 = vadd.f32 %v750, %v179
    %v755 = vadd.f32 %v751, %v180
    %v756 = vsel %vm573, %v752, -inf
    %757 = vmax.xlane.f32.xlu0 %v756
    %v758 = vpop.xlane.xlu0 %757
    %v759 = vsel %vm573, %v753, -inf
    %760 = vmax.xlane.f32.xlu0 %v759
    %v761 = vpop.xlane.xlu0 %760
    %v762 = vsel %vm573, %v754, -inf
    %763 = vmax.xlane.f32.xlu0 %v762
    %v764 = vpop.xlane.xlu0 %763
    %v765 = vsel %vm573, %v755, -inf
    %766 = vmax.xlane.f32.xlu0 %v765
    %v767 = vpop.xlane.xlu0 %766
    %v768 = vsub.f32 %v752, %v758
    %v769 = vsub.f32 %v753, %v761
    %v770 = vsub.f32 %v754, %v764
    %v771 = vsub.f32 %v755, %v767
    %v772 = vmul.f32 %v768, 1.442695
    %v773 = vpow.pop %v772
    %v774 = vmul.f32 %v769, 1.442695
    %v775 = vpow.pop %v774
    %v776 = vmul.f32 %v770, 1.442695
    %v777 = vpow.pop %v776
    %v778 = vmul.f32 %v771, 1.442695
    %v779 = vpow.pop %v778
    %v780 = vsel %vm573, %v773, 0.0
    %781 = vadd.xlane.f32.xlu0 %v780
    %v782 = vpop.xlane.xlu0 %781
    %v783 = vsel %vm573, %v775, 0.0
    %784 = vadd.xlane.f32.xlu0 %v783
    %v785 = vpop.xlane.xlu0 %784
    %v786 = vsel %vm573, %v777, 0.0
    %787 = vadd.xlane.f32.xlu0 %v786
    %v788 = vpop.xlane.xlu0 %787
    %v789 = vsel %vm573, %v779, 0.0
    %790 = vadd.xlane.f32.xlu0 %v789
    %v791 = vpop.xlane.xlu0 %790
    %v792 = vrcp.pop %v782
    %v793 = vrcp.pop %v785
    %v794 = vrcp.pop %v788
    %v795 = vrcp.pop %v791
    %v796 = vmul.f32 %v773, %v792
    %v797 = vmul.f32 %v775, %v793
    %v798 = vmul.f32 %v777, %v794
    %v799 = vmul.f32 %v779, %v795
    %v800 = vadd.f32 %v796, 0.0
    %v801 = vadd.f32 %v797, 0.0
    %v802 = vadd.f32 %v798, 0.0
    %v803 = vadd.f32 %v799, 0.0
    %v805 = vsel %vm573, %v796, 0
    %v808 = vsel %vm573, %v797, 0
    %810 = vmatprep.subr.mxu0 0.0
    %811 = vmatpush1.msra.mxu0 %v555
    %812 = vmatprep.subr.mxu0 0.0
    %813 = vmatpush1.msra.mxu0 %v560
    %814 = vmatprep.subr.mxu0 0.0
    %815 = vmatpush1.msra.mxu0 0.0
    %816 = vmatprep.subr.mxu0 0.0
    %817 = vmatpush1.msra.mxu0 0.0
    %818 = vmatprep.subr.mxu0 0.0
    %819 = vmatpush1.msra.mxu0 0.0
    %820 = vmatprep.subr.mxu0 0.0
    %821 = vmatpush1.msra.mxu0 0.0
    %822 = vmatprep.subr.mxu0 0.0
    %823 = vmatpush1.msra.mxu0 0.0
    %824 = vmatprep.subr.mxu0 0.0
    %825 = vmatpush1.msra.mxu0 0.0
    %826 = vmatprep.subr.mxu0 0.0
    %827 = vmatpush1.msra.mxu0 0.0
    %828 = vmatprep.subr.mxu0 0.0
    %829 = vmatpush1.msra.mxu0 0.0
    %830 = vmatprep.subr.mxu0 0.0
    %831 = vmatpush1.msra.mxu0 0.0
    %832 = vmatprep.subr.mxu0 0.0
    %833 = vmatpush1.msra.mxu0 0.0
    %834 = vmatprep.subr.mxu0 0.0
    %835 = vmatpush1.msra.mxu0 0.0
    %836 = vmatprep.subr.mxu0 0.0
    %837 = vmatpush1.msra.mxu0 0.0
    %838 = vmatprep.subr.mxu0 0.0
    %839 = vmatpush1.msra.mxu0 0.0
    %840 = vmatprep.subr.mxu0 0.0
    %841 = vmatpush1.msra.mxu0 0.0
    %842 = vmatprep.subr.mxu0 0.0
    %843 = vmatpush1.msra.mxu0 0.0
    %844 = vmatprep.subr.mxu0 0.0
    %845 = vmatpush1.msra.mxu0 0.0
    %846 = vmatprep.subr.mxu0 0.0
    %847 = vmatpush1.msra.mxu0 0.0
    %848 = vmatprep.subr.mxu0 0.0
    %849 = vmatpush1.msra.mxu0 0.0
    %850 = vmatprep.subr.mxu0 0.0
    %851 = vmatpush1.msra.mxu0 0.0
    %852 = vmatprep.subr.mxu0 0.0
    %853 = vmatpush1.msra.mxu0 0.0
    %854 = vmatprep.subr.mxu0 0.0
    %855 = vmatpush1.msra.mxu0 0.0
    %856 = vmatprep.subr.mxu0 0.0
    %857 = vmatpush1.msra.mxu0 0.0
    %858 = vmatprep.subr.mxu0 0.0
    %859 = vmatpush1.msra.mxu0 0.0
    %860 = vmatprep.subr.mxu0 0.0
    %861 = vmatpush1.msra.mxu0 0.0
    %862 = vmatprep.subr.mxu0 0.0
    %863 = vmatpush1.msra.mxu0 0.0
    %864 = vmatprep.subr.mxu0 0.0
    %865 = vmatpush1.msra.mxu0 0.0
    %866 = vmatprep.subr.mxu0 0.0
    %867 = vmatpush1.msra.mxu0 0.0
    %868 = vmatprep.subr.mxu0 0.0
    %869 = vmatpush1.msra.mxu0 0.0
    %870 = vmatprep.subr.mxu0 0.0
    %871 = vmatpush1.msra.mxu0 0.0
    %872 = vmatprep.subr.mxu0 0.0
    %873 = vmatpush1.msra.mxu0 0.0
    %874 = vmatprep.mubr.f32.mxu0 0.0
    %875 = vmatmul.mubr.f32.gmra.mrb[0].mxu0 %v805
    %v876 = vpop.f32.mrb[0].mxu0
    %v877 = vadd.f32 0.0, %v876
    %v878 = vpop.f32.mrb[0].mxu0
    %879 = vmatprep.mubr.f32.mxu0 0.0
    %880 = vmatmul.mubr.f32.gmra.mrb[0].mxu0 %v808
    %v881 = vpop.f32.mrb[0].mxu0
    %v882 = vadd.f32 0.0, %v881
    %v883 = vpop.f32.mrb[0].mxu0
    %884 = vdwg.mxu0
    %v886 = vsel %vm573, %v798, 0
    %v889 = vsel %vm573, %v799, 0
    %891 = vmatprep.subr.mxu0 0.0
    %892 = vmatpush1.msra.mxu0 %v565
    %893 = vmatprep.subr.mxu0 0.0
    %894 = vmatpush1.msra.mxu0 %v570
    %895 = vmatprep.subr.mxu0 0.0
    %896 = vmatpush1.msra.mxu0 0.0
    %897 = vmatprep.subr.mxu0 0.0
    %898 = vmatpush1.msra.mxu0 0.0
    %899 = vmatprep.subr.mxu0 0.0
    %900 = vmatpush1.msra.mxu0 0.0
    %901 = vmatprep.subr.mxu0 0.0
    %902 = vmatpush1.msra.mxu0 0.0
    %903 = vmatprep.subr.mxu0 0.0
    %904 = vmatpush1.msra.mxu0 0.0
    %905 = vmatprep.subr.mxu0 0.0
    %906 = vmatpush1.msra.mxu0 0.0
    %907 = vmatprep.subr.mxu0 0.0
    %908 = vmatpush1.msra.mxu0 0.0
    %909 = vmatprep.subr.mxu0 0.0
    %910 = vmatpush1.msra.mxu0 0.0
    %911 = vmatprep.subr.mxu0 0.0
    %912 = vmatpush1.msra.mxu0 0.0
    %913 = vmatprep.subr.mxu0 0.0
    %914 = vmatpush1.msra.mxu0 0.0
    %915 = vmatprep.subr.mxu0 0.0
    %916 = vmatpush1.msra.mxu0 0.0
    %917 = vmatprep.subr.mxu0 0.0
    %918 = vmatpush1.msra.mxu0 0.0
    %919 = vmatprep.subr.mxu0 0.0
    %920 = vmatpush1.msra.mxu0 0.0
    %921 = vmatprep.subr.mxu0 0.0
    %922 = vmatpush1.msra.mxu0 0.0
    %923 = vmatprep.subr.mxu0 0.0
    %924 = vmatpush1.msra.mxu0 0.0
    %925 = vmatprep.subr.mxu0 0.0
    %926 = vmatpush1.msra.mxu0 0.0
    %927 = vmatprep.subr.mxu0 0.0
    %928 = vmatpush1.msra.mxu0 0.0
    %929 = vmatprep.subr.mxu0 0.0
    %930 = vmatpush1.msra.mxu0 0.0
    %931 = vmatprep.subr.mxu0 0.0
    %932 = vmatpush1.msra.mxu0 0.0
    %933 = vmatprep.subr.mxu0 0.0
    %934 = vmatpush1.msra.mxu0 0.0
    %935 = vmatprep.subr.mxu0 0.0
    %936 = vmatpush1.msra.mxu0 0.0
    %937 = vmatprep.subr.mxu0 0.0
    %938 = vmatpush1.msra.mxu0 0.0
    %939 = vmatprep.subr.mxu0 0.0
    %940 = vmatpush1.msra.mxu0 0.0
    %941 = vmatprep.subr.mxu0 0.0
    %942 = vmatpush1.msra.mxu0 0.0
    %943 = vmatprep.subr.mxu0 0.0
    %944 = vmatpush1.msra.mxu0 0.0
    %945 = vmatprep.subr.mxu0 0.0
    %946 = vmatpush1.msra.mxu0 0.0
    %947 = vmatprep.subr.mxu0 0.0
    %948 = vmatpush1.msra.mxu0 0.0
    %949 = vmatprep.subr.mxu0 0.0
    %950 = vmatpush1.msra.mxu0 0.0
    %951 = vmatprep.subr.mxu0 0.0
    %952 = vmatpush1.msra.mxu0 0.0
    %953 = vmatprep.subr.mxu0 0.0
    %954 = vmatpush1.msra.mxu0 0.0
    %955 = vmatprep.mubr.f32.mxu0 0.0
    %956 = vmatmul.mubr.f32.gmra.mrb[0].mxu0 %v886
    %v957 = vpop.f32.mrb[0].mxu0
    %v958 = vadd.f32 0.0, %v957
    %v959 = vpop.f32.mrb[0].mxu0
    %960 = vmatprep.mubr.f32.mxu0 0.0
    %961 = vmatmul.mubr.f32.gmra.mrb[0].mxu0 %v889
    %v962 = vpop.f32.mrb[0].mxu0
    %v963 = vadd.f32 0.0, %v962
    %v964 = vpop.f32.mrb[0].mxu0
    %965 = vdwg.mxu0
    %v966 = vld [vmem:[%s4] sm:$0xff]
    %v967 = vld [vmem:[%s4 + $0x8] sm:$0xff]
    %s968 = scalar_lea.vmem %s3, 64
    %v969 = vld [vmem:[%s968] sm:$0xff]
    %v970 = vld [vmem:[%s968 + $0x8] sm:$0xff]
    %v971 = vld [vmem:[%s968 + $0x10] sm:$0xff]
    %v972 = vld [vmem:[%s968 + $0x18] sm:$0xff]
    %v973 = vld [vmem:[%s968 + $0x20] sm:$0xff]
    %v974 = vld [vmem:[%s968 + $0x28] sm:$0xff]
    %v975 = vld [vmem:[%s968 + $0x30] sm:$0xff]
    %v976 = vld [vmem:[%s968 + $0x38] sm:$0xff]
    %v977 = vld [vmem:[%s6 + $0x2] sm:$0x1]
    %v978 = vlaneseq
    %v979 = vshrl.u32 %v978, 7
    %v980 = vsub.s32 0, %v979
    %v981 = vrot.slane %v977, %v980
    %983 = vrot.lane.b32.xlu0 %v981, 112
    %v984 = vpop.permute.xlu0 %983
    %986 = vmatprep.subr.mxu0 0.0
    %987 = vmatpush1.msra.mxu0 %v969
    %988 = vmatprep.subr.mxu0 0.0
    %989 = vmatpush1.msra.mxu0 %v970
    %990 = vmatprep.subr.mxu0 0.0
    %991 = vmatpush1.msra.mxu0 %v971
    %992 = vmatprep.subr.mxu0 0.0
    %993 = vmatpush1.msra.mxu0 %v972
    %994 = vmatprep.subr.mxu0 0.0
    %995 = vmatpush1.msra.mxu0 %v973
    %996 = vmatprep.subr.mxu0 0.0
    %997 = vmatpush1.msra.mxu0 %v974
    %998 = vmatprep.subr.mxu0 0.0
    %999 = vmatpush1.msra.mxu0 %v975
    %1000 = vmatprep.subr.mxu0 0.0
    %1001 = vmatpush1.msra.mxu0 %v976
    %1002 = vmatprep.subr.mxu0 0.0
    %1003 = vmatpush1.msra.mxu0 0.0
    %1004 = vmatprep.subr.mxu0 0.0
    %1005 = vmatpush1.msra.mxu0 0.0
    %1006 = vmatprep.subr.mxu0 0.0
    %1007 = vmatpush1.msra.mxu0 0.0
    %1008 = vmatprep.subr.mxu0 0.0
    %1009 = vmatpush1.msra.mxu0 0.0
    %1010 = vmatprep.subr.mxu0 0.0
    %1011 = vmatpush1.msra.mxu0 0.0
    %1012 = vmatprep.subr.mxu0 0.0
    %1013 = vmatpush1.msra.mxu0 0.0
    %1014 = vmatprep.subr.mxu0 0.0
    %1015 = vmatpush1.msra.mxu0 0.0
    %1016 = vmatprep.subr.mxu0 0.0
    %1017 = vmatpush1.msra.mxu0 0.0
    %1018 = vmatprep.subr.mxu0 0.0
    %1019 = vmatpush1.msra.mxu0 0.0
    %1020 = vmatprep.subr.mxu0 0.0
    %1021 = vmatpush1.msra.mxu0 0.0
    %1022 = vmatprep.subr.mxu0 0.0
    %1023 = vmatpush1.msra.mxu0 0.0
    %1024 = vmatprep.subr.mxu0 0.0
    %1025 = vmatpush1.msra.mxu0 0.0
    %1026 = vmatprep.subr.mxu0 0.0
    %1027 = vmatpush1.msra.mxu0 0.0
    %1028 = vmatprep.subr.mxu0 0.0
    %1029 = vmatpush1.msra.mxu0 0.0
    %1030 = vmatprep.subr.mxu0 0.0
    %1031 = vmatpush1.msra.mxu0 0.0
    %1032 = vmatprep.subr.mxu0 0.0
    %1033 = vmatpush1.msra.mxu0 0.0
    %1034 = vmatprep.subr.mxu0 0.0
    %1035 = vmatpush1.msra.mxu0 0.0
    %1036 = vmatprep.subr.mxu0 0.0
    %1037 = vmatpush1.msra.mxu0 0.0
    %1038 = vmatprep.subr.mxu0 0.0
    %1039 = vmatpush1.msra.mxu0 0.0
    %1040 = vmatprep.subr.mxu0 0.0
    %1041 = vmatpush1.msra.mxu0 0.0
    %1042 = vmatprep.subr.mxu0 0.0
    %1043 = vmatpush1.msra.mxu0 0.0
    %1044 = vmatprep.subr.mxu0 0.0
    %1045 = vmatpush1.msra.mxu0 0.0
    %1046 = vmatprep.subr.mxu0 0.0
    %1047 = vmatpush1.msra.mxu0 0.0
    %1048 = vmatprep.subr.mxu0 0.0
    %1049 = vmatpush1.msra.mxu0 0.0
    %1050 = vmatprep.mubr.f32.mxu0 0.0
    %1051 = vmatmul.mubr.f32.gmra.mrb[0].mxu0 %v267
    %v1052 = vpop.f32.mrb[0].mxu0
    %v1053 = vadd.f32 %v984, %v1052
    %v1054 = vpop.f32.mrb[0].mxu0
    %1055 = vmatprep.mubr.f32.mxu0 0.0
    %1056 = vmatmul.mubr.f32.gmra.mrb[0].mxu0 %v270
    %v1057 = vpop.f32.mrb[0].mxu0
    %v1058 = vadd.f32 %v984, %v1057
    %v1059 = vpop.f32.mrb[0].mxu0
    %1060 = vmatprep.mubr.f32.mxu0 0.0
    %1061 = vmatmul.mubr.f32.gmra.mrb[0].mxu0 %v273
    %v1062 = vpop.f32.mrb[0].mxu0
    %v1063 = vadd.f32 %v984, %v1062
    %v1064 = vpop.f32.mrb[0].mxu0
    %1065 = vmatprep.mubr.f32.mxu0 0.0
    %1066 = vmatmul.mubr.f32.gmra.mrb[0].mxu0 %v276
    %v1067 = vpop.f32.mrb[0].mxu0
    %v1068 = vadd.f32 %v984, %v1067
    %v1069 = vpop.f32.mrb[0].mxu0
    %1070 = vdwg.mxu0
    %s1071 = scalar_lea.vmem %s3, 320
    %v1072 = vld [vmem:[%s1071] sm:$0xff]
    %v1073 = vld [vmem:[%s1071 + $0x8] sm:$0xff]
    %v1074 = vld [vmem:[%s1071 + $0x10] sm:$0xff]
    %v1075 = vld [vmem:[%s1071 + $0x18] sm:$0xff]
    %v1076 = vld [vmem:[%s1071 + $0x20] sm:$0xff]
    %v1077 = vld [vmem:[%s1071 + $0x28] sm:$0xff]
    %v1078 = vld [vmem:[%s1071 + $0x30] sm:$0xff]
    %v1079 = vld [vmem:[%s1071 + $0x38] sm:$0xff]
    %v1080 = vld [vmem:[%s6 + $0x3] sm:$0x1]
    %v1081 = vlaneseq
    %v1082 = vshrl.u32 %v1081, 7
    %v1083 = vsub.s32 0, %v1082
    %v1084 = vrot.slane %v1080, %v1083
    %1086 = vrot.lane.b32.xlu0 %v1084, 112
    %v1087 = vpop.permute.xlu0 %1086
    %1089 = vmatprep.subr.mxu0 0.0
    %1090 = vmatpush1.msra.mxu0 %v1072
    %1091 = vmatprep.subr.mxu0 0.0
    %1092 = vmatpush1.msra.mxu0 %v1073
    %1093 = vmatprep.subr.mxu0 0.0
    %1094 = vmatpush1.msra.mxu0 %v1074
    %1095 = vmatprep.subr.mxu0 0.0
    %1096 = vmatpush1.msra.mxu0 %v1075
    %1097 = vmatprep.subr.mxu0 0.0
    %1098 = vmatpush1.msra.mxu0 %v1076
    %1099 = vmatprep.subr.mxu0 0.0
    %1100 = vmatpush1.msra.mxu0 %v1077
    %1101 = vmatprep.subr.mxu0 0.0
    %1102 = vmatpush1.msra.mxu0 %v1078
    %1103 = vmatprep.subr.mxu0 0.0
    %1104 = vmatpush1.msra.mxu0 %v1079
    %1105 = vmatprep.subr.mxu0 0.0
    %1106 = vmatpush1.msra.mxu0 0.0
    %1107 = vmatprep.subr.mxu0 0.0
    %1108 = vmatpush1.msra.mxu0 0.0
    %1109 = vmatprep.subr.mxu0 0.0
    %1110 = vmatpush1.msra.mxu0 0.0
    %1111 = vmatprep.subr.mxu0 0.0
    %1112 = vmatpush1.msra.mxu0 0.0
    %1113 = vmatprep.subr.mxu0 0.0
    %1114 = vmatpush1.msra.mxu0 0.0
    %1115 = vmatprep.subr.mxu0 0.0
    %1116 = vmatpush1.msra.mxu0 0.0
    %1117 = vmatprep.subr.mxu0 0.0
    %1118 = vmatpush1.msra.mxu0 0.0
    %1119 = vmatprep.subr.mxu0 0.0
    %1120 = vmatpush1.msra.mxu0 0.0
    %1121 = vmatprep.subr.mxu0 0.0
    %1122 = vmatpush1.msra.mxu0 0.0
    %1123 = vmatprep.subr.mxu0 0.0
    %1124 = vmatpush1.msra.mxu0 0.0
    %1125 = vmatprep.subr.mxu0 0.0
    %1126 = vmatpush1.msra.mxu0 0.0
    %1127 = vmatprep.subr.mxu0 0.0
    %1128 = vmatpush1.msra.mxu0 0.0
    %1129 = vmatprep.subr.mxu0 0.0
    %1130 = vmatpush1.msra.mxu0 0.0
    %1131 = vmatprep.subr.mxu0 0.0
    %1132 = vmatpush1.msra.mxu0 0.0
    %1133 = vmatprep.subr.mxu0 0.0
    %1134 = vmatpush1.msra.mxu0 0.0
    %1135 = vmatprep.subr.mxu0 0.0
    %1136 = vmatpush1.msra.mxu0 0.0
    %1137 = vmatprep.subr.mxu0 0.0
    %1138 = vmatpush1.msra.mxu0 0.0
    %1139 = vmatprep.subr.mxu0 0.0
    %1140 = vmatpush1.msra.mxu0 0.0
    %1141 = vmatprep.subr.mxu0 0.0
    %1142 = vmatpush1.msra.mxu0 0.0
    %1143 = vmatprep.subr.mxu0 0.0
    %1144 = vmatpush1.msra.mxu0 0.0
    %1145 = vmatprep.subr.mxu0 0.0
    %1146 = vmatpush1.msra.mxu0 0.0
    %1147 = vmatprep.subr.mxu0 0.0
    %1148 = vmatpush1.msra.mxu0 0.0
    %1149 = vmatprep.subr.mxu0 0.0
    %1150 = vmatpush1.msra.mxu0 0.0
    %1151 = vmatprep.subr.mxu0 0.0
    %1152 = vmatpush1.msra.mxu0 0.0
    %1153 = vmatprep.mubr.f32.mxu0 0.0
    %1154 = vmatmul.mubr.f32.gmra.mrb[0].mxu0 %v378
    %v1155 = vpop.f32.mrb[0].mxu0
    %v1156 = vadd.f32 %v1087, %v1155
    %v1157 = vpop.f32.mrb[0].mxu0
    %1158 = vmatprep.mubr.f32.mxu0 0.0
    %1159 = vmatmul.mubr.f32.gmra.mrb[0].mxu0 %v381
    %v1160 = vpop.f32.mrb[0].mxu0
    %v1161 = vadd.f32 %v1087, %v1160
    %v1162 = vpop.f32.mrb[0].mxu0
    %1163 = vmatprep.mubr.f32.mxu0 0.0
    %1164 = vmatmul.mubr.f32.gmra.mrb[0].mxu0 %v384
    %v1165 = vpop.f32.mrb[0].mxu0
    %v1166 = vadd.f32 %v1087, %v1165
    %v1167 = vpop.f32.mrb[0].mxu0
    %1168 = vmatprep.mubr.f32.mxu0 0.0
    %1169 = vmatmul.mubr.f32.gmra.mrb[0].mxu0 %v387
    %v1170 = vpop.f32.mrb[0].mxu0
    %v1171 = vadd.f32 %v1087, %v1170
    %v1172 = vpop.f32.mrb[0].mxu0
    %1173 = vdwg.mxu0
    %s1174 = scalar_lea.vmem %s3, 576
    %v1175 = vld [vmem:[%s1174] sm:$0xff]
    %v1176 = vld [vmem:[%s1174 + $0x8] sm:$0xff]
    %v1177 = vld [vmem:[%s1174 + $0x10] sm:$0xff]
    %v1178 = vld [vmem:[%s1174 + $0x18] sm:$0xff]
    %v1179 = vld [vmem:[%s1174 + $0x20] sm:$0xff]
    %v1180 = vld [vmem:[%s1174 + $0x28] sm:$0xff]
    %v1181 = vld [vmem:[%s1174 + $0x30] sm:$0xff]
    %v1182 = vld [vmem:[%s1174 + $0x38] sm:$0xff]
    %v1183 = vld [vmem:[%s6 + $0x4] sm:$0x1]
    %v1184 = vlaneseq
    %v1185 = vshrl.u32 %v1184, 7
    %v1186 = vsub.s32 0, %v1185
    %v1187 = vrot.slane %v1183, %v1186
    %1189 = vrot.lane.b32.xlu0 %v1187, 112
    %v1190 = vpop.permute.xlu0 %1189
    %1192 = vmatprep.subr.mxu0 0.0
    %1193 = vmatpush1.msra.mxu0 %v1175
    %1194 = vmatprep.subr.mxu0 0.0
    %1195 = vmatpush1.msra.mxu0 %v1176
    %1196 = vmatprep.subr.mxu0 0.0
    %1197 = vmatpush1.msra.mxu0 %v1177
    %1198 = vmatprep.subr.mxu0 0.0
    %1199 = vmatpush1.msra.mxu0 %v1178
    %1200 = vmatprep.subr.mxu0 0.0
    %1201 = vmatpush1.msra.mxu0 %v1179
    %1202 = vmatprep.subr.mxu0 0.0
    %1203 = vmatpush1.msra.mxu0 %v1180
    %1204 = vmatprep.subr.mxu0 0.0
    %1205 = vmatpush1.msra.mxu0 %v1181
    %1206 = vmatprep.subr.mxu0 0.0
    %1207 = vmatpush1.msra.mxu0 %v1182
    %1208 = vmatprep.subr.mxu0 0.0
    %1209 = vmatpush1.msra.mxu0 0.0
    %1210 = vmatprep.subr.mxu0 0.0
    %1211 = vmatpush1.msra.mxu0 0.0
    %1212 = vmatprep.subr.mxu0 0.0
    %1213 = vmatpush1.msra.mxu0 0.0
    %1214 = vmatprep.subr.mxu0 0.0
    %1215 = vmatpush1.msra.mxu0 0.0
    %1216 = vmatprep.subr.mxu0 0.0
    %1217 = vmatpush1.msra.mxu0 0.0
    %1218 = vmatprep.subr.mxu0 0.0
    %1219 = vmatpush1.msra.mxu0 0.0
    %1220 = vmatprep.subr.mxu0 0.0
    %1221 = vmatpush1.msra.mxu0 0.0
    %1222 = vmatprep.subr.mxu0 0.0
    %1223 = vmatpush1.msra.mxu0 0.0
    %1224 = vmatprep.subr.mxu0 0.0
    %1225 = vmatpush1.msra.mxu0 0.0
    %1226 = vmatprep.subr.mxu0 0.0
    %1227 = vmatpush1.msra.mxu0 0.0
    %1228 = vmatprep.subr.mxu0 0.0
    %1229 = vmatpush1.msra.mxu0 0.0
    %1230 = vmatprep.subr.mxu0 0.0
    %1231 = vmatpush1.msra.mxu0 0.0
    %1232 = vmatprep.subr.mxu0 0.0
    %1233 = vmatpush1.msra.mxu0 0.0
    %1234 = vmatprep.subr.mxu0 0.0
    %1235 = vmatpush1.msra.mxu0 0.0
    %1236 = vmatprep.subr.mxu0 0.0
    %1237 = vmatpush1.msra.mxu0 0.0
    %1238 = vmatprep.subr.mxu0 0.0
    %1239 = vmatpush1.msra.mxu0 0.0
    %1240 = vmatprep.subr.mxu0 0.0
    %1241 = vmatpush1.msra.mxu0 0.0
    %1242 = vmatprep.subr.mxu0 0.0
    %1243 = vmatpush1.msra.mxu0 0.0
    %1244 = vmatprep.subr.mxu0 0.0
    %1245 = vmatpush1.msra.mxu0 0.0
    %1246 = vmatprep.subr.mxu0 0.0
    %1247 = vmatpush1.msra.mxu0 0.0
    %1248 = vmatprep.subr.mxu0 0.0
    %1249 = vmatpush1.msra.mxu0 0.0
    %1250 = vmatprep.subr.mxu0 0.0
    %1251 = vmatpush1.msra.mxu0 0.0
    %1252 = vmatprep.subr.mxu0 0.0
    %1253 = vmatpush1.msra.mxu0 0.0
    %1254 = vmatprep.subr.mxu0 0.0
    %1255 = vmatpush1.msra.mxu0 0.0
    %1256 = vmatprep.mubr.f32.mxu0 0.0
    %1257 = vmatmul.mubr.f32.gmra.mrb[0].mxu0 %v378
    %v1258 = vpop.f32.mrb[0].mxu0
    %v1259 = vadd.f32 %v1190, %v1258
    %v1260 = vpop.f32.mrb[0].mxu0
    %1261 = vmatprep.mubr.f32.mxu0 0.0
    %1262 = vmatmul.mubr.f32.gmra.mrb[0].mxu0 %v381
    %v1263 = vpop.f32.mrb[0].mxu0
    %v1264 = vadd.f32 %v1190, %v1263
    %v1265 = vpop.f32.mrb[0].mxu0
    %1266 = vmatprep.mubr.f32.mxu0 0.0
    %1267 = vmatmul.mubr.f32.gmra.mrb[0].mxu0 %v384
    %v1268 = vpop.f32.mrb[0].mxu0
    %v1269 = vadd.f32 %v1190, %v1268
    %v1270 = vpop.f32.mrb[0].mxu0
    %1271 = vmatprep.mubr.f32.mxu0 0.0
    %1272 = vmatmul.mubr.f32.gmra.mrb[0].mxu0 %v387
    %v1273 = vpop.f32.mrb[0].mxu0
    %v1274 = vadd.f32 %v1190, %v1273
    %v1275 = vpop.f32.mrb[0].mxu0
    %1276 = vdwg.mxu0
    %v1278 = vsel %vm573, %v1053, 0
    %v1281 = vsel %vm573, %v1058, 0
    %v1284 = vsel %vm573, %v1156, 0
    %v1287 = vsel %vm573, %v1161, 0
    %1289 = vmatprep.subr.mxu0 0.0
    %1290 = vmatpush1.xpose.msra.mxu0 %v1284
    %1291 = vmatprep.subr.mxu0 0.0
    %1292 = vmatpush1.xpose.msra.mxu0 %v1287
    %1293 = vmatprep.subr.mxu0 0.0
    %1294 = vmatpush1.xpose.msra.mxu0 0.0
    %1295 = vmatprep.subr.mxu0 0.0
    %1296 = vmatpush1.xpose.msra.mxu0 0.0
    %1297 = vmatprep.subr.mxu0 0.0
    %1298 = vmatpush1.xpose.msra.mxu0 0.0
    %1299 = vmatprep.subr.mxu0 0.0
    %1300 = vmatpush1.xpose.msra.mxu0 0.0
    %1301 = vmatprep.subr.mxu0 0.0
    %1302 = vmatpush1.xpose.msra.mxu0 0.0
    %1303 = vmatprep.subr.mxu0 0.0
    %1304 = vmatpush1.xpose.msra.mxu0 0.0
    %1305 = vmatprep.subr.mxu0 0.0
    %1306 = vmatpush1.xpose.msra.mxu0 0.0
    %1307 = vmatprep.subr.mxu0 0.0
    %1308 = vmatpush1.xpose.msra.mxu0 0.0
    %1309 = vmatprep.subr.mxu0 0.0
    %1310 = vmatpush1.xpose.msra.mxu0 0.0
    %1311 = vmatprep.subr.mxu0 0.0
    %1312 = vmatpush1.xpose.msra.mxu0 0.0
    %1313 = vmatprep.subr.mxu0 0.0
    %1314 = vmatpush1.xpose.msra.mxu0 0.0
    %1315 = vmatprep.subr.mxu0 0.0
    %1316 = vmatpush1.xpose.msra.mxu0 0.0
    %1317 = vmatprep.subr.mxu0 0.0
    %1318 = vmatpush1.xpose.msra.mxu0 0.0
    %1319 = vmatprep.subr.mxu0 0.0
    %1320 = vmatpush1.xpose.msra.mxu0 0.0
    %1321 = vmatprep.subr.mxu0 0.0
    %1322 = vmatpush1.xpose.msra.mxu0 0.0
    %1323 = vmatprep.subr.mxu0 0.0
    %1324 = vmatpush1.xpose.msra.mxu0 0.0
    %1325 = vmatprep.subr.mxu0 0.0
    %1326 = vmatpush1.xpose.msra.mxu0 0.0
    %1327 = vmatprep.subr.mxu0 0.0
    %1328 = vmatpush1.xpose.msra.mxu0 0.0
    %1329 = vmatprep.subr.mxu0 0.0
    %1330 = vmatpush1.xpose.msra.mxu0 0.0
    %1331 = vmatprep.subr.mxu0 0.0
    %1332 = vmatpush1.xpose.msra.mxu0 0.0
    %1333 = vmatprep.subr.mxu0 0.0
    %1334 = vmatpush1.xpose.msra.mxu0 0.0
    %1335 = vmatprep.subr.mxu0 0.0
    %1336 = vmatpush1.xpose.msra.mxu0 0.0
    %1337 = vmatprep.subr.mxu0 0.0
    %1338 = vmatpush1.xpose.msra.mxu0 0.0
    %1339 = vmatprep.subr.mxu0 0.0
    %1340 = vmatpush1.xpose.msra.mxu0 0.0
    %1341 = vmatprep.subr.mxu0 0.0
    %1342 = vmatpush1.xpose.msra.mxu0 0.0
    %1343 = vmatprep.subr.mxu0 0.0
    %1344 = vmatpush1.xpose.msra.mxu0 0.0
    %1345 = vmatprep.subr.mxu0 0.0
    %1346 = vmatpush1.xpose.msra.mxu0 0.0
    %1347 = vmatprep.subr.mxu0 0.0
    %1348 = vmatpush1.xpose.msra.mxu0 0.0
    %1349 = vmatprep.subr.mxu0 0.0
    %1350 = vmatpush1.xpose.msra.mxu0 0.0
    %1351 = vmatprep.subr.mxu0 0.0
    %1352 = vmatpush1.xpose.msra.mxu0 0.0
    %1353 = vmatprep.mubr.f32.mxu0 0.0
    %1354 = vmatmul.mubr.f32.gmra.mrb[0].mxu0 %v1278
    %v1355 = vpop.f32.mrb[0].mxu0
    %v1356 = vadd.f32 0.0, %v1355
    %v1357 = vpop.f32.mrb[0].mxu0
    %1358 = vmatprep.mubr.f32.mxu0 0.0
    %1359 = vmatmul.mubr.f32.gmra.mrb[0].mxu0 %v1281
    %v1360 = vpop.f32.mrb[0].mxu0
    %v1361 = vadd.f32 0.0, %v1360
    %v1362 = vpop.f32.mrb[0].mxu0
    %1363 = vdwg.mxu0
    %v1365 = vsel %vm573, %v1063, 0
    %v1368 = vsel %vm573, %v1068, 0
    %v1371 = vsel %vm573, %v1166, 0
    %v1374 = vsel %vm573, %v1171, 0
    %1376 = vmatprep.subr.mxu0 0.0
    %1377 = vmatpush1.xpose.msra.mxu0 %v1371
    %1378 = vmatprep.subr.mxu0 0.0
    %1379 = vmatpush1.xpose.msra.mxu0 %v1374
    %1380 = vmatprep.subr.mxu0 0.0
    %1381 = vmatpush1.xpose.msra.mxu0 0.0
    %1382 = vmatprep.subr.mxu0 0.0
    %1383 = vmatpush1.xpose.msra.mxu0 0.0
    %1384 = vmatprep.subr.mxu0 0.0
    %1385 = vmatpush1.xpose.msra.mxu0 0.0
    %1386 = vmatprep.subr.mxu0 0.0
    %1387 = vmatpush1.xpose.msra.mxu0 0.0
    %1388 = vmatprep.subr.mxu0 0.0
    %1389 = vmatpush1.xpose.msra.mxu0 0.0
    %1390 = vmatprep.subr.mxu0 0.0
    %1391 = vmatpush1.xpose.msra.mxu0 0.0
    %1392 = vmatprep.subr.mxu0 0.0
    %1393 = vmatpush1.xpose.msra.mxu0 0.0
    %1394 = vmatprep.subr.mxu0 0.0
    %1395 = vmatpush1.xpose.msra.mxu0 0.0
    %1396 = vmatprep.subr.mxu0 0.0
    %1397 = vmatpush1.xpose.msra.mxu0 0.0
    %1398 = vmatprep.subr.mxu0 0.0
    %1399 = vmatpush1.xpose.msra.mxu0 0.0
    %1400 = vmatprep.subr.mxu0 0.0
    %1401 = vmatpush1.xpose.msra.mxu0 0.0
    %1402 = vmatprep.subr.mxu0 0.0
    %1403 = vmatpush1.xpose.msra.mxu0 0.0
    %1404 = vmatprep.subr.mxu0 0.0
    %1405 = vmatpush1.xpose.msra.mxu0 0.0
    %1406 = vmatprep.subr.mxu0 0.0
    %1407 = vmatpush1.xpose.msra.mxu0 0.0
    %1408 = vmatprep.subr.mxu0 0.0
    %1409 = vmatpush1.xpose.msra.mxu0 0.0
    %1410 = vmatprep.subr.mxu0 0.0
    %1411 = vmatpush1.xpose.msra.mxu0 0.0
    %1412 = vmatprep.subr.mxu0 0.0
    %1413 = vmatpush1.xpose.msra.mxu0 0.0
    %1414 = vmatprep.subr.mxu0 0.0
    %1415 = vmatpush1.xpose.msra.mxu0 0.0
    %1416 = vmatprep.subr.mxu0 0.0
    %1417 = vmatpush1.xpose.msra.mxu0 0.0
    %1418 = vmatprep.subr.mxu0 0.0
    %1419 = vmatpush1.xpose.msra.mxu0 0.0
    %1420 = vmatprep.subr.mxu0 0.0
    %1421 = vmatpush1.xpose.msra.mxu0 0.0
    %1422 = vmatprep.subr.mxu0 0.0
    %1423 = vmatpush1.xpose.msra.mxu0 0.0
    %1424 = vmatprep.subr.mxu0 0.0
    %1425 = vmatpush1.xpose.msra.mxu0 0.0
    %1426 = vmatprep.subr.mxu0 0.0
    %1427 = vmatpush1.xpose.msra.mxu0 0.0
    %1428 = vmatprep.subr.mxu0 0.0
    %1429 = vmatpush1.xpose.msra.mxu0 0.0
    %1430 = vmatprep.subr.mxu0 0.0
    %1431 = vmatpush1.xpose.msra.mxu0 0.0
    %1432 = vmatprep.subr.mxu0 0.0
    %1433 = vmatpush1.xpose.msra.mxu0 0.0
    %1434 = vmatprep.subr.mxu0 0.0
    %1435 = vmatpush1.xpose.msra.mxu0 0.0
    %1436 = vmatprep.subr.mxu0 0.0
    %1437 = vmatpush1.xpose.msra.mxu0 0.0
    %1438 = vmatprep.subr.mxu0 0.0
    %1439 = vmatpush1.xpose.msra.mxu0 0.0
    %1440 = vmatprep.mubr.f32.mxu0 0.0
    %1441 = vmatmul.mubr.f32.gmra.mrb[0].mxu0 %v1365
    %v1442 = vpop.f32.mrb[0].mxu0
    %v1443 = vadd.f32 0.0, %v1442
    %v1444 = vpop.f32.mrb[0].mxu0
    %1445 = vmatprep.mubr.f32.mxu0 0.0
    %1446 = vmatmul.mubr.f32.gmra.mrb[0].mxu0 %v1368
    %v1447 = vpop.f32.mrb[0].mxu0
    %v1448 = vadd.f32 0.0, %v1447
    %v1449 = vpop.f32.mrb[0].mxu0
    %1450 = vdwg.mxu0
    %v1451 = vmul.f32 %v1356, 0.25
    %v1452 = vmul.f32 %v1361, 0.25
    %v1453 = vmul.f32 %v1443, 0.25
    %v1454 = vmul.f32 %v1448, 0.25
    %v1455 = vadd.f32 %v1451, %v179
    %v1456 = vadd.f32 %v1452, %v180
    %v1457 = vadd.f32 %v1453, %v179
    %v1458 = vadd.f32 %v1454, %v180
    %v1459 = vsel %vm573, %v1455, -inf
    %1460 = vmax.xlane.f32.xlu0 %v1459
    %v1461 = vpop.xlane.xlu0 %1460
    %v1462 = vsel %vm573, %v1456, -inf
    %1463 = vmax.xlane.f32.xlu0 %v1462
    %v1464 = vpop.xlane.xlu0 %1463
    %v1465 = vsel %vm573, %v1457, -inf
    %1466 = vmax.xlane.f32.xlu0 %v1465
    %v1467 = vpop.xlane.xlu0 %1466
    %v1468 = vsel %vm573, %v1458, -inf
    %1469 = vmax.xlane.f32.xlu0 %v1468
    %v1470 = vpop.xlane.xlu0 %1469
    %v1471 = vsub.f32 %v1455, %v1461
    %v1472 = vsub.f32 %v1456, %v1464
    %v1473 = vsub.f32 %v1457, %v1467
    %v1474 = vsub.f32 %v1458, %v1470
    %v1475 = vmul.f32 %v1471, 1.442695
    %v1476 = vpow.pop %v1475
    %v1477 = vmul.f32 %v1472, 1.442695
    %v1478 = vpow.pop %v1477
    %v1479 = vmul.f32 %v1473, 1.442695
    %v1480 = vpow.pop %v1479
    %v1481 = vmul.f32 %v1474, 1.442695
    %v1482 = vpow.pop %v1481
    %v1483 = vsel %vm573, %v1476, 0.0
    %1484 = vadd.xlane.f32.xlu0 %v1483
    %v1485 = vpop.xlane.xlu0 %1484
    %v1486 = vsel %vm573, %v1478, 0.0
    %1487 = vadd.xlane.f32.xlu0 %v1486
    %v1488 = vpop.xlane.xlu0 %1487
    %v1489 = vsel %vm573, %v1480, 0.0
    %1490 = vadd.xlane.f32.xlu0 %v1489
    %v1491 = vpop.xlane.xlu0 %1490
    %v1492 = vsel %vm573, %v1482, 0.0
    %1493 = vadd.xlane.f32.xlu0 %v1492
    %v1494 = vpop.xlane.xlu0 %1493
    %v1495 = vrcp.pop %v1485
    %v1496 = vrcp.pop %v1488
    %v1497 = vrcp.pop %v1491
    %v1498 = vrcp.pop %v1494
    %v1499 = vmul.f32 %v1476, %v1495
    %v1500 = vmul.f32 %v1478, %v1496
    %v1501 = vmul.f32 %v1480, %v1497
    %v1502 = vmul.f32 %v1482, %v1498
    %v1503 = vadd.f32 %v800, %v1499
    %v1504 = vadd.f32 %v801, %v1500
    %v1505 = vadd.f32 %v802, %v1501
    %v1506 = vadd.f32 %v803, %v1502
    %v1508 = vsel %vm573, %v1499, 0
    %v1511 = vsel %vm573, %v1500, 0
    %1513 = vmatprep.subr.mxu0 0.0
    %1514 = vmatpush1.msra.mxu0 %v1259
    %1515 = vmatprep.subr.mxu0 0.0
    %1516 = vmatpush1.msra.mxu0 %v1264
    %1517 = vmatprep.subr.mxu0 0.0
    %1518 = vmatpush1.msra.mxu0 0.0
    %1519 = vmatprep.subr.mxu0 0.0
    %1520 = vmatpush1.msra.mxu0 0.0
    %1521 = vmatprep.subr.mxu0 0.0
    %1522 = vmatpush1.msra.mxu0 0.0
    %1523 = vmatprep.subr.mxu0 0.0
    %1524 = vmatpush1.msra.mxu0 0.0
    %1525 = vmatprep.subr.mxu0 0.0
    %1526 = vmatpush1.msra.mxu0 0.0
    %1527 = vmatprep.subr.mxu0 0.0
    %1528 = vmatpush1.msra.mxu0 0.0
    %1529 = vmatprep.subr.mxu0 0.0
    %1530 = vmatpush1.msra.mxu0 0.0
    %1531 = vmatprep.subr.mxu0 0.0
    %1532 = vmatpush1.msra.mxu0 0.0
    %1533 = vmatprep.subr.mxu0 0.0
    %1534 = vmatpush1.msra.mxu0 0.0
    %1535 = vmatprep.subr.mxu0 0.0
    %1536 = vmatpush1.msra.mxu0 0.0
    %1537 = vmatprep.subr.mxu0 0.0
    %1538 = vmatpush1.msra.mxu0 0.0
    %1539 = vmatprep.subr.mxu0 0.0
    %1540 = vmatpush1.msra.mxu0 0.0
    %1541 = vmatprep.subr.mxu0 0.0
    %1542 = vmatpush1.msra.mxu0 0.0
    %1543 = vmatprep.subr.mxu0 0.0
    %1544 = vmatpush1.msra.mxu0 0.0
    %1545 = vmatprep.subr.mxu0 0.0
    %1546 = vmatpush1.msra.mxu0 0.0
    %1547 = vmatprep.subr.mxu0 0.0
    %1548 = vmatpush1.msra.mxu0 0.0
    %1549 = vmatprep.subr.mxu0 0.0
    %1550 = vmatpush1.msra.mxu0 0.0
    %1551 = vmatprep.subr.mxu0 0.0
    %1552 = vmatpush1.msra.mxu0 0.0
    %1553 = vmatprep.subr.mxu0 0.0
    %1554 = vmatpush1.msra.mxu0 0.0
    %1555 = vmatprep.subr.mxu0 0.0
    %1556 = vmatpush1.msra.mxu0 0.0
    %1557 = vmatprep.subr.mxu0 0.0
    %1558 = vmatpush1.msra.mxu0 0.0
    %1559 = vmatprep.subr.mxu0 0.0
    %1560 = vmatpush1.msra.mxu0 0.0
    %1561 = vmatprep.subr.mxu0 0.0
    %1562 = vmatpush1.msra.mxu0 0.0
    %1563 = vmatprep.subr.mxu0 0.0
    %1564 = vmatpush1.msra.mxu0 0.0
    %1565 = vmatprep.subr.mxu0 0.0
    %1566 = vmatpush1.msra.mxu0 0.0
    %1567 = vmatprep.subr.mxu0 0.0
    %1568 = vmatpush1.msra.mxu0 0.0
    %1569 = vmatprep.subr.mxu0 0.0
    %1570 = vmatpush1.msra.mxu0 0.0
    %1571 = vmatprep.subr.mxu0 0.0
    %1572 = vmatpush1.msra.mxu0 0.0
    %1573 = vmatprep.subr.mxu0 0.0
    %1574 = vmatpush1.msra.mxu0 0.0
    %1575 = vmatprep.subr.mxu0 0.0
    %1576 = vmatpush1.msra.mxu0 0.0
    %1577 = vmatprep.mubr.f32.mxu0 0.0
    %1578 = vmatmul.mubr.f32.gmra.mrb[0].mxu0 %v1508
    %v1579 = vpop.f32.mrb[0].mxu0
    %v1580 = vadd.f32 0.0, %v1579
    %v1581 = vpop.f32.mrb[0].mxu0
    %1582 = vmatprep.mubr.f32.mxu0 0.0
    %1583 = vmatmul.mubr.f32.gmra.mrb[0].mxu0 %v1511
    %v1584 = vpop.f32.mrb[0].mxu0
    %v1585 = vadd.f32 0.0, %v1584
    %v1586 = vpop.f32.mrb[0].mxu0
    %1587 = vdwg.mxu0
    %v1589 = vsel %vm573, %v1501, 0
    %v1592 = vsel %vm573, %v1502, 0
    %1594 = vmatprep.subr.mxu0 0.0
    %1595 = vmatpush1.msra.mxu0 %v1269
    %1596 = vmatprep.subr.mxu0 0.0
    %1597 = vmatpush1.msra.mxu0 %v1274
    %1598 = vmatprep.subr.mxu0 0.0
    %1599 = vmatpush1.msra.mxu0 0.0
    %1600 = vmatprep.subr.mxu0 0.0
    %1601 = vmatpush1.msra.mxu0 0.0
    %1602 = vmatprep.subr.mxu0 0.0
    %1603 = vmatpush1.msra.mxu0 0.0
    %1604 = vmatprep.subr.mxu0 0.0
    %1605 = vmatpush1.msra.mxu0 0.0
    %1606 = vmatprep.subr.mxu0 0.0
    %1607 = vmatpush1.msra.mxu0 0.0
    %1608 = vmatprep.subr.mxu0 0.0
    %1609 = vmatpush1.msra.mxu0 0.0
    %1610 = vmatprep.subr.mxu0 0.0
    %1611 = vmatpush1.msra.mxu0 0.0
    %1612 = vmatprep.subr.mxu0 0.0
    %1613 = vmatpush1.msra.mxu0 0.0
    %1614 = vmatprep.subr.mxu0 0.0
    %1615 = vmatpush1.msra.mxu0 0.0
    %1616 = vmatprep.subr.mxu0 0.0
    %1617 = vmatpush1.msra.mxu0 0.0
    %1618 = vmatprep.subr.mxu0 0.0
    %1619 = vmatpush1.msra.mxu0 0.0
    %1620 = vmatprep.subr.mxu0 0.0
    %1621 = vmatpush1.msra.mxu0 0.0
    %1622 = vmatprep.subr.mxu0 0.0
    %1623 = vmatpush1.msra.mxu0 0.0
    %1624 = vmatprep.subr.mxu0 0.0
    %1625 = vmatpush1.msra.mxu0 0.0
    %1626 = vmatprep.subr.mxu0 0.0
    %1627 = vmatpush1.msra.mxu0 0.0
    %1628 = vmatprep.subr.mxu0 0.0
    %1629 = vmatpush1.msra.mxu0 0.0
    %1630 = vmatprep.subr.mxu0 0.0
    %1631 = vmatpush1.msra.mxu0 0.0
    %1632 = vmatprep.subr.mxu0 0.0
    %1633 = vmatpush1.msra.mxu0 0.0
    %1634 = vmatprep.subr.mxu0 0.0
    %1635 = vmatpush1.msra.mxu0 0.0
    %1636 = vmatprep.subr.mxu0 0.0
    %1637 = vmatpush1.msra.mxu0 0.0
    %1638 = vmatprep.subr.mxu0 0.0
    %1639 = vmatpush1.msra.mxu0 0.0
    %1640 = vmatprep.subr.mxu0 0.0
    %1641 = vmatpush1.msra.mxu0 0.0
    %1642 = vmatprep.subr.mxu0 0.0
    %1643 = vmatpush1.msra.mxu0 0.0
    %1644 = vmatprep.subr.mxu0 0.0
    %1645 = vmatpush1.msra.mxu0 0.0
    %1646 = vmatprep.subr.mxu0 0.0
    %1647 = vmatpush1.msra.mxu0 0.0
    %1648 = vmatprep.subr.mxu0 0.0
    %1649 = vmatpush1.msra.mxu0 0.0
    %1650 = vmatprep.subr.mxu0 0.0
    %1651 = vmatpush1.msra.mxu0 0.0
    %1652 = vmatprep.subr.mxu0 0.0
    %1653 = vmatpush1.msra.mxu0 0.0
    %1654 = vmatprep.subr.mxu0 0.0
    %1655 = vmatpush1.msra.mxu0 0.0
    %1656 = vmatprep.subr.mxu0 0.0
    %1657 = vmatpush1.msra.mxu0 0.0
    %1658 = vmatprep.mubr.f32.mxu0 0.0
    %1659 = vmatmul.mubr.f32.gmra.mrb[0].mxu0 %v1589
    %v1660 = vpop.f32.mrb[0].mxu0
    %v1661 = vadd.f32 0.0, %v1660
    %v1662 = vpop.f32.mrb[0].mxu0
    %1663 = vmatprep.mubr.f32.mxu0 0.0
    %1664 = vmatmul.mubr.f32.gmra.mrb[0].mxu0 %v1592
    %v1665 = vpop.f32.mrb[0].mxu0
    %v1666 = vadd.f32 0.0, %v1665
    %v1667 = vpop.f32.mrb[0].mxu0
    %1668 = vdwg.mxu0
    %s1669 = scalar_lea.vmem %s4, 16
    %v1670 = vld [vmem:[%s1669] sm:$0xff]
    %v1671 = vld [vmem:[%s1669 + $0x8] sm:$0xff]
    %v1673 = vsel %vm573, %v1580, 0
    %v1676 = vsel %vm573, %v1585, 0
    %v1679 = vsel %vm573, %v1661, 0
    %v1682 = vsel %vm573, %v1666, 0
    %1684 = vmatprep.subr.mxu0 0.0
    %1685 = vmatpush1.msra.mxu0 %v1670
    %1686 = vmatprep.subr.mxu0 0.0
    %1687 = vmatpush1.msra.mxu0 %v1671
    %1688 = vmatprep.subr.mxu0 0.0
    %1689 = vmatpush1.msra.mxu0 0.0
    %1690 = vmatprep.subr.mxu0 0.0
    %1691 = vmatpush1.msra.mxu0 0.0
    %1692 = vmatprep.subr.mxu0 0.0
    %1693 = vmatpush1.msra.mxu0 0.0
    %1694 = vmatprep.subr.mxu0 0.0
    %1695 = vmatpush1.msra.mxu0 0.0
    %1696 = vmatprep.subr.mxu0 0.0
    %1697 = vmatpush1.msra.mxu0 0.0
    %1698 = vmatprep.subr.mxu0 0.0
    %1699 = vmatpush1.msra.mxu0 0.0
    %1700 = vmatprep.subr.mxu0 0.0
    %1701 = vmatpush1.msra.mxu0 0.0
    %1702 = vmatprep.subr.mxu0 0.0
    %1703 = vmatpush1.msra.mxu0 0.0
    %1704 = vmatprep.subr.mxu0 0.0
    %1705 = vmatpush1.msra.mxu0 0.0
    %1706 = vmatprep.subr.mxu0 0.0
    %1707 = vmatpush1.msra.mxu0 0.0
    %1708 = vmatprep.subr.mxu0 0.0
    %1709 = vmatpush1.msra.mxu0 0.0
    %1710 = vmatprep.subr.mxu0 0.0
    %1711 = vmatpush1.msra.mxu0 0.0
    %1712 = vmatprep.subr.mxu0 0.0
    %1713 = vmatpush1.msra.mxu0 0.0
    %1714 = vmatprep.subr.mxu0 0.0
    %1715 = vmatpush1.msra.mxu0 0.0
    %1716 = vmatprep.subr.mxu0 0.0
    %1717 = vmatpush1.msra.mxu0 0.0
    %1718 = vmatprep.subr.mxu0 0.0
    %1719 = vmatpush1.msra.mxu0 0.0
    %1720 = vmatprep.subr.mxu0 0.0
    %1721 = vmatpush1.msra.mxu0 0.0
    %1722 = vmatprep.subr.mxu0 0.0
    %1723 = vmatpush1.msra.mxu0 0.0
    %1724 = vmatprep.subr.mxu0 0.0
    %1725 = vmatpush1.msra.mxu0 0.0
    %1726 = vmatprep.subr.mxu0 0.0
    %1727 = vmatpush1.msra.mxu0 0.0
    %1728 = vmatprep.subr.mxu0 0.0
    %1729 = vmatpush1.msra.mxu0 0.0
    %1730 = vmatprep.subr.mxu0 0.0
    %1731 = vmatpush1.msra.mxu0 0.0
    %1732 = vmatprep.subr.mxu0 0.0
    %1733 = vmatpush1.msra.mxu0 0.0
    %1734 = vmatprep.subr.mxu0 0.0
    %1735 = vmatpush1.msra.mxu0 0.0
    %1736 = vmatprep.subr.mxu0 0.0
    %1737 = vmatpush1.msra.mxu0 0.0
    %1738 = vmatprep.subr.mxu0 0.0
    %1739 = vmatpush1.msra.mxu0 0.0
    %1740 = vmatprep.subr.mxu0 0.0
    %1741 = vmatpush1.msra.mxu0 0.0
    %1742 = vmatprep.subr.mxu0 0.0
    %1743 = vmatpush1.msra.mxu0 0.0
    %1744 = vmatprep.subr.mxu0 0.0
    %1745 = vmatpush1.msra.mxu0 0.0
    %1746 = vmatprep.subr.mxu0 0.0
    %1747 = vmatpush1.msra.mxu0 0.0
    %1748 = vmatprep.mubr.f32.mxu0 0.0
    %1749 = vmatmul.mubr.f32.gmra.mrb[0].mxu0 %v1673
    %v1750 = vpop.f32.mrb[0].mxu0
    %v1751 = vadd.f32 0.0, %v1750
    %v1752 = vpop.f32.mrb[0].mxu0
    %1753 = vmatprep.mubr.f32.mxu0 0.0
    %1754 = vmatmul.mubr.f32.gmra.mrb[0].mxu0 %v1676
    %v1755 = vpop.f32.mrb[0].mxu0
    %v1756 = vadd.f32 0.0, %v1755
    %v1757 = vpop.f32.mrb[0].mxu0
    %1758 = vmatprep.mubr.f32.mxu0 0.0
    %1759 = vmatmul.mubr.f32.gmra.mrb[0].mxu0 %v1679
    %v1760 = vpop.f32.mrb[0].mxu0
    %v1761 = vadd.f32 0.0, %v1760
    %v1762 = vpop.f32.mrb[0].mxu0
    %1763 = vmatprep.mubr.f32.mxu0 0.0
    %1764 = vmatmul.mubr.f32.gmra.mrb[0].mxu0 %v1682
    %v1765 = vpop.f32.mrb[0].mxu0
    %v1766 = vadd.f32 0.0, %v1765
    %v1767 = vpop.f32.mrb[0].mxu0
    %1768 = vdwg.mxu0
    %v1770 = vsel %vm573, %v877, 0
    %v1773 = vsel %vm573, %v882, 0
    %v1776 = vsel %vm573, %v958, 0
    %v1779 = vsel %vm573, %v963, 0
    %1781 = vmatprep.subr.mxu0 0.0
    %1782 = vmatpush1.msra.mxu0 %v966
    %1783 = vmatprep.subr.mxu0 0.0
    %1784 = vmatpush1.msra.mxu0 %v967
    %1785 = vmatprep.subr.mxu0 0.0
    %1786 = vmatpush1.msra.mxu0 0.0
    %1787 = vmatprep.subr.mxu0 0.0
    %1788 = vmatpush1.msra.mxu0 0.0
    %1789 = vmatprep.subr.mxu0 0.0
    %1790 = vmatpush1.msra.mxu0 0.0
    %1791 = vmatprep.subr.mxu0 0.0
    %1792 = vmatpush1.msra.mxu0 0.0
    %1793 = vmatprep.subr.mxu0 0.0
    %1794 = vmatpush1.msra.mxu0 0.0
    %1795 = vmatprep.subr.mxu0 0.0
    %1796 = vmatpush1.msra.mxu0 0.0
    %1797 = vmatprep.subr.mxu0 0.0
    %1798 = vmatpush1.msra.mxu0 0.0
    %1799 = vmatprep.subr.mxu0 0.0
    %1800 = vmatpush1.msra.mxu0 0.0
    %1801 = vmatprep.subr.mxu0 0.0
    %1802 = vmatpush1.msra.mxu0 0.0
    %1803 = vmatprep.subr.mxu0 0.0
    %1804 = vmatpush1.msra.mxu0 0.0
    %1805 = vmatprep.subr.mxu0 0.0
    %1806 = vmatpush1.msra.mxu0 0.0
    %1807 = vmatprep.subr.mxu0 0.0
    %1808 = vmatpush1.msra.mxu0 0.0
    %1809 = vmatprep.subr.mxu0 0.0
    %1810 = vmatpush1.msra.mxu0 0.0
    %1811 = vmatprep.subr.mxu0 0.0
    %1812 = vmatpush1.msra.mxu0 0.0
    %1813 = vmatprep.subr.mxu0 0.0
    %1814 = vmatpush1.msra.mxu0 0.0
    %1815 = vmatprep.subr.mxu0 0.0
    %1816 = vmatpush1.msra.mxu0 0.0
    %1817 = vmatprep.subr.mxu0 0.0
    %1818 = vmatpush1.msra.mxu0 0.0
    %1819 = vmatprep.subr.mxu0 0.0
    %1820 = vmatpush1.msra.mxu0 0.0
    %1821 = vmatprep.subr.mxu0 0.0
    %1822 = vmatpush1.msra.mxu0 0.0
    %1823 = vmatprep.subr.mxu0 0.0
    %1824 = vmatpush1.msra.mxu0 0.0
    %1825 = vmatprep.subr.mxu0 0.0
    %1826 = vmatpush1.msra.mxu0 0.0
    %1827 = vmatprep.subr.mxu0 0.0
    %1828 = vmatpush1.msra.mxu0 0.0
    %1829 = vmatprep.subr.mxu0 0.0
    %1830 = vmatpush1.msra.mxu0 0.0
    %1831 = vmatprep.subr.mxu0 0.0
    %1832 = vmatpush1.msra.mxu0 0.0
    %1833 = vmatprep.subr.mxu0 0.0
    %1834 = vmatpush1.msra.mxu0 0.0
    %1835 = vmatprep.subr.mxu0 0.0
    %1836 = vmatpush1.msra.mxu0 0.0
    %1837 = vmatprep.subr.mxu0 0.0
    %1838 = vmatpush1.msra.mxu0 0.0
    %1839 = vmatprep.subr.mxu0 0.0
    %1840 = vmatpush1.msra.mxu0 0.0
    %1841 = vmatprep.subr.mxu0 0.0
    %1842 = vmatpush1.msra.mxu0 0.0
    %1843 = vmatprep.subr.mxu0 0.0
    %1844 = vmatpush1.msra.mxu0 0.0
    %1845 = vmatprep.mubr.f32.mxu0 0.0
    %1846 = vmatmul.mubr.f32.gmra.mrb[0].mxu0 %v1770
    %v1847 = vpop.f32.mrb[0].mxu0
    %v1848 = vadd.f32 %v1751, %v1847
    %v1849 = vpop.f32.mrb[0].mxu0
    %1850 = vmatprep.mubr.f32.mxu0 0.0
    %1851 = vmatmul.mubr.f32.gmra.mrb[0].mxu0 %v1773
    %v1852 = vpop.f32.mrb[0].mxu0
    %v1853 = vadd.f32 %v1756, %v1852
    %v1854 = vpop.f32.mrb[0].mxu0
    %1855 = vmatprep.mubr.f32.mxu0 0.0
    %1856 = vmatmul.mubr.f32.gmra.mrb[0].mxu0 %v1776
    %v1857 = vpop.f32.mrb[0].mxu0
    %v1858 = vadd.f32 %v1761, %v1857
    %v1859 = vpop.f32.mrb[0].mxu0
    %1860 = vmatprep.mubr.f32.mxu0 0.0
    %1861 = vmatmul.mubr.f32.gmra.mrb[0].mxu0 %v1779
    %v1862 = vpop.f32.mrb[0].mxu0
    %v1863 = vadd.f32 %v1766, %v1862
    %v1864 = vpop.f32.mrb[0].mxu0
    %1865 = vdwg.mxu0
    %s1866 = scalar_lea.vmem %s3, 128
    %v1867 = vld [vmem:[%s1866] sm:$0xff]
    %v1868 = vld [vmem:[%s1866 + $0x8] sm:$0xff]
    %v1869 = vld [vmem:[%s1866 + $0x10] sm:$0xff]
    %v1870 = vld [vmem:[%s1866 + $0x18] sm:$0xff]
    %v1871 = vld [vmem:[%s1866 + $0x20] sm:$0xff]
    %v1872 = vld [vmem:[%s1866 + $0x28] sm:$0xff]
    %v1873 = vld [vmem:[%s1866 + $0x30] sm:$0xff]
    %v1874 = vld [vmem:[%s1866 + $0x38] sm:$0xff]
    %v1875 = vld [vmem:[%s6 + $0x2] sm:$0x1]
    %v1876 = vlaneseq
    %v1877 = vshrl.u32 %v1876, 7
    %v1878 = vsub.s32 0, %v1877
    %v1879 = vrot.slane %v1875, %v1878
    %1881 = vrot.lane.b32.xlu0 %v1879, 96
    %v1882 = vpop.permute.xlu0 %1881
    %1884 = vmatprep.subr.mxu0 0.0
    %1885 = vmatpush1.msra.mxu0 %v1867
    %1886 = vmatprep.subr.mxu0 0.0
    %1887 = vmatpush1.msra.mxu0 %v1868
    %1888 = vmatprep.subr.mxu0 0.0
    %1889 = vmatpush1.msra.mxu0 %v1869
    %1890 = vmatprep.subr.mxu0 0.0
    %1891 = vmatpush1.msra.mxu0 %v1870
    %1892 = vmatprep.subr.mxu0 0.0
    %1893 = vmatpush1.msra.mxu0 %v1871
    %1894 = vmatprep.subr.mxu0 0.0
    %1895 = vmatpush1.msra.mxu0 %v1872
    %1896 = vmatprep.subr.mxu0 0.0
    %1897 = vmatpush1.msra.mxu0 %v1873
    %1898 = vmatprep.subr.mxu0 0.0
    %1899 = vmatpush1.msra.mxu0 %v1874
    %1900 = vmatprep.subr.mxu0 0.0
    %1901 = vmatpush1.msra.mxu0 0.0
    %1902 = vmatprep.subr.mxu0 0.0
    %1903 = vmatpush1.msra.mxu0 0.0
    %1904 = vmatprep.subr.mxu0 0.0
    %1905 = vmatpush1.msra.mxu0 0.0
    %1906 = vmatprep.subr.mxu0 0.0
    %1907 = vmatpush1.msra.mxu0 0.0
    %1908 = vmatprep.subr.mxu0 0.0
    %1909 = vmatpush1.msra.mxu0 0.0
    %1910 = vmatprep.subr.mxu0 0.0
    %1911 = vmatpush1.msra.mxu0 0.0
    %1912 = vmatprep.subr.mxu0 0.0
    %1913 = vmatpush1.msra.mxu0 0.0
    %1914 = vmatprep.subr.mxu0 0.0
    %1915 = vmatpush1.msra.mxu0 0.0
    %1916 = vmatprep.subr.mxu0 0.0
    %1917 = vmatpush1.msra.mxu0 0.0
    %1918 = vmatprep.subr.mxu0 0.0
    %1919 = vmatpush1.msra.mxu0 0.0
    %1920 = vmatprep.subr.mxu0 0.0
    %1921 = vmatpush1.msra.mxu0 0.0
    %1922 = vmatprep.subr.mxu0 0.0
    %1923 = vmatpush1.msra.mxu0 0.0
    %1924 = vmatprep.subr.mxu0 0.0
    %1925 = vmatpush1.msra.mxu0 0.0
    %1926 = vmatprep.subr.mxu0 0.0
    %1927 = vmatpush1.msra.mxu0 0.0
    %1928 = vmatprep.subr.mxu0 0.0
    %1929 = vmatpush1.msra.mxu0 0.0
    %1930 = vmatprep.subr.mxu0 0.0
    %1931 = vmatpush1.msra.mxu0 0.0
    %1932 = vmatprep.subr.mxu0 0.0
    %1933 = vmatpush1.msra.mxu0 0.0
    %1934 = vmatprep.subr.mxu0 0.0
    %1935 = vmatpush1.msra.mxu0 0.0
    %1936 = vmatprep.subr.mxu0 0.0
    %1937 = vmatpush1.msra.mxu0 0.0
    %1938 = vmatprep.subr.mxu0 0.0
    %1939 = vmatpush1.msra.mxu0 0.0
    %1940 = vmatprep.subr.mxu0 0.0
    %1941 = vmatpush1.msra.mxu0 0.0
    %1942 = vmatprep.subr.mxu0 0.0
    %1943 = vmatpush1.msra.mxu0 0.0
    %1944 = vmatprep.subr.mxu0 0.0
    %1945 = vmatpush1.msra.mxu0 0.0
    %1946 = vmatprep.subr.mxu0 0.0
    %1947 = vmatpush1.msra.mxu0 0.0
    %1948 = vmatprep.mubr.f32.mxu0 0.0
    %1949 = vmatmul.mubr.f32.gmra.mrb[0].mxu0 %v267
    %v1950 = vpop.f32.mrb[0].mxu0
    %v1951 = vadd.f32 %v1882, %v1950
    %v1952 = vpop.f32.mrb[0].mxu0
    %1953 = vmatprep.mubr.f32.mxu0 0.0
    %1954 = vmatmul.mubr.f32.gmra.mrb[0].mxu0 %v270
    %v1955 = vpop.f32.mrb[0].mxu0
    %v1956 = vadd.f32 %v1882, %v1955
    %v1957 = vpop.f32.mrb[0].mxu0
    %1958 = vmatprep.mubr.f32.mxu0 0.0
    %1959 = vmatmul.mubr.f32.gmra.mrb[0].mxu0 %v273
    %v1960 = vpop.f32.mrb[0].mxu0
    %v1961 = vadd.f32 %v1882, %v1960
    %v1962 = vpop.f32.mrb[0].mxu0
    %1963 = vmatprep.mubr.f32.mxu0 0.0
    %1964 = vmatmul.mubr.f32.gmra.mrb[0].mxu0 %v276
    %v1965 = vpop.f32.mrb[0].mxu0
    %v1966 = vadd.f32 %v1882, %v1965
    %v1967 = vpop.f32.mrb[0].mxu0
    %1968 = vdwg.mxu0
    %s1969 = scalar_lea.vmem %s3, 384
    %v1970 = vld [vmem:[%s1969] sm:$0xff]
    %v1971 = vld [vmem:[%s1969 + $0x8] sm:$0xff]
    %v1972 = vld [vmem:[%s1969 + $0x10] sm:$0xff]
    %v1973 = vld [vmem:[%s1969 + $0x18] sm:$0xff]
    %v1974 = vld [vmem:[%s1969 + $0x20] sm:$0xff]
    %v1975 = vld [vmem:[%s1969 + $0x28] sm:$0xff]
    %v1976 = vld [vmem:[%s1969 + $0x30] sm:$0xff]
    %v1977 = vld [vmem:[%s1969 + $0x38] sm:$0xff]
    %v1978 = vld [vmem:[%s6 + $0x3] sm:$0x1]
    %v1979 = vlaneseq
    %v1980 = vshrl.u32 %v1979, 7
    %v1981 = vsub.s32 0, %v1980
    %v1982 = vrot.slane %v1978, %v1981
    %1984 = vrot.lane.b32.xlu0 %v1982, 96
    %v1985 = vpop.permute.xlu0 %1984
    %1987 = vmatprep.subr.mxu0 0.0
    %1988 = vmatpush1.msra.mxu0 %v1970
    %1989 = vmatprep.subr.mxu0 0.0
    %1990 = vmatpush1.msra.mxu0 %v1971
    %1991 = vmatprep.subr.mxu0 0.0
    %1992 = vmatpush1.msra.mxu0 %v1972
    %1993 = vmatprep.subr.mxu0 0.0
    %1994 = vmatpush1.msra.mxu0 %v1973
    %1995 = vmatprep.subr.mxu0 0.0
    %1996 = vmatpush1.msra.mxu0 %v1974
    %1997 = vmatprep.subr.mxu0 0.0
    %1998 = vmatpush1.msra.mxu0 %v1975
    %1999 = vmatprep.subr.mxu0 0.0
    %2000 = vmatpush1.msra.mxu0 %v1976
    %2001 = vmatprep.subr.mxu0 0.0
    %2002 = vmatpush1.msra.mxu0 %v1977
    %2003 = vmatprep.subr.mxu0 0.0
    %2004 = vmatpush1.msra.mxu0 0.0
    %2005 = vmatprep.subr.mxu0 0.0
    %2006 = vmatpush1.msra.mxu0 0.0
    %2007 = vmatprep.subr.mxu0 0.0
    %2008 = vmatpush1.msra.mxu0 0.0
    %2009 = vmatprep.subr.mxu0 0.0
    %2010 = vmatpush1.msra.mxu0 0.0
    %2011 = vmatprep.subr.mxu0 0.0
    %2012 = vmatpush1.msra.mxu0 0.0
    %2013 = vmatprep.subr.mxu0 0.0
    %2014 = vmatpush1.msra.mxu0 0.0
    %2015 = vmatprep.subr.mxu0 0.0
    %2016 = vmatpush1.msra.mxu0 0.0
    %2017 = vmatprep.subr.mxu0 0.0
    %2018 = vmatpush1.msra.mxu0 0.0
    %2019 = vmatprep.subr.mxu0 0.0
    %2020 = vmatpush1.msra.mxu0 0.0
    %2021 = vmatprep.subr.mxu0 0.0
    %2022 = vmatpush1.msra.mxu0 0.0
    %2023 = vmatprep.subr.mxu0 0.0
    %2024 = vmatpush1.msra.mxu0 0.0
    %2025 = vmatprep.subr.mxu0 0.0
    %2026 = vmatpush1.msra.mxu0 0.0
    %2027 = vmatprep.subr.mxu0 0.0
    %2028 = vmatpush1.msra.mxu0 0.0
    %2029 = vmatprep.subr.mxu0 0.0
    %2030 = vmatpush1.msra.mxu0 0.0
    %2031 = vmatprep.subr.mxu0 0.0
    %2032 = vmatpush1.msra.mxu0 0.0
    %2033 = vmatprep.subr.mxu0 0.0
    %2034 = vmatpush1.msra.mxu0 0.0
    %2035 = vmatprep.subr.mxu0 0.0
    %2036 = vmatpush1.msra.mxu0 0.0
    %2037 = vmatprep.subr.mxu0 0.0
    %2038 = vmatpush1.msra.mxu0 0.0
    %2039 = vmatprep.subr.mxu0 0.0
    %2040 = vmatpush1.msra.mxu0 0.0
    %2041 = vmatprep.subr.mxu0 0.0
    %2042 = vmatpush1.msra.mxu0 0.0
    %2043 = vmatprep.subr.mxu0 0.0
    %2044 = vmatpush1.msra.mxu0 0.0
    %2045 = vmatprep.subr.mxu0 0.0
    %2046 = vmatpush1.msra.mxu0 0.0
    %2047 = vmatprep.subr.mxu0 0.0
    %2048 = vmatpush1.msra.mxu0 0.0
    %2049 = vmatprep.subr.mxu0 0.0
    %2050 = vmatpush1.msra.mxu0 0.0
    %2051 = vmatprep.mubr.f32.mxu0 0.0
    %2052 = vmatmul.mubr.f32.gmra.mrb[0].mxu0 %v378
    %v2053 = vpop.f32.mrb[0].mxu0
    %v2054 = vadd.f32 %v1985, %v2053
    %v2055 = vpop.f32.mrb[0].mxu0
    %2056 = vmatprep.mubr.f32.mxu0 0.0
    %2057 = vmatmul.mubr.f32.gmra.mrb[0].mxu0 %v381
    %v2058 = vpop.f32.mrb[0].mxu0
    %v2059 = vadd.f32 %v1985, %v2058
    %v2060 = vpop.f32.mrb[0].mxu0
    %2061 = vmatprep.mubr.f32.mxu0 0.0
    %2062 = vmatmul.mubr.f32.gmra.mrb[0].mxu0 %v384
    %v2063 = vpop.f32.mrb[0].mxu0
    %v2064 = vadd.f32 %v1985, %v2063
    %v2065 = vpop.f32.mrb[0].mxu0
    %2066 = vmatprep.mubr.f32.mxu0 0.0
    %2067 = vmatmul.mubr.f32.gmra.mrb[0].mxu0 %v387
    %v2068 = vpop.f32.mrb[0].mxu0
    %v2069 = vadd.f32 %v1985, %v2068
    %v2070 = vpop.f32.mrb[0].mxu0
    %2071 = vdwg.mxu0
    %s2072 = scalar_lea.vmem %s3, 640
    %v2073 = vld [vmem:[%s2072] sm:$0xff]
    %v2074 = vld [vmem:[%s2072 + $0x8] sm:$0xff]
    %v2075 = vld [vmem:[%s2072 + $0x10] sm:$0xff]
    %v2076 = vld [vmem:[%s2072 + $0x18] sm:$0xff]
    %v2077 = vld [vmem:[%s2072 + $0x20] sm:$0xff]
    %v2078 = vld [vmem:[%s2072 + $0x28] sm:$0xff]
    %v2079 = vld [vmem:[%s2072 + $0x30] sm:$0xff]
    %v2080 = vld [vmem:[%s2072 + $0x38] sm:$0xff]
    %v2081 = vld [vmem:[%s6 + $0x4] sm:$0x1]
    %v2082 = vlaneseq
    %v2083 = vshrl.u32 %v2082, 7
    %v2084 = vsub.s32 0, %v2083
    %v2085 = vrot.slane %v2081, %v2084
    %2087 = vrot.lane.b32.xlu0 %v2085, 96
    %v2088 = vpop.permute.xlu0 %2087
    %2090 = vmatprep.subr.mxu0 0.0
    %2091 = vmatpush1.msra.mxu0 %v2073
    %2092 = vmatprep.subr.mxu0 0.0
    %2093 = vmatpush1.msra.mxu0 %v2074
    %2094 = vmatprep.subr.mxu0 0.0
    %2095 = vmatpush1.msra.mxu0 %v2075
    %2096 = vmatprep.subr.mxu0 0.0
    %2097 = vmatpush1.msra.mxu0 %v2076
    %2098 = vmatprep.subr.mxu0 0.0
    %2099 = vmatpush1.msra.mxu0 %v2077
    %2100 = vmatprep.subr.mxu0 0.0
    %2101 = vmatpush1.msra.mxu0 %v2078
    %2102 = vmatprep.subr.mxu0 0.0
    %2103 = vmatpush1.msra.mxu0 %v2079
    %2104 = vmatprep.subr.mxu0 0.0
    %2105 = vmatpush1.msra.mxu0 %v2080
    %2106 = vmatprep.subr.mxu0 0.0
    %2107 = vmatpush1.msra.mxu0 0.0
    %2108 = vmatprep.subr.mxu0 0.0
    %2109 = vmatpush1.msra.mxu0 0.0
    %2110 = vmatprep.subr.mxu0 0.0
    %2111 = vmatpush1.msra.mxu0 0.0
    %2112 = vmatprep.subr.mxu0 0.0
    %2113 = vmatpush1.msra.mxu0 0.0
    %2114 = vmatprep.subr.mxu0 0.0
    %2115 = vmatpush1.msra.mxu0 0.0
    %2116 = vmatprep.subr.mxu0 0.0
    %2117 = vmatpush1.msra.mxu0 0.0
    %2118 = vmatprep.subr.mxu0 0.0
    %2119 = vmatpush1.msra.mxu0 0.0
    %2120 = vmatprep.subr.mxu0 0.0
    %2121 = vmatpush1.msra.mxu0 0.0
    %2122 = vmatprep.subr.mxu0 0.0
    %2123 = vmatpush1.msra.mxu0 0.0
    %2124 = vmatprep.subr.mxu0 0.0
    %2125 = vmatpush1.msra.mxu0 0.0
    %2126 = vmatprep.subr.mxu0 0.0
    %2127 = vmatpush1.msra.mxu0 0.0
    %2128 = vmatprep.subr.mxu0 0.0
    %2129 = vmatpush1.msra.mxu0 0.0
    %2130 = vmatprep.subr.mxu0 0.0
    %2131 = vmatpush1.msra.mxu0 0.0
    %2132 = vmatprep.subr.mxu0 0.0
    %2133 = vmatpush1.msra.mxu0 0.0
    %2134 = vmatprep.subr.mxu0 0.0
    %2135 = vmatpush1.msra.mxu0 0.0
    %2136 = vmatprep.subr.mxu0 0.0
    %2137 = vmatpush1.msra.mxu0 0.0
    %2138 = vmatprep.subr.mxu0 0.0
    %2139 = vmatpush1.msra.mxu0 0.0
    %2140 = vmatprep.subr.mxu0 0.0
    %2141 = vmatpush1.msra.mxu0 0.0
    %2142 = vmatprep.subr.mxu0 0.0
    %2143 = vmatpush1.msra.mxu0 0.0
    %2144 = vmatprep.subr.mxu0 0.0
    %2145 = vmatpush1.msra.mxu0 0.0
    %2146 = vmatprep.subr.mxu0 0.0
    %2147 = vmatpush1.msra.mxu0 0.0
    %2148 = vmatprep.subr.mxu0 0.0
    %2149 = vmatpush1.msra.mxu0 0.0
    %2150 = vmatprep.subr.mxu0 0.0
    %2151 = vmatpush1.msra.mxu0 0.0
    %2152 = vmatprep.subr.mxu0 0.0
    %2153 = vmatpush1.msra.mxu0 0.0
    %2154 = vmatprep.mubr.f32.mxu0 0.0
    %2155 = vmatmul.mubr.f32.gmra.mrb[0].mxu0 %v378
    %v2156 = vpop.f32.mrb[0].mxu0
    %v2157 = vadd.f32 %v2088, %v2156
    %v2158 = vpop.f32.mrb[0].mxu0
    %2159 = vmatprep.mubr.f32.mxu0 0.0
    %2160 = vmatmul.mubr.f32.gmra.mrb[0].mxu0 %v381
    %v2161 = vpop.f32.mrb[0].mxu0
    %v2162 = vadd.f32 %v2088, %v2161
    %v2163 = vpop.f32.mrb[0].mxu0
    %2164 = vmatprep.mubr.f32.mxu0 0.0
    %2165 = vmatmul.mubr.f32.gmra.mrb[0].mxu0 %v384
    %v2166 = vpop.f32.mrb[0].mxu0
    %v2167 = vadd.f32 %v2088, %v2166
    %v2168 = vpop.f32.mrb[0].mxu0
    %2169 = vmatprep.mubr.f32.mxu0 0.0
    %2170 = vmatmul.mubr.f32.gmra.mrb[0].mxu0 %v387
    %v2171 = vpop.f32.mrb[0].mxu0
    %v2172 = vadd.f32 %v2088, %v2171
    %v2173 = vpop.f32.mrb[0].mxu0
    %2174 = vdwg.mxu0
    %v2176 = vsel %vm573, %v1951, 0
    %v2179 = vsel %vm573, %v1956, 0
    %v2182 = vsel %vm573, %v2054, 0
    %v2185 = vsel %vm573, %v2059, 0
    %2187 = vmatprep.subr.mxu0 0.0
    %2188 = vmatpush1.xpose.msra.mxu0 %v2182
    %2189 = vmatprep.subr.mxu0 0.0
    %2190 = vmatpush1.xpose.msra.mxu0 %v2185
    %2191 = vmatprep.subr.mxu0 0.0
    %2192 = vmatpush1.xpose.msra.mxu0 0.0
    %2193 = vmatprep.subr.mxu0 0.0
    %2194 = vmatpush1.xpose.msra.mxu0 0.0
    %2195 = vmatprep.subr.mxu0 0.0
    %2196 = vmatpush1.xpose.msra.mxu0 0.0
    %2197 = vmatprep.subr.mxu0 0.0
    %2198 = vmatpush1.xpose.msra.mxu0 0.0
    %2199 = vmatprep.subr.mxu0 0.0
    %2200 = vmatpush1.xpose.msra.mxu0 0.0
    %2201 = vmatprep.subr.mxu0 0.0
    %2202 = vmatpush1.xpose.msra.mxu0 0.0
    %2203 = vmatprep.subr.mxu0 0.0
    %2204 = vmatpush1.xpose.msra.mxu0 0.0
    %2205 = vmatprep.subr.mxu0 0.0
    %2206 = vmatpush1.xpose.msra.mxu0 0.0
    %2207 = vmatprep.subr.mxu0 0.0
    %2208 = vmatpush1.xpose.msra.mxu0 0.0
    %2209 = vmatprep.subr.mxu0 0.0
    %2210 = vmatpush1.xpose.msra.mxu0 0.0
    %2211 = vmatprep.subr.mxu0 0.0
    %2212 = vmatpush1.xpose.msra.mxu0 0.0
    %2213 = vmatprep.subr.mxu0 0.0
    %2214 = vmatpush1.xpose.msra.mxu0 0.0
    %2215 = vmatprep.subr.mxu0 0.0
    %2216 = vmatpush1.xpose.msra.mxu0 0.0
    %2217 = vmatprep.subr.mxu0 0.0
    %2218 = vmatpush1.xpose.msra.mxu0 0.0
    %2219 = vmatprep.subr.mxu0 0.0
    %2220 = vmatpush1.xpose.msra.mxu0 0.0
    %2221 = vmatprep.subr.mxu0 0.0
    %2222 = vmatpush1.xpose.msra.mxu0 0.0
    %2223 = vmatprep.subr.mxu0 0.0
    %2224 = vmatpush1.xpose.msra.mxu0 0.0
    %2225 = vmatprep.subr.mxu0 0.0
    %2226 = vmatpush1.xpose.msra.mxu0 0.0
    %2227 = vmatprep.subr.mxu0 0.0
    %2228 = vmatpush1.xpose.msra.mxu0 0.0
    %2229 = vmatprep.subr.mxu0 0.0
    %2230 = vmatpush1.xpose.msra.mxu0 0.0
    %2231 = vmatprep.subr.mxu0 0.0
    %2232 = vmatpush1.xpose.msra.mxu0 0.0
    %2233 = vmatprep.subr.mxu0 0.0
    %2234 = vmatpush1.xpose.msra.mxu0 0.0
    %2235 = vmatprep.subr.mxu0 0.0
    %2236 = vmatpush1.xpose.msra.mxu0 0.0
    %2237 = vmatprep.subr.mxu0 0.0
    %2238 = vmatpush1.xpose.msra.mxu0 0.0
    %2239 = vmatprep.subr.mxu0 0.0
    %2240 = vmatpush1.xpose.msra.mxu0 0.0
    %2241 = vmatprep.subr.mxu0 0.0
    %2242 = vmatpush1.xpose.msra.mxu0 0.0
    %2243 = vmatprep.subr.mxu0 0.0
    %2244 = vmatpush1.xpose.msra.mxu0 0.0
    %2245 = vmatprep.subr.mxu0 0.0
    %2246 = vmatpush1.xpose.msra.mxu0 0.0
    %2247 = vmatprep.subr.mxu0 0.0
    %2248 = vmatpush1.xpose.msra.mxu0 0.0
    %2249 = vmatprep.subr.mxu0 0.0
    %2250 = vmatpush1.xpose.msra.mxu0 0.0
    %2251 = vmatprep.mubr.f32.mxu0 0.0
    %2252 = vmatmul.mubr.f32.gmra.mrb[0].mxu0 %v2176
    %v2253 = vpop.f32.mrb[0].mxu0
    %v2254 = vadd.f32 0.0, %v2253
    %v2255 = vpop.f32.mrb[0].mxu0
    %2256 = vmatprep.mubr.f32.mxu0 0.0
    %2257 = vmatmul.mubr.f32.gmra.mrb[0].mxu0 %v2179
    %v2258 = vpop.f32.mrb[0].mxu0
    %v2259 = vadd.f32 0.0, %v2258
    %v2260 = vpop.f32.mrb[0].mxu0
    %2261 = vdwg.mxu0
    %v2263 = vsel %vm573, %v1961, 0
    %v2266 = vsel %vm573, %v1966, 0
    %v2269 = vsel %vm573, %v2064, 0
    %v2272 = vsel %vm573, %v2069, 0
    %2274 = vmatprep.subr.mxu0 0.0
    %2275 = vmatpush1.xpose.msra.mxu0 %v2269
    %2276 = vmatprep.subr.mxu0 0.0
    %2277 = vmatpush1.xpose.msra.mxu0 %v2272
    %2278 = vmatprep.subr.mxu0 0.0
    %2279 = vmatpush1.xpose.msra.mxu0 0.0
    %2280 = vmatprep.subr.mxu0 0.0
    %2281 = vmatpush1.xpose.msra.mxu0 0.0
    %2282 = vmatprep.subr.mxu0 0.0
    %2283 = vmatpush1.xpose.msra.mxu0 0.0
    %2284 = vmatprep.subr.mxu0 0.0
    %2285 = vmatpush1.xpose.msra.mxu0 0.0
    %2286 = vmatprep.subr.mxu0 0.0
    %2287 = vmatpush1.xpose.msra.mxu0 0.0
    %2288 = vmatprep.subr.mxu0 0.0
    %2289 = vmatpush1.xpose.msra.mxu0 0.0
    %2290 = vmatprep.subr.mxu0 0.0
    %2291 = vmatpush1.xpose.msra.mxu0 0.0
    %2292 = vmatprep.subr.mxu0 0.0
    %2293 = vmatpush1.xpose.msra.mxu0 0.0
    %2294 = vmatprep.subr.mxu0 0.0
    %2295 = vmatpush1.xpose.msra.mxu0 0.0
    %2296 = vmatprep.subr.mxu0 0.0
    %2297 = vmatpush1.xpose.msra.mxu0 0.0
    %2298 = vmatprep.subr.mxu0 0.0
    %2299 = vmatpush1.xpose.msra.mxu0 0.0
    %2300 = vmatprep.subr.mxu0 0.0
    %2301 = vmatpush1.xpose.msra.mxu0 0.0
    %2302 = vmatprep.subr.mxu0 0.0
    %2303 = vmatpush1.xpose.msra.mxu0 0.0
    %2304 = vmatprep.subr.mxu0 0.0
    %2305 = vmatpush1.xpose.msra.mxu0 0.0
    %2306 = vmatprep.subr.mxu0 0.0
    %2307 = vmatpush1.xpose.msra.mxu0 0.0
    %2308 = vmatprep.subr.mxu0 0.0
    %2309 = vmatpush1.xpose.msra.mxu0 0.0
    %2310 = vmatprep.subr.mxu0 0.0
    %2311 = vmatpush1.xpose.msra.mxu0 0.0
    %2312 = vmatprep.subr.mxu0 0.0
    %2313 = vmatpush1.xpose.msra.mxu0 0.0
    %2314 = vmatprep.subr.mxu0 0.0
    %2315 = vmatpush1.xpose.msra.mxu0 0.0
    %2316 = vmatprep.subr.mxu0 0.0
    %2317 = vmatpush1.xpose.msra.mxu0 0.0
    %2318 = vmatprep.subr.mxu0 0.0
    %2319 = vmatpush1.xpose.msra.mxu0 0.0
    %2320 = vmatprep.subr.mxu0 0.0
    %2321 = vmatpush1.xpose.msra.mxu0 0.0
    %2322 = vmatprep.subr.mxu0 0.0
    %2323 = vmatpush1.xpose.msra.mxu0 0.0
    %2324 = vmatprep.subr.mxu0 0.0
    %2325 = vmatpush1.xpose.msra.mxu0 0.0
    %2326 = vmatprep.subr.mxu0 0.0
    %2327 = vmatpush1.xpose.msra.mxu0 0.0
    %2328 = vmatprep.subr.mxu0 0.0
    %2329 = vmatpush1.xpose.msra.mxu0 0.0
    %2330 = vmatprep.subr.mxu0 0.0
    %2331 = vmatpush1.xpose.msra.mxu0 0.0
    %2332 = vmatprep.subr.mxu0 0.0
    %2333 = vmatpush1.xpose.msra.mxu0 0.0
    %2334 = vmatprep.subr.mxu0 0.0
    %2335 = vmatpush1.xpose.msra.mxu0 0.0
    %2336 = vmatprep.subr.mxu0 0.0
    %2337 = vmatpush1.xpose.msra.mxu0 0.0
    %2338 = vmatprep.mubr.f32.mxu0 0.0
    %2339 = vmatmul.mubr.f32.gmra.mrb[0].mxu0 %v2263
    %v2340 = vpop.f32.mrb[0].mxu0
    %v2341 = vadd.f32 0.0, %v2340
    %v2342 = vpop.f32.mrb[0].mxu0
    %2343 = vmatprep.mubr.f32.mxu0 0.0
    %2344 = vmatmul.mubr.f32.gmra.mrb[0].mxu0 %v2266
    %v2345 = vpop.f32.mrb[0].mxu0
    %v2346 = vadd.f32 0.0, %v2345
    %v2347 = vpop.f32.mrb[0].mxu0
    %2348 = vdwg.mxu0
    %v2349 = vmul.f32 %v2254, 0.25
    %v2350 = vmul.f32 %v2259, 0.25
    %v2351 = vmul.f32 %v2341, 0.25
    %v2352 = vmul.f32 %v2346, 0.25
    %v2353 = vadd.f32 %v2349, %v179
    %v2354 = vadd.f32 %v2350, %v180
    %v2355 = vadd.f32 %v2351, %v179
    %v2356 = vadd.f32 %v2352, %v180
    %v2357 = vsel %vm573, %v2353, -inf
    %2358 = vmax.xlane.f32.xlu0 %v2357
    %v2359 = vpop.xlane.xlu0 %2358
    %v2360 = vsel %vm573, %v2354, -inf
    %2361 = vmax.xlane.f32.xlu0 %v2360
    %v2362 = vpop.xlane.xlu0 %2361
    %v2363 = vsel %vm573, %v2355, -inf
    %2364 = vmax.xlane.f32.xlu0 %v2363
    %v2365 = vpop.xlane.xlu0 %2364
    %v2366 = vsel %vm573, %v2356, -inf
    %2367 = vmax.xlane.f32.xlu0 %v2366
    %v2368 = vpop.xlane.xlu0 %2367
    %v2369 = vsub.f32 %v2353, %v2359
    %v2370 = vsub.f32 %v2354, %v2362
    %v2371 = vsub.f32 %v2355, %v2365
    %v2372 = vsub.f32 %v2356, %v2368
    %v2373 = vmul.f32 %v2369, 1.442695
    %v2374 = vpow.pop %v2373
    %v2375 = vmul.f32 %v2370, 1.442695
    %v2376 = vpow.pop %v2375
    %v2377 = vmul.f32 %v2371, 1.442695
    %v2378 = vpow.pop %v2377
    %v2379 = vmul.f32 %v2372, 1.442695
    %v2380 = vpow.pop %v2379
    %v2381 = vsel %vm573, %v2374, 0.0
    %2382 = vadd.xlane.f32.xlu0 %v2381
    %v2383 = vpop.xlane.xlu0 %2382
    %v2384 = vsel %vm573, %v2376, 0.0
    %2385 = vadd.xlane.f32.xlu0 %v2384
    %v2386 = vpop.xlane.xlu0 %2385
    %v2387 = vsel %vm573, %v2378, 0.0
    %2388 = vadd.xlane.f32.xlu0 %v2387
    %v2389 = vpop.xlane.xlu0 %2388
    %v2390 = vsel %vm573, %v2380, 0.0
    %2391 = vadd.xlane.f32.xlu0 %v2390
    %v2392 = vpop.xlane.xlu0 %2391
    %v2393 = vrcp.pop %v2383
    %v2394 = vrcp.pop %v2386
    %v2395 = vrcp.pop %v2389
    %v2396 = vrcp.pop %v2392
    %v2397 = vmul.f32 %v2374, %v2393
    %v2398 = vmul.f32 %v2376, %v2394
    %v2399 = vmul.f32 %v2378, %v2395
    %v2400 = vmul.f32 %v2380, %v2396
    %v2401 = vadd.f32 %v1503, %v2397
    %v2402 = vadd.f32 %v1504, %v2398
    %v2403 = vadd.f32 %v1505, %v2399
    %v2404 = vadd.f32 %v1506, %v2400
    %v2406 = vsel %vm573, %v2397, 0
    %v2409 = vsel %vm573, %v2398, 0
    %2411 = vmatprep.subr.mxu0 0.0
    %2412 = vmatpush1.msra.mxu0 %v2157
    %2413 = vmatprep.subr.mxu0 0.0
    %2414 = vmatpush1.msra.mxu0 %v2162
    %2415 = vmatprep.subr.mxu0 0.0
    %2416 = vmatpush1.msra.mxu0 0.0
    %2417 = vmatprep.subr.mxu0 0.0
    %2418 = vmatpush1.msra.mxu0 0.0
    %2419 = vmatprep.subr.mxu0 0.0
    %2420 = vmatpush1.msra.mxu0 0.0
    %2421 = vmatprep.subr.mxu0 0.0
    %2422 = vmatpush1.msra.mxu0 0.0
    %2423 = vmatprep.subr.mxu0 0.0
    %2424 = vmatpush1.msra.mxu0 0.0
    %2425 = vmatprep.subr.mxu0 0.0
    %2426 = vmatpush1.msra.mxu0 0.0
    %2427 = vmatprep.subr.mxu0 0.0
    %2428 = vmatpush1.msra.mxu0 0.0
    %2429 = vmatprep.subr.mxu0 0.0
    %2430 = vmatpush1.msra.mxu0 0.0
    %2431 = vmatprep.subr.mxu0 0.0
    %2432 = vmatpush1.msra.mxu0 0.0
    %2433 = vmatprep.subr.mxu0 0.0
    %2434 = vmatpush1.msra.mxu0 0.0
    %2435 = vmatprep.subr.mxu0 0.0
    %2436 = vmatpush1.msra.mxu0 0.0
    %2437 = vmatprep.subr.mxu0 0.0
    %2438 = vmatpush1.msra.mxu0 0.0
    %2439 = vmatprep.subr.mxu0 0.0
    %2440 = vmatpush1.msra.mxu0 0.0
    %2441 = vmatprep.subr.mxu0 0.0
    %2442 = vmatpush1.msra.mxu0 0.0
    %2443 = vmatprep.subr.mxu0 0.0
    %2444 = vmatpush1.msra.mxu0 0.0
    %2445 = vmatprep.subr.mxu0 0.0
    %2446 = vmatpush1.msra.mxu0 0.0
    %2447 = vmatprep.subr.mxu0 0.0
    %2448 = vmatpush1.msra.mxu0 0.0
    %2449 = vmatprep.subr.mxu0 0.0
    %2450 = vmatpush1.msra.mxu0 0.0
    %2451 = vmatprep.subr.mxu0 0.0
    %2452 = vmatpush1.msra.mxu0 0.0
    %2453 = vmatprep.subr.mxu0 0.0
    %2454 = vmatpush1.msra.mxu0 0.0
    %2455 = vmatprep.subr.mxu0 0.0
    %2456 = vmatpush1.msra.mxu0 0.0
    %2457 = vmatprep.subr.mxu0 0.0
    %2458 = vmatpush1.msra.mxu0 0.0
    %2459 = vmatprep.subr.mxu0 0.0
    %2460 = vmatpush1.msra.mxu0 0.0
    %2461 = vmatprep.subr.mxu0 0.0
    %2462 = vmatpush1.msra.mxu0 0.0
    %2463 = vmatprep.subr.mxu0 0.0
    %2464 = vmatpush1.msra.mxu0 0.0
    %2465 = vmatprep.subr.mxu0 0.0
    %2466 = vmatpush1.msra.mxu0 0.0
    %2467 = vmatprep.subr.mxu0 0.0
    %2468 = vmatpush1.msra.mxu0 0.0
    %2469 = vmatprep.subr.mxu0 0.0
    %2470 = vmatpush1.msra.mxu0 0.0
    %2471 = vmatprep.subr.mxu0 0.0
    %2472 = vmatpush1.msra.mxu0 0.0
    %2473 = vmatprep.subr.mxu0 0.0
    %2474 = vmatpush1.msra.mxu0 0.0
    %2475 = vmatprep.mubr.f32.mxu0 0.0
    %2476 = vmatmul.mubr.f32.gmra.mrb[0].mxu0 %v2406
    %v2477 = vpop.f32.mrb[0].mxu0
    %v2478 = vadd.f32 0.0, %v2477
    %v2479 = vpop.f32.mrb[0].mxu0
    %2480 = vmatprep.mubr.f32.mxu0 0.0
    %2481 = vmatmul.mubr.f32.gmra.mrb[0].mxu0 %v2409
    %v2482 = vpop.f32.mrb[0].mxu0
    %v2483 = vadd.f32 0.0, %v2482
    %v2484 = vpop.f32.mrb[0].mxu0
    %2485 = vdwg.mxu0
    %v2487 = vsel %vm573, %v2399, 0
    %v2490 = vsel %vm573, %v2400, 0
    %2492 = vmatprep.subr.mxu0 0.0
    %2493 = vmatpush1.msra.mxu0 %v2167
    %2494 = vmatprep.subr.mxu0 0.0
    %2495 = vmatpush1.msra.mxu0 %v2172
    %2496 = vmatprep.subr.mxu0 0.0
    %2497 = vmatpush1.msra.mxu0 0.0
    %2498 = vmatprep.subr.mxu0 0.0
    %2499 = vmatpush1.msra.mxu0 0.0
    %2500 = vmatprep.subr.mxu0 0.0
    %2501 = vmatpush1.msra.mxu0 0.0
    %2502 = vmatprep.subr.mxu0 0.0
    %2503 = vmatpush1.msra.mxu0 0.0
    %2504 = vmatprep.subr.mxu0 0.0
    %2505 = vmatpush1.msra.mxu0 0.0
    %2506 = vmatprep.subr.mxu0 0.0
    %2507 = vmatpush1.msra.mxu0 0.0
    %2508 = vmatprep.subr.mxu0 0.0
    %2509 = vmatpush1.msra.mxu0 0.0
    %2510 = vmatprep.subr.mxu0 0.0
    %2511 = vmatpush1.msra.mxu0 0.0
    %2512 = vmatprep.subr.mxu0 0.0
    %2513 = vmatpush1.msra.mxu0 0.0
    %2514 = vmatprep.subr.mxu0 0.0
    %2515 = vmatpush1.msra.mxu0 0.0
    %2516 = vmatprep.subr.mxu0 0.0
    %2517 = vmatpush1.msra.mxu0 0.0
    %2518 = vmatprep.subr.mxu0 0.0
    %2519 = vmatpush1.msra.mxu0 0.0
    %2520 = vmatprep.subr.mxu0 0.0
    %2521 = vmatpush1.msra.mxu0 0.0
    %2522 = vmatprep.subr.mxu0 0.0
    %2523 = vmatpush1.msra.mxu0 0.0
    %2524 = vmatprep.subr.mxu0 0.0
    %2525 = vmatpush1.msra.mxu0 0.0
    %2526 = vmatprep.subr.mxu0 0.0
    %2527 = vmatpush1.msra.mxu0 0.0
    %2528 = vmatprep.subr.mxu0 0.0
    %2529 = vmatpush1.msra.mxu0 0.0
    %2530 = vmatprep.subr.mxu0 0.0
    %2531 = vmatpush1.msra.mxu0 0.0
    %2532 = vmatprep.subr.mxu0 0.0
    %2533 = vmatpush1.msra.mxu0 0.0
    %2534 = vmatprep.subr.mxu0 0.0
    %2535 = vmatpush1.msra.mxu0 0.0
    %2536 = vmatprep.subr.mxu0 0.0
    %2537 = vmatpush1.msra.mxu0 0.0
    %2538 = vmatprep.subr.mxu0 0.0
    %2539 = vmatpush1.msra.mxu0 0.0
    %2540 = vmatprep.subr.mxu0 0.0
    %2541 = vmatpush1.msra.mxu0 0.0
    %2542 = vmatprep.subr.mxu0 0.0
    %2543 = vmatpush1.msra.mxu0 0.0
    %2544 = vmatprep.subr.mxu0 0.0
    %2545 = vmatpush1.msra.mxu0 0.0
    %2546 = vmatprep.subr.mxu0 0.0
    %2547 = vmatpush1.msra.mxu0 0.0
    %2548 = vmatprep.subr.mxu0 0.0
    %2549 = vmatpush1.msra.mxu0 0.0
    %2550 = vmatprep.subr.mxu0 0.0
    %2551 = vmatpush1.msra.mxu0 0.0
    %2552 = vmatprep.subr.mxu0 0.0
    %2553 = vmatpush1.msra.mxu0 0.0
    %2554 = vmatprep.subr.mxu0 0.0
    %2555 = vmatpush1.msra.mxu0 0.0
    %2556 = vmatprep.mubr.f32.mxu0 0.0
    %2557 = vmatmul.mubr.f32.gmra.mrb[0].mxu0 %v2487
    %v2558 = vpop.f32.mrb[0].mxu0
    %v2559 = vadd.f32 0.0, %v2558
    %v2560 = vpop.f32.mrb[0].mxu0
    %2561 = vmatprep.mubr.f32.mxu0 0.0
    %2562 = vmatmul.mubr.f32.gmra.mrb[0].mxu0 %v2490
    %v2563 = vpop.f32.mrb[0].mxu0
    %v2564 = vadd.f32 0.0, %v2563
    %v2565 = vpop.f32.mrb[0].mxu0
    %2566 = vdwg.mxu0
    %s2567 = scalar_lea.vmem %s4, 32
    %v2568 = vld [vmem:[%s2567] sm:$0xff]
    %v2569 = vld [vmem:[%s2567 + $0x8] sm:$0xff]
    %v2571 = vsel %vm573, %v2478, 0
    %v2574 = vsel %vm573, %v2483, 0
    %v2577 = vsel %vm573, %v2559, 0
    %v2580 = vsel %vm573, %v2564, 0
    %2582 = vmatprep.subr.mxu0 0.0
    %2583 = vmatpush1.msra.mxu0 %v2568
    %2584 = vmatprep.subr.mxu0 0.0
    %2585 = vmatpush1.msra.mxu0 %v2569
    %2586 = vmatprep.subr.mxu0 0.0
    %2587 = vmatpush1.msra.mxu0 0.0
    %2588 = vmatprep.subr.mxu0 0.0
    %2589 = vmatpush1.msra.mxu0 0.0
    %2590 = vmatprep.subr.mxu0 0.0
    %2591 = vmatpush1.msra.mxu0 0.0
    %2592 = vmatprep.subr.mxu0 0.0
    %2593 = vmatpush1.msra.mxu0 0.0
    %2594 = vmatprep.subr.mxu0 0.0
    %2595 = vmatpush1.msra.mxu0 0.0
    %2596 = vmatprep.subr.mxu0 0.0
    %2597 = vmatpush1.msra.mxu0 0.0
    %2598 = vmatprep.subr.mxu0 0.0
    %2599 = vmatpush1.msra.mxu0 0.0
    %2600 = vmatprep.subr.mxu0 0.0
    %2601 = vmatpush1.msra.mxu0 0.0
    %2602 = vmatprep.subr.mxu0 0.0
    %2603 = vmatpush1.msra.mxu0 0.0
    %2604 = vmatprep.subr.mxu0 0.0
    %2605 = vmatpush1.msra.mxu0 0.0
    %2606 = vmatprep.subr.mxu0 0.0
    %2607 = vmatpush1.msra.mxu0 0.0
    %2608 = vmatprep.subr.mxu0 0.0
    %2609 = vmatpush1.msra.mxu0 0.0
    %2610 = vmatprep.subr.mxu0 0.0
    %2611 = vmatpush1.msra.mxu0 0.0
    %2612 = vmatprep.subr.mxu0 0.0
    %2613 = vmatpush1.msra.mxu0 0.0
    %2614 = vmatprep.subr.mxu0 0.0
    %2615 = vmatpush1.msra.mxu0 0.0
    %2616 = vmatprep.subr.mxu0 0.0
    %2617 = vmatpush1.msra.mxu0 0.0
    %2618 = vmatprep.subr.mxu0 0.0
    %2619 = vmatpush1.msra.mxu0 0.0
    %2620 = vmatprep.subr.mxu0 0.0
    %2621 = vmatpush1.msra.mxu0 0.0
    %2622 = vmatprep.subr.mxu0 0.0
    %2623 = vmatpush1.msra.mxu0 0.0
    %2624 = vmatprep.subr.mxu0 0.0
    %2625 = vmatpush1.msra.mxu0 0.0
    %2626 = vmatprep.subr.mxu0 0.0
    %2627 = vmatpush1.msra.mxu0 0.0
    %2628 = vmatprep.subr.mxu0 0.0
    %2629 = vmatpush1.msra.mxu0 0.0
    %2630 = vmatprep.subr.mxu0 0.0
    %2631 = vmatpush1.msra.mxu0 0.0
    %2632 = vmatprep.subr.mxu0 0.0
    %2633 = vmatpush1.msra.mxu0 0.0
    %2634 = vmatprep.subr.mxu0 0.0
    %2635 = vmatpush1.msra.mxu0 0.0
    %2636 = vmatprep.subr.mxu0 0.0
    %2637 = vmatpush1.msra.mxu0 0.0
    %2638 = vmatprep.subr.mxu0 0.0
    %2639 = vmatpush1.msra.mxu0 0.0
    %2640 = vmatprep.subr.mxu0 0.0
    %2641 = vmatpush1.msra.mxu0 0.0
    %2642 = vmatprep.subr.mxu0 0.0
    %2643 = vmatpush1.msra.mxu0 0.0
    %2644 = vmatprep.subr.mxu0 0.0
    %2645 = vmatpush1.msra.mxu0 0.0
    %2646 = vmatprep.mubr.f32.mxu0 0.0
    %2647 = vmatmul.mubr.f32.gmra.mrb[0].mxu0 %v2571
    %v2648 = vpop.f32.mrb[0].mxu0
    %v2649 = vadd.f32 0.0, %v2648
    %v2650 = vpop.f32.mrb[0].mxu0
    %2651 = vmatprep.mubr.f32.mxu0 0.0
    %2652 = vmatmul.mubr.f32.gmra.mrb[0].mxu0 %v2574
    %v2653 = vpop.f32.mrb[0].mxu0
    %v2654 = vadd.f32 0.0, %v2653
    %v2655 = vpop.f32.mrb[0].mxu0
    %2656 = vmatprep.mubr.f32.mxu0 0.0
    %2657 = vmatmul.mubr.f32.gmra.mrb[0].mxu0 %v2577
    %v2658 = vpop.f32.mrb[0].mxu0
    %v2659 = vadd.f32 0.0, %v2658
    %v2660 = vpop.f32.mrb[0].mxu0
    %2661 = vmatprep.mubr.f32.mxu0 0.0
    %2662 = vmatmul.mubr.f32.gmra.mrb[0].mxu0 %v2580
    %v2663 = vpop.f32.mrb[0].mxu0
    %v2664 = vadd.f32 0.0, %v2663
    %v2665 = vpop.f32.mrb[0].mxu0
    %2666 = vdwg.mxu0
    %v2667 = vadd.f32 %v1848, %v2649
    %v2668 = vadd.f32 %v1853, %v2654
    %v2669 = vadd.f32 %v1858, %v2659
    %v2670 = vadd.f32 %v1863, %v2664
    %s2671 = scalar_lea.vmem %s3, 192
    %v2672 = vld [vmem:[%s2671] sm:$0xff]
    %v2673 = vld [vmem:[%s2671 + $0x8] sm:$0xff]
    %v2674 = vld [vmem:[%s2671 + $0x10] sm:$0xff]
    %v2675 = vld [vmem:[%s2671 + $0x18] sm:$0xff]
    %v2676 = vld [vmem:[%s2671 + $0x20] sm:$0xff]
    %v2677 = vld [vmem:[%s2671 + $0x28] sm:$0xff]
    %v2678 = vld [vmem:[%s2671 + $0x30] sm:$0xff]
    %v2679 = vld [vmem:[%s2671 + $0x38] sm:$0xff]
    %v2680 = vld [vmem:[%s6 + $0x2] sm:$0x1]
    %v2681 = vlaneseq
    %v2682 = vshrl.u32 %v2681, 7
    %v2683 = vsub.s32 0, %v2682
    %v2684 = vrot.slane %v2680, %v2683
    %2686 = vrot.lane.b32.xlu0 %v2684, 80
    %v2687 = vpop.permute.xlu0 %2686
    %2689 = vmatprep.subr.mxu0 0.0
    %2690 = vmatpush1.msra.mxu0 %v2672
    %2691 = vmatprep.subr.mxu0 0.0
    %2692 = vmatpush1.msra.mxu0 %v2673
    %2693 = vmatprep.subr.mxu0 0.0
    %2694 = vmatpush1.msra.mxu0 %v2674
    %2695 = vmatprep.subr.mxu0 0.0
    %2696 = vmatpush1.msra.mxu0 %v2675
    %2697 = vmatprep.subr.mxu0 0.0
    %2698 = vmatpush1.msra.mxu0 %v2676
    %2699 = vmatprep.subr.mxu0 0.0
    %2700 = vmatpush1.msra.mxu0 %v2677
    %2701 = vmatprep.subr.mxu0 0.0
    %2702 = vmatpush1.msra.mxu0 %v2678
    %2703 = vmatprep.subr.mxu0 0.0
    %2704 = vmatpush1.msra.mxu0 %v2679
    %2705 = vmatprep.subr.mxu0 0.0
    %2706 = vmatpush1.msra.mxu0 0.0
    %2707 = vmatprep.subr.mxu0 0.0
    %2708 = vmatpush1.msra.mxu0 0.0
    %2709 = vmatprep.subr.mxu0 0.0
    %2710 = vmatpush1.msra.mxu0 0.0
    %2711 = vmatprep.subr.mxu0 0.0
    %2712 = vmatpush1.msra.mxu0 0.0
    %2713 = vmatprep.subr.mxu0 0.0
    %2714 = vmatpush1.msra.mxu0 0.0
    %2715 = vmatprep.subr.mxu0 0.0
    %2716 = vmatpush1.msra.mxu0 0.0
    %2717 = vmatprep.subr.mxu0 0.0
    %2718 = vmatpush1.msra.mxu0 0.0
    %2719 = vmatprep.subr.mxu0 0.0
    %2720 = vmatpush1.msra.mxu0 0.0
    %2721 = vmatprep.subr.mxu0 0.0
    %2722 = vmatpush1.msra.mxu0 0.0
    %2723 = vmatprep.subr.mxu0 0.0
    %2724 = vmatpush1.msra.mxu0 0.0
    %2725 = vmatprep.subr.mxu0 0.0
    %2726 = vmatpush1.msra.mxu0 0.0
    %2727 = vmatprep.subr.mxu0 0.0
    %2728 = vmatpush1.msra.mxu0 0.0
    %2729 = vmatprep.subr.mxu0 0.0
    %2730 = vmatpush1.msra.mxu0 0.0
    %2731 = vmatprep.subr.mxu0 0.0
    %2732 = vmatpush1.msra.mxu0 0.0
    %2733 = vmatprep.subr.mxu0 0.0
    %2734 = vmatpush1.msra.mxu0 0.0
    %2735 = vmatprep.subr.mxu0 0.0
    %2736 = vmatpush1.msra.mxu0 0.0
    %2737 = vmatprep.subr.mxu0 0.0
    %2738 = vmatpush1.msra.mxu0 0.0
    %2739 = vmatprep.subr.mxu0 0.0
    %2740 = vmatpush1.msra.mxu0 0.0
    %2741 = vmatprep.subr.mxu0 0.0
    %2742 = vmatpush1.msra.mxu0 0.0
    %2743 = vmatprep.subr.mxu0 0.0
    %2744 = vmatpush1.msra.mxu0 0.0
    %2745 = vmatprep.subr.mxu0 0.0
    %2746 = vmatpush1.msra.mxu0 0.0
    %2747 = vmatprep.subr.mxu0 0.0
    %2748 = vmatpush1.msra.mxu0 0.0
    %2749 = vmatprep.subr.mxu0 0.0
    %2750 = vmatpush1.msra.mxu0 0.0
    %2751 = vmatprep.subr.mxu0 0.0
    %2752 = vmatpush1.msra.mxu0 0.0
    %2753 = vmatprep.mubr.f32.mxu0 0.0
    %2754 = vmatmul.mubr.f32.gmra.mrb[0].mxu0 %v267
    %v2755 = vpop.f32.mrb[0].mxu0
    %v2756 = vadd.f32 %v2687, %v2755
    %v2757 = vpop.f32.mrb[0].mxu0
    %2758 = vmatprep.mubr.f32.mxu0 0.0
    %2759 = vmatmul.mubr.f32.gmra.mrb[0].mxu0 %v270
    %v2760 = vpop.f32.mrb[0].mxu0
    %v2761 = vadd.f32 %v2687, %v2760
    %v2762 = vpop.f32.mrb[0].mxu0
    %2763 = vmatprep.mubr.f32.mxu0 0.0
    %2764 = vmatmul.mubr.f32.gmra.mrb[0].mxu0 %v273
    %v2765 = vpop.f32.mrb[0].mxu0
    %v2766 = vadd.f32 %v2687, %v2765
    %v2767 = vpop.f32.mrb[0].mxu0
    %2768 = vmatprep.mubr.f32.mxu0 0.0
    %2769 = vmatmul.mubr.f32.gmra.mrb[0].mxu0 %v276
    %v2770 = vpop.f32.mrb[0].mxu0
    %v2771 = vadd.f32 %v2687, %v2770
    %v2772 = vpop.f32.mrb[0].mxu0
    %2773 = vdwg.mxu0
    %s2774 = scalar_lea.vmem %s3, 448
    %v2775 = vld [vmem:[%s2774] sm:$0xff]
    %v2776 = vld [vmem:[%s2774 + $0x8] sm:$0xff]
    %v2777 = vld [vmem:[%s2774 + $0x10] sm:$0xff]
    %v2778 = vld [vmem:[%s2774 + $0x18] sm:$0xff]
    %v2779 = vld [vmem:[%s2774 + $0x20] sm:$0xff]
    %v2780 = vld [vmem:[%s2774 + $0x28] sm:$0xff]
    %v2781 = vld [vmem:[%s2774 + $0x30] sm:$0xff]
    %v2782 = vld [vmem:[%s2774 + $0x38] sm:$0xff]
    %v2783 = vld [vmem:[%s6 + $0x3] sm:$0x1]
    %v2784 = vlaneseq
    %v2785 = vshrl.u32 %v2784, 7
    %v2786 = vsub.s32 0, %v2785
    %v2787 = vrot.slane %v2783, %v2786
    %2789 = vrot.lane.b32.xlu0 %v2787, 80
    %v2790 = vpop.permute.xlu0 %2789
    %2792 = vmatprep.subr.mxu0 0.0
    %2793 = vmatpush1.msra.mxu0 %v2775
    %2794 = vmatprep.subr.mxu0 0.0
    %2795 = vmatpush1.msra.mxu0 %v2776
    %2796 = vmatprep.subr.mxu0 0.0
    %2797 = vmatpush1.msra.mxu0 %v2777
    %2798 = vmatprep.subr.mxu0 0.0
    %2799 = vmatpush1.msra.mxu0 %v2778
    %2800 = vmatprep.subr.mxu0 0.0
    %2801 = vmatpush1.msra.mxu0 %v2779
    %2802 = vmatprep.subr.mxu0 0.0
    %2803 = vmatpush1.msra.mxu0 %v2780
    %2804 = vmatprep.subr.mxu0 0.0
    %2805 = vmatpush1.msra.mxu0 %v2781
    %2806 = vmatprep.subr.mxu0 0.0
    %2807 = vmatpush1.msra.mxu0 %v2782
    %2808 = vmatprep.subr.mxu0 0.0
    %2809 = vmatpush1.msra.mxu0 0.0
    %2810 = vmatprep.subr.mxu0 0.0
    %2811 = vmatpush1.msra.mxu0 0.0
    %2812 = vmatprep.subr.mxu0 0.0
    %2813 = vmatpush1.msra.mxu0 0.0
    %2814 = vmatprep.subr.mxu0 0.0
    %2815 = vmatpush1.msra.mxu0 0.0
    %2816 = vmatprep.subr.mxu0 0.0
    %2817 = vmatpush1.msra.mxu0 0.0
    %2818 = vmatprep.subr.mxu0 0.0
    %2819 = vmatpush1.msra.mxu0 0.0
    %2820 = vmatprep.subr.mxu0 0.0
    %2821 = vmatpush1.msra.mxu0 0.0
    %2822 = vmatprep.subr.mxu0 0.0
    %2823 = vmatpush1.msra.mxu0 0.0
    %2824 = vmatprep.subr.mxu0 0.0
    %2825 = vmatpush1.msra.mxu0 0.0
    %2826 = vmatprep.subr.mxu0 0.0
    %2827 = vmatpush1.msra.mxu0 0.0
    %2828 = vmatprep.subr.mxu0 0.0
    %2829 = vmatpush1.msra.mxu0 0.0
    %2830 = vmatprep.subr.mxu0 0.0
    %2831 = vmatpush1.msra.mxu0 0.0
    %2832 = vmatprep.subr.mxu0 0.0
    %2833 = vmatpush1.msra.mxu0 0.0
    %2834 = vmatprep.subr.mxu0 0.0
    %2835 = vmatpush1.msra.mxu0 0.0
    %2836 = vmatprep.subr.mxu0 0.0
    %2837 = vmatpush1.msra.mxu0 0.0
    %2838 = vmatprep.subr.mxu0 0.0
    %2839 = vmatpush1.msra.mxu0 0.0
    %2840 = vmatprep.subr.mxu0 0.0
    %2841 = vmatpush1.msra.mxu0 0.0
    %2842 = vmatprep.subr.mxu0 0.0
    %2843 = vmatpush1.msra.mxu0 0.0
    %2844 = vmatprep.subr.mxu0 0.0
    %2845 = vmatpush1.msra.mxu0 0.0
    %2846 = vmatprep.subr.mxu0 0.0
    %2847 = vmatpush1.msra.mxu0 0.0
    %2848 = vmatprep.subr.mxu0 0.0
    %2849 = vmatpush1.msra.mxu0 0.0
    %2850 = vmatprep.subr.mxu0 0.0
    %2851 = vmatpush1.msra.mxu0 0.0
    %2852 = vmatprep.subr.mxu0 0.0
    %2853 = vmatpush1.msra.mxu0 0.0
    %2854 = vmatprep.subr.mxu0 0.0
    %2855 = vmatpush1.msra.mxu0 0.0
    %2856 = vmatprep.mubr.f32.mxu0 0.0
    %2857 = vmatmul.mubr.f32.gmra.mrb[0].mxu0 %v378
    %v2858 = vpop.f32.mrb[0].mxu0
    %v2859 = vadd.f32 %v2790, %v2858
    %v2860 = vpop.f32.mrb[0].mxu0
    %2861 = vmatprep.mubr.f32.mxu0 0.0
    %2862 = vmatmul.mubr.f32.gmra.mrb[0].mxu0 %v381
    %v2863 = vpop.f32.mrb[0].mxu0
    %v2864 = vadd.f32 %v2790, %v2863
    %v2865 = vpop.f32.mrb[0].mxu0
    %2866 = vmatprep.mubr.f32.mxu0 0.0
    %2867 = vmatmul.mubr.f32.gmra.mrb[0].mxu0 %v384
    %v2868 = vpop.f32.mrb[0].mxu0
    %v2869 = vadd.f32 %v2790, %v2868
    %v2870 = vpop.f32.mrb[0].mxu0
    %2871 = vmatprep.mubr.f32.mxu0 0.0
    %2872 = vmatmul.mubr.f32.gmra.mrb[0].mxu0 %v387
    %v2873 = vpop.f32.mrb[0].mxu0
    %v2874 = vadd.f32 %v2790, %v2873
    %v2875 = vpop.f32.mrb[0].mxu0
    %2876 = vdwg.mxu0
    %s2877 = scalar_lea.vmem %s3, 704
    %v2878 = vld [vmem:[%s2877] sm:$0xff]
    %v2879 = vld [vmem:[%s2877 + $0x8] sm:$0xff]
    %v2880 = vld [vmem:[%s2877 + $0x10] sm:$0xff]
    %v2881 = vld [vmem:[%s2877 + $0x18] sm:$0xff]
    %v2882 = vld [vmem:[%s2877 + $0x20] sm:$0xff]
    %v2883 = vld [vmem:[%s2877 + $0x28] sm:$0xff]
    %v2884 = vld [vmem:[%s2877 + $0x30] sm:$0xff]
    %v2885 = vld [vmem:[%s2877 + $0x38] sm:$0xff]
    %v2886 = vld [vmem:[%s6 + $0x4] sm:$0x1]
    %v2887 = vlaneseq
    %v2888 = vshrl.u32 %v2887, 7
    %v2889 = vsub.s32 0, %v2888
    %v2890 = vrot.slane %v2886, %v2889
    %2892 = vrot.lane.b32.xlu0 %v2890, 80
    %v2893 = vpop.permute.xlu0 %2892
    %2895 = vmatprep.subr.mxu0 0.0
    %2896 = vmatpush1.msra.mxu0 %v2878
    %2897 = vmatprep.subr.mxu0 0.0
    %2898 = vmatpush1.msra.mxu0 %v2879
    %2899 = vmatprep.subr.mxu0 0.0
    %2900 = vmatpush1.msra.mxu0 %v2880
    %2901 = vmatprep.subr.mxu0 0.0
    %2902 = vmatpush1.msra.mxu0 %v2881
    %2903 = vmatprep.subr.mxu0 0.0
    %2904 = vmatpush1.msra.mxu0 %v2882
    %2905 = vmatprep.subr.mxu0 0.0
    %2906 = vmatpush1.msra.mxu0 %v2883
    %2907 = vmatprep.subr.mxu0 0.0
    %2908 = vmatpush1.msra.mxu0 %v2884
    %2909 = vmatprep.subr.mxu0 0.0
    %2910 = vmatpush1.msra.mxu0 %v2885
    %2911 = vmatprep.subr.mxu0 0.0
    %2912 = vmatpush1.msra.mxu0 0.0
    %2913 = vmatprep.subr.mxu0 0.0
    %2914 = vmatpush1.msra.mxu0 0.0
    %2915 = vmatprep.subr.mxu0 0.0
    %2916 = vmatpush1.msra.mxu0 0.0
    %2917 = vmatprep.subr.mxu0 0.0
    %2918 = vmatpush1.msra.mxu0 0.0
    %2919 = vmatprep.subr.mxu0 0.0
    %2920 = vmatpush1.msra.mxu0 0.0
    %2921 = vmatprep.subr.mxu0 0.0
    %2922 = vmatpush1.msra.mxu0 0.0
    %2923 = vmatprep.subr.mxu0 0.0
    %2924 = vmatpush1.msra.mxu0 0.0
    %2925 = vmatprep.subr.mxu0 0.0
    %2926 = vmatpush1.msra.mxu0 0.0
    %2927 = vmatprep.subr.mxu0 0.0
    %2928 = vmatpush1.msra.mxu0 0.0
    %2929 = vmatprep.subr.mxu0 0.0
    %2930 = vmatpush1.msra.mxu0 0.0
    %2931 = vmatprep.subr.mxu0 0.0
    %2932 = vmatpush1.msra.mxu0 0.0
    %2933 = vmatprep.subr.mxu0 0.0
    %2934 = vmatpush1.msra.mxu0 0.0
    %2935 = vmatprep.subr.mxu0 0.0
    %2936 = vmatpush1.msra.mxu0 0.0
    %2937 = vmatprep.subr.mxu0 0.0
    %2938 = vmatpush1.msra.mxu0 0.0
    %2939 = vmatprep.subr.mxu0 0.0
    %2940 = vmatpush1.msra.mxu0 0.0
    %2941 = vmatprep.subr.mxu0 0.0
    %2942 = vmatpush1.msra.mxu0 0.0
    %2943 = vmatprep.subr.mxu0 0.0
    %2944 = vmatpush1.msra.mxu0 0.0
    %2945 = vmatprep.subr.mxu0 0.0
    %2946 = vmatpush1.msra.mxu0 0.0
    %2947 = vmatprep.subr.mxu0 0.0
    %2948 = vmatpush1.msra.mxu0 0.0
    %2949 = vmatprep.subr.mxu0 0.0
    %2950 = vmatpush1.msra.mxu0 0.0
    %2951 = vmatprep.subr.mxu0 0.0
    %2952 = vmatpush1.msra.mxu0 0.0
    %2953 = vmatprep.subr.mxu0 0.0
    %2954 = vmatpush1.msra.mxu0 0.0
    %2955 = vmatprep.subr.mxu0 0.0
    %2956 = vmatpush1.msra.mxu0 0.0
    %2957 = vmatprep.subr.mxu0 0.0
    %2958 = vmatpush1.msra.mxu0 0.0
    %2959 = vmatprep.mubr.f32.mxu0 0.0
    %2960 = vmatmul.mubr.f32.gmra.mrb[0].mxu0 %v378
    %v2961 = vpop.f32.mrb[0].mxu0
    %v2962 = vadd.f32 %v2893, %v2961
    %v2963 = vpop.f32.mrb[0].mxu0
    %2964 = vmatprep.mubr.f32.mxu0 0.0
    %2965 = vmatmul.mubr.f32.gmra.mrb[0].mxu0 %v381
    %v2966 = vpop.f32.mrb[0].mxu0
    %v2967 = vadd.f32 %v2893, %v2966
    %v2968 = vpop.f32.mrb[0].mxu0
    %2969 = vmatprep.mubr.f32.mxu0 0.0
    %2970 = vmatmul.mubr.f32.gmra.mrb[0].mxu0 %v384
    %v2971 = vpop.f32.mrb[0].mxu0
    %v2972 = vadd.f32 %v2893, %v2971
    %v2973 = vpop.f32.mrb[0].mxu0
    %2974 = vmatprep.mubr.f32.mxu0 0.0
    %2975 = vmatmul.mubr.f32.gmra.mrb[0].mxu0 %v387
    %v2976 = vpop.f32.mrb[0].mxu0
    %v2977 = vadd.f32 %v2893, %v2976
    %v2978 = vpop.f32.mrb[0].mxu0
    %2979 = vdwg.mxu0
    %v2981 = vsel %vm573, %v2756, 0
    %v2984 = vsel %vm573, %v2761, 0
    %v2987 = vsel %vm573, %v2859, 0
    %v2990 = vsel %vm573, %v2864, 0
    %2992 = vmatprep.subr.mxu0 0.0
    %2993 = vmatpush1.xpose.msra.mxu0 %v2987
    %2994 = vmatprep.subr.mxu0 0.0
    %2995 = vmatpush1.xpose.msra.mxu0 %v2990
    %2996 = vmatprep.subr.mxu0 0.0
    %2997 = vmatpush1.xpose.msra.mxu0 0.0
    %2998 = vmatprep.subr.mxu0 0.0
    %2999 = vmatpush1.xpose.msra.mxu0 0.0
    %3000 = vmatprep.subr.mxu0 0.0
    %3001 = vmatpush1.xpose.msra.mxu0 0.0
    %3002 = vmatprep.subr.mxu0 0.0
    %3003 = vmatpush1.xpose.msra.mxu0 0.0
    %3004 = vmatprep.subr.mxu0 0.0
    %3005 = vmatpush1.xpose.msra.mxu0 0.0
    %3006 = vmatprep.subr.mxu0 0.0
    %3007 = vmatpush1.xpose.msra.mxu0 0.0
    %3008 = vmatprep.subr.mxu0 0.0
    %3009 = vmatpush1.xpose.msra.mxu0 0.0
    %3010 = vmatprep.subr.mxu0 0.0
    %3011 = vmatpush1.xpose.msra.mxu0 0.0
    %3012 = vmatprep.subr.mxu0 0.0
    %3013 = vmatpush1.xpose.msra.mxu0 0.0
    %3014 = vmatprep.subr.mxu0 0.0
    %3015 = vmatpush1.xpose.msra.mxu0 0.0
    %3016 = vmatprep.subr.mxu0 0.0
    %3017 = vmatpush1.xpose.msra.mxu0 0.0
    %3018 = vmatprep.subr.mxu0 0.0
    %3019 = vmatpush1.xpose.msra.mxu0 0.0
    %3020 = vmatprep.subr.mxu0 0.0
    %3021 = vmatpush1.xpose.msra.mxu0 0.0
    %3022 = vmatprep.subr.mxu0 0.0
    %3023 = vmatpush1.xpose.msra.mxu0 0.0
    %3024 = vmatprep.subr.mxu0 0.0
    %3025 = vmatpush1.xpose.msra.mxu0 0.0
    %3026 = vmatprep.subr.mxu0 0.0
    %3027 = vmatpush1.xpose.msra.mxu0 0.0
    %3028 = vmatprep.subr.mxu0 0.0
    %3029 = vmatpush1.xpose.msra.mxu0 0.0
    %3030 = vmatprep.subr.mxu0 0.0
    %3031 = vmatpush1.xpose.msra.mxu0 0.0
    %3032 = vmatprep.subr.mxu0 0.0
    %3033 = vmatpush1.xpose.msra.mxu0 0.0
    %3034 = vmatprep.subr.mxu0 0.0
    %3035 = vmatpush1.xpose.msra.mxu0 0.0
    %3036 = vmatprep.subr.mxu0 0.0
    %3037 = vmatpush1.xpose.msra.mxu0 0.0
    %3038 = vmatprep.subr.mxu0 0.0
    %3039 = vmatpush1.xpose.msra.mxu0 0.0
    %3040 = vmatprep.subr.mxu0 0.0
    %3041 = vmatpush1.xpose.msra.mxu0 0.0
    %3042 = vmatprep.subr.mxu0 0.0
    %3043 = vmatpush1.xpose.msra.mxu0 0.0
    %3044 = vmatprep.subr.mxu0 0.0
    %3045 = vmatpush1.xpose.msra.mxu0 0.0
    %3046 = vmatprep.subr.mxu0 0.0
    %3047 = vmatpush1.xpose.msra.mxu0 0.0
    %3048 = vmatprep.subr.mxu0 0.0
    %3049 = vmatpush1.xpose.msra.mxu0 0.0
    %3050 = vmatprep.subr.mxu0 0.0
    %3051 = vmatpush1.xpose.msra.mxu0 0.0
    %3052 = vmatprep.subr.mxu0 0.0
    %3053 = vmatpush1.xpose.msra.mxu0 0.0
    %3054 = vmatprep.subr.mxu0 0.0
    %3055 = vmatpush1.xpose.msra.mxu0 0.0
    %3056 = vmatprep.mubr.f32.mxu0 0.0
    %3057 = vmatmul.mubr.f32.gmra.mrb[0].mxu0 %v2981
    %v3058 = vpop.f32.mrb[0].mxu0
    %v3059 = vadd.f32 0.0, %v3058
    %v3060 = vpop.f32.mrb[0].mxu0
    %3061 = vmatprep.mubr.f32.mxu0 0.0
    %3062 = vmatmul.mubr.f32.gmra.mrb[0].mxu0 %v2984
    %v3063 = vpop.f32.mrb[0].mxu0
    %v3064 = vadd.f32 0.0, %v3063
    %v3065 = vpop.f32.mrb[0].mxu0
    %3066 = vdwg.mxu0
    %v3068 = vsel %vm573, %v2766, 0
    %v3071 = vsel %vm573, %v2771, 0
    %v3074 = vsel %vm573, %v2869, 0
    %v3077 = vsel %vm573, %v2874, 0
    %3079 = vmatprep.subr.mxu0 0.0
    %3080 = vmatpush1.xpose.msra.mxu0 %v3074
    %3081 = vmatprep.subr.mxu0 0.0
    %3082 = vmatpush1.xpose.msra.mxu0 %v3077
    %3083 = vmatprep.subr.mxu0 0.0
    %3084 = vmatpush1.xpose.msra.mxu0 0.0
    %3085 = vmatprep.subr.mxu0 0.0
    %3086 = vmatpush1.xpose.msra.mxu0 0.0
    %3087 = vmatprep.subr.mxu0 0.0
    %3088 = vmatpush1.xpose.msra.mxu0 0.0
    %3089 = vmatprep.subr.mxu0 0.0
    %3090 = vmatpush1.xpose.msra.mxu0 0.0
    %3091 = vmatprep.subr.mxu0 0.0
    %3092 = vmatpush1.xpose.msra.mxu0 0.0
    %3093 = vmatprep.subr.mxu0 0.0
    %3094 = vmatpush1.xpose.msra.mxu0 0.0
    %3095 = vmatprep.subr.mxu0 0.0
    %3096 = vmatpush1.xpose.msra.mxu0 0.0
    %3097 = vmatprep.subr.mxu0 0.0
    %3098 = vmatpush1.xpose.msra.mxu0 0.0
    %3099 = vmatprep.subr.mxu0 0.0
    %3100 = vmatpush1.xpose.msra.mxu0 0.0
    %3101 = vmatprep.subr.mxu0 0.0
    %3102 = vmatpush1.xpose.msra.mxu0 0.0
    %3103 = vmatprep.subr.mxu0 0.0
    %3104 = vmatpush1.xpose.msra.mxu0 0.0
    %3105 = vmatprep.subr.mxu0 0.0
    %3106 = vmatpush1.xpose.msra.mxu0 0.0
    %3107 = vmatprep.subr.mxu0 0.0
    %3108 = vmatpush1.xpose.msra.mxu0 0.0
    %3109 = vmatprep.subr.mxu0 0.0
    %3110 = vmatpush1.xpose.msra.mxu0 0.0
    %3111 = vmatprep.subr.mxu0 0.0
    %3112 = vmatpush1.xpose.msra.mxu0 0.0
    %3113 = vmatprep.subr.mxu0 0.0
    %3114 = vmatpush1.xpose.msra.mxu0 0.0
    %3115 = vmatprep.subr.mxu0 0.0
    %3116 = vmatpush1.xpose.msra.mxu0 0.0
    %3117 = vmatprep.subr.mxu0 0.0
    %3118 = vmatpush1.xpose.msra.mxu0 0.0
    %3119 = vmatprep.subr.mxu0 0.0
    %3120 = vmatpush1.xpose.msra.mxu0 0.0
    %3121 = vmatprep.subr.mxu0 0.0
    %3122 = vmatpush1.xpose.msra.mxu0 0.0
    %3123 = vmatprep.subr.mxu0 0.0
    %3124 = vmatpush1.xpose.msra.mxu0 0.0
    %3125 = vmatprep.subr.mxu0 0.0
    %3126 = vmatpush1.xpose.msra.mxu0 0.0
    %3127 = vmatprep.subr.mxu0 0.0
    %3128 = vmatpush1.xpose.msra.mxu0 0.0
    %3129 = vmatprep.subr.mxu0 0.0
    %3130 = vmatpush1.xpose.msra.mxu0 0.0
    %3131 = vmatprep.subr.mxu0 0.0
    %3132 = vmatpush1.xpose.msra.mxu0 0.0
    %3133 = vmatprep.subr.mxu0 0.0
    %3134 = vmatpush1.xpose.msra.mxu0 0.0
    %3135 = vmatprep.subr.mxu0 0.0
    %3136 = vmatpush1.xpose.msra.mxu0 0.0
    %3137 = vmatprep.subr.mxu0 0.0
    %3138 = vmatpush1.xpose.msra.mxu0 0.0
    %3139 = vmatprep.subr.mxu0 0.0
    %3140 = vmatpush1.xpose.msra.mxu0 0.0
    %3141 = vmatprep.subr.mxu0 0.0
    %3142 = vmatpush1.xpose.msra.mxu0 0.0
    %3143 = vmatprep.mubr.f32.mxu0 0.0
    %3144 = vmatmul.mubr.f32.gmra.mrb[0].mxu0 %v3068
    %v3145 = vpop.f32.mrb[0].mxu0
    %v3146 = vadd.f32 0.0, %v3145
    %v3147 = vpop.f32.mrb[0].mxu0
    %3148 = vmatprep.mubr.f32.mxu0 0.0
    %3149 = vmatmul.mubr.f32.gmra.mrb[0].mxu0 %v3071
    %v3150 = vpop.f32.mrb[0].mxu0
    %v3151 = vadd.f32 0.0, %v3150
    %v3152 = vpop.f32.mrb[0].mxu0
    %3153 = vdwg.mxu0
    %v3154 = vmul.f32 %v3059, 0.25
    %v3155 = vmul.f32 %v3064, 0.25
    %v3156 = vmul.f32 %v3146, 0.25
    %v3157 = vmul.f32 %v3151, 0.25
    %v3158 = vadd.f32 %v3154, %v179
    %v3159 = vadd.f32 %v3155, %v180
    %v3160 = vadd.f32 %v3156, %v179
    %v3161 = vadd.f32 %v3157, %v180
    %v3162 = vsel %vm573, %v3158, -inf
    %3163 = vmax.xlane.f32.xlu0 %v3162
    %v3164 = vpop.xlane.xlu0 %3163
    %v3165 = vsel %vm573, %v3159, -inf
    %3166 = vmax.xlane.f32.xlu0 %v3165
    %v3167 = vpop.xlane.xlu0 %3166
    %v3168 = vsel %vm573, %v3160, -inf
    %3169 = vmax.xlane.f32.xlu0 %v3168
    %v3170 = vpop.xlane.xlu0 %3169
    %v3171 = vsel %vm573, %v3161, -inf
    %3172 = vmax.xlane.f32.xlu0 %v3171
    %v3173 = vpop.xlane.xlu0 %3172
    %v3174 = vsub.f32 %v3158, %v3164
    %v3175 = vsub.f32 %v3159, %v3167
    %v3176 = vsub.f32 %v3160, %v3170
    %v3177 = vsub.f32 %v3161, %v3173
    %v3178 = vmul.f32 %v3174, 1.442695
    %v3179 = vpow.pop %v3178
    %v3180 = vmul.f32 %v3175, 1.442695
    %v3181 = vpow.pop %v3180
    %v3182 = vmul.f32 %v3176, 1.442695
    %v3183 = vpow.pop %v3182
    %v3184 = vmul.f32 %v3177, 1.442695
    %v3185 = vpow.pop %v3184
    %v3186 = vsel %vm573, %v3179, 0.0
    %3187 = vadd.xlane.f32.xlu0 %v3186
    %v3188 = vpop.xlane.xlu0 %3187
    %v3189 = vsel %vm573, %v3181, 0.0
    %3190 = vadd.xlane.f32.xlu0 %v3189
    %v3191 = vpop.xlane.xlu0 %3190
    %v3192 = vsel %vm573, %v3183, 0.0
    %3193 = vadd.xlane.f32.xlu0 %v3192
    %v3194 = vpop.xlane.xlu0 %3193
    %v3195 = vsel %vm573, %v3185, 0.0
    %3196 = vadd.xlane.f32.xlu0 %v3195
    %v3197 = vpop.xlane.xlu0 %3196
    %v3198 = vrcp.pop %v3188
    %v3199 = vrcp.pop %v3191
    %v3200 = vrcp.pop %v3194
    %v3201 = vrcp.pop %v3197
    %v3202 = vmul.f32 %v3179, %v3198
    %v3203 = vmul.f32 %v3181, %v3199
    %v3204 = vmul.f32 %v3183, %v3200
    %v3205 = vmul.f32 %v3185, %v3201
    %v3206 = vadd.f32 %v2401, %v3202
    %v3207 = vadd.f32 %v2402, %v3203
    %v3208 = vadd.f32 %v2403, %v3204
    %v3209 = vadd.f32 %v2404, %v3205
    %v3211 = vsel %vm573, %v3202, 0
    %v3214 = vsel %vm573, %v3203, 0
    %3216 = vmatprep.subr.mxu0 0.0
    %3217 = vmatpush1.msra.mxu0 %v2962
    %3218 = vmatprep.subr.mxu0 0.0
    %3219 = vmatpush1.msra.mxu0 %v2967
    %3220 = vmatprep.subr.mxu0 0.0
    %3221 = vmatpush1.msra.mxu0 0.0
    %3222 = vmatprep.subr.mxu0 0.0
    %3223 = vmatpush1.msra.mxu0 0.0
    %3224 = vmatprep.subr.mxu0 0.0
    %3225 = vmatpush1.msra.mxu0 0.0
    %3226 = vmatprep.subr.mxu0 0.0
    %3227 = vmatpush1.msra.mxu0 0.0
    %3228 = vmatprep.subr.mxu0 0.0
    %3229 = vmatpush1.msra.mxu0 0.0
    %3230 = vmatprep.subr.mxu0 0.0
    %3231 = vmatpush1.msra.mxu0 0.0
    %3232 = vmatprep.subr.mxu0 0.0
    %3233 = vmatpush1.msra.mxu0 0.0
    %3234 = vmatprep.subr.mxu0 0.0
    %3235 = vmatpush1.msra.mxu0 0.0
    %3236 = vmatprep.subr.mxu0 0.0
    %3237 = vmatpush1.msra.mxu0 0.0
    %3238 = vmatprep.subr.mxu0 0.0
    %3239 = vmatpush1.msra.mxu0 0.0
    %3240 = vmatprep.subr.mxu0 0.0
    %3241 = vmatpush1.msra.mxu0 0.0
    %3242 = vmatprep.subr.mxu0 0.0
    %3243 = vmatpush1.msra.mxu0 0.0
    %3244 = vmatprep.subr.mxu0 0.0
    %3245 = vmatpush1.msra.mxu0 0.0
    %3246 = vmatprep.subr.mxu0 0.0
    %3247 = vmatpush1.msra.mxu0 0.0
    %3248 = vmatprep.subr.mxu0 0.0
    %3249 = vmatpush1.msra.mxu0 0.0
    %3250 = vmatprep.subr.mxu0 0.0
    %3251 = vmatpush1.msra.mxu0 0.0
    %3252 = vmatprep.subr.mxu0 0.0
    %3253 = vmatpush1.msra.mxu0 0.0
    %3254 = vmatprep.subr.mxu0 0.0
    %3255 = vmatpush1.msra.mxu0 0.0
    %3256 = vmatprep.subr.mxu0 0.0
    %3257 = vmatpush1.msra.mxu0 0.0
    %3258 = vmatprep.subr.mxu0 0.0
    %3259 = vmatpush1.msra.mxu0 0.0
    %3260 = vmatprep.subr.mxu0 0.0
    %3261 = vmatpush1.msra.mxu0 0.0
    %3262 = vmatprep.subr.mxu0 0.0
    %3263 = vmatpush1.msra.mxu0 0.0
    %3264 = vmatprep.subr.mxu0 0.0
    %3265 = vmatpush1.msra.mxu0 0.0
    %3266 = vmatprep.subr.mxu0 0.0
    %3267 = vmatpush1.msra.mxu0 0.0
    %3268 = vmatprep.subr.mxu0 0.0
    %3269 = vmatpush1.msra.mxu0 0.0
    %3270 = vmatprep.subr.mxu0 0.0
    %3271 = vmatpush1.msra.mxu0 0.0
    %3272 = vmatprep.subr.mxu0 0.0
    %3273 = vmatpush1.msra.mxu0 0.0
    %3274 = vmatprep.subr.mxu0 0.0
    %3275 = vmatpush1.msra.mxu0 0.0
    %3276 = vmatprep.subr.mxu0 0.0
    %3277 = vmatpush1.msra.mxu0 0.0
    %3278 = vmatprep.subr.mxu0 0.0
    %3279 = vmatpush1.msra.mxu0 0.0
    %3280 = vmatprep.mubr.f32.mxu0 0.0
    %3281 = vmatmul.mubr.f32.gmra.mrb[0].mxu0 %v3211
    %v3282 = vpop.f32.mrb[0].mxu0
    %v3283 = vadd.f32 0.0, %v3282
    %v3284 = vpop.f32.mrb[0].mxu0
    %3285 = vmatprep.mubr.f32.mxu0 0.0
    %3286 = vmatmul.mubr.f32.gmra.mrb[0].mxu0 %v3214
    %v3287 = vpop.f32.mrb[0].mxu0
    %v3288 = vadd.f32 0.0, %v3287
    %v3289 = vpop.f32.mrb[0].mxu0
    %3290 = vdwg.mxu0
    %v3292 = vsel %vm573, %v3204, 0
    %v3295 = vsel %vm573, %v3205, 0
    %3297 = vmatprep.subr.mxu0 0.0
    %3298 = vmatpush1.msra.mxu0 %v2972
    %3299 = vmatprep.subr.mxu0 0.0
    %3300 = vmatpush1.msra.mxu0 %v2977
    %3301 = vmatprep.subr.mxu0 0.0
    %3302 = vmatpush1.msra.mxu0 0.0
    %3303 = vmatprep.subr.mxu0 0.0
    %3304 = vmatpush1.msra.mxu0 0.0
    %3305 = vmatprep.subr.mxu0 0.0
    %3306 = vmatpush1.msra.mxu0 0.0
    %3307 = vmatprep.subr.mxu0 0.0
    %3308 = vmatpush1.msra.mxu0 0.0
    %3309 = vmatprep.subr.mxu0 0.0
    %3310 = vmatpush1.msra.mxu0 0.0
    %3311 = vmatprep.subr.mxu0 0.0
    %3312 = vmatpush1.msra.mxu0 0.0
    %3313 = vmatprep.subr.mxu0 0.0
    %3314 = vmatpush1.msra.mxu0 0.0
    %3315 = vmatprep.subr.mxu0 0.0
    %3316 = vmatpush1.msra.mxu0 0.0
    %3317 = vmatprep.subr.mxu0 0.0
    %3318 = vmatpush1.msra.mxu0 0.0
    %3319 = vmatprep.subr.mxu0 0.0
    %3320 = vmatpush1.msra.mxu0 0.0
    %3321 = vmatprep.subr.mxu0 0.0
    %3322 = vmatpush1.msra.mxu0 0.0
    %3323 = vmatprep.subr.mxu0 0.0
    %3324 = vmatpush1.msra.mxu0 0.0
    %3325 = vmatprep.subr.mxu0 0.0
    %3326 = vmatpush1.msra.mxu0 0.0
    %3327 = vmatprep.subr.mxu0 0.0
    %3328 = vmatpush1.msra.mxu0 0.0
    %3329 = vmatprep.subr.mxu0 0.0
    %3330 = vmatpush1.msra.mxu0 0.0
    %3331 = vmatprep.subr.mxu0 0.0
    %3332 = vmatpush1.msra.mxu0 0.0
    %3333 = vmatprep.subr.mxu0 0.0
    %3334 = vmatpush1.msra.mxu0 0.0
    %3335 = vmatprep.subr.mxu0 0.0
    %3336 = vmatpush1.msra.mxu0 0.0
    %3337 = vmatprep.subr.mxu0 0.0
    %3338 = vmatpush1.msra.mxu0 0.0
    %3339 = vmatprep.subr.mxu0 0.0
    %3340 = vmatpush1.msra.mxu0 0.0
    %3341 = vmatprep.subr.mxu0 0.0
    %3342 = vmatpush1.msra.mxu0 0.0
    %3343 = vmatprep.subr.mxu0 0.0
    %3344 = vmatpush1.msra.mxu0 0.0
    %3345 = vmatprep.subr.mxu0 0.0
    %3346 = vmatpush1.msra.mxu0 0.0
    %3347 = vmatprep.subr.mxu0 0.0
    %3348 = vmatpush1.msra.mxu0 0.0
    %3349 = vmatprep.subr.mxu0 0.0
    %3350 = vmatpush1.msra.mxu0 0.0
    %3351 = vmatprep.subr.mxu0 0.0
    %3352 = vmatpush1.msra.mxu0 0.0
    %3353 = vmatprep.subr.mxu0 0.0
    %3354 = vmatpush1.msra.mxu0 0.0
    %3355 = vmatprep.subr.mxu0 0.0
    %3356 = vmatpush1.msra.mxu0 0.0
    %3357 = vmatprep.subr.mxu0 0.0
    %3358 = vmatpush1.msra.mxu0 0.0
    %3359 = vmatprep.subr.mxu0 0.0
    %3360 = vmatpush1.msra.mxu0 0.0
    %3361 = vmatprep.mubr.f32.mxu0 0.0
    %3362 = vmatmul.mubr.f32.gmra.mrb[0].mxu0 %v3292
    %v3363 = vpop.f32.mrb[0].mxu0
    %v3364 = vadd.f32 0.0, %v3363
    %v3365 = vpop.f32.mrb[0].mxu0
    %3366 = vmatprep.mubr.f32.mxu0 0.0
    %3367 = vmatmul.mubr.f32.gmra.mrb[0].mxu0 %v3295
    %v3368 = vpop.f32.mrb[0].mxu0
    %v3369 = vadd.f32 0.0, %v3368
    %v3370 = vpop.f32.mrb[0].mxu0
    %3371 = vdwg.mxu0
    %s3372 = scalar_lea.vmem %s4, 48
    %v3373 = vld [vmem:[%s3372] sm:$0xff]
    %v3374 = vld [vmem:[%s3372 + $0x8] sm:$0xff]
    %v3376 = vsel %vm573, %v3283, 0
    %v3379 = vsel %vm573, %v3288, 0
    %v3382 = vsel %vm573, %v3364, 0
    %v3385 = vsel %vm573, %v3369, 0
    %3387 = vmatprep.subr.mxu0 0.0
    %3388 = vmatpush1.msra.mxu0 %v3373
    %3389 = vmatprep.subr.mxu0 0.0
    %3390 = vmatpush1.msra.mxu0 %v3374
    %3391 = vmatprep.subr.mxu0 0.0
    %3392 = vmatpush1.msra.mxu0 0.0
    %3393 = vmatprep.subr.mxu0 0.0
    %3394 = vmatpush1.msra.mxu0 0.0
    %3395 = vmatprep.subr.mxu0 0.0
    %3396 = vmatpush1.msra.mxu0 0.0
    %3397 = vmatprep.subr.mxu0 0.0
    %3398 = vmatpush1.msra.mxu0 0.0
    %3399 = vmatprep.subr.mxu0 0.0
    %3400 = vmatpush1.msra.mxu0 0.0
    %3401 = vmatprep.subr.mxu0 0.0
    %3402 = vmatpush1.msra.mxu0 0.0
    %3403 = vmatprep.subr.mxu0 0.0
    %3404 = vmatpush1.msra.mxu0 0.0
    %3405 = vmatprep.subr.mxu0 0.0
    %3406 = vmatpush1.msra.mxu0 0.0
    %3407 = vmatprep.subr.mxu0 0.0
    %3408 = vmatpush1.msra.mxu0 0.0
    %3409 = vmatprep.subr.mxu0 0.0
    %3410 = vmatpush1.msra.mxu0 0.0
    %3411 = vmatprep.subr.mxu0 0.0
    %3412 = vmatpush1.msra.mxu0 0.0
    %3413 = vmatprep.subr.mxu0 0.0
    %3414 = vmatpush1.msra.mxu0 0.0
    %3415 = vmatprep.subr.mxu0 0.0
    %3416 = vmatpush1.msra.mxu0 0.0
    %3417 = vmatprep.subr.mxu0 0.0
    %3418 = vmatpush1.msra.mxu0 0.0
    %3419 = vmatprep.subr.mxu0 0.0
    %3420 = vmatpush1.msra.mxu0 0.0
    %3421 = vmatprep.subr.mxu0 0.0
    %3422 = vmatpush1.msra.mxu0 0.0
    %3423 = vmatprep.subr.mxu0 0.0
    %3424 = vmatpush1.msra.mxu0 0.0
    %3425 = vmatprep.subr.mxu0 0.0
    %3426 = vmatpush1.msra.mxu0 0.0
    %3427 = vmatprep.subr.mxu0 0.0
    %3428 = vmatpush1.msra.mxu0 0.0
    %3429 = vmatprep.subr.mxu0 0.0
    %3430 = vmatpush1.msra.mxu0 0.0
    %3431 = vmatprep.subr.mxu0 0.0
    %3432 = vmatpush1.msra.mxu0 0.0
    %3433 = vmatprep.subr.mxu0 0.0
    %3434 = vmatpush1.msra.mxu0 0.0
    %3435 = vmatprep.subr.mxu0 0.0
    %3436 = vmatpush1.msra.mxu0 0.0
    %3437 = vmatprep.subr.mxu0 0.0
    %3438 = vmatpush1.msra.mxu0 0.0
    %3439 = vmatprep.subr.mxu0 0.0
    %3440 = vmatpush1.msra.mxu0 0.0
    %3441 = vmatprep.subr.mxu0 0.0
    %3442 = vmatpush1.msra.mxu0 0.0
    %3443 = vmatprep.subr.mxu0 0.0
    %3444 = vmatpush1.msra.mxu0 0.0
    %3445 = vmatprep.subr.mxu0 0.0
    %3446 = vmatpush1.msra.mxu0 0.0
    %3447 = vmatprep.subr.mxu0 0.0
    %3448 = vmatpush1.msra.mxu0 0.0
    %3449 = vmatprep.subr.mxu0 0.0
    %3450 = vmatpush1.msra.mxu0 0.0
    %3451 = vmatprep.mubr.f32.mxu0 0.0
    %3452 = vmatmul.mubr.f32.gmra.mrb[0].mxu0 %v3376
    %v3453 = vpop.f32.mrb[0].mxu0
    %v3454 = vadd.f32 0.0, %v3453
    %v3455 = vpop.f32.mrb[0].mxu0
    %3456 = vmatprep.mubr.f32.mxu0 0.0
    %3457 = vmatmul.mubr.f32.gmra.mrb[0].mxu0 %v3379
    %v3458 = vpop.f32.mrb[0].mxu0
    %v3459 = vadd.f32 0.0, %v3458
    %v3460 = vpop.f32.mrb[0].mxu0
    %3461 = vmatprep.mubr.f32.mxu0 0.0
    %3462 = vmatmul.mubr.f32.gmra.mrb[0].mxu0 %v3382
    %v3463 = vpop.f32.mrb[0].mxu0
    %v3464 = vadd.f32 0.0, %v3463
    %v3465 = vpop.f32.mrb[0].mxu0
    %3466 = vmatprep.mubr.f32.mxu0 0.0
    %3467 = vmatmul.mubr.f32.gmra.mrb[0].mxu0 %v3385
    %v3468 = vpop.f32.mrb[0].mxu0
    %v3469 = vadd.f32 0.0, %v3468
    %v3470 = vpop.f32.mrb[0].mxu0
    %3471 = vdwg.mxu0
    %v3472 = vadd.f32 %v2667, %v3454
    %v3473 = vadd.f32 %v2668, %v3459
    %v3474 = vadd.f32 %v2669, %v3464
    %v3475 = vadd.f32 %v2670, %v3469
    %v3476 = vld [vmem:[%s6 + $0x5] sm:$0x1]
    %v3477 = vlaneseq
    %v3478 = vshrl.u32 %v3477, 7
    %v3479 = vsub.s32 0, %v3478
    %v3480 = vrot.slane %v3476, %v3479
    %v3481 = vadd.f32 %v3472, %v3480
    %v3482 = vadd.f32 %v3473, %v3480
    %v3483 = vadd.f32 %v3474, %v3480
    %v3484 = vadd.f32 %v3475, %v3480
    %v3485 = vmul.f32 %v3206, 0.25
    %v3486 = vmul.f32 %v3207, 0.25
    %v3487 = vmul.f32 %v3208, 0.25
    %v3488 = vmul.f32 %v3209, 0.25
    %3489 = vst.msk [vmem:[%s8] sm:$0xff] %vm573, %v3485
    %3490 = vst.msk [vmem:[%s8 + $0x8] sm:$0xff] %vm573, %v3486
    %3491 = vst.msk [vmem:[%s8 + $0x10] sm:$0xff] %vm573, %v3487
    %3492 = vst.msk [vmem:[%s8 + $0x18] sm:$0xff] %vm573, %v3488
    %v3493 = vadd.f32 %v3481, %v249
    %v3494 = vadd.f32 %v3482, %v250
    %v3495 = vadd.f32 %v3483, %v251
    %v3496 = vadd.f32 %v3484, %v252
    %v3497 = vld [vmem:[%s6 + $0x6] sm:$0x1]
    %v3498 = vld [vmem:[%s6 + $0x7] sm:$0x1]
    %v3499 = vsel %vm183, %v3493, 0.0
    %3500 = vadd.xlane.f32.xlu0 %v3499
    %v3501 = vpop.xlane.xlu0 %3500
    %v3502 = vsel %vm183, %v3494, 0.0
    %3503 = vadd.xlane.f32.xlu0 %v3502
    %v3504 = vpop.xlane.xlu0 %3503
    %v3505 = vsel %vm183, %v3495, 0.0
    %3506 = vadd.xlane.f32.xlu0 %v3505
    %v3507 = vpop.xlane.xlu0 %3506
    %v3508 = vsel %vm183, %v3496, 0.0
    %3509 = vadd.xlane.f32.xlu0 %v3508
    %v3510 = vpop.xlane.xlu0 %3509
    %v3511 = vmul.f32 %v3501, %v196
    %v3512 = vmul.f32 %v3504, %v196
    %v3513 = vmul.f32 %v3507, %v196
    %v3514 = vmul.f32 %v3510, %v196
    %v3515 = vsub.f32 %v3493, %v3511
    %v3516 = vsub.f32 %v3494, %v3512
    %v3517 = vsub.f32 %v3495, %v3513
    %v3518 = vsub.f32 %v3496, %v3514
    %v3519 = vmul.f32 %v3515, %v3515
    %v3520 = vmul.f32 %v3516, %v3516
    %v3521 = vmul.f32 %v3517, %v3517
    %v3522 = vmul.f32 %v3518, %v3518
    %v3523 = vsel %vm183, %v3519, 0.0
    %3524 = vadd.xlane.f32.xlu0 %v3523
    %v3525 = vpop.xlane.xlu0 %3524
    %v3526 = vsel %vm183, %v3520, 0.0
    %3527 = vadd.xlane.f32.xlu0 %v3526
    %v3528 = vpop.xlane.xlu0 %3527
    %v3529 = vsel %vm183, %v3521, 0.0
    %3530 = vadd.xlane.f32.xlu0 %v3529
    %v3531 = vpop.xlane.xlu0 %3530
    %v3532 = vsel %vm183, %v3522, 0.0
    %3533 = vadd.xlane.f32.xlu0 %v3532
    %v3534 = vpop.xlane.xlu0 %3533
    %v3535 = vmul.f32 %v3525, %v196
    %v3536 = vmul.f32 %v3528, %v196
    %v3537 = vmul.f32 %v3531, %v196
    %v3538 = vmul.f32 %v3534, %v196
    %v3539 = vadd.f32 %v3535, 1e-05
    %v3540 = vadd.f32 %v3536, 1e-05
    %v3541 = vadd.f32 %v3537, 1e-05
    %v3542 = vadd.f32 %v3538, 1e-05
    %v3543 = vrsqrt.pop %v3539
    %v3544 = vrsqrt.pop %v3540
    %v3545 = vrsqrt.pop %v3541
    %v3546 = vrsqrt.pop %v3542
    %v3547 = vmul.f32 %v3515, %v3543
    %v3548 = vmul.f32 %v3516, %v3544
    %v3549 = vmul.f32 %v3517, %v3545
    %v3550 = vmul.f32 %v3518, %v3546
    %v3551 = vlaneseq
    %v3552 = vshrl.u32 %v3551, 7
    %v3553 = vsub.s32 0, %v3552
    %v3554 = vrot.slane %v3497, %v3553
    %v3555 = vmul.f32 %v3547, %v3554
    %v3556 = vmul.f32 %v3548, %v3554
    %v3557 = vmul.f32 %v3549, %v3554
    %v3558 = vmul.f32 %v3550, %v3554
    %v3559 = vlaneseq
    %v3560 = vshrl.u32 %v3559, 7
    %v3561 = vsub.s32 0, %v3560
    %v3562 = vrot.slane %v3498, %v3561
    %v3563 = vadd.f32 %v3555, %v3562
    %v3564 = vadd.f32 %v3556, %v3562
    %v3565 = vadd.f32 %v3557, %v3562
    %v3566 = vadd.f32 %v3558, %v3562
    %v3567 = vld [vmem:[%s5] sm:$0xff]
    %v3568 = vld [vmem:[%s5 + $0x8] sm:$0xff]
    %v3569 = vld [vmem:[%s5 + $0x10] sm:$0xff]
    %v3570 = vld [vmem:[%s5 + $0x18] sm:$0xff]
    %v3571 = vld [vmem:[%s5 + $0x20] sm:$0xff]
    %v3572 = vld [vmem:[%s5 + $0x28] sm:$0xff]
    %v3573 = vld [vmem:[%s5 + $0x30] sm:$0xff]
    %v3574 = vld [vmem:[%s5 + $0x38] sm:$0xff]
    %v3575 = vld [vmem:[%s6 + $0x8] sm:$0x1]
    %v3576 = vlaneseq
    %v3577 = vshrl.u32 %v3576, 7
    %v3578 = vsub.s32 0, %v3577
    %v3579 = vrot.slane %v3575, %v3578
    %v3581 = vsel %vm183, %v3563, 0
    %v3584 = vsel %vm183, %v3564, 0
    %v3587 = vsel %vm183, %v3565, 0
    %v3590 = vsel %vm183, %v3566, 0
    %3592 = vmatprep.subr.mxu0 0.0
    %3593 = vmatpush1.msra.mxu0 %v3567
    %3594 = vmatprep.subr.mxu0 0.0
    %3595 = vmatpush1.msra.mxu0 %v3568
    %3596 = vmatprep.subr.mxu0 0.0
    %3597 = vmatpush1.msra.mxu0 %v3569
    %3598 = vmatprep.subr.mxu0 0.0
    %3599 = vmatpush1.msra.mxu0 %v3570
    %3600 = vmatprep.subr.mxu0 0.0
    %3601 = vmatpush1.msra.mxu0 %v3571
    %3602 = vmatprep.subr.mxu0 0.0
    %3603 = vmatpush1.msra.mxu0 %v3572
    %3604 = vmatprep.subr.mxu0 0.0
    %3605 = vmatpush1.msra.mxu0 %v3573
    %3606 = vmatprep.subr.mxu0 0.0
    %3607 = vmatpush1.msra.mxu0 %v3574
    %3608 = vmatprep.subr.mxu0 0.0
    %3609 = vmatpush1.msra.mxu0 0.0
    %3610 = vmatprep.subr.mxu0 0.0
    %3611 = vmatpush1.msra.mxu0 0.0
    %3612 = vmatprep.subr.mxu0 0.0
    %3613 = vmatpush1.msra.mxu0 0.0
    %3614 = vmatprep.subr.mxu0 0.0
    %3615 = vmatpush1.msra.mxu0 0.0
    %3616 = vmatprep.subr.mxu0 0.0
    %3617 = vmatpush1.msra.mxu0 0.0
    %3618 = vmatprep.subr.mxu0 0.0
    %3619 = vmatpush1.msra.mxu0 0.0
    %3620 = vmatprep.subr.mxu0 0.0
    %3621 = vmatpush1.msra.mxu0 0.0
    %3622 = vmatprep.subr.mxu0 0.0
    %3623 = vmatpush1.msra.mxu0 0.0
    %3624 = vmatprep.subr.mxu0 0.0
    %3625 = vmatpush1.msra.mxu0 0.0
    %3626 = vmatprep.subr.mxu0 0.0
    %3627 = vmatpush1.msra.mxu0 0.0
    %3628 = vmatprep.subr.mxu0 0.0
    %3629 = vmatpush1.msra.mxu0 0.0
    %3630 = vmatprep.subr.mxu0 0.0
    %3631 = vmatpush1.msra.mxu0 0.0
    %3632 = vmatprep.subr.mxu0 0.0
    %3633 = vmatpush1.msra.mxu0 0.0
    %3634 = vmatprep.subr.mxu0 0.0
    %3635 = vmatpush1.msra.mxu0 0.0
    %3636 = vmatprep.subr.mxu0 0.0
    %3637 = vmatpush1.msra.mxu0 0.0
    %3638 = vmatprep.subr.mxu0 0.0
    %3639 = vmatpush1.msra.mxu0 0.0
    %3640 = vmatprep.subr.mxu0 0.0
    %3641 = vmatpush1.msra.mxu0 0.0
    %3642 = vmatprep.subr.mxu0 0.0
    %3643 = vmatpush1.msra.mxu0 0.0
    %3644 = vmatprep.subr.mxu0 0.0
    %3645 = vmatpush1.msra.mxu0 0.0
    %3646 = vmatprep.subr.mxu0 0.0
    %3647 = vmatpush1.msra.mxu0 0.0
    %3648 = vmatprep.subr.mxu0 0.0
    %3649 = vmatpush1.msra.mxu0 0.0
    %3650 = vmatprep.subr.mxu0 0.0
    %3651 = vmatpush1.msra.mxu0 0.0
    %3652 = vmatprep.subr.mxu0 0.0
    %3653 = vmatpush1.msra.mxu0 0.0
    %3654 = vmatprep.subr.mxu0 0.0
    %3655 = vmatpush1.msra.mxu0 0.0
    %3656 = vmatprep.mubr.f32.mxu0 0.0
    %3657 = vmatmul.mubr.f32.gmra.mrb[0].mxu0 %v3581
    %v3658 = vpop.f32.mrb[0].mxu0
    %v3659 = vadd.f32 %v3579, %v3658
    %v3660 = vpop.f32.mrb[0].mxu0
    %3661 = vmatprep.mubr.f32.mxu0 0.0
    %3662 = vmatmul.mubr.f32.gmra.mrb[0].mxu0 %v3584
    %v3663 = vpop.f32.mrb[0].mxu0
    %v3664 = vadd.f32 %v3579, %v3663
    %v3665 = vpop.f32.mrb[0].mxu0
    %3666 = vmatprep.mubr.f32.mxu0 0.0
    %3667 = vmatmul.mubr.f32.gmra.mrb[0].mxu0 %v3587
    %v3668 = vpop.f32.mrb[0].mxu0
    %v3669 = vadd.f32 %v3579, %v3668
    %v3670 = vpop.f32.mrb[0].mxu0
    %3671 = vmatprep.mubr.f32.mxu0 0.0
    %3672 = vmatmul.mubr.f32.gmra.mrb[0].mxu0 %v3590
    %v3673 = vpop.f32.mrb[0].mxu0
    %v3674 = vadd.f32 %v3579, %v3673
    %v3675 = vpop.f32.mrb[0].mxu0
    %3676 = vdwg.mxu0
    %v3677 = vmax.f32 %v3659, 0.0
    %v3678 = vmax.f32 %v3664, 0.0
    %v3679 = vmax.f32 %v3669, 0.0
    %v3680 = vmax.f32 %v3674, 0.0
    %s3681 = scalar_lea.vmem %s5, 64
    %v3682 = vld [vmem:[%s3681] sm:$0xff]
    %v3683 = vld [vmem:[%s3681 + $0x8] sm:$0xff]
    %v3684 = vld [vmem:[%s3681 + $0x10] sm:$0xff]
    %v3685 = vld [vmem:[%s3681 + $0x18] sm:$0xff]
    %v3686 = vld [vmem:[%s3681 + $0x20] sm:$0xff]
    %v3687 = vld [vmem:[%s3681 + $0x28] sm:$0xff]
    %v3688 = vld [vmem:[%s3681 + $0x30] sm:$0xff]
    %v3689 = vld [vmem:[%s3681 + $0x38] sm:$0xff]
    %v3690 = vld [vmem:[%s6 + $0x9] sm:$0x1]
    %v3691 = vlaneseq
    %v3692 = vshrl.u32 %v3691, 7
    %v3693 = vsub.s32 0, %v3692
    %v3694 = vrot.slane %v3690, %v3693
    %v3696 = vsel %vm183, %v3677, 0
    %v3699 = vsel %vm183, %v3678, 0
    %v3702 = vsel %vm183, %v3679, 0
    %v3705 = vsel %vm183, %v3680, 0
    %3707 = vmatprep.subr.mxu0 0.0
    %3708 = vmatpush1.msra.mxu0 %v3682
    %3709 = vmatprep.subr.mxu0 0.0
    %3710 = vmatpush1.msra.mxu0 %v3683
    %3711 = vmatprep.subr.mxu0 0.0
    %3712 = vmatpush1.msra.mxu0 %v3684
    %3713 = vmatprep.subr.mxu0 0.0
    %3714 = vmatpush1.msra.mxu0 %v3685
    %3715 = vmatprep.subr.mxu0 0.0
    %3716 = vmatpush1.msra.mxu0 %v3686
    %3717 = vmatprep.subr.mxu0 0.0
    %3718 = vmatpush1.msra.mxu0 %v3687
    %3719 = vmatprep.subr.mxu0 0.0
    %3720 = vmatpush1.msra.mxu0 %v3688
    %3721 = vmatprep.subr.mxu0 0.0
    %3722 = vmatpush1.msra.mxu0 %v3689
    %3723 = vmatprep.subr.mxu0 0.0
    %3724 = vmatpush1.msra.mxu0 0.0
    %3725 = vmatprep.subr.mxu0 0.0
    %3726 = vmatpush1.msra.mxu0 0.0
    %3727 = vmatprep.subr.mxu0 0.0
    %3728 = vmatpush1.msra.mxu0 0.0
    %3729 = vmatprep.subr.mxu0 0.0
    %3730 = vmatpush1.msra.mxu0 0.0
    %3731 = vmatprep.subr.mxu0 0.0
    %3732 = vmatpush1.msra.mxu0 0.0
    %3733 = vmatprep.subr.mxu0 0.0
    %3734 = vmatpush1.msra.mxu0 0.0
    %3735 = vmatprep.subr.mxu0 0.0
    %3736 = vmatpush1.msra.mxu0 0.0
    %3737 = vmatprep.subr.mxu0 0.0
    %3738 = vmatpush1.msra.mxu0 0.0
    %3739 = vmatprep.subr.mxu0 0.0
    %3740 = vmatpush1.msra.mxu0 0.0
    %3741 = vmatprep.subr.mxu0 0.0
    %3742 = vmatpush1.msra.mxu0 0.0
    %3743 = vmatprep.subr.mxu0 0.0
    %3744 = vmatpush1.msra.mxu0 0.0
    %3745 = vmatprep.subr.mxu0 0.0
    %3746 = vmatpush1.msra.mxu0 0.0
    %3747 = vmatprep.subr.mxu0 0.0
    %3748 = vmatpush1.msra.mxu0 0.0
    %3749 = vmatprep.subr.mxu0 0.0
    %3750 = vmatpush1.msra.mxu0 0.0
    %3751 = vmatprep.subr.mxu0 0.0
    %3752 = vmatpush1.msra.mxu0 0.0
    %3753 = vmatprep.subr.mxu0 0.0
    %3754 = vmatpush1.msra.mxu0 0.0
    %3755 = vmatprep.subr.mxu0 0.0
    %3756 = vmatpush1.msra.mxu0 0.0
    %3757 = vmatprep.subr.mxu0 0.0
    %3758 = vmatpush1.msra.mxu0 0.0
    %3759 = vmatprep.subr.mxu0 0.0
    %3760 = vmatpush1.msra.mxu0 0.0
    %3761 = vmatprep.subr.mxu0 0.0
    %3762 = vmatpush1.msra.mxu0 0.0
    %3763 = vmatprep.subr.mxu0 0.0
    %3764 = vmatpush1.msra.mxu0 0.0
    %3765 = vmatprep.subr.mxu0 0.0
    %3766 = vmatpush1.msra.mxu0 0.0
    %3767 = vmatprep.subr.mxu0 0.0
    %3768 = vmatpush1.msra.mxu0 0.0
    %3769 = vmatprep.subr.mxu0 0.0
    %3770 = vmatpush1.msra.mxu0 0.0
    %3771 = vmatprep.mubr.f32.mxu0 0.0
    %3772 = vmatmul.mubr.f32.gmra.mrb[0].mxu0 %v3696
    %v3773 = vpop.f32.mrb[0].mxu0
    %v3774 = vadd.f32 %v3694, %v3773
    %v3775 = vpop.f32.mrb[0].mxu0
    %3776 = vmatprep.mubr.f32.mxu0 0.0
    %3777 = vmatmul.mubr.f32.gmra.mrb[0].mxu0 %v3699
    %v3778 = vpop.f32.mrb[0].mxu0
    %v3779 = vadd.f32 %v3694, %v3778
    %v3780 = vpop.f32.mrb[0].mxu0
    %3781 = vmatprep.mubr.f32.mxu0 0.0
    %3782 = vmatmul.mubr.f32.gmra.mrb[0].mxu0 %v3702
    %v3783 = vpop.f32.mrb[0].mxu0
    %v3784 = vadd.f32 %v3694, %v3783
    %v3785 = vpop.f32.mrb[0].mxu0
    %3786 = vmatprep.mubr.f32.mxu0 0.0
    %3787 = vmatmul.mubr.f32.gmra.mrb[0].mxu0 %v3705
    %v3788 = vpop.f32.mrb[0].mxu0
    %v3789 = vadd.f32 %v3694, %v3788
    %v3790 = vpop.f32.mrb[0].mxu0
    %3791 = vdwg.mxu0
    %v3792 = vadd.f32 %v3774, %v3563
    %v3793 = vadd.f32 %v3779, %v3564
    %v3794 = vadd.f32 %v3784, %v3565
    %v3795 = vadd.f32 %v3789, %v3566
    %v3796 = vmul.f32 %v3792, %v166
    %v3797 = vmul.f32 %v3793, %v167
    %v3798 = vmul.f32 %v3794, %v168
    %v3799 = vmul.f32 %v3795, %v169
    %v3800 = vld [vmem:[%s6 + $0xa] sm:$0x1]
    %v3801 = vld [vmem:[%s6 + $0xb] sm:$0x1]
    %v3802 = vsel %vm183, %v3796, 0.0
    %3803 = vadd.xlane.f32.xlu0 %v3802
    %v3804 = vpop.xlane.xlu0 %3803
    %v3805 = vsel %vm183, %v3797, 0.0
    %3806 = vadd.xlane.f32.xlu0 %v3805
    %v3807 = vpop.xlane.xlu0 %3806
    %v3808 = vsel %vm183, %v3798, 0.0
    %3809 = vadd.xlane.f32.xlu0 %v3808
    %v3810 = vpop.xlane.xlu0 %3809
    %v3811 = vsel %vm183, %v3799, 0.0
    %3812 = vadd.xlane.f32.xlu0 %v3811
    %v3813 = vpop.xlane.xlu0 %3812
    %v3814 = vmul.f32 %v3804, %v196
    %v3815 = vmul.f32 %v3807, %v196
    %v3816 = vmul.f32 %v3810, %v196
    %v3817 = vmul.f32 %v3813, %v196
    %v3818 = vsub.f32 %v3796, %v3814
    %v3819 = vsub.f32 %v3797, %v3815
    %v3820 = vsub.f32 %v3798, %v3816
    %v3821 = vsub.f32 %v3799, %v3817
    %v3822 = vmul.f32 %v3818, %v3818
    %v3823 = vmul.f32 %v3819, %v3819
    %v3824 = vmul.f32 %v3820, %v3820
    %v3825 = vmul.f32 %v3821, %v3821
    %v3826 = vsel %vm183, %v3822, 0.0
    %3827 = vadd.xlane.f32.xlu0 %v3826
    %v3828 = vpop.xlane.xlu0 %3827
    %v3829 = vsel %vm183, %v3823, 0.0
    %3830 = vadd.xlane.f32.xlu0 %v3829
    %v3831 = vpop.xlane.xlu0 %3830
    %v3832 = vsel %vm183, %v3824, 0.0
    %3833 = vadd.xlane.f32.xlu0 %v3832
    %v3834 = vpop.xlane.xlu0 %3833
    %v3835 = vsel %vm183, %v3825, 0.0
    %3836 = vadd.xlane.f32.xlu0 %v3835
    %v3837 = vpop.xlane.xlu0 %3836
    %v3838 = vmul.f32 %v3828, %v196
    %v3839 = vmul.f32 %v3831, %v196
    %v3840 = vmul.f32 %v3834, %v196
    %v3841 = vmul.f32 %v3837, %v196
    %v3842 = vadd.f32 %v3838, 1e-05
    %v3843 = vadd.f32 %v3839, 1e-05
    %v3844 = vadd.f32 %v3840, 1e-05
    %v3845 = vadd.f32 %v3841, 1e-05
    %v3846 = vrsqrt.pop %v3842
    %v3847 = vrsqrt.pop %v3843
    %v3848 = vrsqrt.pop %v3844
    %v3849 = vrsqrt.pop %v3845
    %v3850 = vmul.f32 %v3818, %v3846
    %v3851 = vmul.f32 %v3819, %v3847
    %v3852 = vmul.f32 %v3820, %v3848
    %v3853 = vmul.f32 %v3821, %v3849
    %v3854 = vlaneseq
    %v3855 = vshrl.u32 %v3854, 7
    %v3856 = vsub.s32 0, %v3855
    %v3857 = vrot.slane %v3800, %v3856
    %v3858 = vmul.f32 %v3850, %v3857
    %v3859 = vmul.f32 %v3851, %v3857
    %v3860 = vmul.f32 %v3852, %v3857
    %v3861 = vmul.f32 %v3853, %v3857
    %v3862 = vlaneseq
    %v3863 = vshrl.u32 %v3862, 7
    %v3864 = vsub.s32 0, %v3863
    %v3865 = vrot.slane %v3801, %v3864
    %v3866 = vadd.f32 %v3858, %v3865
    %v3867 = vadd.f32 %v3859, %v3865
    %v3868 = vadd.f32 %v3860, %v3865
    %v3869 = vadd.f32 %v3861, %v3865
    %s3870 = scalar_lea.vmem %s3, 768
    %v3871 = vld [vmem:[%s3870] sm:$0xff]
    %v3872 = vld [vmem:[%s3870 + $0x8] sm:$0xff]
    %v3873 = vld [vmem:[%s3870 + $0x10] sm:$0xff]
    %v3874 = vld [vmem:[%s3870 + $0x18] sm:$0xff]
    %v3875 = vld [vmem:[%s3870 + $0x20] sm:$0xff]
    %v3876 = vld [vmem:[%s3870 + $0x28] sm:$0xff]
    %v3877 = vld [vmem:[%s3870 + $0x30] sm:$0xff]
    %v3878 = vld [vmem:[%s3870 + $0x38] sm:$0xff]
    %v3879 = vld [vmem:[%s6 + $0xc] sm:$0x1]
    %v3880 = vlaneseq
    %v3881 = vshrl.u32 %v3880, 7
    %v3882 = vsub.s32 0, %v3881
    %v3883 = vrot.slane %v3879, %v3882
    %v3885 = vsel %vm183, %v3866, 0
    %v3888 = vsel %vm183, %v3867, 0
    %v3891 = vsel %vm183, %v3868, 0
    %v3894 = vsel %vm183, %v3869, 0
    %3896 = vmatprep.subr.mxu0 0.0
    %3897 = vmatpush1.msra.mxu0 %v3871
    %3898 = vmatprep.subr.mxu0 0.0
    %3899 = vmatpush1.msra.mxu0 %v3872
    %3900 = vmatprep.subr.mxu0 0.0
    %3901 = vmatpush1.msra.mxu0 %v3873
    %3902 = vmatprep.subr.mxu0 0.0
    %3903 = vmatpush1.msra.mxu0 %v3874
    %3904 = vmatprep.subr.mxu0 0.0
    %3905 = vmatpush1.msra.mxu0 %v3875
    %3906 = vmatprep.subr.mxu0 0.0
    %3907 = vmatpush1.msra.mxu0 %v3876
    %3908 = vmatprep.subr.mxu0 0.0
    %3909 = vmatpush1.msra.mxu0 %v3877
    %3910 = vmatprep.subr.mxu0 0.0
    %3911 = vmatpush1.msra.mxu0 %v3878
    %3912 = vmatprep.subr.mxu0 0.0
    %3913 = vmatpush1.msra.mxu0 0.0
    %3914 = vmatprep.subr.mxu0 0.0
    %3915 = vmatpush1.msra.mxu0 0.0
    %3916 = vmatprep.subr.mxu0 0.0
    %3917 = vmatpush1.msra.mxu0 0.0
    %3918 = vmatprep.subr.mxu0 0.0
    %3919 = vmatpush1.msra.mxu0 0.0
    %3920 = vmatprep.subr.mxu0 0.0
    %3921 = vmatpush1.msra.mxu0 0.0
    %3922 = vmatprep.subr.mxu0 0.0
    %3923 = vmatpush1.msra.mxu0 0.0
    %3924 = vmatprep.subr.mxu0 0.0
    %3925 = vmatpush1.msra.mxu0 0.0
    %3926 = vmatprep.subr.mxu0 0.0
    %3927 = vmatpush1.msra.mxu0 0.0
    %3928 = vmatprep.subr.mxu0 0.0
    %3929 = vmatpush1.msra.mxu0 0.0
    %3930 = vmatprep.subr.mxu0 0.0
    %3931 = vmatpush1.msra.mxu0 0.0
    %3932 = vmatprep.subr.mxu0 0.0
    %3933 = vmatpush1.msra.mxu0 0.0
    %3934 = vmatprep.subr.mxu0 0.0
    %3935 = vmatpush1.msra.mxu0 0.0
    %3936 = vmatprep.subr.mxu0 0.0
    %3937 = vmatpush1.msra.mxu0 0.0
    %3938 = vmatprep.subr.mxu0 0.0
    %3939 = vmatpush1.msra.mxu0 0.0
    %3940 = vmatprep.subr.mxu0 0.0
    %3941 = vmatpush1.msra.mxu0 0.0
    %3942 = vmatprep.subr.mxu0 0.0
    %3943 = vmatpush1.msra.mxu0 0.0
    %3944 = vmatprep.subr.mxu0 0.0
    %3945 = vmatpush1.msra.mxu0 0.0
    %3946 = vmatprep.subr.mxu0 0.0
    %3947 = vmatpush1.msra.mxu0 0.0
    %3948 = vmatprep.subr.mxu0 0.0
    %3949 = vmatpush1.msra.mxu0 0.0
    %3950 = vmatprep.subr.mxu0 0.0
    %3951 = vmatpush1.msra.mxu0 0.0
    %3952 = vmatprep.subr.mxu0 0.0
    %3953 = vmatpush1.msra.mxu0 0.0
    %3954 = vmatprep.subr.mxu0 0.0
    %3955 = vmatpush1.msra.mxu0 0.0
    %3956 = vmatprep.subr.mxu0 0.0
    %3957 = vmatpush1.msra.mxu0 0.0
    %3958 = vmatprep.subr.mxu0 0.0
    %3959 = vmatpush1.msra.mxu0 0.0
    %3960 = vmatprep.mubr.f32.mxu0 0.0
    %3961 = vmatmul.mubr.f32.gmra.mrb[0].mxu0 %v3885
    %v3962 = vpop.f32.mrb[0].mxu0
    %v3963 = vadd.f32 %v3883, %v3962
    %v3964 = vpop.f32.mrb[0].mxu0
    %3965 = vmatprep.mubr.f32.mxu0 0.0
    %3966 = vmatmul.mubr.f32.gmra.mrb[0].mxu0 %v3888
    %v3967 = vpop.f32.mrb[0].mxu0
    %v3968 = vadd.f32 %v3883, %v3967
    %v3969 = vpop.f32.mrb[0].mxu0
    %3970 = vmatprep.mubr.f32.mxu0 0.0
    %3971 = vmatmul.mubr.f32.gmra.mrb[0].mxu0 %v3891
    %v3972 = vpop.f32.mrb[0].mxu0
    %v3973 = vadd.f32 %v3883, %v3972
    %v3974 = vpop.f32.mrb[0].mxu0
    %3975 = vmatprep.mubr.f32.mxu0 0.0
    %3976 = vmatmul.mubr.f32.gmra.mrb[0].mxu0 %v3894
    %v3977 = vpop.f32.mrb[0].mxu0
    %v3978 = vadd.f32 %v3883, %v3977
    %v3979 = vpop.f32.mrb[0].mxu0
    %3980 = vdwg.mxu0
    %s3981 = scalar_lea.vmem %s3, 1024
    %v3982 = vld [vmem:[%s3981] sm:$0xff]
    %v3983 = vld [vmem:[%s3981 + $0x8] sm:$0xff]
    %v3984 = vld [vmem:[%s3981 + $0x10] sm:$0xff]
    %v3985 = vld [vmem:[%s3981 + $0x18] sm:$0xff]
    %v3986 = vld [vmem:[%s3981 + $0x20] sm:$0xff]
    %v3987 = vld [vmem:[%s3981 + $0x28] sm:$0xff]
    %v3988 = vld [vmem:[%s3981 + $0x30] sm:$0xff]
    %v3989 = vld [vmem:[%s3981 + $0x38] sm:$0xff]
    %v3990 = vld [vmem:[%s6 + $0xd] sm:$0x1]
    %v3991 = vlaneseq
    %v3992 = vshrl.u32 %v3991, 7
    %v3993 = vsub.s32 0, %v3992
    %v3994 = vrot.slane %v3990, %v3993
    %v3996 = vsel %vm183, %v3796, 0
    %v3999 = vsel %vm183, %v3797, 0
    %v4002 = vsel %vm183, %v3798, 0
    %v4005 = vsel %vm183, %v3799, 0
    %4007 = vmatprep.subr.mxu0 0.0
    %4008 = vmatpush1.msra.mxu0 %v3982
    %4009 = vmatprep.subr.mxu0 0.0
    %4010 = vmatpush1.msra.mxu0 %v3983
    %4011 = vmatprep.subr.mxu0 0.0
    %4012 = vmatpush1.msra.mxu0 %v3984
    %4013 = vmatprep.subr.mxu0 0.0
    %4014 = vmatpush1.msra.mxu0 %v3985
    %4015 = vmatprep.subr.mxu0 0.0
    %4016 = vmatpush1.msra.mxu0 %v3986
    %4017 = vmatprep.subr.mxu0 0.0
    %4018 = vmatpush1.msra.mxu0 %v3987
    %4019 = vmatprep.subr.mxu0 0.0
    %4020 = vmatpush1.msra.mxu0 %v3988
    %4021 = vmatprep.subr.mxu0 0.0
    %4022 = vmatpush1.msra.mxu0 %v3989
    %4023 = vmatprep.subr.mxu0 0.0
    %4024 = vmatpush1.msra.mxu0 0.0
    %4025 = vmatprep.subr.mxu0 0.0
    %4026 = vmatpush1.msra.mxu0 0.0
    %4027 = vmatprep.subr.mxu0 0.0
    %4028 = vmatpush1.msra.mxu0 0.0
    %4029 = vmatprep.subr.mxu0 0.0
    %4030 = vmatpush1.msra.mxu0 0.0
    %4031 = vmatprep.subr.mxu0 0.0
    %4032 = vmatpush1.msra.mxu0 0.0
    %4033 = vmatprep.subr.mxu0 0.0
    %4034 = vmatpush1.msra.mxu0 0.0
    %4035 = vmatprep.subr.mxu0 0.0
    %4036 = vmatpush1.msra.mxu0 0.0
    %4037 = vmatprep.subr.mxu0 0.0
    %4038 = vmatpush1.msra.mxu0 0.0
    %4039 = vmatprep.subr.mxu0 0.0
    %4040 = vmatpush1.msra.mxu0 0.0
    %4041 = vmatprep.subr.mxu0 0.0
    %4042 = vmatpush1.msra.mxu0 0.0
    %4043 = vmatprep.subr.mxu0 0.0
    %4044 = vmatpush1.msra.mxu0 0.0
    %4045 = vmatprep.subr.mxu0 0.0
    %4046 = vmatpush1.msra.mxu0 0.0
    %4047 = vmatprep.subr.mxu0 0.0
    %4048 = vmatpush1.msra.mxu0 0.0
    %4049 = vmatprep.subr.mxu0 0.0
    %4050 = vmatpush1.msra.mxu0 0.0
    %4051 = vmatprep.subr.mxu0 0.0
    %4052 = vmatpush1.msra.mxu0 0.0
    %4053 = vmatprep.subr.mxu0 0.0
    %4054 = vmatpush1.msra.mxu0 0.0
    %4055 = vmatprep.subr.mxu0 0.0
    %4056 = vmatpush1.msra.mxu0 0.0
    %4057 = vmatprep.subr.mxu0 0.0
    %4058 = vmatpush1.msra.mxu0 0.0
    %4059 = vmatprep.subr.mxu0 0.0
    %4060 = vmatpush1.msra.mxu0 0.0
    %4061 = vmatprep.subr.mxu0 0.0
    %4062 = vmatpush1.msra.mxu0 0.0
    %4063 = vmatprep.subr.mxu0 0.0
    %4064 = vmatpush1.msra.mxu0 0.0
    %4065 = vmatprep.subr.mxu0 0.0
    %4066 = vmatpush1.msra.mxu0 0.0
    %4067 = vmatprep.subr.mxu0 0.0
    %4068 = vmatpush1.msra.mxu0 0.0
    %4069 = vmatprep.subr.mxu0 0.0
    %4070 = vmatpush1.msra.mxu0 0.0
    %4071 = vmatprep.mubr.f32.mxu0 0.0
    %4072 = vmatmul.mubr.f32.gmra.mrb[0].mxu0 %v3996
    %v4073 = vpop.f32.mrb[0].mxu0
    %v4074 = vadd.f32 %v3994, %v4073
    %v4075 = vpop.f32.mrb[0].mxu0
    %4076 = vmatprep.mubr.f32.mxu0 0.0
    %4077 = vmatmul.mubr.f32.gmra.mrb[0].mxu0 %v3999
    %v4078 = vpop.f32.mrb[0].mxu0
    %v4079 = vadd.f32 %v3994, %v4078
    %v4080 = vpop.f32.mrb[0].mxu0
    %4081 = vmatprep.mubr.f32.mxu0 0.0
    %4082 = vmatmul.mubr.f32.gmra.mrb[0].mxu0 %v4002
    %v4083 = vpop.f32.mrb[0].mxu0
    %v4084 = vadd.f32 %v3994, %v4083
    %v4085 = vpop.f32.mrb[0].mxu0
    %4086 = vmatprep.mubr.f32.mxu0 0.0
    %4087 = vmatmul.mubr.f32.gmra.mrb[0].mxu0 %v4005
    %v4088 = vpop.f32.mrb[0].mxu0
    %v4089 = vadd.f32 %v3994, %v4088
    %v4090 = vpop.f32.mrb[0].mxu0
    %4091 = vdwg.mxu0
    %s4092 = scalar_lea.vmem %s3, 1280
    %v4093 = vld [vmem:[%s4092] sm:$0xff]
    %v4094 = vld [vmem:[%s4092 + $0x8] sm:$0xff]
    %v4095 = vld [vmem:[%s4092 + $0x10] sm:$0xff]
    %v4096 = vld [vmem:[%s4092 + $0x18] sm:$0xff]
    %v4097 = vld [vmem:[%s4092 + $0x20] sm:$0xff]
    %v4098 = vld [vmem:[%s4092 + $0x28] sm:$0xff]
    %v4099 = vld [vmem:[%s4092 + $0x30] sm:$0xff]
    %v4100 = vld [vmem:[%s4092 + $0x38] sm:$0xff]
    %v4101 = vld [vmem:[%s6 + $0xe] sm:$0x1]
    %v4102 = vlaneseq
    %v4103 = vshrl.u32 %v4102, 7
    %v4104 = vsub.s32 0, %v4103
    %v4105 = vrot.slane %v4101, %v4104
    %4106 = vmatprep.subr.mxu0 0.0
    %4107 = vmatpush1.msra.mxu0 %v4093
    %4108 = vmatprep.subr.mxu0 0.0
    %4109 = vmatpush1.msra.mxu0 %v4094
    %4110 = vmatprep.subr.mxu0 0.0
    %4111 = vmatpush1.msra.mxu0 %v4095
    %4112 = vmatprep.subr.mxu0 0.0
    %4113 = vmatpush1.msra.mxu0 %v4096
    %4114 = vmatprep.subr.mxu0 0.0
    %4115 = vmatpush1.msra.mxu0 %v4097
    %4116 = vmatprep.subr.mxu0 0.0
    %4117 = vmatpush1.msra.mxu0 %v4098
    %4118 = vmatprep.subr.mxu0 0.0
    %4119 = vmatpush1.msra.mxu0 %v4099
    %4120 = vmatprep.subr.mxu0 0.0
    %4121 = vmatpush1.msra.mxu0 %v4100
    %4122 = vmatprep.subr.mxu0 0.0
    %4123 = vmatpush1.msra.mxu0 0.0
    %4124 = vmatprep.subr.mxu0 0.0
    %4125 = vmatpush1.msra.mxu0 0.0
    %4126 = vmatprep.subr.mxu0 0.0
    %4127 = vmatpush1.msra.mxu0 0.0
    %4128 = vmatprep.subr.mxu0 0.0
    %4129 = vmatpush1.msra.mxu0 0.0
    %4130 = vmatprep.subr.mxu0 0.0
    %4131 = vmatpush1.msra.mxu0 0.0
    %4132 = vmatprep.subr.mxu0 0.0
    %4133 = vmatpush1.msra.mxu0 0.0
    %4134 = vmatprep.subr.mxu0 0.0
    %4135 = vmatpush1.msra.mxu0 0.0
    %4136 = vmatprep.subr.mxu0 0.0
    %4137 = vmatpush1.msra.mxu0 0.0
    %4138 = vmatprep.subr.mxu0 0.0
    %4139 = vmatpush1.msra.mxu0 0.0
    %4140 = vmatprep.subr.mxu0 0.0
    %4141 = vmatpush1.msra.mxu0 0.0
    %4142 = vmatprep.subr.mxu0 0.0
    %4143 = vmatpush1.msra.mxu0 0.0
    %4144 = vmatprep.subr.mxu0 0.0
    %4145 = vmatpush1.msra.mxu0 0.0
    %4146 = vmatprep.subr.mxu0 0.0
    %4147 = vmatpush1.msra.mxu0 0.0
    %4148 = vmatprep.subr.mxu0 0.0
    %4149 = vmatpush1.msra.mxu0 0.0
    %4150 = vmatprep.subr.mxu0 0.0
    %4151 = vmatpush1.msra.mxu0 0.0
    %4152 = vmatprep.subr.mxu0 0.0
    %4153 = vmatpush1.msra.mxu0 0.0
    %4154 = vmatprep.subr.mxu0 0.0
    %4155 = vmatpush1.msra.mxu0 0.0
    %4156 = vmatprep.subr.mxu0 0.0
    %4157 = vmatpush1.msra.mxu0 0.0
    %4158 = vmatprep.subr.mxu0 0.0
    %4159 = vmatpush1.msra.mxu0 0.0
    %4160 = vmatprep.subr.mxu0 0.0
    %4161 = vmatpush1.msra.mxu0 0.0
    %4162 = vmatprep.subr.mxu0 0.0
    %4163 = vmatpush1.msra.mxu0 0.0
    %4164 = vmatprep.subr.mxu0 0.0
    %4165 = vmatpush1.msra.mxu0 0.0
    %4166 = vmatprep.subr.mxu0 0.0
    %4167 = vmatpush1.msra.mxu0 0.0
    %4168 = vmatprep.subr.mxu0 0.0
    %4169 = vmatpush1.msra.mxu0 0.0
    %4170 = vmatprep.mubr.f32.mxu0 0.0
    %4171 = vmatmul.mubr.f32.gmra.mrb[0].mxu0 %v3996
    %v4172 = vpop.f32.mrb[0].mxu0
    %v4173 = vadd.f32 %v4105, %v4172
    %v4174 = vpop.f32.mrb[0].mxu0
    %4175 = vmatprep.mubr.f32.mxu0 0.0
    %4176 = vmatmul.mubr.f32.gmra.mrb[0].mxu0 %v3999
    %v4177 = vpop.f32.mrb[0].mxu0
    %v4178 = vadd.f32 %v4105, %v4177
    %v4179 = vpop.f32.mrb[0].mxu0
    %4180 = vmatprep.mubr.f32.mxu0 0.0
    %4181 = vmatmul.mubr.f32.gmra.mrb[0].mxu0 %v4002
    %v4182 = vpop.f32.mrb[0].mxu0
    %v4183 = vadd.f32 %v4105, %v4182
    %v4184 = vpop.f32.mrb[0].mxu0
    %4185 = vmatprep.mubr.f32.mxu0 0.0
    %4186 = vmatmul.mubr.f32.gmra.mrb[0].mxu0 %v4005
    %v4187 = vpop.f32.mrb[0].mxu0
    %v4188 = vadd.f32 %v4105, %v4187
    %v4189 = vpop.f32.mrb[0].mxu0
    %4190 = vdwg.mxu0
    %v4192 = vsel %vm573, %v3963, 0
    %v4195 = vsel %vm573, %v3968, 0
    %v4198 = vsel %vm573, %v4074, 0
    %v4201 = vsel %vm573, %v4079, 0
    %4203 = vmatprep.subr.mxu0 0.0
    %4204 = vmatpush1.xpose.msra.mxu0 %v4198
    %4205 = vmatprep.subr.mxu0 0.0
    %4206 = vmatpush1.xpose.msra.mxu0 %v4201
    %4207 = vmatprep.subr.mxu0 0.0
    %4208 = vmatpush1.xpose.msra.mxu0 0.0
    %4209 = vmatprep.subr.mxu0 0.0
    %4210 = vmatpush1.xpose.msra.mxu0 0.0
    %4211 = vmatprep.subr.mxu0 0.0
    %4212 = vmatpush1.xpose.msra.mxu0 0.0
    %4213 = vmatprep.subr.mxu0 0.0
    %4214 = vmatpush1.xpose.msra.mxu0 0.0
    %4215 = vmatprep.subr.mxu0 0.0
    %4216 = vmatpush1.xpose.msra.mxu0 0.0
    %4217 = vmatprep.subr.mxu0 0.0
    %4218 = vmatpush1.xpose.msra.mxu0 0.0
    %4219 = vmatprep.subr.mxu0 0.0
    %4220 = vmatpush1.xpose.msra.mxu0 0.0
    %4221 = vmatprep.subr.mxu0 0.0
    %4222 = vmatpush1.xpose.msra.mxu0 0.0
    %4223 = vmatprep.subr.mxu0 0.0
    %4224 = vmatpush1.xpose.msra.mxu0 0.0
    %4225 = vmatprep.subr.mxu0 0.0
    %4226 = vmatpush1.xpose.msra.mxu0 0.0
    %4227 = vmatprep.subr.mxu0 0.0
    %4228 = vmatpush1.xpose.msra.mxu0 0.0
    %4229 = vmatprep.subr.mxu0 0.0
    %4230 = vmatpush1.xpose.msra.mxu0 0.0
    %4231 = vmatprep.subr.mxu0 0.0
    %4232 = vmatpush1.xpose.msra.mxu0 0.0
    %4233 = vmatprep.subr.mxu0 0.0
    %4234 = vmatpush1.xpose.msra.mxu0 0.0
    %4235 = vmatprep.subr.mxu0 0.0
    %4236 = vmatpush1.xpose.msra.mxu0 0.0
    %4237 = vmatprep.subr.mxu0 0.0
    %4238 = vmatpush1.xpose.msra.mxu0 0.0
    %4239 = vmatprep.subr.mxu0 0.0
    %4240 = vmatpush1.xpose.msra.mxu0 0.0
    %4241 = vmatprep.subr.mxu0 0.0
    %4242 = vmatpush1.xpose.msra.mxu0 0.0
    %4243 = vmatprep.subr.mxu0 0.0
    %4244 = vmatpush1.xpose.msra.mxu0 0.0
    %4245 = vmatprep.subr.mxu0 0.0
    %4246 = vmatpush1.xpose.msra.mxu0 0.0
    %4247 = vmatprep.subr.mxu0 0.0
    %4248 = vmatpush1.xpose.msra.mxu0 0.0
    %4249 = vmatprep.subr.mxu0 0.0
    %4250 = vmatpush1.xpose.msra.mxu0 0.0
    %4251 = vmatprep.subr.mxu0 0.0
    %4252 = vmatpush1.xpose.msra.mxu0 0.0
    %4253 = vmatprep.subr.mxu0 0.0
    %4254 = vmatpush1.xpose.msra.mxu0 0.0
    %4255 = vmatprep.subr.mxu0 0.0
    %4256 = vmatpush1.xpose.msra.mxu0 0.0
    %4257 = vmatprep.subr.mxu0 0.0
    %4258 = vmatpush1.xpose.msra.mxu0 0.0
    %4259 = vmatprep.subr.mxu0 0.0
    %4260 = vmatpush1.xpose.msra.mxu0 0.0
    %4261 = vmatprep.subr.mxu0 0.0
    %4262 = vmatpush1.xpose.msra.mxu0 0.0
    %4263 = vmatprep.subr.mxu0 0.0
    %4264 = vmatpush1.xpose.msra.mxu0 0.0
    %4265 = vmatprep.subr.mxu0 0.0
    %4266 = vmatpush1.xpose.msra.mxu0 0.0
    %4267 = vmatprep.mubr.f32.mxu0 0.0
    %4268 = vmatmul.mubr.f32.gmra.mrb[0].mxu0 %v4192
    %v4269 = vpop.f32.mrb[0].mxu0
    %v4270 = vadd.f32 0.0, %v4269
    %v4271 = vpop.f32.mrb[0].mxu0
    %4272 = vmatprep.mubr.f32.mxu0 0.0
    %4273 = vmatmul.mubr.f32.gmra.mrb[0].mxu0 %v4195
    %v4274 = vpop.f32.mrb[0].mxu0
    %v4275 = vadd.f32 0.0, %v4274
    %v4276 = vpop.f32.mrb[0].mxu0
    %4277 = vdwg.mxu0
    %v4279 = vsel %vm573, %v3973, 0
    %v4282 = vsel %vm573, %v3978, 0
    %v4285 = vsel %vm573, %v4084, 0
    %v4288 = vsel %vm573, %v4089, 0
    %4290 = vmatprep.subr.mxu0 0.0
    %4291 = vmatpush1.xpose.msra.mxu0 %v4285
    %4292 = vmatprep.subr.mxu0 0.0
    %4293 = vmatpush1.xpose.msra.mxu0 %v4288
    %4294 = vmatprep.subr.mxu0 0.0
    %4295 = vmatpush1.xpose.msra.mxu0 0.0
    %4296 = vmatprep.subr.mxu0 0.0
    %4297 = vmatpush1.xpose.msra.mxu0 0.0
    %4298 = vmatprep.subr.mxu0 0.0
    %4299 = vmatpush1.xpose.msra.mxu0 0.0
    %4300 = vmatprep.subr.mxu0 0.0
    %4301 = vmatpush1.xpose.msra.mxu0 0.0
    %4302 = vmatprep.subr.mxu0 0.0
    %4303 = vmatpush1.xpose.msra.mxu0 0.0
    %4304 = vmatprep.subr.mxu0 0.0
    %4305 = vmatpush1.xpose.msra.mxu0 0.0
    %4306 = vmatprep.subr.mxu0 0.0
    %4307 = vmatpush1.xpose.msra.mxu0 0.0
    %4308 = vmatprep.subr.mxu0 0.0
    %4309 = vmatpush1.xpose.msra.mxu0 0.0
    %4310 = vmatprep.subr.mxu0 0.0
    %4311 = vmatpush1.xpose.msra.mxu0 0.0
    %4312 = vmatprep.subr.mxu0 0.0
    %4313 = vmatpush1.xpose.msra.mxu0 0.0
    %4314 = vmatprep.subr.mxu0 0.0
    %4315 = vmatpush1.xpose.msra.mxu0 0.0
    %4316 = vmatprep.subr.mxu0 0.0
    %4317 = vmatpush1.xpose.msra.mxu0 0.0
    %4318 = vmatprep.subr.mxu0 0.0
    %4319 = vmatpush1.xpose.msra.mxu0 0.0
    %4320 = vmatprep.subr.mxu0 0.0
    %4321 = vmatpush1.xpose.msra.mxu0 0.0
    %4322 = vmatprep.subr.mxu0 0.0
    %4323 = vmatpush1.xpose.msra.mxu0 0.0
    %4324 = vmatprep.subr.mxu0 0.0
    %4325 = vmatpush1.xpose.msra.mxu0 0.0
    %4326 = vmatprep.subr.mxu0 0.0
    %4327 = vmatpush1.xpose.msra.mxu0 0.0
    %4328 = vmatprep.subr.mxu0 0.0
    %4329 = vmatpush1.xpose.msra.mxu0 0.0
    %4330 = vmatprep.subr.mxu0 0.0
    %4331 = vmatpush1.xpose.msra.mxu0 0.0
    %4332 = vmatprep.subr.mxu0 0.0
    %4333 = vmatpush1.xpose.msra.mxu0 0.0
    %4334 = vmatprep.subr.mxu0 0.0
    %4335 = vmatpush1.xpose.msra.mxu0 0.0
    %4336 = vmatprep.subr.mxu0 0.0
    %4337 = vmatpush1.xpose.msra.mxu0 0.0
    %4338 = vmatprep.subr.mxu0 0.0
    %4339 = vmatpush1.xpose.msra.mxu0 0.0
    %4340 = vmatprep.subr.mxu0 0.0
    %4341 = vmatpush1.xpose.msra.mxu0 0.0
    %4342 = vmatprep.subr.mxu0 0.0
    %4343 = vmatpush1.xpose.msra.mxu0 0.0
    %4344 = vmatprep.subr.mxu0 0.0
    %4345 = vmatpush1.xpose.msra.mxu0 0.0
    %4346 = vmatprep.subr.mxu0 0.0
    %4347 = vmatpush1.xpose.msra.mxu0 0.0
    %4348 = vmatprep.subr.mxu0 0.0
    %4349 = vmatpush1.xpose.msra.mxu0 0.0
    %4350 = vmatprep.subr.mxu0 0.0
    %4351 = vmatpush1.xpose.msra.mxu0 0.0
    %4352 = vmatprep.subr.mxu0 0.0
    %4353 = vmatpush1.xpose.msra.mxu0 0.0
    %4354 = vmatprep.mubr.f32.mxu0 0.0
    %4355 = vmatmul.mubr.f32.gmra.mrb[0].mxu0 %v4279
    %v4356 = vpop.f32.mrb[0].mxu0
    %v4357 = vadd.f32 0.0, %v4356
    %v4358 = vpop.f32.mrb[0].mxu0
    %4359 = vmatprep.mubr.f32.mxu0 0.0
    %4360 = vmatmul.mubr.f32.gmra.mrb[0].mxu0 %v4282
    %v4361 = vpop.f32.mrb[0].mxu0
    %v4362 = vadd.f32 0.0, %v4361
    %v4363 = vpop.f32.mrb[0].mxu0
    %4364 = vdwg.mxu0
    %v4365 = vmul.f32 %v4270, 0.25
    %v4366 = vmul.f32 %v4275, 0.25
    %v4367 = vmul.f32 %v4357, 0.25
    %v4368 = vmul.f32 %v4362, 0.25
    %v4369 = vadd.f32 %v4365, %v179
    %v4370 = vadd.f32 %v4366, %v180
    %v4371 = vadd.f32 %v4367, %v179
    %v4372 = vadd.f32 %v4368, %v180
    %v4373 = vsel %vm573, %v4369, -inf
    %4374 = vmax.xlane.f32.xlu0 %v4373
    %v4375 = vpop.xlane.xlu0 %4374
    %v4376 = vsel %vm573, %v4370, -inf
    %4377 = vmax.xlane.f32.xlu0 %v4376
    %v4378 = vpop.xlane.xlu0 %4377
    %v4379 = vsel %vm573, %v4371, -inf
    %4380 = vmax.xlane.f32.xlu0 %v4379
    %v4381 = vpop.xlane.xlu0 %4380
    %v4382 = vsel %vm573, %v4372, -inf
    %4383 = vmax.xlane.f32.xlu0 %v4382
    %v4384 = vpop.xlane.xlu0 %4383
    %v4385 = vsub.f32 %v4369, %v4375
    %v4386 = vsub.f32 %v4370, %v4378
    %v4387 = vsub.f32 %v4371, %v4381
    %v4388 = vsub.f32 %v4372, %v4384
    %v4389 = vmul.f32 %v4385, 1.442695
    %v4390 = vpow.pop %v4389
    %v4391 = vmul.f32 %v4386, 1.442695
    %v4392 = vpow.pop %v4391
    %v4393 = vmul.f32 %v4387, 1.442695
    %v4394 = vpow.pop %v4393
    %v4395 = vmul.f32 %v4388, 1.442695
    %v4396 = vpow.pop %v4395
    %v4397 = vsel %vm573, %v4390, 0.0
    %4398 = vadd.xlane.f32.xlu0 %v4397
    %v4399 = vpop.xlane.xlu0 %4398
    %v4400 = vsel %vm573, %v4392, 0.0
    %4401 = vadd.xlane.f32.xlu0 %v4400
    %v4402 = vpop.xlane.xlu0 %4401
    %v4403 = vsel %vm573, %v4394, 0.0
    %4404 = vadd.xlane.f32.xlu0 %v4403
    %v4405 = vpop.xlane.xlu0 %4404
    %v4406 = vsel %vm573, %v4396, 0.0
    %4407 = vadd.xlane.f32.xlu0 %v4406
    %v4408 = vpop.xlane.xlu0 %4407
    %v4409 = vrcp.pop %v4399
    %v4410 = vrcp.pop %v4402
    %v4411 = vrcp.pop %v4405
    %v4412 = vrcp.pop %v4408
    %v4413 = vmul.f32 %v4390, %v4409
    %v4414 = vmul.f32 %v4392, %v4410
    %v4415 = vmul.f32 %v4394, %v4411
    %v4416 = vmul.f32 %v4396, %v4412
    %v4417 = vadd.f32 %v4413, 0.0
    %v4418 = vadd.f32 %v4414, 0.0
    %v4419 = vadd.f32 %v4415, 0.0
    %v4420 = vadd.f32 %v4416, 0.0
    %v4422 = vsel %vm573, %v4413, 0
    %v4425 = vsel %vm573, %v4414, 0
    %4427 = vmatprep.subr.mxu0 0.0
    %4428 = vmatpush1.msra.mxu0 %v4173
    %4429 = vmatprep.subr.mxu0 0.0
    %4430 = vmatpush1.msra.mxu0 %v4178
    %4431 = vmatprep.subr.mxu0 0.0
    %4432 = vmatpush1.msra.mxu0 0.0
    %4433 = vmatprep.subr.mxu0 0.0
    %4434 = vmatpush1.msra.mxu0 0.0
    %4435 = vmatprep.subr.mxu0 0.0
    %4436 = vmatpush1.msra.mxu0 0.0
    %4437 = vmatprep.subr.mxu0 0.0
    %4438 = vmatpush1.msra.mxu0 0.0
    %4439 = vmatprep.subr.mxu0 0.0
    %4440 = vmatpush1.msra.mxu0 0.0
    %4441 = vmatprep.subr.mxu0 0.0
    %4442 = vmatpush1.msra.mxu0 0.0
    %4443 = vmatprep.subr.mxu0 0.0
    %4444 = vmatpush1.msra.mxu0 0.0
    %4445 = vmatprep.subr.mxu0 0.0
    %4446 = vmatpush1.msra.mxu0 0.0
    %4447 = vmatprep.subr.mxu0 0.0
    %4448 = vmatpush1.msra.mxu0 0.0
    %4449 = vmatprep.subr.mxu0 0.0
    %4450 = vmatpush1.msra.mxu0 0.0
    %4451 = vmatprep.subr.mxu0 0.0
    %4452 = vmatpush1.msra.mxu0 0.0
    %4453 = vmatprep.subr.mxu0 0.0
    %4454 = vmatpush1.msra.mxu0 0.0
    %4455 = vmatprep.subr.mxu0 0.0
    %4456 = vmatpush1.msra.mxu0 0.0
    %4457 = vmatprep.subr.mxu0 0.0
    %4458 = vmatpush1.msra.mxu0 0.0
    %4459 = vmatprep.subr.mxu0 0.0
    %4460 = vmatpush1.msra.mxu0 0.0
    %4461 = vmatprep.subr.mxu0 0.0
    %4462 = vmatpush1.msra.mxu0 0.0
    %4463 = vmatprep.subr.mxu0 0.0
    %4464 = vmatpush1.msra.mxu0 0.0
    %4465 = vmatprep.subr.mxu0 0.0
    %4466 = vmatpush1.msra.mxu0 0.0
    %4467 = vmatprep.subr.mxu0 0.0
    %4468 = vmatpush1.msra.mxu0 0.0
    %4469 = vmatprep.subr.mxu0 0.0
    %4470 = vmatpush1.msra.mxu0 0.0
    %4471 = vmatprep.subr.mxu0 0.0
    %4472 = vmatpush1.msra.mxu0 0.0
    %4473 = vmatprep.subr.mxu0 0.0
    %4474 = vmatpush1.msra.mxu0 0.0
    %4475 = vmatprep.subr.mxu0 0.0
    %4476 = vmatpush1.msra.mxu0 0.0
    %4477 = vmatprep.subr.mxu0 0.0
    %4478 = vmatpush1.msra.mxu0 0.0
    %4479 = vmatprep.subr.mxu0 0.0
    %4480 = vmatpush1.msra.mxu0 0.0
    %4481 = vmatprep.subr.mxu0 0.0
    %4482 = vmatpush1.msra.mxu0 0.0
    %4483 = vmatprep.subr.mxu0 0.0
    %4484 = vmatpush1.msra.mxu0 0.0
    %4485 = vmatprep.subr.mxu0 0.0
    %4486 = vmatpush1.msra.mxu0 0.0
    %4487 = vmatprep.subr.mxu0 0.0
    %4488 = vmatpush1.msra.mxu0 0.0
    %4489 = vmatprep.subr.mxu0 0.0
    %4490 = vmatpush1.msra.mxu0 0.0
    %4491 = vmatprep.mubr.f32.mxu0 0.0
    %4492 = vmatmul.mubr.f32.gmra.mrb[0].mxu0 %v4422
    %v4493 = vpop.f32.mrb[0].mxu0
    %v4494 = vadd.f32 0.0, %v4493
    %v4495 = vpop.f32.mrb[0].mxu0
    %4496 = vmatprep.mubr.f32.mxu0 0.0
    %4497 = vmatmul.mubr.f32.gmra.mrb[0].mxu0 %v4425
    %v4498 = vpop.f32.mrb[0].mxu0
    %v4499 = vadd.f32 0.0, %v4498
    %v4500 = vpop.f32.mrb[0].mxu0
    %4501 = vdwg.mxu0
    %v4503 = vsel %vm573, %v4415, 0
    %v4506 = vsel %vm573, %v4416, 0
    %4508 = vmatprep.subr.mxu0 0.0
    %4509 = vmatpush1.msra.mxu0 %v4183
    %4510 = vmatprep.subr.mxu0 0.0
    %4511 = vmatpush1.msra.mxu0 %v4188
    %4512 = vmatprep.subr.mxu0 0.0
    %4513 = vmatpush1.msra.mxu0 0.0
    %4514 = vmatprep.subr.mxu0 0.0
    %4515 = vmatpush1.msra.mxu0 0.0
    %4516 = vmatprep.subr.mxu0 0.0
    %4517 = vmatpush1.msra.mxu0 0.0
    %4518 = vmatprep.subr.mxu0 0.0
    %4519 = vmatpush1.msra.mxu0 0.0
    %4520 = vmatprep.subr.mxu0 0.0
    %4521 = vmatpush1.msra.mxu0 0.0
    %4522 = vmatprep.subr.mxu0 0.0
    %4523 = vmatpush1.msra.mxu0 0.0
    %4524 = vmatprep.subr.mxu0 0.0
    %4525 = vmatpush1.msra.mxu0 0.0
    %4526 = vmatprep.subr.mxu0 0.0
    %4527 = vmatpush1.msra.mxu0 0.0
    %4528 = vmatprep.subr.mxu0 0.0
    %4529 = vmatpush1.msra.mxu0 0.0
    %4530 = vmatprep.subr.mxu0 0.0
    %4531 = vmatpush1.msra.mxu0 0.0
    %4532 = vmatprep.subr.mxu0 0.0
    %4533 = vmatpush1.msra.mxu0 0.0
    %4534 = vmatprep.subr.mxu0 0.0
    %4535 = vmatpush1.msra.mxu0 0.0
    %4536 = vmatprep.subr.mxu0 0.0
    %4537 = vmatpush1.msra.mxu0 0.0
    %4538 = vmatprep.subr.mxu0 0.0
    %4539 = vmatpush1.msra.mxu0 0.0
    %4540 = vmatprep.subr.mxu0 0.0
    %4541 = vmatpush1.msra.mxu0 0.0
    %4542 = vmatprep.subr.mxu0 0.0
    %4543 = vmatpush1.msra.mxu0 0.0
    %4544 = vmatprep.subr.mxu0 0.0
    %4545 = vmatpush1.msra.mxu0 0.0
    %4546 = vmatprep.subr.mxu0 0.0
    %4547 = vmatpush1.msra.mxu0 0.0
    %4548 = vmatprep.subr.mxu0 0.0
    %4549 = vmatpush1.msra.mxu0 0.0
    %4550 = vmatprep.subr.mxu0 0.0
    %4551 = vmatpush1.msra.mxu0 0.0
    %4552 = vmatprep.subr.mxu0 0.0
    %4553 = vmatpush1.msra.mxu0 0.0
    %4554 = vmatprep.subr.mxu0 0.0
    %4555 = vmatpush1.msra.mxu0 0.0
    %4556 = vmatprep.subr.mxu0 0.0
    %4557 = vmatpush1.msra.mxu0 0.0
    %4558 = vmatprep.subr.mxu0 0.0
    %4559 = vmatpush1.msra.mxu0 0.0
    %4560 = vmatprep.subr.mxu0 0.0
    %4561 = vmatpush1.msra.mxu0 0.0
    %4562 = vmatprep.subr.mxu0 0.0
    %4563 = vmatpush1.msra.mxu0 0.0
    %4564 = vmatprep.subr.mxu0 0.0
    %4565 = vmatpush1.msra.mxu0 0.0
    %4566 = vmatprep.subr.mxu0 0.0
    %4567 = vmatpush1.msra.mxu0 0.0
    %4568 = vmatprep.subr.mxu0 0.0
    %4569 = vmatpush1.msra.mxu0 0.0
    %4570 = vmatprep.subr.mxu0 0.0
    %4571 = vmatpush1.msra.mxu0 0.0
    %4572 = vmatprep.mubr.f32.mxu0 0.0
    %4573 = vmatmul.mubr.f32.gmra.mrb[0].mxu0 %v4503
    %v4574 = vpop.f32.mrb[0].mxu0
    %v4575 = vadd.f32 0.0, %v4574
    %v4576 = vpop.f32.mrb[0].mxu0
    %4577 = vmatprep.mubr.f32.mxu0 0.0
    %4578 = vmatmul.mubr.f32.gmra.mrb[0].mxu0 %v4506
    %v4579 = vpop.f32.mrb[0].mxu0
    %v4580 = vadd.f32 0.0, %v4579
    %v4581 = vpop.f32.mrb[0].mxu0
    %4582 = vdwg.mxu0
    %s4583 = scalar_lea.vmem %s4, 64
    %v4584 = vld [vmem:[%s4583] sm:$0xff]
    %v4585 = vld [vmem:[%s4583 + $0x8] sm:$0xff]
    %s4586 = scalar_lea.vmem %s3, 832
    %v4587 = vld [vmem:[%s4586] sm:$0xff]
    %v4588 = vld [vmem:[%s4586 + $0x8] sm:$0xff]
    %v4589 = vld [vmem:[%s4586 + $0x10] sm:$0xff]
    %v4590 = vld [vmem:[%s4586 + $0x18] sm:$0xff]
    %v4591 = vld [vmem:[%s4586 + $0x20] sm:$0xff]
    %v4592 = vld [vmem:[%s4586 + $0x28] sm:$0xff]
    %v4593 = vld [vmem:[%s4586 + $0x30] sm:$0xff]
    %v4594 = vld [vmem:[%s4586 + $0x38] sm:$0xff]
    %v4595 = vld [vmem:[%s6 + $0xc] sm:$0x1]
    %v4596 = vlaneseq
    %v4597 = vshrl.u32 %v4596, 7
    %v4598 = vsub.s32 0, %v4597
    %v4599 = vrot.slane %v4595, %v4598
    %4601 = vrot.lane.b32.xlu0 %v4599, 112
    %v4602 = vpop.permute.xlu0 %4601
    %4604 = vmatprep.subr.mxu0 0.0
    %4605 = vmatpush1.msra.mxu0 %v4587
    %4606 = vmatprep.subr.mxu0 0.0
    %4607 = vmatpush1.msra.mxu0 %v4588
    %4608 = vmatprep.subr.mxu0 0.0
    %4609 = vmatpush1.msra.mxu0 %v4589
    %4610 = vmatprep.subr.mxu0 0.0
    %4611 = vmatpush1.msra.mxu0 %v4590
    %4612 = vmatprep.subr.mxu0 0.0
    %4613 = vmatpush1.msra.mxu0 %v4591
    %4614 = vmatprep.subr.mxu0 0.0
    %4615 = vmatpush1.msra.mxu0 %v4592
    %4616 = vmatprep.subr.mxu0 0.0
    %4617 = vmatpush1.msra.mxu0 %v4593
    %4618 = vmatprep.subr.mxu0 0.0
    %4619 = vmatpush1.msra.mxu0 %v4594
    %4620 = vmatprep.subr.mxu0 0.0
    %4621 = vmatpush1.msra.mxu0 0.0
    %4622 = vmatprep.subr.mxu0 0.0
    %4623 = vmatpush1.msra.mxu0 0.0
    %4624 = vmatprep.subr.mxu0 0.0
    %4625 = vmatpush1.msra.mxu0 0.0
    %4626 = vmatprep.subr.mxu0 0.0
    %4627 = vmatpush1.msra.mxu0 0.0
    %4628 = vmatprep.subr.mxu0 0.0
    %4629 = vmatpush1.msra.mxu0 0.0
    %4630 = vmatprep.subr.mxu0 0.0
    %4631 = vmatpush1.msra.mxu0 0.0
    %4632 = vmatprep.subr.mxu0 0.0
    %4633 = vmatpush1.msra.mxu0 0.0
    %4634 = vmatprep.subr.mxu0 0.0
    %4635 = vmatpush1.msra.mxu0 0.0
    %4636 = vmatprep.subr.mxu0 0.0
    %4637 = vmatpush1.msra.mxu0 0.0
    %4638 = vmatprep.subr.mxu0 0.0
    %4639 = vmatpush1.msra.mxu0 0.0
    %4640 = vmatprep.subr.mxu0 0.0
    %4641 = vmatpush1.msra.mxu0 0.0
    %4642 = vmatprep.subr.mxu0 0.0
    %4643 = vmatpush1.msra.mxu0 0.0
    %4644 = vmatprep.subr.mxu0 0.0
    %4645 = vmatpush1.msra.mxu0 0.0
    %4646 = vmatprep.subr.mxu0 0.0
    %4647 = vmatpush1.msra.mxu0 0.0
    %4648 = vmatprep.subr.mxu0 0.0
    %4649 = vmatpush1.msra.mxu0 0.0
    %4650 = vmatprep.subr.mxu0 0.0
    %4651 = vmatpush1.msra.mxu0 0.0
    %4652 = vmatprep.subr.mxu0 0.0
    %4653 = vmatpush1.msra.mxu0 0.0
    %4654 = vmatprep.subr.mxu0 0.0
    %4655 = vmatpush1.msra.mxu0 0.0
    %4656 = vmatprep.subr.mxu0 0.0
    %4657 = vmatpush1.msra.mxu0 0.0
    %4658 = vmatprep.subr.mxu0 0.0
    %4659 = vmatpush1.msra.mxu0 0.0
    %4660 = vmatprep.subr.mxu0 0.0
    %4661 = vmatpush1.msra.mxu0 0.0
    %4662 = vmatprep.subr.mxu0 0.0
    %4663 = vmatpush1.msra.mxu0 0.0
    %4664 = vmatprep.subr.mxu0 0.0
    %4665 = vmatpush1.msra.mxu0 0.0
    %4666 = vmatprep.subr.mxu0 0.0
    %4667 = vmatpush1.msra.mxu0 0.0
    %4668 = vmatprep.mubr.f32.mxu0 0.0
    %4669 = vmatmul.mubr.f32.gmra.mrb[0].mxu0 %v3885
    %v4670 = vpop.f32.mrb[0].mxu0
    %v4671 = vadd.f32 %v4602, %v4670
    %v4672 = vpop.f32.mrb[0].mxu0
    %4673 = vmatprep.mubr.f32.mxu0 0.0
    %4674 = vmatmul.mubr.f32.gmra.mrb[0].mxu0 %v3888
    %v4675 = vpop.f32.mrb[0].mxu0
    %v4676 = vadd.f32 %v4602, %v4675
    %v4677 = vpop.f32.mrb[0].mxu0
    %4678 = vmatprep.mubr.f32.mxu0 0.0
    %4679 = vmatmul.mubr.f32.gmra.mrb[0].mxu0 %v3891
    %v4680 = vpop.f32.mrb[0].mxu0
    %v4681 = vadd.f32 %v4602, %v4680
    %v4682 = vpop.f32.mrb[0].mxu0
    %4683 = vmatprep.mubr.f32.mxu0 0.0
    %4684 = vmatmul.mubr.f32.gmra.mrb[0].mxu0 %v3894
    %v4685 = vpop.f32.mrb[0].mxu0
    %v4686 = vadd.f32 %v4602, %v4685
    %v4687 = vpop.f32.mrb[0].mxu0
    %4688 = vdwg.mxu0
    %s4689 = scalar_lea.vmem %s3, 1088
    %v4690 = vld [vmem:[%s4689] sm:$0xff]
    %v4691 = vld [vmem:[%s4689 + $0x8] sm:$0xff]
    %v4692 = vld [vmem:[%s4689 + $0x10] sm:$0xff]
    %v4693 = vld [vmem:[%s4689 + $0x18] sm:$0xff]
    %v4694 = vld [vmem:[%s4689 + $0x20] sm:$0xff]
    %v4695 = vld [vmem:[%s4689 + $0x28] sm:$0xff]
    %v4696 = vld [vmem:[%s4689 + $0x30] sm:$0xff]
    %v4697 = vld [vmem:[%s4689 + $0x38] sm:$0xff]
    %v4698 = vld [vmem:[%s6 + $0xd] sm:$0x1]
    %v4699 = vlaneseq
    %v4700 = vshrl.u32 %v4699, 7
    %v4701 = vsub.s32 0, %v4700
    %v4702 = vrot.slane %v4698, %v4701
    %4704 = vrot.lane.b32.xlu0 %v4702, 112
    %v4705 = vpop.permute.xlu0 %4704
    %4707 = vmatprep.subr.mxu0 0.0
    %4708 = vmatpush1.msra.mxu0 %v4690
    %4709 = vmatprep.subr.mxu0 0.0
    %4710 = vmatpush1.msra.mxu0 %v4691
    %4711 = vmatprep.subr.mxu0 0.0
    %4712 = vmatpush1.msra.mxu0 %v4692
    %4713 = vmatprep.subr.mxu0 0.0
    %4714 = vmatpush1.msra.mxu0 %v4693
    %4715 = vmatprep.subr.mxu0 0.0
    %4716 = vmatpush1.msra.mxu0 %v4694
    %4717 = vmatprep.subr.mxu0 0.0
    %4718 = vmatpush1.msra.mxu0 %v4695
    %4719 = vmatprep.subr.mxu0 0.0
    %4720 = vmatpush1.msra.mxu0 %v4696
    %4721 = vmatprep.subr.mxu0 0.0
    %4722 = vmatpush1.msra.mxu0 %v4697
    %4723 = vmatprep.subr.mxu0 0.0
    %4724 = vmatpush1.msra.mxu0 0.0
    %4725 = vmatprep.subr.mxu0 0.0
    %4726 = vmatpush1.msra.mxu0 0.0
    %4727 = vmatprep.subr.mxu0 0.0
    %4728 = vmatpush1.msra.mxu0 0.0
    %4729 = vmatprep.subr.mxu0 0.0
    %4730 = vmatpush1.msra.mxu0 0.0
    %4731 = vmatprep.subr.mxu0 0.0
    %4732 = vmatpush1.msra.mxu0 0.0
    %4733 = vmatprep.subr.mxu0 0.0
    %4734 = vmatpush1.msra.mxu0 0.0
    %4735 = vmatprep.subr.mxu0 0.0
    %4736 = vmatpush1.msra.mxu0 0.0
    %4737 = vmatprep.subr.mxu0 0.0
    %4738 = vmatpush1.msra.mxu0 0.0
    %4739 = vmatprep.subr.mxu0 0.0
    %4740 = vmatpush1.msra.mxu0 0.0
    %4741 = vmatprep.subr.mxu0 0.0
    %4742 = vmatpush1.msra.mxu0 0.0
    %4743 = vmatprep.subr.mxu0 0.0
    %4744 = vmatpush1.msra.mxu0 0.0
    %4745 = vmatprep.subr.mxu0 0.0
    %4746 = vmatpush1.msra.mxu0 0.0
    %4747 = vmatprep.subr.mxu0 0.0
    %4748 = vmatpush1.msra.mxu0 0.0
    %4749 = vmatprep.subr.mxu0 0.0
    %4750 = vmatpush1.msra.mxu0 0.0
    %4751 = vmatprep.subr.mxu0 0.0
    %4752 = vmatpush1.msra.mxu0 0.0
    %4753 = vmatprep.subr.mxu0 0.0
    %4754 = vmatpush1.msra.mxu0 0.0
    %4755 = vmatprep.subr.mxu0 0.0
    %4756 = vmatpush1.msra.mxu0 0.0
    %4757 = vmatprep.subr.mxu0 0.0
    %4758 = vmatpush1.msra.mxu0 0.0
    %4759 = vmatprep.subr.mxu0 0.0
    %4760 = vmatpush1.msra.mxu0 0.0
    %4761 = vmatprep.subr.mxu0 0.0
    %4762 = vmatpush1.msra.mxu0 0.0
    %4763 = vmatprep.subr.mxu0 0.0
    %4764 = vmatpush1.msra.mxu0 0.0
    %4765 = vmatprep.subr.mxu0 0.0
    %4766 = vmatpush1.msra.mxu0 0.0
    %4767 = vmatprep.subr.mxu0 0.0
    %4768 = vmatpush1.msra.mxu0 0.0
    %4769 = vmatprep.subr.mxu0 0.0
    %4770 = vmatpush1.msra.mxu0 0.0
    %4771 = vmatprep.mubr.f32.mxu0 0.0
    %4772 = vmatmul.mubr.f32.gmra.mrb[0].mxu0 %v3996
    %v4773 = vpop.f32.mrb[0].mxu0
    %v4774 = vadd.f32 %v4705, %v4773
    %v4775 = vpop.f32.mrb[0].mxu0
    %4776 = vmatprep.mubr.f32.mxu0 0.0
    %4777 = vmatmul.mubr.f32.gmra.mrb[0].mxu0 %v3999
    %v4778 = vpop.f32.mrb[0].mxu0
    %v4779 = vadd.f32 %v4705, %v4778
    %v4780 = vpop.f32.mrb[0].mxu0
    %4781 = vmatprep.mubr.f32.mxu0 0.0
    %4782 = vmatmul.mubr.f32.gmra.mrb[0].mxu0 %v4002
    %v4783 = vpop.f32.mrb[0].mxu0
    %v4784 = vadd.f32 %v4705, %v4783
    %v4785 = vpop.f32.mrb[0].mxu0
    %4786 = vmatprep.mubr.f32.mxu0 0.0
    %4787 = vmatmul.mubr.f32.gmra.mrb[0].mxu0 %v4005
    %v4788 = vpop.f32.mrb[0].mxu0
    %v4789 = vadd.f32 %v4705, %v4788
    %v4790 = vpop.f32.mrb[0].mxu0
    %4791 = vdwg.mxu0
    %s4792 = scalar_lea.vmem %s3, 1344
    %v4793 = vld [vmem:[%s4792] sm:$0xff]
    %v4794 = vld [vmem:[%s4792 + $0x8] sm:$0xff]
    %v4795 = vld [vmem:[%s4792 + $0x10] sm:$0xff]
    %v4796 = vld [vmem:[%s4792 + $0x18] sm:$0xff]
    %v4797 = vld [vmem:[%s4792 + $0x20] sm:$0xff]
    %v4798 = vld [vmem:[%s4792 + $0x28] sm:$0xff]
    %v4799 = vld [vmem:[%s4792 + $0x30] sm:$0xff]
    %v4800 = vld [vmem:[%s4792 + $0x38] sm:$0xff]
    %v4801 = vld [vmem:[%s6 + $0xe] sm:$0x1]
    %v4802 = vlaneseq
    %v4803 = vshrl.u32 %v4802, 7
    %v4804 = vsub.s32 0, %v4803
    %v4805 = vrot.slane %v4801, %v4804
    %4807 = vrot.lane.b32.xlu0 %v4805, 112
    %v4808 = vpop.permute.xlu0 %4807
    %4810 = vmatprep.subr.mxu0 0.0
    %4811 = vmatpush1.msra.mxu0 %v4793
    %4812 = vmatprep.subr.mxu0 0.0
    %4813 = vmatpush1.msra.mxu0 %v4794
    %4814 = vmatprep.subr.mxu0 0.0
    %4815 = vmatpush1.msra.mxu0 %v4795
    %4816 = vmatprep.subr.mxu0 0.0
    %4817 = vmatpush1.msra.mxu0 %v4796
    %4818 = vmatprep.subr.mxu0 0.0
    %4819 = vmatpush1.msra.mxu0 %v4797
    %4820 = vmatprep.subr.mxu0 0.0
    %4821 = vmatpush1.msra.mxu0 %v4798
    %4822 = vmatprep.subr.mxu0 0.0
    %4823 = vmatpush1.msra.mxu0 %v4799
    %4824 = vmatprep.subr.mxu0 0.0
    %4825 = vmatpush1.msra.mxu0 %v4800
    %4826 = vmatprep.subr.mxu0 0.0
    %4827 = vmatpush1.msra.mxu0 0.0
    %4828 = vmatprep.subr.mxu0 0.0
    %4829 = vmatpush1.msra.mxu0 0.0
    %4830 = vmatprep.subr.mxu0 0.0
    %4831 = vmatpush1.msra.mxu0 0.0
    %4832 = vmatprep.subr.mxu0 0.0
    %4833 = vmatpush1.msra.mxu0 0.0
    %4834 = vmatprep.subr.mxu0 0.0
    %4835 = vmatpush1.msra.mxu0 0.0
    %4836 = vmatprep.subr.mxu0 0.0
    %4837 = vmatpush1.msra.mxu0 0.0
    %4838 = vmatprep.subr.mxu0 0.0
    %4839 = vmatpush1.msra.mxu0 0.0
    %4840 = vmatprep.subr.mxu0 0.0
    %4841 = vmatpush1.msra.mxu0 0.0
    %4842 = vmatprep.subr.mxu0 0.0
    %4843 = vmatpush1.msra.mxu0 0.0
    %4844 = vmatprep.subr.mxu0 0.0
    %4845 = vmatpush1.msra.mxu0 0.0
    %4846 = vmatprep.subr.mxu0 0.0
    %4847 = vmatpush1.msra.mxu0 0.0
    %4848 = vmatprep.subr.mxu0 0.0
    %4849 = vmatpush1.msra.mxu0 0.0
    %4850 = vmatprep.subr.mxu0 0.0
    %4851 = vmatpush1.msra.mxu0 0.0
    %4852 = vmatprep.subr.mxu0 0.0
    %4853 = vmatpush1.msra.mxu0 0.0
    %4854 = vmatprep.subr.mxu0 0.0
    %4855 = vmatpush1.msra.mxu0 0.0
    %4856 = vmatprep.subr.mxu0 0.0
    %4857 = vmatpush1.msra.mxu0 0.0
    %4858 = vmatprep.subr.mxu0 0.0
    %4859 = vmatpush1.msra.mxu0 0.0
    %4860 = vmatprep.subr.mxu0 0.0
    %4861 = vmatpush1.msra.mxu0 0.0
    %4862 = vmatprep.subr.mxu0 0.0
    %4863 = vmatpush1.msra.mxu0 0.0
    %4864 = vmatprep.subr.mxu0 0.0
    %4865 = vmatpush1.msra.mxu0 0.0
    %4866 = vmatprep.subr.mxu0 0.0
    %4867 = vmatpush1.msra.mxu0 0.0
    %4868 = vmatprep.subr.mxu0 0.0
    %4869 = vmatpush1.msra.mxu0 0.0
    %4870 = vmatprep.subr.mxu0 0.0
    %4871 = vmatpush1.msra.mxu0 0.0
    %4872 = vmatprep.subr.mxu0 0.0
    %4873 = vmatpush1.msra.mxu0 0.0
    %4874 = vmatprep.mubr.f32.mxu0 0.0
    %4875 = vmatmul.mubr.f32.gmra.mrb[0].mxu0 %v3996
    %v4876 = vpop.f32.mrb[0].mxu0
    %v4877 = vadd.f32 %v4808, %v4876
    %v4878 = vpop.f32.mrb[0].mxu0
    %4879 = vmatprep.mubr.f32.mxu0 0.0
    %4880 = vmatmul.mubr.f32.gmra.mrb[0].mxu0 %v3999
    %v4881 = vpop.f32.mrb[0].mxu0
    %v4882 = vadd.f32 %v4808, %v4881
    %v4883 = vpop.f32.mrb[0].mxu0
    %4884 = vmatprep.mubr.f32.mxu0 0.0
    %4885 = vmatmul.mubr.f32.gmra.mrb[0].mxu0 %v4002
    %v4886 = vpop.f32.mrb[0].mxu0
    %v4887 = vadd.f32 %v4808, %v4886
    %v4888 = vpop.f32.mrb[0].mxu0
    %4889 = vmatprep.mubr.f32.mxu0 0.0
    %4890 = vmatmul.mubr.f32.gmra.mrb[0].mxu0 %v4005
    %v4891 = vpop.f32.mrb[0].mxu0
    %v4892 = vadd.f32 %v4808, %v4891
    %v4893 = vpop.f32.mrb[0].mxu0
    %4894 = vdwg.mxu0
    %v4896 = vsel %vm573, %v4671, 0
    %v4899 = vsel %vm573, %v4676, 0
    %v4902 = vsel %vm573, %v4774, 0
    %v4905 = vsel %vm573, %v4779, 0
    %4907 = vmatprep.subr.mxu0 0.0
    %4908 = vmatpush1.xpose.msra.mxu0 %v4902
    %4909 = vmatprep.subr.mxu0 0.0
    %4910 = vmatpush1.xpose.msra.mxu0 %v4905
    %4911 = vmatprep.subr.mxu0 0.0
    %4912 = vmatpush1.xpose.msra.mxu0 0.0
    %4913 = vmatprep.subr.mxu0 0.0
    %4914 = vmatpush1.xpose.msra.mxu0 0.0
    %4915 = vmatprep.subr.mxu0 0.0
    %4916 = vmatpush1.xpose.msra.mxu0 0.0
    %4917 = vmatprep.subr.mxu0 0.0
    %4918 = vmatpush1.xpose.msra.mxu0 0.0
    %4919 = vmatprep.subr.mxu0 0.0
    %4920 = vmatpush1.xpose.msra.mxu0 0.0
    %4921 = vmatprep.subr.mxu0 0.0
    %4922 = vmatpush1.xpose.msra.mxu0 0.0
    %4923 = vmatprep.subr.mxu0 0.0
    %4924 = vmatpush1.xpose.msra.mxu0 0.0
    %4925 = vmatprep.subr.mxu0 0.0
    %4926 = vmatpush1.xpose.msra.mxu0 0.0
    %4927 = vmatprep.subr.mxu0 0.0
    %4928 = vmatpush1.xpose.msra.mxu0 0.0
    %4929 = vmatprep.subr.mxu0 0.0
    %4930 = vmatpush1.xpose.msra.mxu0 0.0
    %4931 = vmatprep.subr.mxu0 0.0
    %4932 = vmatpush1.xpose.msra.mxu0 0.0
    %4933 = vmatprep.subr.mxu0 0.0
    %4934 = vmatpush1.xpose.msra.mxu0 0.0
    %4935 = vmatprep.subr.mxu0 0.0
    %4936 = vmatpush1.xpose.msra.mxu0 0.0
    %4937 = vmatprep.subr.mxu0 0.0
    %4938 = vmatpush1.xpose.msra.mxu0 0.0
    %4939 = vmatprep.subr.mxu0 0.0
    %4940 = vmatpush1.xpose.msra.mxu0 0.0
    %4941 = vmatprep.subr.mxu0 0.0
    %4942 = vmatpush1.xpose.msra.mxu0 0.0
    %4943 = vmatprep.subr.mxu0 0.0
    %4944 = vmatpush1.xpose.msra.mxu0 0.0
    %4945 = vmatprep.subr.mxu0 0.0
    %4946 = vmatpush1.xpose.msra.mxu0 0.0
    %4947 = vmatprep.subr.mxu0 0.0
    %4948 = vmatpush1.xpose.msra.mxu0 0.0
    %4949 = vmatprep.subr.mxu0 0.0
    %4950 = vmatpush1.xpose.msra.mxu0 0.0
    %4951 = vmatprep.subr.mxu0 0.0
    %4952 = vmatpush1.xpose.msra.mxu0 0.0
    %4953 = vmatprep.subr.mxu0 0.0
    %4954 = vmatpush1.xpose.msra.mxu0 0.0
    %4955 = vmatprep.subr.mxu0 0.0
    %4956 = vmatpush1.xpose.msra.mxu0 0.0
    %4957 = vmatprep.subr.mxu0 0.0
    %4958 = vmatpush1.xpose.msra.mxu0 0.0
    %4959 = vmatprep.subr.mxu0 0.0
    %4960 = vmatpush1.xpose.msra.mxu0 0.0
    %4961 = vmatprep.subr.mxu0 0.0
    %4962 = vmatpush1.xpose.msra.mxu0 0.0
    %4963 = vmatprep.subr.mxu0 0.0
    %4964 = vmatpush1.xpose.msra.mxu0 0.0
    %4965 = vmatprep.subr.mxu0 0.0
    %4966 = vmatpush1.xpose.msra.mxu0 0.0
    %4967 = vmatprep.subr.mxu0 0.0
    %4968 = vmatpush1.xpose.msra.mxu0 0.0
    %4969 = vmatprep.subr.mxu0 0.0
    %4970 = vmatpush1.xpose.msra.mxu0 0.0
    %4971 = vmatprep.mubr.f32.mxu0 0.0
    %4972 = vmatmul.mubr.f32.gmra.mrb[0].mxu0 %v4896
    %v4973 = vpop.f32.mrb[0].mxu0
    %v4974 = vadd.f32 0.0, %v4973
    %v4975 = vpop.f32.mrb[0].mxu0
    %4976 = vmatprep.mubr.f32.mxu0 0.0
    %4977 = vmatmul.mubr.f32.gmra.mrb[0].mxu0 %v4899
    %v4978 = vpop.f32.mrb[0].mxu0
    %v4979 = vadd.f32 0.0, %v4978
    %v4980 = vpop.f32.mrb[0].mxu0
    %4981 = vdwg.mxu0
    %v4983 = vsel %vm573, %v4681, 0
    %v4986 = vsel %vm573, %v4686, 0
    %v4989 = vsel %vm573, %v4784, 0
    %v4992 = vsel %vm573, %v4789, 0
    %4994 = vmatprep.subr.mxu0 0.0
    %4995 = vmatpush1.xpose.msra.mxu0 %v4989
    %4996 = vmatprep.subr.mxu0 0.0
    %4997 = vmatpush1.xpose.msra.mxu0 %v4992
    %4998 = vmatprep.subr.mxu0 0.0
    %4999 = vmatpush1.xpose.msra.mxu0 0.0
    %5000 = vmatprep.subr.mxu0 0.0
    %5001 = vmatpush1.xpose.msra.mxu0 0.0
    %5002 = vmatprep.subr.mxu0 0.0
    %5003 = vmatpush1.xpose.msra.mxu0 0.0
    %5004 = vmatprep.subr.mxu0 0.0
    %5005 = vmatpush1.xpose.msra.mxu0 0.0
    %5006 = vmatprep.subr.mxu0 0.0
    %5007 = vmatpush1.xpose.msra.mxu0 0.0
    %5008 = vmatprep.subr.mxu0 0.0
    %5009 = vmatpush1.xpose.msra.mxu0 0.0
    %5010 = vmatprep.subr.mxu0 0.0
    %5011 = vmatpush1.xpose.msra.mxu0 0.0
    %5012 = vmatprep.subr.mxu0 0.0
    %5013 = vmatpush1.xpose.msra.mxu0 0.0
    %5014 = vmatprep.subr.mxu0 0.0
    %5015 = vmatpush1.xpose.msra.mxu0 0.0
    %5016 = vmatprep.subr.mxu0 0.0
    %5017 = vmatpush1.xpose.msra.mxu0 0.0
    %5018 = vmatprep.subr.mxu0 0.0
    %5019 = vmatpush1.xpose.msra.mxu0 0.0
    %5020 = vmatprep.subr.mxu0 0.0
    %5021 = vmatpush1.xpose.msra.mxu0 0.0
    %5022 = vmatprep.subr.mxu0 0.0
    %5023 = vmatpush1.xpose.msra.mxu0 0.0
    %5024 = vmatprep.subr.mxu0 0.0
    %5025 = vmatpush1.xpose.msra.mxu0 0.0
    %5026 = vmatprep.subr.mxu0 0.0
    %5027 = vmatpush1.xpose.msra.mxu0 0.0
    %5028 = vmatprep.subr.mxu0 0.0
    %5029 = vmatpush1.xpose.msra.mxu0 0.0
    %5030 = vmatprep.subr.mxu0 0.0
    %5031 = vmatpush1.xpose.msra.mxu0 0.0
    %5032 = vmatprep.subr.mxu0 0.0
    %5033 = vmatpush1.xpose.msra.mxu0 0.0
    %5034 = vmatprep.subr.mxu0 0.0
    %5035 = vmatpush1.xpose.msra.mxu0 0.0
    %5036 = vmatprep.subr.mxu0 0.0
    %5037 = vmatpush1.xpose.msra.mxu0 0.0
    %5038 = vmatprep.subr.mxu0 0.0
    %5039 = vmatpush1.xpose.msra.mxu0 0.0
    %5040 = vmatprep.subr.mxu0 0.0
    %5041 = vmatpush1.xpose.msra.mxu0 0.0
    %5042 = vmatprep.subr.mxu0 0.0
    %5043 = vmatpush1.xpose.msra.mxu0 0.0
    %5044 = vmatprep.subr.mxu0 0.0
    %5045 = vmatpush1.xpose.msra.mxu0 0.0
    %5046 = vmatprep.subr.mxu0 0.0
    %5047 = vmatpush1.xpose.msra.mxu0 0.0
    %5048 = vmatprep.subr.mxu0 0.0
    %5049 = vmatpush1.xpose.msra.mxu0 0.0
    %5050 = vmatprep.subr.mxu0 0.0
    %5051 = vmatpush1.xpose.msra.mxu0 0.0
    %5052 = vmatprep.subr.mxu0 0.0
    %5053 = vmatpush1.xpose.msra.mxu0 0.0
    %5054 = vmatprep.subr.mxu0 0.0
    %5055 = vmatpush1.xpose.msra.mxu0 0.0
    %5056 = vmatprep.subr.mxu0 0.0
    %5057 = vmatpush1.xpose.msra.mxu0 0.0
    %5058 = vmatprep.mubr.f32.mxu0 0.0
    %5059 = vmatmul.mubr.f32.gmra.mrb[0].mxu0 %v4983
    %v5060 = vpop.f32.mrb[0].mxu0
    %v5061 = vadd.f32 0.0, %v5060
    %v5062 = vpop.f32.mrb[0].mxu0
    %5063 = vmatprep.mubr.f32.mxu0 0.0
    %5064 = vmatmul.mubr.f32.gmra.mrb[0].mxu0 %v4986
    %v5065 = vpop.f32.mrb[0].mxu0
    %v5066 = vadd.f32 0.0, %v5065
    %v5067 = vpop.f32.mrb[0].mxu0
    %5068 = vdwg.mxu0
    %v5069 = vmul.f32 %v4974, 0.25
    %v5070 = vmul.f32 %v4979, 0.25
    %v5071 = vmul.f32 %v5061, 0.25
    %v5072 = vmul.f32 %v5066, 0.25
    %v5073 = vadd.f32 %v5069, %v179
    %v5074 = vadd.f32 %v5070, %v180
    %v5075 = vadd.f32 %v5071, %v179
    %v5076 = vadd.f32 %v5072, %v180
    %v5077 = vsel %vm573, %v5073, -inf
    %5078 = vmax.xlane.f32.xlu0 %v5077
    %v5079 = vpop.xlane.xlu0 %5078
    %v5080 = vsel %vm573, %v5074, -inf
    %5081 = vmax.xlane.f32.xlu0 %v5080
    %v5082 = vpop.xlane.xlu0 %5081
    %v5083 = vsel %vm573, %v5075, -inf
    %5084 = vmax.xlane.f32.xlu0 %v5083
    %v5085 = vpop.xlane.xlu0 %5084
    %v5086 = vsel %vm573, %v5076, -inf
    %5087 = vmax.xlane.f32.xlu0 %v5086
    %v5088 = vpop.xlane.xlu0 %5087
    %v5089 = vsub.f32 %v5073, %v5079
    %v5090 = vsub.f32 %v5074, %v5082
    %v5091 = vsub.f32 %v5075, %v5085
    %v5092 = vsub.f32 %v5076, %v5088
    %v5093 = vmul.f32 %v5089, 1.442695
    %v5094 = vpow.pop %v5093
    %v5095 = vmul.f32 %v5090, 1.442695
    %v5096 = vpow.pop %v5095
    %v5097 = vmul.f32 %v5091, 1.442695
    %v5098 = vpow.pop %v5097
    %v5099 = vmul.f32 %v5092, 1.442695
    %v5100 = vpow.pop %v5099
    %v5101 = vsel %vm573, %v5094, 0.0
    %5102 = vadd.xlane.f32.xlu0 %v5101
    %v5103 = vpop.xlane.xlu0 %5102
    %v5104 = vsel %vm573, %v5096, 0.0
    %5105 = vadd.xlane.f32.xlu0 %v5104
    %v5106 = vpop.xlane.xlu0 %5105
    %v5107 = vsel %vm573, %v5098, 0.0
    %5108 = vadd.xlane.f32.xlu0 %v5107
    %v5109 = vpop.xlane.xlu0 %5108
    %v5110 = vsel %vm573, %v5100, 0.0
    %5111 = vadd.xlane.f32.xlu0 %v5110
    %v5112 = vpop.xlane.xlu0 %5111
    %v5113 = vrcp.pop %v5103
    %v5114 = vrcp.pop %v5106
    %v5115 = vrcp.pop %v5109
    %v5116 = vrcp.pop %v5112
    %v5117 = vmul.f32 %v5094, %v5113
    %v5118 = vmul.f32 %v5096, %v5114
    %v5119 = vmul.f32 %v5098, %v5115
    %v5120 = vmul.f32 %v5100, %v5116
    %v5121 = vadd.f32 %v4417, %v5117
    %v5122 = vadd.f32 %v4418, %v5118
    %v5123 = vadd.f32 %v4419, %v5119
    %v5124 = vadd.f32 %v4420, %v5120
    %v5126 = vsel %vm573, %v5117, 0
    %v5129 = vsel %vm573, %v5118, 0
    %5131 = vmatprep.subr.mxu0 0.0
    %5132 = vmatpush1.msra.mxu0 %v4877
    %5133 = vmatprep.subr.mxu0 0.0
    %5134 = vmatpush1.msra.mxu0 %v4882
    %5135 = vmatprep.subr.mxu0 0.0
    %5136 = vmatpush1.msra.mxu0 0.0
    %5137 = vmatprep.subr.mxu0 0.0
    %5138 = vmatpush1.msra.mxu0 0.0
    %5139 = vmatprep.subr.mxu0 0.0
    %5140 = vmatpush1.msra.mxu0 0.0
    %5141 = vmatprep.subr.mxu0 0.0
    %5142 = vmatpush1.msra.mxu0 0.0
    %5143 = vmatprep.subr.mxu0 0.0
    %5144 = vmatpush1.msra.mxu0 0.0
    %5145 = vmatprep.subr.mxu0 0.0
    %5146 = vmatpush1.msra.mxu0 0.0
    %5147 = vmatprep.subr.mxu0 0.0
    %5148 = vmatpush1.msra.mxu0 0.0
    %5149 = vmatprep.subr.mxu0 0.0
    %5150 = vmatpush1.msra.mxu0 0.0
    %5151 = vmatprep.subr.mxu0 0.0
    %5152 = vmatpush1.msra.mxu0 0.0
    %5153 = vmatprep.subr.mxu0 0.0
    %5154 = vmatpush1.msra.mxu0 0.0
    %5155 = vmatprep.subr.mxu0 0.0
    %5156 = vmatpush1.msra.mxu0 0.0
    %5157 = vmatprep.subr.mxu0 0.0
    %5158 = vmatpush1.msra.mxu0 0.0
    %5159 = vmatprep.subr.mxu0 0.0
    %5160 = vmatpush1.msra.mxu0 0.0
    %5161 = vmatprep.subr.mxu0 0.0
    %5162 = vmatpush1.msra.mxu0 0.0
    %5163 = vmatprep.subr.mxu0 0.0
    %5164 = vmatpush1.msra.mxu0 0.0
    %5165 = vmatprep.subr.mxu0 0.0
    %5166 = vmatpush1.msra.mxu0 0.0
    %5167 = vmatprep.subr.mxu0 0.0
    %5168 = vmatpush1.msra.mxu0 0.0
    %5169 = vmatprep.subr.mxu0 0.0
    %5170 = vmatpush1.msra.mxu0 0.0
    %5171 = vmatprep.subr.mxu0 0.0
    %5172 = vmatpush1.msra.mxu0 0.0
    %5173 = vmatprep.subr.mxu0 0.0
    %5174 = vmatpush1.msra.mxu0 0.0
    %5175 = vmatprep.subr.mxu0 0.0
    %5176 = vmatpush1.msra.mxu0 0.0
    %5177 = vmatprep.subr.mxu0 0.0
    %5178 = vmatpush1.msra.mxu0 0.0
    %5179 = vmatprep.subr.mxu0 0.0
    %5180 = vmatpush1.msra.mxu0 0.0
    %5181 = vmatprep.subr.mxu0 0.0
    %5182 = vmatpush1.msra.mxu0 0.0
    %5183 = vmatprep.subr.mxu0 0.0
    %5184 = vmatpush1.msra.mxu0 0.0
    %5185 = vmatprep.subr.mxu0 0.0
    %5186 = vmatpush1.msra.mxu0 0.0
    %5187 = vmatprep.subr.mxu0 0.0
    %5188 = vmatpush1.msra.mxu0 0.0
    %5189 = vmatprep.subr.mxu0 0.0
    %5190 = vmatpush1.msra.mxu0 0.0
    %5191 = vmatprep.subr.mxu0 0.0
    %5192 = vmatpush1.msra.mxu0 0.0
    %5193 = vmatprep.subr.mxu0 0.0
    %5194 = vmatpush1.msra.mxu0 0.0
    %5195 = vmatprep.mubr.f32.mxu0 0.0
    %5196 = vmatmul.mubr.f32.gmra.mrb[0].mxu0 %v5126
    %v5197 = vpop.f32.mrb[0].mxu0
    %v5198 = vadd.f32 0.0, %v5197
    %v5199 = vpop.f32.mrb[0].mxu0
    %5200 = vmatprep.mubr.f32.mxu0 0.0
    %5201 = vmatmul.mubr.f32.gmra.mrb[0].mxu0 %v5129
    %v5202 = vpop.f32.mrb[0].mxu0
    %v5203 = vadd.f32 0.0, %v5202
    %v5204 = vpop.f32.mrb[0].mxu0
    %5205 = vdwg.mxu0
    %v5207 = vsel %vm573, %v5119, 0
    %v5210 = vsel %vm573, %v5120, 0
    %5212 = vmatprep.subr.mxu0 0.0
    %5213 = vmatpush1.msra.mxu0 %v4887
    %5214 = vmatprep.subr.mxu0 0.0
    %5215 = vmatpush1.msra.mxu0 %v4892
    %5216 = vmatprep.subr.mxu0 0.0
    %5217 = vmatpush1.msra.mxu0 0.0
    %5218 = vmatprep.subr.mxu0 0.0
    %5219 = vmatpush1.msra.mxu0 0.0
    %5220 = vmatprep.subr.mxu0 0.0
    %5221 = vmatpush1.msra.mxu0 0.0
    %5222 = vmatprep.subr.mxu0 0.0
    %5223 = vmatpush1.msra.mxu0 0.0
    %5224 = vmatprep.subr.mxu0 0.0
    %5225 = vmatpush1.msra.mxu0 0.0
    %5226 = vmatprep.subr.mxu0 0.0
    %5227 = vmatpush1.msra.mxu0 0.0
    %5228 = vmatprep.subr.mxu0 0.0
    %5229 = vmatpush1.msra.mxu0 0.0
    %5230 = vmatprep.subr.mxu0 0.0
    %5231 = vmatpush1.msra.mxu0 0.0
    %5232 = vmatprep.subr.mxu0 0.0
    %5233 = vmatpush1.msra.mxu0 0.0
    %5234 = vmatprep.subr.mxu0 0.0
    %5235 = vmatpush1.msra.mxu0 0.0
    %5236 = vmatprep.subr.mxu0 0.0
    %5237 = vmatpush1.msra.mxu0 0.0
    %5238 = vmatprep.subr.mxu0 0.0
    %5239 = vmatpush1.msra.mxu0 0.0
    %5240 = vmatprep.subr.mxu0 0.0
    %5241 = vmatpush1.msra.mxu0 0.0
    %5242 = vmatprep.subr.mxu0 0.0
    %5243 = vmatpush1.msra.mxu0 0.0
    %5244 = vmatprep.subr.mxu0 0.0
    %5245 = vmatpush1.msra.mxu0 0.0
    %5246 = vmatprep.subr.mxu0 0.0
    %5247 = vmatpush1.msra.mxu0 0.0
    %5248 = vmatprep.subr.mxu0 0.0
    %5249 = vmatpush1.msra.mxu0 0.0
    %5250 = vmatprep.subr.mxu0 0.0
    %5251 = vmatpush1.msra.mxu0 0.0
    %5252 = vmatprep.subr.mxu0 0.0
    %5253 = vmatpush1.msra.mxu0 0.0
    %5254 = vmatprep.subr.mxu0 0.0
    %5255 = vmatpush1.msra.mxu0 0.0
    %5256 = vmatprep.subr.mxu0 0.0
    %5257 = vmatpush1.msra.mxu0 0.0
    %5258 = vmatprep.subr.mxu0 0.0
    %5259 = vmatpush1.msra.mxu0 0.0
    %5260 = vmatprep.subr.mxu0 0.0
    %5261 = vmatpush1.msra.mxu0 0.0
    %5262 = vmatprep.subr.mxu0 0.0
    %5263 = vmatpush1.msra.mxu0 0.0
    %5264 = vmatprep.subr.mxu0 0.0
    %5265 = vmatpush1.msra.mxu0 0.0
    %5266 = vmatprep.subr.mxu0 0.0
    %5267 = vmatpush1.msra.mxu0 0.0
    %5268 = vmatprep.subr.mxu0 0.0
    %5269 = vmatpush1.msra.mxu0 0.0
    %5270 = vmatprep.subr.mxu0 0.0
    %5271 = vmatpush1.msra.mxu0 0.0
    %5272 = vmatprep.subr.mxu0 0.0
    %5273 = vmatpush1.msra.mxu0 0.0
    %5274 = vmatprep.subr.mxu0 0.0
    %5275 = vmatpush1.msra.mxu0 0.0
    %5276 = vmatprep.mubr.f32.mxu0 0.0
    %5277 = vmatmul.mubr.f32.gmra.mrb[0].mxu0 %v5207
    %v5278 = vpop.f32.mrb[0].mxu0
    %v5279 = vadd.f32 0.0, %v5278
    %v5280 = vpop.f32.mrb[0].mxu0
    %5281 = vmatprep.mubr.f32.mxu0 0.0
    %5282 = vmatmul.mubr.f32.gmra.mrb[0].mxu0 %v5210
    %v5283 = vpop.f32.mrb[0].mxu0
    %v5284 = vadd.f32 0.0, %v5283
    %v5285 = vpop.f32.mrb[0].mxu0
    %5286 = vdwg.mxu0
    %s5287 = scalar_lea.vmem %s4, 80
    %v5288 = vld [vmem:[%s5287] sm:$0xff]
    %v5289 = vld [vmem:[%s5287 + $0x8] sm:$0xff]
    %v5291 = vsel %vm573, %v5198, 0
    %v5294 = vsel %vm573, %v5203, 0
    %v5297 = vsel %vm573, %v5279, 0
    %v5300 = vsel %vm573, %v5284, 0
    %5302 = vmatprep.subr.mxu0 0.0
    %5303 = vmatpush1.msra.mxu0 %v5288
    %5304 = vmatprep.subr.mxu0 0.0
    %5305 = vmatpush1.msra.mxu0 %v5289
    %5306 = vmatprep.subr.mxu0 0.0
    %5307 = vmatpush1.msra.mxu0 0.0
    %5308 = vmatprep.subr.mxu0 0.0
    %5309 = vmatpush1.msra.mxu0 0.0
    %5310 = vmatprep.subr.mxu0 0.0
    %5311 = vmatpush1.msra.mxu0 0.0
    %5312 = vmatprep.subr.mxu0 0.0
    %5313 = vmatpush1.msra.mxu0 0.0
    %5314 = vmatprep.subr.mxu0 0.0
    %5315 = vmatpush1.msra.mxu0 0.0
    %5316 = vmatprep.subr.mxu0 0.0
    %5317 = vmatpush1.msra.mxu0 0.0
    %5318 = vmatprep.subr.mxu0 0.0
    %5319 = vmatpush1.msra.mxu0 0.0
    %5320 = vmatprep.subr.mxu0 0.0
    %5321 = vmatpush1.msra.mxu0 0.0
    %5322 = vmatprep.subr.mxu0 0.0
    %5323 = vmatpush1.msra.mxu0 0.0
    %5324 = vmatprep.subr.mxu0 0.0
    %5325 = vmatpush1.msra.mxu0 0.0
    %5326 = vmatprep.subr.mxu0 0.0
    %5327 = vmatpush1.msra.mxu0 0.0
    %5328 = vmatprep.subr.mxu0 0.0
    %5329 = vmatpush1.msra.mxu0 0.0
    %5330 = vmatprep.subr.mxu0 0.0
    %5331 = vmatpush1.msra.mxu0 0.0
    %5332 = vmatprep.subr.mxu0 0.0
    %5333 = vmatpush1.msra.mxu0 0.0
    %5334 = vmatprep.subr.mxu0 0.0
    %5335 = vmatpush1.msra.mxu0 0.0
    %5336 = vmatprep.subr.mxu0 0.0
    %5337 = vmatpush1.msra.mxu0 0.0
    %5338 = vmatprep.subr.mxu0 0.0
    %5339 = vmatpush1.msra.mxu0 0.0
    %5340 = vmatprep.subr.mxu0 0.0
    %5341 = vmatpush1.msra.mxu0 0.0
    %5342 = vmatprep.subr.mxu0 0.0
    %5343 = vmatpush1.msra.mxu0 0.0
    %5344 = vmatprep.subr.mxu0 0.0
    %5345 = vmatpush1.msra.mxu0 0.0
    %5346 = vmatprep.subr.mxu0 0.0
    %5347 = vmatpush1.msra.mxu0 0.0
    %5348 = vmatprep.subr.mxu0 0.0
    %5349 = vmatpush1.msra.mxu0 0.0
    %5350 = vmatprep.subr.mxu0 0.0
    %5351 = vmatpush1.msra.mxu0 0.0
    %5352 = vmatprep.subr.mxu0 0.0
    %5353 = vmatpush1.msra.mxu0 0.0
    %5354 = vmatprep.subr.mxu0 0.0
    %5355 = vmatpush1.msra.mxu0 0.0
    %5356 = vmatprep.subr.mxu0 0.0
    %5357 = vmatpush1.msra.mxu0 0.0
    %5358 = vmatprep.subr.mxu0 0.0
    %5359 = vmatpush1.msra.mxu0 0.0
    %5360 = vmatprep.subr.mxu0 0.0
    %5361 = vmatpush1.msra.mxu0 0.0
    %5362 = vmatprep.subr.mxu0 0.0
    %5363 = vmatpush1.msra.mxu0 0.0
    %5364 = vmatprep.subr.mxu0 0.0
    %5365 = vmatpush1.msra.mxu0 0.0
    %5366 = vmatprep.mubr.f32.mxu0 0.0
    %5367 = vmatmul.mubr.f32.gmra.mrb[0].mxu0 %v5291
    %v5368 = vpop.f32.mrb[0].mxu0
    %v5369 = vadd.f32 0.0, %v5368
    %v5370 = vpop.f32.mrb[0].mxu0
    %5371 = vmatprep.mubr.f32.mxu0 0.0
    %5372 = vmatmul.mubr.f32.gmra.mrb[0].mxu0 %v5294
    %v5373 = vpop.f32.mrb[0].mxu0
    %v5374 = vadd.f32 0.0, %v5373
    %v5375 = vpop.f32.mrb[0].mxu0
    %5376 = vmatprep.mubr.f32.mxu0 0.0
    %5377 = vmatmul.mubr.f32.gmra.mrb[0].mxu0 %v5297
    %v5378 = vpop.f32.mrb[0].mxu0
    %v5379 = vadd.f32 0.0, %v5378
    %v5380 = vpop.f32.mrb[0].mxu0
    %5381 = vmatprep.mubr.f32.mxu0 0.0
    %5382 = vmatmul.mubr.f32.gmra.mrb[0].mxu0 %v5300
    %v5383 = vpop.f32.mrb[0].mxu0
    %v5384 = vadd.f32 0.0, %v5383
    %v5385 = vpop.f32.mrb[0].mxu0
    %5386 = vdwg.mxu0
    %v5388 = vsel %vm573, %v4494, 0
    %v5391 = vsel %vm573, %v4499, 0
    %v5394 = vsel %vm573, %v4575, 0
    %v5397 = vsel %vm573, %v4580, 0
    %5399 = vmatprep.subr.mxu0 0.0
    %5400 = vmatpush1.msra.mxu0 %v4584
    %5401 = vmatprep.subr.mxu0 0.0
    %5402 = vmatpush1.msra.mxu0 %v4585
    %5403 = vmatprep.subr.mxu0 0.0
    %5404 = vmatpush1.msra.mxu0 0.0
    %5405 = vmatprep.subr.mxu0 0.0
    %5406 = vmatpush1.msra.mxu0 0.0
    %5407 = vmatprep.subr.mxu0 0.0
    %5408 = vmatpush1.msra.mxu0 0.0
    %5409 = vmatprep.subr.mxu0 0.0
    %5410 = vmatpush1.msra.mxu0 0.0
    %5411 = vmatprep.subr.mxu0 0.0
    %5412 = vmatpush1.msra.mxu0 0.0
    %5413 = vmatprep.subr.mxu0 0.0
    %5414 = vmatpush1.msra.mxu0 0.0
    %5415 = vmatprep.subr.mxu0 0.0
    %5416 = vmatpush1.msra.mxu0 0.0
    %5417 = vmatprep.subr.mxu0 0.0
    %5418 = vmatpush1.msra.mxu0 0.0
    %5419 = vmatprep.subr.mxu0 0.0
    %5420 = vmatpush1.msra.mxu0 0.0
    %5421 = vmatprep.subr.mxu0 0.0
    %5422 = vmatpush1.msra.mxu0 0.0
    %5423 = vmatprep.subr.mxu0 0.0
    %5424 = vmatpush1.msra.mxu0 0.0
    %5425 = vmatprep.subr.mxu0 0.0
    %5426 = vmatpush1.msra.mxu0 0.0
    %5427 = vmatprep.subr.mxu0 0.0
    %5428 = vmatpush1.msra.mxu0 0.0
    %5429 = vmatprep.subr.mxu0 0.0
    %5430 = vmatpush1.msra.mxu0 0.0
    %5431 = vmatprep.subr.mxu0 0.0
    %5432 = vmatpush1.msra.mxu0 0.0
    %5433 = vmatprep.subr.mxu0 0.0
    %5434 = vmatpush1.msra.mxu0 0.0
    %5435 = vmatprep.subr.mxu0 0.0
    %5436 = vmatpush1.msra.mxu0 0.0
    %5437 = vmatprep.subr.mxu0 0.0
    %5438 = vmatpush1.msra.mxu0 0.0
    %5439 = vmatprep.subr.mxu0 0.0
    %5440 = vmatpush1.msra.mxu0 0.0
    %5441 = vmatprep.subr.mxu0 0.0
    %5442 = vmatpush1.msra.mxu0 0.0
    %5443 = vmatprep.subr.mxu0 0.0
    %5444 = vmatpush1.msra.mxu0 0.0
    %5445 = vmatprep.subr.mxu0 0.0
    %5446 = vmatpush1.msra.mxu0 0.0
    %5447 = vmatprep.subr.mxu0 0.0
    %5448 = vmatpush1.msra.mxu0 0.0
    %5449 = vmatprep.subr.mxu0 0.0
    %5450 = vmatpush1.msra.mxu0 0.0
    %5451 = vmatprep.subr.mxu0 0.0
    %5452 = vmatpush1.msra.mxu0 0.0
    %5453 = vmatprep.subr.mxu0 0.0
    %5454 = vmatpush1.msra.mxu0 0.0
    %5455 = vmatprep.subr.mxu0 0.0
    %5456 = vmatpush1.msra.mxu0 0.0
    %5457 = vmatprep.subr.mxu0 0.0
    %5458 = vmatpush1.msra.mxu0 0.0
    %5459 = vmatprep.subr.mxu0 0.0
    %5460 = vmatpush1.msra.mxu0 0.0
    %5461 = vmatprep.subr.mxu0 0.0
    %5462 = vmatpush1.msra.mxu0 0.0
    %5463 = vmatprep.mubr.f32.mxu0 0.0
    %5464 = vmatmul.mubr.f32.gmra.mrb[0].mxu0 %v5388
    %v5465 = vpop.f32.mrb[0].mxu0
    %v5466 = vadd.f32 %v5369, %v5465
    %v5467 = vpop.f32.mrb[0].mxu0
    %5468 = vmatprep.mubr.f32.mxu0 0.0
    %5469 = vmatmul.mubr.f32.gmra.mrb[0].mxu0 %v5391
    %v5470 = vpop.f32.mrb[0].mxu0
    %v5471 = vadd.f32 %v5374, %v5470
    %v5472 = vpop.f32.mrb[0].mxu0
    %5473 = vmatprep.mubr.f32.mxu0 0.0
    %5474 = vmatmul.mubr.f32.gmra.mrb[0].mxu0 %v5394
    %v5475 = vpop.f32.mrb[0].mxu0
    %v5476 = vadd.f32 %v5379, %v5475
    %v5477 = vpop.f32.mrb[0].mxu0
    %5478 = vmatprep.mubr.f32.mxu0 0.0
    %5479 = vmatmul.mubr.f32.gmra.mrb[0].mxu0 %v5397
    %v5480 = vpop.f32.mrb[0].mxu0
    %v5481 = vadd.f32 %v5384, %v5480
    %v5482 = vpop.f32.mrb[0].mxu0
    %5483 = vdwg.mxu0
    %s5484 = scalar_lea.vmem %s3, 896
    %v5485 = vld [vmem:[%s5484] sm:$0xff]
    %v5486 = vld [vmem:[%s5484 + $0x8] sm:$0xff]
    %v5487 = vld [vmem:[%s5484 + $0x10] sm:$0xff]
    %v5488 = vld [vmem:[%s5484 + $0x18] sm:$0xff]
    %v5489 = vld [vmem:[%s5484 + $0x20] sm:$0xff]
    %v5490 = vld [vmem:[%s5484 + $0x28] sm:$0xff]
    %v5491 = vld [vmem:[%s5484 + $0x30] sm:$0xff]
    %v5492 = vld [vmem:[%s5484 + $0x38] sm:$0xff]
    %v5493 = vld [vmem:[%s6 + $0xc] sm:$0x1]
    %v5494 = vlaneseq
    %v5495 = vshrl.u32 %v5494, 7
    %v5496 = vsub.s32 0, %v5495
    %v5497 = vrot.slane %v5493, %v5496
    %5499 = vrot.lane.b32.xlu0 %v5497, 96
    %v5500 = vpop.permute.xlu0 %5499
    %5502 = vmatprep.subr.mxu0 0.0
    %5503 = vmatpush1.msra.mxu0 %v5485
    %5504 = vmatprep.subr.mxu0 0.0
    %5505 = vmatpush1.msra.mxu0 %v5486
    %5506 = vmatprep.subr.mxu0 0.0
    %5507 = vmatpush1.msra.mxu0 %v5487
    %5508 = vmatprep.subr.mxu0 0.0
    %5509 = vmatpush1.msra.mxu0 %v5488
    %5510 = vmatprep.subr.mxu0 0.0
    %5511 = vmatpush1.msra.mxu0 %v5489
    %5512 = vmatprep.subr.mxu0 0.0
    %5513 = vmatpush1.msra.mxu0 %v5490
    %5514 = vmatprep.subr.mxu0 0.0
    %5515 = vmatpush1.msra.mxu0 %v5491
    %5516 = vmatprep.subr.mxu0 0.0
    %5517 = vmatpush1.msra.mxu0 %v5492
    %5518 = vmatprep.subr.mxu0 0.0
    %5519 = vmatpush1.msra.mxu0 0.0
    %5520 = vmatprep.subr.mxu0 0.0
    %5521 = vmatpush1.msra.mxu0 0.0
    %5522 = vmatprep.subr.mxu0 0.0
    %5523 = vmatpush1.msra.mxu0 0.0
    %5524 = vmatprep.subr.mxu0 0.0
    %5525 = vmatpush1.msra.mxu0 0.0
    %5526 = vmatprep.subr.mxu0 0.0
    %5527 = vmatpush1.msra.mxu0 0.0
    %5528 = vmatprep.subr.mxu0 0.0
    %5529 = vmatpush1.msra.mxu0 0.0
    %5530 = vmatprep.subr.mxu0 0.0
    %5531 = vmatpush1.msra.mxu0 0.0
    %5532 = vmatprep.subr.mxu0 0.0
    %5533 = vmatpush1.msra.mxu0 0.0
    %5534 = vmatprep.subr.mxu0 0.0
    %5535 = vmatpush1.msra.mxu0 0.0
    %5536 = vmatprep.subr.mxu0 0.0
    %5537 = vmatpush1.msra.mxu0 0.0
    %5538 = vmatprep.subr.mxu0 0.0
    %5539 = vmatpush1.msra.mxu0 0.0
    %5540 = vmatprep.subr.mxu0 0.0
    %5541 = vmatpush1.msra.mxu0 0.0
    %5542 = vmatprep.subr.mxu0 0.0
    %5543 = vmatpush1.msra.mxu0 0.0
    %5544 = vmatprep.subr.mxu0 0.0
    %5545 = vmatpush1.msra.mxu0 0.0
    %5546 = vmatprep.subr.mxu0 0.0
    %5547 = vmatpush1.msra.mxu0 0.0
    %5548 = vmatprep.subr.mxu0 0.0
    %5549 = vmatpush1.msra.mxu0 0.0
    %5550 = vmatprep.subr.mxu0 0.0
    %5551 = vmatpush1.msra.mxu0 0.0
    %5552 = vmatprep.subr.mxu0 0.0
    %5553 = vmatpush1.msra.mxu0 0.0
    %5554 = vmatprep.subr.mxu0 0.0
    %5555 = vmatpush1.msra.mxu0 0.0
    %5556 = vmatprep.subr.mxu0 0.0
    %5557 = vmatpush1.msra.mxu0 0.0
    %5558 = vmatprep.subr.mxu0 0.0
    %5559 = vmatpush1.msra.mxu0 0.0
    %5560 = vmatprep.subr.mxu0 0.0
    %5561 = vmatpush1.msra.mxu0 0.0
    %5562 = vmatprep.subr.mxu0 0.0
    %5563 = vmatpush1.msra.mxu0 0.0
    %5564 = vmatprep.subr.mxu0 0.0
    %5565 = vmatpush1.msra.mxu0 0.0
    %5566 = vmatprep.mubr.f32.mxu0 0.0
    %5567 = vmatmul.mubr.f32.gmra.mrb[0].mxu0 %v3885
    %v5568 = vpop.f32.mrb[0].mxu0
    %v5569 = vadd.f32 %v5500, %v5568
    %v5570 = vpop.f32.mrb[0].mxu0
    %5571 = vmatprep.mubr.f32.mxu0 0.0
    %5572 = vmatmul.mubr.f32.gmra.mrb[0].mxu0 %v3888
    %v5573 = vpop.f32.mrb[0].mxu0
    %v5574 = vadd.f32 %v5500, %v5573
    %v5575 = vpop.f32.mrb[0].mxu0
    %5576 = vmatprep.mubr.f32.mxu0 0.0
    %5577 = vmatmul.mubr.f32.gmra.mrb[0].mxu0 %v3891
    %v5578 = vpop.f32.mrb[0].mxu0
    %v5579 = vadd.f32 %v5500, %v5578
    %v5580 = vpop.f32.mrb[0].mxu0
    %5581 = vmatprep.mubr.f32.mxu0 0.0
    %5582 = vmatmul.mubr.f32.gmra.mrb[0].mxu0 %v3894
    %v5583 = vpop.f32.mrb[0].mxu0
    %v5584 = vadd.f32 %v5500, %v5583
    %v5585 = vpop.f32.mrb[0].mxu0
    %5586 = vdwg.mxu0
    %s5587 = scalar_lea.vmem %s3, 1152
    %v5588 = vld [vmem:[%s5587] sm:$0xff]
    %v5589 = vld [vmem:[%s5587 + $0x8] sm:$0xff]
    %v5590 = vld [vmem:[%s5587 + $0x10] sm:$0xff]
    %v5591 = vld [vmem:[%s5587 + $0x18] sm:$0xff]
    %v5592 = vld [vmem:[%s5587 + $0x20] sm:$0xff]
    %v5593 = vld [vmem:[%s5587 + $0x28] sm:$0xff]
    %v5594 = vld [vmem:[%s5587 + $0x30] sm:$0xff]
    %v5595 = vld [vmem:[%s5587 + $0x38] sm:$0xff]
    %v5596 = vld [vmem:[%s6 + $0xd] sm:$0x1]
    %v5597 = vlaneseq
    %v5598 = vshrl.u32 %v5597, 7
    %v5599 = vsub.s32 0, %v5598
    %v5600 = vrot.slane %v5596, %v5599
    %5602 = vrot.lane.b32.xlu0 %v5600, 96
    %v5603 = vpop.permute.xlu0 %5602
    %5605 = vmatprep.subr.mxu0 0.0
    %5606 = vmatpush1.msra.mxu0 %v5588
    %5607 = vmatprep.subr.mxu0 0.0
    %5608 = vmatpush1.msra.mxu0 %v5589
    %5609 = vmatprep.subr.mxu0 0.0
    %5610 = vmatpush1.msra.mxu0 %v5590
    %5611 = vmatprep.subr.mxu0 0.0
    %5612 = vmatpush1.msra.mxu0 %v5591
    %5613 = vmatprep.subr.mxu0 0.0
    %5614 = vmatpush1.msra.mxu0 %v5592
    %5615 = vmatprep.subr.mxu0 0.0
    %5616 = vmatpush1.msra.mxu0 %v5593
    %5617 = vmatprep.subr.mxu0 0.0
    %5618 = vmatpush1.msra.mxu0 %v5594
    %5619 = vmatprep.subr.mxu0 0.0
    %5620 = vmatpush1.msra.mxu0 %v5595
    %5621 = vmatprep.subr.mxu0 0.0
    %5622 = vmatpush1.msra.mxu0 0.0
    %5623 = vmatprep.subr.mxu0 0.0
    %5624 = vmatpush1.msra.mxu0 0.0
    %5625 = vmatprep.subr.mxu0 0.0
    %5626 = vmatpush1.msra.mxu0 0.0
    %5627 = vmatprep.subr.mxu0 0.0
    %5628 = vmatpush1.msra.mxu0 0.0
    %5629 = vmatprep.subr.mxu0 0.0
    %5630 = vmatpush1.msra.mxu0 0.0
    %5631 = vmatprep.subr.mxu0 0.0
    %5632 = vmatpush1.msra.mxu0 0.0
    %5633 = vmatprep.subr.mxu0 0.0
    %5634 = vmatpush1.msra.mxu0 0.0
    %5635 = vmatprep.subr.mxu0 0.0
    %5636 = vmatpush1.msra.mxu0 0.0
    %5637 = vmatprep.subr.mxu0 0.0
    %5638 = vmatpush1.msra.mxu0 0.0
    %5639 = vmatprep.subr.mxu0 0.0
    %5640 = vmatpush1.msra.mxu0 0.0
    %5641 = vmatprep.subr.mxu0 0.0
    %5642 = vmatpush1.msra.mxu0 0.0
    %5643 = vmatprep.subr.mxu0 0.0
    %5644 = vmatpush1.msra.mxu0 0.0
    %5645 = vmatprep.subr.mxu0 0.0
    %5646 = vmatpush1.msra.mxu0 0.0
    %5647 = vmatprep.subr.mxu0 0.0
    %5648 = vmatpush1.msra.mxu0 0.0
    %5649 = vmatprep.subr.mxu0 0.0
    %5650 = vmatpush1.msra.mxu0 0.0
    %5651 = vmatprep.subr.mxu0 0.0
    %5652 = vmatpush1.msra.mxu0 0.0
    %5653 = vmatprep.subr.mxu0 0.0
    %5654 = vmatpush1.msra.mxu0 0.0
    %5655 = vmatprep.subr.mxu0 0.0
    %5656 = vmatpush1.msra.mxu0 0.0
    %5657 = vmatprep.subr.mxu0 0.0
    %5658 = vmatpush1.msra.mxu0 0.0
    %5659 = vmatprep.subr.mxu0 0.0
    %5660 = vmatpush1.msra.mxu0 0.0
    %5661 = vmatprep.subr.mxu0 0.0
    %5662 = vmatpush1.msra.mxu0 0.0
    %5663 = vmatprep.subr.mxu0 0.0
    %5664 = vmatpush1.msra.mxu0 0.0
    %5665 = vmatprep.subr.mxu0 0.0
    %5666 = vmatpush1.msra.mxu0 0.0
    %5667 = vmatprep.subr.mxu0 0.0
    %5668 = vmatpush1.msra.mxu0 0.0
    %5669 = vmatprep.mubr.f32.mxu0 0.0
    %5670 = vmatmul.mubr.f32.gmra.mrb[0].mxu0 %v3996
    %v5671 = vpop.f32.mrb[0].mxu0
    %v5672 = vadd.f32 %v5603, %v5671
    %v5673 = vpop.f32.mrb[0].mxu0
    %5674 = vmatprep.mubr.f32.mxu0 0.0
    %5675 = vmatmul.mubr.f32.gmra.mrb[0].mxu0 %v3999
    %v5676 = vpop.f32.mrb[0].mxu0
    %v5677 = vadd.f32 %v5603, %v5676
    %v5678 = vpop.f32.mrb[0].mxu0
    %5679 = vmatprep.mubr.f32.mxu0 0.0
    %5680 = vmatmul.mubr.f32.gmra.mrb[0].mxu0 %v4002
    %v5681 = vpop.f32.mrb[0].mxu0
    %v5682 = vadd.f32 %v5603, %v5681
    %v5683 = vpop.f32.mrb[0].mxu0
    %5684 = vmatprep.mubr.f32.mxu0 0.0
    %5685 = vmatmul.mubr.f32.gmra.mrb[0].mxu0 %v4005
    %v5686 = vpop.f32.mrb[0].mxu0
    %v5687 = vadd.f32 %v5603, %v5686
    %v5688 = vpop.f32.mrb[0].mxu0
    %5689 = vdwg.mxu0
    %s5690 = scalar_lea.vmem %s3, 1408
    %v5691 = vld [vmem:[%s5690] sm:$0xff]
    %v5692 = vld [vmem:[%s5690 + $0x8] sm:$0xff]
    %v5693 = vld [vmem:[%s5690 + $0x10] sm:$0xff]
    %v5694 = vld [vmem:[%s5690 + $0x18] sm:$0xff]
    %v5695 = vld [vmem:[%s5690 + $0x20] sm:$0xff]
    %v5696 = vld [vmem:[%s5690 + $0x28] sm:$0xff]
    %v5697 = vld [vmem:[%s5690 + $0x30] sm:$0xff]
    %v5698 = vld [vmem:[%s5690 + $0x38] sm:$0xff]
    %v5699 = vld [vmem:[%s6 + $0xe] sm:$0x1]
    %v5700 = vlaneseq
    %v5701 = vshrl.u32 %v5700, 7
    %v5702 = vsub.s32 0, %v5701
    %v5703 = vrot.slane %v5699, %v5702
    %5705 = vrot.lane.b32.xlu0 %v5703, 96
    %v5706 = vpop.permute.xlu0 %5705
    %5708 = vmatprep.subr.mxu0 0.0
    %5709 = vmatpush1.msra.mxu0 %v5691
    %5710 = vmatprep.subr.mxu0 0.0
    %5711 = vmatpush1.msra.mxu0 %v5692
    %5712 = vmatprep.subr.mxu0 0.0
    %5713 = vmatpush1.msra.mxu0 %v5693
    %5714 = vmatprep.subr.mxu0 0.0
    %5715 = vmatpush1.msra.mxu0 %v5694
    %5716 = vmatprep.subr.mxu0 0.0
    %5717 = vmatpush1.msra.mxu0 %v5695
    %5718 = vmatprep.subr.mxu0 0.0
    %5719 = vmatpush1.msra.mxu0 %v5696
    %5720 = vmatprep.subr.mxu0 0.0
    %5721 = vmatpush1.msra.mxu0 %v5697
    %5722 = vmatprep.subr.mxu0 0.0
    %5723 = vmatpush1.msra.mxu0 %v5698
    %5724 = vmatprep.subr.mxu0 0.0
    %5725 = vmatpush1.msra.mxu0 0.0
    %5726 = vmatprep.subr.mxu0 0.0
    %5727 = vmatpush1.msra.mxu0 0.0
    %5728 = vmatprep.subr.mxu0 0.0
    %5729 = vmatpush1.msra.mxu0 0.0
    %5730 = vmatprep.subr.mxu0 0.0
    %5731 = vmatpush1.msra.mxu0 0.0
    %5732 = vmatprep.subr.mxu0 0.0
    %5733 = vmatpush1.msra.mxu0 0.0
    %5734 = vmatprep.subr.mxu0 0.0
    %5735 = vmatpush1.msra.mxu0 0.0
    %5736 = vmatprep.subr.mxu0 0.0
    %5737 = vmatpush1.msra.mxu0 0.0
    %5738 = vmatprep.subr.mxu0 0.0
    %5739 = vmatpush1.msra.mxu0 0.0
    %5740 = vmatprep.subr.mxu0 0.0
    %5741 = vmatpush1.msra.mxu0 0.0
    %5742 = vmatprep.subr.mxu0 0.0
    %5743 = vmatpush1.msra.mxu0 0.0
    %5744 = vmatprep.subr.mxu0 0.0
    %5745 = vmatpush1.msra.mxu0 0.0
    %5746 = vmatprep.subr.mxu0 0.0
    %5747 = vmatpush1.msra.mxu0 0.0
    %5748 = vmatprep.subr.mxu0 0.0
    %5749 = vmatpush1.msra.mxu0 0.0
    %5750 = vmatprep.subr.mxu0 0.0
    %5751 = vmatpush1.msra.mxu0 0.0
    %5752 = vmatprep.subr.mxu0 0.0
    %5753 = vmatpush1.msra.mxu0 0.0
    %5754 = vmatprep.subr.mxu0 0.0
    %5755 = vmatpush1.msra.mxu0 0.0
    %5756 = vmatprep.subr.mxu0 0.0
    %5757 = vmatpush1.msra.mxu0 0.0
    %5758 = vmatprep.subr.mxu0 0.0
    %5759 = vmatpush1.msra.mxu0 0.0
    %5760 = vmatprep.subr.mxu0 0.0
    %5761 = vmatpush1.msra.mxu0 0.0
    %5762 = vmatprep.subr.mxu0 0.0
    %5763 = vmatpush1.msra.mxu0 0.0
    %5764 = vmatprep.subr.mxu0 0.0
    %5765 = vmatpush1.msra.mxu0 0.0
    %5766 = vmatprep.subr.mxu0 0.0
    %5767 = vmatpush1.msra.mxu0 0.0
    %5768 = vmatprep.subr.mxu0 0.0
    %5769 = vmatpush1.msra.mxu0 0.0
    %5770 = vmatprep.subr.mxu0 0.0
    %5771 = vmatpush1.msra.mxu0 0.0
    %5772 = vmatprep.mubr.f32.mxu0 0.0
    %5773 = vmatmul.mubr.f32.gmra.mrb[0].mxu0 %v3996
    %v5774 = vpop.f32.mrb[0].mxu0
    %v5775 = vadd.f32 %v5706, %v5774
    %v5776 = vpop.f32.mrb[0].mxu0
    %5777 = vmatprep.mubr.f32.mxu0 0.0
    %5778 = vmatmul.mubr.f32.gmra.mrb[0].mxu0 %v3999
    %v5779 = vpop.f32.mrb[0].mxu0
    %v5780 = vadd.f32 %v5706, %v5779
    %v5781 = vpop.f32.mrb[0].mxu0
    %5782 = vmatprep.mubr.f32.mxu0 0.0
    %5783 = vmatmul.mubr.f32.gmra.mrb[0].mxu0 %v4002
    %v5784 = vpop.f32.mrb[0].mxu0
    %v5785 = vadd.f32 %v5706, %v5784
    %v5786 = vpop.f32.mrb[0].mxu0
    %5787 = vmatprep.mubr.f32.mxu0 0.0
    %5788 = vmatmul.mubr.f32.gmra.mrb[0].mxu0 %v4005
    %v5789 = vpop.f32.mrb[0].mxu0
    %v5790 = vadd.f32 %v5706, %v5789
    %v5791 = vpop.f32.mrb[0].mxu0
    %5792 = vdwg.mxu0
    %v5794 = vsel %vm573, %v5569, 0
    %v5797 = vsel %vm573, %v5574, 0
    %v5800 = vsel %vm573, %v5672, 0
    %v5803 = vsel %vm573, %v5677, 0
    %5805 = vmatprep.subr.mxu0 0.0
    %5806 = vmatpush1.xpose.msra.mxu0 %v5800
    %5807 = vmatprep.subr.mxu0 0.0
    %5808 = vmatpush1.xpose.msra.mxu0 %v5803
    %5809 = vmatprep.subr.mxu0 0.0
    %5810 = vmatpush1.xpose.msra.mxu0 0.0
    %5811 = vmatprep.subr.mxu0 0.0
    %5812 = vmatpush1.xpose.msra.mxu0 0.0
    %5813 = vmatprep.subr.mxu0 0.0
    %5814 = vmatpush1.xpose.msra.mxu0 0.0
    %5815 = vmatprep.subr.mxu0 0.0
    %5816 = vmatpush1.xpose.msra.mxu0 0.0
    %5817 = vmatprep.subr.mxu0 0.0
    %5818 = vmatpush1.xpose.msra.mxu0 0.0
    %5819 = vmatprep.subr.mxu0 0.0
    %5820 = vmatpush1.xpose.msra.mxu0 0.0
    %5821 = vmatprep.subr.mxu0 0.0
    %5822 = vmatpush1.xpose.msra.mxu0 0.0
    %5823 = vmatprep.subr.mxu0 0.0
    %5824 = vmatpush1.xpose.msra.mxu0 0.0
    %5825 = vmatprep.subr.mxu0 0.0
    %5826 = vmatpush1.xpose.msra.mxu0 0.0
    %5827 = vmatprep.subr.mxu0 0.0
    %5828 = vmatpush1.xpose.msra.mxu0 0.0
    %5829 = vmatprep.subr.mxu0 0.0
    %5830 = vmatpush1.xpose.msra.mxu0 0.0
    %5831 = vmatprep.subr.mxu0 0.0
    %5832 = vmatpush1.xpose.msra.mxu0 0.0
    %5833 = vmatprep.subr.mxu0 0.0
    %5834 = vmatpush1.xpose.msra.mxu0 0.0
    %5835 = vmatprep.subr.mxu0 0.0
    %5836 = vmatpush1.xpose.msra.mxu0 0.0
    %5837 = vmatprep.subr.mxu0 0.0
    %5838 = vmatpush1.xpose.msra.mxu0 0.0
    %5839 = vmatprep.subr.mxu0 0.0
    %5840 = vmatpush1.xpose.msra.mxu0 0.0
    %5841 = vmatprep.subr.mxu0 0.0
    %5842 = vmatpush1.xpose.msra.mxu0 0.0
    %5843 = vmatprep.subr.mxu0 0.0
    %5844 = vmatpush1.xpose.msra.mxu0 0.0
    %5845 = vmatprep.subr.mxu0 0.0
    %5846 = vmatpush1.xpose.msra.mxu0 0.0
    %5847 = vmatprep.subr.mxu0 0.0
    %5848 = vmatpush1.xpose.msra.mxu0 0.0
    %5849 = vmatprep.subr.mxu0 0.0
    %5850 = vmatpush1.xpose.msra.mxu0 0.0
    %5851 = vmatprep.subr.mxu0 0.0
    %5852 = vmatpush1.xpose.msra.mxu0 0.0
    %5853 = vmatprep.subr.mxu0 0.0
    %5854 = vmatpush1.xpose.msra.mxu0 0.0
    %5855 = vmatprep.subr.mxu0 0.0
    %5856 = vmatpush1.xpose.msra.mxu0 0.0
    %5857 = vmatprep.subr.mxu0 0.0
    %5858 = vmatpush1.xpose.msra.mxu0 0.0
    %5859 = vmatprep.subr.mxu0 0.0
    %5860 = vmatpush1.xpose.msra.mxu0 0.0
    %5861 = vmatprep.subr.mxu0 0.0
    %5862 = vmatpush1.xpose.msra.mxu0 0.0
    %5863 = vmatprep.subr.mxu0 0.0
    %5864 = vmatpush1.xpose.msra.mxu0 0.0
    %5865 = vmatprep.subr.mxu0 0.0
    %5866 = vmatpush1.xpose.msra.mxu0 0.0
    %5867 = vmatprep.subr.mxu0 0.0
    %5868 = vmatpush1.xpose.msra.mxu0 0.0
    %5869 = vmatprep.mubr.f32.mxu0 0.0
    %5870 = vmatmul.mubr.f32.gmra.mrb[0].mxu0 %v5794
    %v5871 = vpop.f32.mrb[0].mxu0
    %v5872 = vadd.f32 0.0, %v5871
    %v5873 = vpop.f32.mrb[0].mxu0
    %5874 = vmatprep.mubr.f32.mxu0 0.0
    %5875 = vmatmul.mubr.f32.gmra.mrb[0].mxu0 %v5797
    %v5876 = vpop.f32.mrb[0].mxu0
    %v5877 = vadd.f32 0.0, %v5876
    %v5878 = vpop.f32.mrb[0].mxu0
    %5879 = vdwg.mxu0
    %v5881 = vsel %vm573, %v5579, 0
    %v5884 = vsel %vm573, %v5584, 0
    %v5887 = vsel %vm573, %v5682, 0
    %v5890 = vsel %vm573, %v5687, 0
    %5892 = vmatprep.subr.mxu0 0.0
    %5893 = vmatpush1.xpose.msra.mxu0 %v5887
    %5894 = vmatprep.subr.mxu0 0.0
    %5895 = vmatpush1.xpose.msra.mxu0 %v5890
    %5896 = vmatprep.subr.mxu0 0.0
    %5897 = vmatpush1.xpose.msra.mxu0 0.0
    %5898 = vmatprep.subr.mxu0 0.0
    %5899 = vmatpush1.xpose.msra.mxu0 0.0
    %5900 = vmatprep.subr.mxu0 0.0
    %5901 = vmatpush1.xpose.msra.mxu0 0.0
    %5902 = vmatprep.subr.mxu0 0.0
    %5903 = vmatpush1.xpose.msra.mxu0 0.0
    %5904 = vmatprep.subr.mxu0 0.0
    %5905 = vmatpush1.xpose.msra.mxu0 0.0
    %5906 = vmatprep.subr.mxu0 0.0
    %5907 = vmatpush1.xpose.msra.mxu0 0.0
    %5908 = vmatprep.subr.mxu0 0.0
    %5909 = vmatpush1.xpose.msra.mxu0 0.0
    %5910 = vmatprep.subr.mxu0 0.0
    %5911 = vmatpush1.xpose.msra.mxu0 0.0
    %5912 = vmatprep.subr.mxu0 0.0
    %5913 = vmatpush1.xpose.msra.mxu0 0.0
    %5914 = vmatprep.subr.mxu0 0.0
    %5915 = vmatpush1.xpose.msra.mxu0 0.0
    %5916 = vmatprep.subr.mxu0 0.0
    %5917 = vmatpush1.xpose.msra.mxu0 0.0
    %5918 = vmatprep.subr.mxu0 0.0
    %5919 = vmatpush1.xpose.msra.mxu0 0.0
    %5920 = vmatprep.subr.mxu0 0.0
    %5921 = vmatpush1.xpose.msra.mxu0 0.0
    %5922 = vmatprep.subr.mxu0 0.0
    %5923 = vmatpush1.xpose.msra.mxu0 0.0
    %5924 = vmatprep.subr.mxu0 0.0
    %5925 = vmatpush1.xpose.msra.mxu0 0.0
    %5926 = vmatprep.subr.mxu0 0.0
    %5927 = vmatpush1.xpose.msra.mxu0 0.0
    %5928 = vmatprep.subr.mxu0 0.0
    %5929 = vmatpush1.xpose.msra.mxu0 0.0
    %5930 = vmatprep.subr.mxu0 0.0
    %5931 = vmatpush1.xpose.msra.mxu0 0.0
    %5932 = vmatprep.subr.mxu0 0.0
    %5933 = vmatpush1.xpose.msra.mxu0 0.0
    %5934 = vmatprep.subr.mxu0 0.0
    %5935 = vmatpush1.xpose.msra.mxu0 0.0
    %5936 = vmatprep.subr.mxu0 0.0
    %5937 = vmatpush1.xpose.msra.mxu0 0.0
    %5938 = vmatprep.subr.mxu0 0.0
    %5939 = vmatpush1.xpose.msra.mxu0 0.0
    %5940 = vmatprep.subr.mxu0 0.0
    %5941 = vmatpush1.xpose.msra.mxu0 0.0
    %5942 = vmatprep.subr.mxu0 0.0
    %5943 = vmatpush1.xpose.msra.mxu0 0.0
    %5944 = vmatprep.subr.mxu0 0.0
    %5945 = vmatpush1.xpose.msra.mxu0 0.0
    %5946 = vmatprep.subr.mxu0 0.0
    %5947 = vmatpush1.xpose.msra.mxu0 0.0
    %5948 = vmatprep.subr.mxu0 0.0
    %5949 = vmatpush1.xpose.msra.mxu0 0.0
    %5950 = vmatprep.subr.mxu0 0.0
    %5951 = vmatpush1.xpose.msra.mxu0 0.0
    %5952 = vmatprep.subr.mxu0 0.0
    %5953 = vmatpush1.xpose.msra.mxu0 0.0
    %5954 = vmatprep.subr.mxu0 0.0
    %5955 = vmatpush1.xpose.msra.mxu0 0.0
    %5956 = vmatprep.mubr.f32.mxu0 0.0
    %5957 = vmatmul.mubr.f32.gmra.mrb[0].mxu0 %v5881
    %v5958 = vpop.f32.mrb[0].mxu0
    %v5959 = vadd.f32 0.0, %v5958
    %v5960 = vpop.f32.mrb[0].mxu0
    %5961 = vmatprep.mubr.f32.mxu0 0.0
    %5962 = vmatmul.mubr.f32.gmra.mrb[0].mxu0 %v5884
    %v5963 = vpop.f32.mrb[0].mxu0
    %v5964 = vadd.f32 0.0, %v5963
    %v5965 = vpop.f32.mrb[0].mxu0
    %5966 = vdwg.mxu0
    %v5967 = vmul.f32 %v5872, 0.25
    %v5968 = vmul.f32 %v5877, 0.25
    %v5969 = vmul.f32 %v5959, 0.25
    %v5970 = vmul.f32 %v5964, 0.25
    %v5971 = vadd.f32 %v5967, %v179
    %v5972 = vadd.f32 %v5968, %v180
    %v5973 = vadd.f32 %v5969, %v179
    %v5974 = vadd.f32 %v5970, %v180
    %v5975 = vsel %vm573, %v5971, -inf
    %5976 = vmax.xlane.f32.xlu0 %v5975
    %v5977 = vpop.xlane.xlu0 %5976
    %v5978 = vsel %vm573, %v5972, -inf
    %5979 = vmax.xlane.f32.xlu0 %v5978
    %v5980 = vpop.xlane.xlu0 %5979
    %v5981 = vsel %vm573, %v5973, -inf
    %5982 = vmax.xlane.f32.xlu0 %v5981
    %v5983 = vpop.xlane.xlu0 %5982
    %v5984 = vsel %vm573, %v5974, -inf
    %5985 = vmax.xlane.f32.xlu0 %v5984
    %v5986 = vpop.xlane.xlu0 %5985
    %v5987 = vsub.f32 %v5971, %v5977
    %v5988 = vsub.f32 %v5972, %v5980
    %v5989 = vsub.f32 %v5973, %v5983
    %v5990 = vsub.f32 %v5974, %v5986
    %v5991 = vmul.f32 %v5987, 1.442695
    %v5992 = vpow.pop %v5991
    %v5993 = vmul.f32 %v5988, 1.442695
    %v5994 = vpow.pop %v5993
    %v5995 = vmul.f32 %v5989, 1.442695
    %v5996 = vpow.pop %v5995
    %v5997 = vmul.f32 %v5990, 1.442695
    %v5998 = vpow.pop %v5997
    %v5999 = vsel %vm573, %v5992, 0.0
    %6000 = vadd.xlane.f32.xlu0 %v5999
    %v6001 = vpop.xlane.xlu0 %6000
    %v6002 = vsel %vm573, %v5994, 0.0
    %6003 = vadd.xlane.f32.xlu0 %v6002
    %v6004 = vpop.xlane.xlu0 %6003
    %v6005 = vsel %vm573, %v5996, 0.0
    %6006 = vadd.xlane.f32.xlu0 %v6005
    %v6007 = vpop.xlane.xlu0 %6006
    %v6008 = vsel %vm573, %v5998, 0.0
    %6009 = vadd.xlane.f32.xlu0 %v6008
    %v6010 = vpop.xlane.xlu0 %6009
    %v6011 = vrcp.pop %v6001
    %v6012 = vrcp.pop %v6004
    %v6013 = vrcp.pop %v6007
    %v6014 = vrcp.pop %v6010
    %v6015 = vmul.f32 %v5992, %v6011
    %v6016 = vmul.f32 %v5994, %v6012
    %v6017 = vmul.f32 %v5996, %v6013
    %v6018 = vmul.f32 %v5998, %v6014
    %v6019 = vadd.f32 %v5121, %v6015
    %v6020 = vadd.f32 %v5122, %v6016
    %v6021 = vadd.f32 %v5123, %v6017
    %v6022 = vadd.f32 %v5124, %v6018
    %v6024 = vsel %vm573, %v6015, 0
    %v6027 = vsel %vm573, %v6016, 0
    %6029 = vmatprep.subr.mxu0 0.0
    %6030 = vmatpush1.msra.mxu0 %v5775
    %6031 = vmatprep.subr.mxu0 0.0
    %6032 = vmatpush1.msra.mxu0 %v5780
    %6033 = vmatprep.subr.mxu0 0.0
    %6034 = vmatpush1.msra.mxu0 0.0
    %6035 = vmatprep.subr.mxu0 0.0
    %6036 = vmatpush1.msra.mxu0 0.0
    %6037 = vmatprep.subr.mxu0 0.0
    %6038 = vmatpush1.msra.mxu0 0.0
    %6039 = vmatprep.subr.mxu0 0.0
    %6040 = vmatpush1.msra.mxu0 0.0
    %6041 = vmatprep.subr.mxu0 0.0
    %6042 = vmatpush1.msra.mxu0 0.0
    %6043 = vmatprep.subr.mxu0 0.0
    %6044 = vmatpush1.msra.mxu0 0.0
    %6045 = vmatprep.subr.mxu0 0.0
    %6046 = vmatpush1.msra.mxu0 0.0
    %6047 = vmatprep.subr.mxu0 0.0
    %6048 = vmatpush1.msra.mxu0 0.0
    %6049 = vmatprep.subr.mxu0 0.0
    %6050 = vmatpush1.msra.mxu0 0.0
    %6051 = vmatprep.subr.mxu0 0.0
    %6052 = vmatpush1.msra.mxu0 0.0
    %6053 = vmatprep.subr.mxu0 0.0
    %6054 = vmatpush1.msra.mxu0 0.0
    %6055 = vmatprep.subr.mxu0 0.0
    %6056 = vmatpush1.msra.mxu0 0.0
    %6057 = vmatprep.subr.mxu0 0.0
    %6058 = vmatpush1.msra.mxu0 0.0
    %6059 = vmatprep.subr.mxu0 0.0
    %6060 = vmatpush1.msra.mxu0 0.0
    %6061 = vmatprep.subr.mxu0 0.0
    %6062 = vmatpush1.msra.mxu0 0.0
    %6063 = vmatprep.subr.mxu0 0.0
    %6064 = vmatpush1.msra.mxu0 0.0
    %6065 = vmatprep.subr.mxu0 0.0
    %6066 = vmatpush1.msra.mxu0 0.0
    %6067 = vmatprep.subr.mxu0 0.0
    %6068 = vmatpush1.msra.mxu0 0.0
    %6069 = vmatprep.subr.mxu0 0.0
    %6070 = vmatpush1.msra.mxu0 0.0
    %6071 = vmatprep.subr.mxu0 0.0
    %6072 = vmatpush1.msra.mxu0 0.0
    %6073 = vmatprep.subr.mxu0 0.0
    %6074 = vmatpush1.msra.mxu0 0.0
    %6075 = vmatprep.subr.mxu0 0.0
    %6076 = vmatpush1.msra.mxu0 0.0
    %6077 = vmatprep.subr.mxu0 0.0
    %6078 = vmatpush1.msra.mxu0 0.0
    %6079 = vmatprep.subr.mxu0 0.0
    %6080 = vmatpush1.msra.mxu0 0.0
    %6081 = vmatprep.subr.mxu0 0.0
    %6082 = vmatpush1.msra.mxu0 0.0
    %6083 = vmatprep.subr.mxu0 0.0
    %6084 = vmatpush1.msra.mxu0 0.0
    %6085 = vmatprep.subr.mxu0 0.0
    %6086 = vmatpush1.msra.mxu0 0.0
    %6087 = vmatprep.subr.mxu0 0.0
    %6088 = vmatpush1.msra.mxu0 0.0
    %6089 = vmatprep.subr.mxu0 0.0
    %6090 = vmatpush1.msra.mxu0 0.0
    %6091 = vmatprep.subr.mxu0 0.0
    %6092 = vmatpush1.msra.mxu0 0.0
    %6093 = vmatprep.mubr.f32.mxu0 0.0
    %6094 = vmatmul.mubr.f32.gmra.mrb[0].mxu0 %v6024
    %v6095 = vpop.f32.mrb[0].mxu0
    %v6096 = vadd.f32 0.0, %v6095
    %v6097 = vpop.f32.mrb[0].mxu0
    %6098 = vmatprep.mubr.f32.mxu0 0.0
    %6099 = vmatmul.mubr.f32.gmra.mrb[0].mxu0 %v6027
    %v6100 = vpop.f32.mrb[0].mxu0
    %v6101 = vadd.f32 0.0, %v6100
    %v6102 = vpop.f32.mrb[0].mxu0
    %6103 = vdwg.mxu0
    %v6105 = vsel %vm573, %v6017, 0
    %v6108 = vsel %vm573, %v6018, 0
    %6110 = vmatprep.subr.mxu0 0.0
    %6111 = vmatpush1.msra.mxu0 %v5785
    %6112 = vmatprep.subr.mxu0 0.0
    %6113 = vmatpush1.msra.mxu0 %v5790
    %6114 = vmatprep.subr.mxu0 0.0
    %6115 = vmatpush1.msra.mxu0 0.0
    %6116 = vmatprep.subr.mxu0 0.0
    %6117 = vmatpush1.msra.mxu0 0.0
    %6118 = vmatprep.subr.mxu0 0.0
    %6119 = vmatpush1.msra.mxu0 0.0
    %6120 = vmatprep.subr.mxu0 0.0
    %6121 = vmatpush1.msra.mxu0 0.0
    %6122 = vmatprep.subr.mxu0 0.0
    %6123 = vmatpush1.msra.mxu0 0.0
    %6124 = vmatprep.subr.mxu0 0.0
    %6125 = vmatpush1.msra.mxu0 0.0
    %6126 = vmatprep.subr.mxu0 0.0
    %6127 = vmatpush1.msra.mxu0 0.0
    %6128 = vmatprep.subr.mxu0 0.0
    %6129 = vmatpush1.msra.mxu0 0.0
    %6130 = vmatprep.subr.mxu0 0.0
    %6131 = vmatpush1.msra.mxu0 0.0
    %6132 = vmatprep.subr.mxu0 0.0
    %6133 = vmatpush1.msra.mxu0 0.0
    %6134 = vmatprep.subr.mxu0 0.0
    %6135 = vmatpush1.msra.mxu0 0.0
    %6136 = vmatprep.subr.mxu0 0.0
    %6137 = vmatpush1.msra.mxu0 0.0
    %6138 = vmatprep.subr.mxu0 0.0
    %6139 = vmatpush1.msra.mxu0 0.0
    %6140 = vmatprep.subr.mxu0 0.0
    %6141 = vmatpush1.msra.mxu0 0.0
    %6142 = vmatprep.subr.mxu0 0.0
    %6143 = vmatpush1.msra.mxu0 0.0
    %6144 = vmatprep.subr.mxu0 0.0
    %6145 = vmatpush1.msra.mxu0 0.0
    %6146 = vmatprep.subr.mxu0 0.0
    %6147 = vmatpush1.msra.mxu0 0.0
    %6148 = vmatprep.subr.mxu0 0.0
    %6149 = vmatpush1.msra.mxu0 0.0
    %6150 = vmatprep.subr.mxu0 0.0
    %6151 = vmatpush1.msra.mxu0 0.0
    %6152 = vmatprep.subr.mxu0 0.0
    %6153 = vmatpush1.msra.mxu0 0.0
    %6154 = vmatprep.subr.mxu0 0.0
    %6155 = vmatpush1.msra.mxu0 0.0
    %6156 = vmatprep.subr.mxu0 0.0
    %6157 = vmatpush1.msra.mxu0 0.0
    %6158 = vmatprep.subr.mxu0 0.0
    %6159 = vmatpush1.msra.mxu0 0.0
    %6160 = vmatprep.subr.mxu0 0.0
    %6161 = vmatpush1.msra.mxu0 0.0
    %6162 = vmatprep.subr.mxu0 0.0
    %6163 = vmatpush1.msra.mxu0 0.0
    %6164 = vmatprep.subr.mxu0 0.0
    %6165 = vmatpush1.msra.mxu0 0.0
    %6166 = vmatprep.subr.mxu0 0.0
    %6167 = vmatpush1.msra.mxu0 0.0
    %6168 = vmatprep.subr.mxu0 0.0
    %6169 = vmatpush1.msra.mxu0 0.0
    %6170 = vmatprep.subr.mxu0 0.0
    %6171 = vmatpush1.msra.mxu0 0.0
    %6172 = vmatprep.subr.mxu0 0.0
    %6173 = vmatpush1.msra.mxu0 0.0
    %6174 = vmatprep.mubr.f32.mxu0 0.0
    %6175 = vmatmul.mubr.f32.gmra.mrb[0].mxu0 %v6105
    %v6176 = vpop.f32.mrb[0].mxu0
    %v6177 = vadd.f32 0.0, %v6176
    %v6178 = vpop.f32.mrb[0].mxu0
    %6179 = vmatprep.mubr.f32.mxu0 0.0
    %6180 = vmatmul.mubr.f32.gmra.mrb[0].mxu0 %v6108
    %v6181 = vpop.f32.mrb[0].mxu0
    %v6182 = vadd.f32 0.0, %v6181
    %v6183 = vpop.f32.mrb[0].mxu0
    %6184 = vdwg.mxu0
    %s6185 = scalar_lea.vmem %s4, 96
    %v6186 = vld [vmem:[%s6185] sm:$0xff]
    %v6187 = vld [vmem:[%s6185 + $0x8] sm:$0xff]
    %v6189 = vsel %vm573, %v6096, 0
    %v6192 = vsel %vm573, %v6101, 0
    %v6195 = vsel %vm573, %v6177, 0
    %v6198 = vsel %vm573, %v6182, 0
    %6200 = vmatprep.subr.mxu0 0.0
    %6201 = vmatpush1.msra.mxu0 %v6186
    %6202 = vmatprep.subr.mxu0 0.0
    %6203 = vmatpush1.msra.mxu0 %v6187
    %6204 = vmatprep.subr.mxu0 0.0
    %6205 = vmatpush1.msra.mxu0 0.0
    %6206 = vmatprep.subr.mxu0 0.0
    %6207 = vmatpush1.msra.mxu0 0.0
    %6208 = vmatprep.subr.mxu0 0.0
    %6209 = vmatpush1.msra.mxu0 0.0
    %6210 = vmatprep.subr.mxu0 0.0
    %6211 = vmatpush1.msra.mxu0 0.0
    %6212 = vmatprep.subr.mxu0 0.0
    %6213 = vmatpush1.msra.mxu0 0.0
    %6214 = vmatprep.subr.mxu0 0.0
    %6215 = vmatpush1.msra.mxu0 0.0
    %6216 = vmatprep.subr.mxu0 0.0
    %6217 = vmatpush1.msra.mxu0 0.0
    %6218 = vmatprep.subr.mxu0 0.0
    %6219 = vmatpush1.msra.mxu0 0.0
    %6220 = vmatprep.subr.mxu0 0.0
    %6221 = vmatpush1.msra.mxu0 0.0
    %6222 = vmatprep.subr.mxu0 0.0
    %6223 = vmatpush1.msra.mxu0 0.0
    %6224 = vmatprep.subr.mxu0 0.0
    %6225 = vmatpush1.msra.mxu0 0.0
    %6226 = vmatprep.subr.mxu0 0.0
    %6227 = vmatpush1.msra.mxu0 0.0
    %6228 = vmatprep.subr.mxu0 0.0
    %6229 = vmatpush1.msra.mxu0 0.0
    %6230 = vmatprep.subr.mxu0 0.0
    %6231 = vmatpush1.msra.mxu0 0.0
    %6232 = vmatprep.subr.mxu0 0.0
    %6233 = vmatpush1.msra.mxu0 0.0
    %6234 = vmatprep.subr.mxu0 0.0
    %6235 = vmatpush1.msra.mxu0 0.0
    %6236 = vmatprep.subr.mxu0 0.0
    %6237 = vmatpush1.msra.mxu0 0.0
    %6238 = vmatprep.subr.mxu0 0.0
    %6239 = vmatpush1.msra.mxu0 0.0
    %6240 = vmatprep.subr.mxu0 0.0
    %6241 = vmatpush1.msra.mxu0 0.0
    %6242 = vmatprep.subr.mxu0 0.0
    %6243 = vmatpush1.msra.mxu0 0.0
    %6244 = vmatprep.subr.mxu0 0.0
    %6245 = vmatpush1.msra.mxu0 0.0
    %6246 = vmatprep.subr.mxu0 0.0
    %6247 = vmatpush1.msra.mxu0 0.0
    %6248 = vmatprep.subr.mxu0 0.0
    %6249 = vmatpush1.msra.mxu0 0.0
    %6250 = vmatprep.subr.mxu0 0.0
    %6251 = vmatpush1.msra.mxu0 0.0
    %6252 = vmatprep.subr.mxu0 0.0
    %6253 = vmatpush1.msra.mxu0 0.0
    %6254 = vmatprep.subr.mxu0 0.0
    %6255 = vmatpush1.msra.mxu0 0.0
    %6256 = vmatprep.subr.mxu0 0.0
    %6257 = vmatpush1.msra.mxu0 0.0
    %6258 = vmatprep.subr.mxu0 0.0
    %6259 = vmatpush1.msra.mxu0 0.0
    %6260 = vmatprep.subr.mxu0 0.0
    %6261 = vmatpush1.msra.mxu0 0.0
    %6262 = vmatprep.subr.mxu0 0.0
    %6263 = vmatpush1.msra.mxu0 0.0
    %6264 = vmatprep.mubr.f32.mxu0 0.0
    %6265 = vmatmul.mubr.f32.gmra.mrb[0].mxu0 %v6189
    %v6266 = vpop.f32.mrb[0].mxu0
    %v6267 = vadd.f32 0.0, %v6266
    %v6268 = vpop.f32.mrb[0].mxu0
    %6269 = vmatprep.mubr.f32.mxu0 0.0
    %6270 = vmatmul.mubr.f32.gmra.mrb[0].mxu0 %v6192
    %v6271 = vpop.f32.mrb[0].mxu0
    %v6272 = vadd.f32 0.0, %v6271
    %v6273 = vpop.f32.mrb[0].mxu0
    %6274 = vmatprep.mubr.f32.mxu0 0.0
    %6275 = vmatmul.mubr.f32.gmra.mrb[0].mxu0 %v6195
    %v6276 = vpop.f32.mrb[0].mxu0
    %v6277 = vadd.f32 0.0, %v6276
    %v6278 = vpop.f32.mrb[0].mxu0
    %6279 = vmatprep.mubr.f32.mxu0 0.0
    %6280 = vmatmul.mubr.f32.gmra.mrb[0].mxu0 %v6198
    %v6281 = vpop.f32.mrb[0].mxu0
    %v6282 = vadd.f32 0.0, %v6281
    %v6283 = vpop.f32.mrb[0].mxu0
    %6284 = vdwg.mxu0
    %v6285 = vadd.f32 %v5466, %v6267
    %v6286 = vadd.f32 %v5471, %v6272
    %v6287 = vadd.f32 %v5476, %v6277
    %v6288 = vadd.f32 %v5481, %v6282
    %s6289 = scalar_lea.vmem %s3, 960
    %v6290 = vld [vmem:[%s6289] sm:$0xff]
    %v6291 = vld [vmem:[%s6289 + $0x8] sm:$0xff]
    %v6292 = vld [vmem:[%s6289 + $0x10] sm:$0xff]
    %v6293 = vld [vmem:[%s6289 + $0x18] sm:$0xff]
    %v6294 = vld [vmem:[%s6289 + $0x20] sm:$0xff]
    %v6295 = vld [vmem:[%s6289 + $0x28] sm:$0xff]
    %v6296 = vld [vmem:[%s6289 + $0x30] sm:$0xff]
    %v6297 = vld [vmem:[%s6289 + $0x38] sm:$0xff]
    %v6298 = vld [vmem:[%s6 + $0xc] sm:$0x1]
    %v6299 = vlaneseq
    %v6300 = vshrl.u32 %v6299, 7
    %v6301 = vsub.s32 0, %v6300
    %v6302 = vrot.slane %v6298, %v6301
    %6304 = vrot.lane.b32.xlu0 %v6302, 80
    %v6305 = vpop.permute.xlu0 %6304
    %6307 = vmatprep.subr.mxu0 0.0
    %6308 = vmatpush1.msra.mxu0 %v6290
    %6309 = vmatprep.subr.mxu0 0.0
    %6310 = vmatpush1.msra.mxu0 %v6291
    %6311 = vmatprep.subr.mxu0 0.0
    %6312 = vmatpush1.msra.mxu0 %v6292
    %6313 = vmatprep.subr.mxu0 0.0
    %6314 = vmatpush1.msra.mxu0 %v6293
    %6315 = vmatprep.subr.mxu0 0.0
    %6316 = vmatpush1.msra.mxu0 %v6294
    %6317 = vmatprep.subr.mxu0 0.0
    %6318 = vmatpush1.msra.mxu0 %v6295
    %6319 = vmatprep.subr.mxu0 0.0
    %6320 = vmatpush1.msra.mxu0 %v6296
    %6321 = vmatprep.subr.mxu0 0.0
    %6322 = vmatpush1.msra.mxu0 %v6297
    %6323 = vmatprep.subr.mxu0 0.0
    %6324 = vmatpush1.msra.mxu0 0.0
    %6325 = vmatprep.subr.mxu0 0.0
    %6326 = vmatpush1.msra.mxu0 0.0
    %6327 = vmatprep.subr.mxu0 0.0
    %6328 = vmatpush1.msra.mxu0 0.0
    %6329 = vmatprep.subr.mxu0 0.0
    %6330 = vmatpush1.msra.mxu0 0.0
    %6331 = vmatprep.subr.mxu0 0.0
    %6332 = vmatpush1.msra.mxu0 0.0
    %6333 = vmatprep.subr.mxu0 0.0
    %6334 = vmatpush1.msra.mxu0 0.0
    %6335 = vmatprep.subr.mxu0 0.0
    %6336 = vmatpush1.msra.mxu0 0.0
    %6337 = vmatprep.subr.mxu0 0.0
    %6338 = vmatpush1.msra.mxu0 0.0
    %6339 = vmatprep.subr.mxu0 0.0
    %6340 = vmatpush1.msra.mxu0 0.0
    %6341 = vmatprep.subr.mxu0 0.0
    %6342 = vmatpush1.msra.mxu0 0.0
    %6343 = vmatprep.subr.mxu0 0.0
    %6344 = vmatpush1.msra.mxu0 0.0
    %6345 = vmatprep.subr.mxu0 0.0
    %6346 = vmatpush1.msra.mxu0 0.0
    %6347 = vmatprep.subr.mxu0 0.0
    %6348 = vmatpush1.msra.mxu0 0.0
    %6349 = vmatprep.subr.mxu0 0.0
    %6350 = vmatpush1.msra.mxu0 0.0
    %6351 = vmatprep.subr.mxu0 0.0
    %6352 = vmatpush1.msra.mxu0 0.0
    %6353 = vmatprep.subr.mxu0 0.0
    %6354 = vmatpush1.msra.mxu0 0.0
    %6355 = vmatprep.subr.mxu0 0.0
    %6356 = vmatpush1.msra.mxu0 0.0
    %6357 = vmatprep.subr.mxu0 0.0
    %6358 = vmatpush1.msra.mxu0 0.0
    %6359 = vmatprep.subr.mxu0 0.0
    %6360 = vmatpush1.msra.mxu0 0.0
    %6361 = vmatprep.subr.mxu0 0.0
    %6362 = vmatpush1.msra.mxu0 0.0
    %6363 = vmatprep.subr.mxu0 0.0
    %6364 = vmatpush1.msra.mxu0 0.0
    %6365 = vmatprep.subr.mxu0 0.0
    %6366 = vmatpush1.msra.mxu0 0.0
    %6367 = vmatprep.subr.mxu0 0.0
    %6368 = vmatpush1.msra.mxu0 0.0
    %6369 = vmatprep.subr.mxu0 0.0
    %6370 = vmatpush1.msra.mxu0 0.0
    %6371 = vmatprep.mubr.f32.mxu0 0.0
    %6372 = vmatmul.mubr.f32.gmra.mrb[0].mxu0 %v3885
    %v6373 = vpop.f32.mrb[0].mxu0
    %v6374 = vadd.f32 %v6305, %v6373
    %v6375 = vpop.f32.mrb[0].mxu0
    %6376 = vmatprep.mubr.f32.mxu0 0.0
    %6377 = vmatmul.mubr.f32.gmra.mrb[0].mxu0 %v3888
    %v6378 = vpop.f32.mrb[0].mxu0
    %v6379 = vadd.f32 %v6305, %v6378
    %v6380 = vpop.f32.mrb[0].mxu0
    %6381 = vmatprep.mubr.f32.mxu0 0.0
    %6382 = vmatmul.mubr.f32.gmra.mrb[0].mxu0 %v3891
    %v6383 = vpop.f32.mrb[0].mxu0
    %v6384 = vadd.f32 %v6305, %v6383
    %v6385 = vpop.f32.mrb[0].mxu0
    %6386 = vmatprep.mubr.f32.mxu0 0.0
    %6387 = vmatmul.mubr.f32.gmra.mrb[0].mxu0 %v3894
    %v6388 = vpop.f32.mrb[0].mxu0
    %v6389 = vadd.f32 %v6305, %v6388
    %v6390 = vpop.f32.mrb[0].mxu0
    %6391 = vdwg.mxu0
    %s6392 = scalar_lea.vmem %s3, 1216
    %v6393 = vld [vmem:[%s6392] sm:$0xff]
    %v6394 = vld [vmem:[%s6392 + $0x8] sm:$0xff]
    %v6395 = vld [vmem:[%s6392 + $0x10] sm:$0xff]
    %v6396 = vld [vmem:[%s6392 + $0x18] sm:$0xff]
    %v6397 = vld [vmem:[%s6392 + $0x20] sm:$0xff]
    %v6398 = vld [vmem:[%s6392 + $0x28] sm:$0xff]
    %v6399 = vld [vmem:[%s6392 + $0x30] sm:$0xff]
    %v6400 = vld [vmem:[%s6392 + $0x38] sm:$0xff]
    %v6401 = vld [vmem:[%s6 + $0xd] sm:$0x1]
    %v6402 = vlaneseq
    %v6403 = vshrl.u32 %v6402, 7
    %v6404 = vsub.s32 0, %v6403
    %v6405 = vrot.slane %v6401, %v6404
    %6407 = vrot.lane.b32.xlu0 %v6405, 80
    %v6408 = vpop.permute.xlu0 %6407
    %6410 = vmatprep.subr.mxu0 0.0
    %6411 = vmatpush1.msra.mxu0 %v6393
    %6412 = vmatprep.subr.mxu0 0.0
    %6413 = vmatpush1.msra.mxu0 %v6394
    %6414 = vmatprep.subr.mxu0 0.0
    %6415 = vmatpush1.msra.mxu0 %v6395
    %6416 = vmatprep.subr.mxu0 0.0
    %6417 = vmatpush1.msra.mxu0 %v6396
    %6418 = vmatprep.subr.mxu0 0.0
    %6419 = vmatpush1.msra.mxu0 %v6397
    %6420 = vmatprep.subr.mxu0 0.0
    %6421 = vmatpush1.msra.mxu0 %v6398
    %6422 = vmatprep.subr.mxu0 0.0
    %6423 = vmatpush1.msra.mxu0 %v6399
    %6424 = vmatprep.subr.mxu0 0.0
    %6425 = vmatpush1.msra.mxu0 %v6400
    %6426 = vmatprep.subr.mxu0 0.0
    %6427 = vmatpush1.msra.mxu0 0.0
    %6428 = vmatprep.subr.mxu0 0.0
    %6429 = vmatpush1.msra.mxu0 0.0
    %6430 = vmatprep.subr.mxu0 0.0
    %6431 = vmatpush1.msra.mxu0 0.0
    %6432 = vmatprep.subr.mxu0 0.0
    %6433 = vmatpush1.msra.mxu0 0.0
    %6434 = vmatprep.subr.mxu0 0.0
    %6435 = vmatpush1.msra.mxu0 0.0
    %6436 = vmatprep.subr.mxu0 0.0
    %6437 = vmatpush1.msra.mxu0 0.0
    %6438 = vmatprep.subr.mxu0 0.0
    %6439 = vmatpush1.msra.mxu0 0.0
    %6440 = vmatprep.subr.mxu0 0.0
    %6441 = vmatpush1.msra.mxu0 0.0
    %6442 = vmatprep.subr.mxu0 0.0
    %6443 = vmatpush1.msra.mxu0 0.0
    %6444 = vmatprep.subr.mxu0 0.0
    %6445 = vmatpush1.msra.mxu0 0.0
    %6446 = vmatprep.subr.mxu0 0.0
    %6447 = vmatpush1.msra.mxu0 0.0
    %6448 = vmatprep.subr.mxu0 0.0
    %6449 = vmatpush1.msra.mxu0 0.0
    %6450 = vmatprep.subr.mxu0 0.0
    %6451 = vmatpush1.msra.mxu0 0.0
    %6452 = vmatprep.subr.mxu0 0.0
    %6453 = vmatpush1.msra.mxu0 0.0
    %6454 = vmatprep.subr.mxu0 0.0
    %6455 = vmatpush1.msra.mxu0 0.0
    %6456 = vmatprep.subr.mxu0 0.0
    %6457 = vmatpush1.msra.mxu0 0.0
    %6458 = vmatprep.subr.mxu0 0.0
    %6459 = vmatpush1.msra.mxu0 0.0
    %6460 = vmatprep.subr.mxu0 0.0
    %6461 = vmatpush1.msra.mxu0 0.0
    %6462 = vmatprep.subr.mxu0 0.0
    %6463 = vmatpush1.msra.mxu0 0.0
    %6464 = vmatprep.subr.mxu0 0.0
    %6465 = vmatpush1.msra.mxu0 0.0
    %6466 = vmatprep.subr.mxu0 0.0
    %6467 = vmatpush1.msra.mxu0 0.0
    %6468 = vmatprep.subr.mxu0 0.0
    %6469 = vmatpush1.msra.mxu0 0.0
    %6470 = vmatprep.subr.mxu0 0.0
    %6471 = vmatpush1.msra.mxu0 0.0
    %6472 = vmatprep.subr.mxu0 0.0
    %6473 = vmatpush1.msra.mxu0 0.0
    %6474 = vmatprep.mubr.f32.mxu0 0.0
    %6475 = vmatmul.mubr.f32.gmra.mrb[0].mxu0 %v3996
    %v6476 = vpop.f32.mrb[0].mxu0
    %v6477 = vadd.f32 %v6408, %v6476
    %v6478 = vpop.f32.mrb[0].mxu0
    %6479 = vmatprep.mubr.f32.mxu0 0.0
    %6480 = vmatmul.mubr.f32.gmra.mrb[0].mxu0 %v3999
    %v6481 = vpop.f32.mrb[0].mxu0
    %v6482 = vadd.f32 %v6408, %v6481
    %v6483 = vpop.f32.mrb[0].mxu0
    %6484 = vmatprep.mubr.f32.mxu0 0.0
    %6485 = vmatmul.mubr.f32.gmra.mrb[0].mxu0 %v4002
    %v6486 = vpop.f32.mrb[0].mxu0
    %v6487 = vadd.f32 %v6408, %v6486
    %v6488 = vpop.f32.mrb[0].mxu0
    %6489 = vmatprep.mubr.f32.mxu0 0.0
    %6490 = vmatmul.mubr.f32.gmra.mrb[0].mxu0 %v4005
    %v6491 = vpop.f32.mrb[0].mxu0
    %v6492 = vadd.f32 %v6408, %v6491
    %v6493 = vpop.f32.mrb[0].mxu0
    %6494 = vdwg.mxu0
    %s6495 = scalar_lea.vmem %s3, 1472
    %v6496 = vld [vmem:[%s6495] sm:$0xff]
    %v6497 = vld [vmem:[%s6495 + $0x8] sm:$0xff]
    %v6498 = vld [vmem:[%s6495 + $0x10] sm:$0xff]
    %v6499 = vld [vmem:[%s6495 + $0x18] sm:$0xff]
    %v6500 = vld [vmem:[%s6495 + $0x20] sm:$0xff]
    %v6501 = vld [vmem:[%s6495 + $0x28] sm:$0xff]
    %v6502 = vld [vmem:[%s6495 + $0x30] sm:$0xff]
    %v6503 = vld [vmem:[%s6495 + $0x38] sm:$0xff]
    %v6504 = vld [vmem:[%s6 + $0xe] sm:$0x1]
    %v6505 = vlaneseq
    %v6506 = vshrl.u32 %v6505, 7
    %v6507 = vsub.s32 0, %v6506
    %v6508 = vrot.slane %v6504, %v6507
    %6510 = vrot.lane.b32.xlu0 %v6508, 80
    %v6511 = vpop.permute.xlu0 %6510
    %6513 = vmatprep.subr.mxu0 0.0
    %6514 = vmatpush1.msra.mxu0 %v6496
    %6515 = vmatprep.subr.mxu0 0.0
    %6516 = vmatpush1.msra.mxu0 %v6497
    %6517 = vmatprep.subr.mxu0 0.0
    %6518 = vmatpush1.msra.mxu0 %v6498
    %6519 = vmatprep.subr.mxu0 0.0
    %6520 = vmatpush1.msra.mxu0 %v6499
    %6521 = vmatprep.subr.mxu0 0.0
    %6522 = vmatpush1.msra.mxu0 %v6500
    %6523 = vmatprep.subr.mxu0 0.0
    %6524 = vmatpush1.msra.mxu0 %v6501
    %6525 = vmatprep.subr.mxu0 0.0
    %6526 = vmatpush1.msra.mxu0 %v6502
    %6527 = vmatprep.subr.mxu0 0.0
    %6528 = vmatpush1.msra.mxu0 %v6503
    %6529 = vmatprep.subr.mxu0 0.0
    %6530 = vmatpush1.msra.mxu0 0.0
    %6531 = vmatprep.subr.mxu0 0.0
    %6532 = vmatpush1.msra.mxu0 0.0
    %6533 = vmatprep.subr.mxu0 0.0
    %6534 = vmatpush1.msra.mxu0 0.0
    %6535 = vmatprep.subr.mxu0 0.0
    %6536 = vmatpush1.msra.mxu0 0.0
    %6537 = vmatprep.subr.mxu0 0.0
    %6538 = vmatpush1.msra.mxu0 0.0
    %6539 = vmatprep.subr.mxu0 0.0
    %6540 = vmatpush1.msra.mxu0 0.0
    %6541 = vmatprep.subr.mxu0 0.0
    %6542 = vmatpush1.msra.mxu0 0.0
    %6543 = vmatprep.subr.mxu0 0.0
    %6544 = vmatpush1.msra.mxu0 0.0
    %6545 = vmatprep.subr.mxu0 0.0
    %6546 = vmatpush1.msra.mxu0 0.0
    %6547 = vmatprep.subr.mxu0 0.0
    %6548 = vmatpush1.msra.mxu0 0.0
    %6549 = vmatprep.subr.mxu0 0.0
    %6550 = vmatpush1.msra.mxu0 0.0
    %6551 = vmatprep.subr.mxu0 0.0
    %6552 = vmatpush1.msra.mxu0 0.0
    %6553 = vmatprep.subr.mxu0 0.0
    %6554 = vmatpush1.msra.mxu0 0.0
    %6555 = vmatprep.subr.mxu0 0.0
    %6556 = vmatpush1.msra.mxu0 0.0
    %6557 = vmatprep.subr.mxu0 0.0
    %6558 = vmatpush1.msra.mxu0 0.0
    %6559 = vmatprep.subr.mxu0 0.0
    %6560 = vmatpush1.msra.mxu0 0.0
    %6561 = vmatprep.subr.mxu0 0.0
    %6562 = vmatpush1.msra.mxu0 0.0
    %6563 = vmatprep.subr.mxu0 0.0
    %6564 = vmatpush1.msra.mxu0 0.0
    %6565 = vmatprep.subr.mxu0 0.0
    %6566 = vmatpush1.msra.mxu0 0.0
    %6567 = vmatprep.subr.mxu0 0.0
    %6568 = vmatpush1.msra.mxu0 0.0
    %6569 = vmatprep.subr.mxu0 0.0
    %6570 = vmatpush1.msra.mxu0 0.0
    %6571 = vmatprep.subr.mxu0 0.0
    %6572 = vmatpush1.msra.mxu0 0.0
    %6573 = vmatprep.subr.mxu0 0.0
    %6574 = vmatpush1.msra.mxu0 0.0
    %6575 = vmatprep.subr.mxu0 0.0
    %6576 = vmatpush1.msra.mxu0 0.0
    %6577 = vmatprep.mubr.f32.mxu0 0.0
    %6578 = vmatmul.mubr.f32.gmra.mrb[0].mxu0 %v3996
    %v6579 = vpop.f32.mrb[0].mxu0
    %v6580 = vadd.f32 %v6511, %v6579
    %v6581 = vpop.f32.mrb[0].mxu0
    %6582 = vmatprep.mubr.f32.mxu0 0.0
    %6583 = vmatmul.mubr.f32.gmra.mrb[0].mxu0 %v3999
    %v6584 = vpop.f32.mrb[0].mxu0
    %v6585 = vadd.f32 %v6511, %v6584
    %v6586 = vpop.f32.mrb[0].mxu0
    %6587 = vmatprep.mubr.f32.mxu0 0.0
    %6588 = vmatmul.mubr.f32.gmra.mrb[0].mxu0 %v4002
    %v6589 = vpop.f32.mrb[0].mxu0
    %v6590 = vadd.f32 %v6511, %v6589
    %v6591 = vpop.f32.mrb[0].mxu0
    %6592 = vmatprep.mubr.f32.mxu0 0.0
    %6593 = vmatmul.mubr.f32.gmra.mrb[0].mxu0 %v4005
    %v6594 = vpop.f32.mrb[0].mxu0
    %v6595 = vadd.f32 %v6511, %v6594
    %v6596 = vpop.f32.mrb[0].mxu0
    %6597 = vdwg.mxu0
    %v6599 = vsel %vm573, %v6374, 0
    %v6602 = vsel %vm573, %v6379, 0
    %v6605 = vsel %vm573, %v6477, 0
    %v6608 = vsel %vm573, %v6482, 0
    %6610 = vmatprep.subr.mxu0 0.0
    %6611 = vmatpush1.xpose.msra.mxu0 %v6605
    %6612 = vmatprep.subr.mxu0 0.0
    %6613 = vmatpush1.xpose.msra.mxu0 %v6608
    %6614 = vmatprep.subr.mxu0 0.0
    %6615 = vmatpush1.xpose.msra.mxu0 0.0
    %6616 = vmatprep.subr.mxu0 0.0
    %6617 = vmatpush1.xpose.msra.mxu0 0.0
    %6618 = vmatprep.subr.mxu0 0.0
    %6619 = vmatpush1.xpose.msra.mxu0 0.0
    %6620 = vmatprep.subr.mxu0 0.0
    %6621 = vmatpush1.xpose.msra.mxu0 0.0
    %6622 = vmatprep.subr.mxu0 0.0
    %6623 = vmatpush1.xpose.msra.mxu0 0.0
    %6624 = vmatprep.subr.mxu0 0.0
    %6625 = vmatpush1.xpose.msra.mxu0 0.0
    %6626 = vmatprep.subr.mxu0 0.0
    %6627 = vmatpush1.xpose.msra.mxu0 0.0
    %6628 = vmatprep.subr.mxu0 0.0
    %6629 = vmatpush1.xpose.msra.mxu0 0.0
    %6630 = vmatprep.subr.mxu0 0.0
    %6631 = vmatpush1.xpose.msra.mxu0 0.0
    %6632 = vmatprep.subr.mxu0 0.0
    %6633 = vmatpush1.xpose.msra.mxu0 0.0
    %6634 = vmatprep.subr.mxu0 0.0
    %6635 = vmatpush1.xpose.msra.mxu0 0.0
    %6636 = vmatprep.subr.mxu0 0.0
    %6637 = vmatpush1.xpose.msra.mxu0 0.0
    %6638 = vmatprep.subr.mxu0 0.0
    %6639 = vmatpush1.xpose.msra.mxu0 0.0
    %6640 = vmatprep.subr.mxu0 0.0
    %6641 = vmatpush1.xpose.msra.mxu0 0.0
    %6642 = vmatprep.subr.mxu0 0.0
    %6643 = vmatpush1.xpose.msra.mxu0 0.0
    %6644 = vmatprep.subr.mxu0 0.0
    %6645 = vmatpush1.xpose.msra.mxu0 0.0
    %6646 = vmatprep.subr.mxu0 0.0
    %6647 = vmatpush1.xpose.msra.mxu0 0.0
    %6648 = vmatprep.subr.mxu0 0.0
    %6649 = vmatpush1.xpose.msra.mxu0 0.0
    %6650 = vmatprep.subr.mxu0 0.0
    %6651 = vmatpush1.xpose.msra.mxu0 0.0
    %6652 = vmatprep.subr.mxu0 0.0
    %6653 = vmatpush1.xpose.msra.mxu0 0.0
    %6654 = vmatprep.subr.mxu0 0.0
    %6655 = vmatpush1.xpose.msra.mxu0 0.0
    %6656 = vmatprep.subr.mxu0 0.0
    %6657 = vmatpush1.xpose.msra.mxu0 0.0
    %6658 = vmatprep.subr.mxu0 0.0
    %6659 = vmatpush1.xpose.msra.mxu0 0.0
    %6660 = vmatprep.subr.mxu0 0.0
    %6661 = vmatpush1.xpose.msra.mxu0 0.0
    %6662 = vmatprep.subr.mxu0 0.0
    %6663 = vmatpush1.xpose.msra.mxu0 0.0
    %6664 = vmatprep.subr.mxu0 0.0
    %6665 = vmatpush1.xpose.msra.mxu0 0.0
    %6666 = vmatprep.subr.mxu0 0.0
    %6667 = vmatpush1.xpose.msra.mxu0 0.0
    %6668 = vmatprep.subr.mxu0 0.0
    %6669 = vmatpush1.xpose.msra.mxu0 0.0
    %6670 = vmatprep.subr.mxu0 0.0
    %6671 = vmatpush1.xpose.msra.mxu0 0.0
    %6672 = vmatprep.subr.mxu0 0.0
    %6673 = vmatpush1.xpose.msra.mxu0 0.0
    %6674 = vmatprep.mubr.f32.mxu0 0.0
    %6675 = vmatmul.mubr.f32.gmra.mrb[0].mxu0 %v6599
    %v6676 = vpop.f32.mrb[0].mxu0
    %v6677 = vadd.f32 0.0, %v6676
    %v6678 = vpop.f32.mrb[0].mxu0
    %6679 = vmatprep.mubr.f32.mxu0 0.0
    %6680 = vmatmul.mubr.f32.gmra.mrb[0].mxu0 %v6602
    %v6681 = vpop.f32.mrb[0].mxu0
    %v6682 = vadd.f32 0.0, %v6681
    %v6683 = vpop.f32.mrb[0].mxu0
    %6684 = vdwg.mxu0
    %v6686 = vsel %vm573, %v6384, 0
    %v6689 = vsel %vm573, %v6389, 0
    %v6692 = vsel %vm573, %v6487, 0
    %v6695 = vsel %vm573, %v6492, 0
    %6697 = vmatprep.subr.mxu0 0.0
    %6698 = vmatpush1.xpose.msra.mxu0 %v6692
    %6699 = vmatprep.subr.mxu0 0.0
    %6700 = vmatpush1.xpose.msra.mxu0 %v6695
    %6701 = vmatprep.subr.mxu0 0.0
    %6702 = vmatpush1.xpose.msra.mxu0 0.0
    %6703 = vmatprep.subr.mxu0 0.0
    %6704 = vmatpush1.xpose.msra.mxu0 0.0
    %6705 = vmatprep.subr.mxu0 0.0
    %6706 = vmatpush1.xpose.msra.mxu0 0.0
    %6707 = vmatprep.subr.mxu0 0.0
    %6708 = vmatpush1.xpose.msra.mxu0 0.0
    %6709 = vmatprep.subr.mxu0 0.0
    %6710 = vmatpush1.xpose.msra.mxu0 0.0
    %6711 = vmatprep.subr.mxu0 0.0
    %6712 = vmatpush1.xpose.msra.mxu0 0.0
    %6713 = vmatprep.subr.mxu0 0.0
    %6714 = vmatpush1.xpose.msra.mxu0 0.0
    %6715 = vmatprep.subr.mxu0 0.0
    %6716 = vmatpush1.xpose.msra.mxu0 0.0
    %6717 = vmatprep.subr.mxu0 0.0
    %6718 = vmatpush1.xpose.msra.mxu0 0.0
    %6719 = vmatprep.subr.mxu0 0.0
    %6720 = vmatpush1.xpose.msra.mxu0 0.0
    %6721 = vmatprep.subr.mxu0 0.0
    %6722 = vmatpush1.xpose.msra.mxu0 0.0
    %6723 = vmatprep.subr.mxu0 0.0
    %6724 = vmatpush1.xpose.msra.mxu0 0.0
    %6725 = vmatprep.subr.mxu0 0.0
    %6726 = vmatpush1.xpose.msra.mxu0 0.0
    %6727 = vmatprep.subr.mxu0 0.0
    %6728 = vmatpush1.xpose.msra.mxu0 0.0
    %6729 = vmatprep.subr.mxu0 0.0
    %6730 = vmatpush1.xpose.msra.mxu0 0.0
    %6731 = vmatprep.subr.mxu0 0.0
    %6732 = vmatpush1.xpose.msra.mxu0 0.0
    %6733 = vmatprep.subr.mxu0 0.0
    %6734 = vmatpush1.xpose.msra.mxu0 0.0
    %6735 = vmatprep.subr.mxu0 0.0
    %6736 = vmatpush1.xpose.msra.mxu0 0.0
    %6737 = vmatprep.subr.mxu0 0.0
    %6738 = vmatpush1.xpose.msra.mxu0 0.0
    %6739 = vmatprep.subr.mxu0 0.0
    %6740 = vmatpush1.xpose.msra.mxu0 0.0
    %6741 = vmatprep.subr.mxu0 0.0
    %6742 = vmatpush1.xpose.msra.mxu0 0.0
    %6743 = vmatprep.subr.mxu0 0.0
    %6744 = vmatpush1.xpose.msra.mxu0 0.0
    %6745 = vmatprep.subr.mxu0 0.0
    %6746 = vmatpush1.xpose.msra.mxu0 0.0
    %6747 = vmatprep.subr.mxu0 0.0
    %6748 = vmatpush1.xpose.msra.mxu0 0.0
    %6749 = vmatprep.subr.mxu0 0.0
    %6750 = vmatpush1.xpose.msra.mxu0 0.0
    %6751 = vmatprep.subr.mxu0 0.0
    %6752 = vmatpush1.xpose.msra.mxu0 0.0
    %6753 = vmatprep.subr.mxu0 0.0
    %6754 = vmatpush1.xpose.msra.mxu0 0.0
    %6755 = vmatprep.subr.mxu0 0.0
    %6756 = vmatpush1.xpose.msra.mxu0 0.0
    %6757 = vmatprep.subr.mxu0 0.0
    %6758 = vmatpush1.xpose.msra.mxu0 0.0
    %6759 = vmatprep.subr.mxu0 0.0
    %6760 = vmatpush1.xpose.msra.mxu0 0.0
    %6761 = vmatprep.mubr.f32.mxu0 0.0
    %6762 = vmatmul.mubr.f32.gmra.mrb[0].mxu0 %v6686
    %v6763 = vpop.f32.mrb[0].mxu0
    %v6764 = vadd.f32 0.0, %v6763
    %v6765 = vpop.f32.mrb[0].mxu0
    %6766 = vmatprep.mubr.f32.mxu0 0.0
    %6767 = vmatmul.mubr.f32.gmra.mrb[0].mxu0 %v6689
    %v6768 = vpop.f32.mrb[0].mxu0
    %v6769 = vadd.f32 0.0, %v6768
    %v6770 = vpop.f32.mrb[0].mxu0
    %6771 = vdwg.mxu0
    %v6772 = vmul.f32 %v6677, 0.25
    %v6773 = vmul.f32 %v6682, 0.25
    %v6774 = vmul.f32 %v6764, 0.25
    %v6775 = vmul.f32 %v6769, 0.25
    %v6776 = vadd.f32 %v6772, %v179
    %v6777 = vadd.f32 %v6773, %v180
    %v6778 = vadd.f32 %v6774, %v179
    %v6779 = vadd.f32 %v6775, %v180
    %v6780 = vsel %vm573, %v6776, -inf
    %6781 = vmax.xlane.f32.xlu0 %v6780
    %v6782 = vpop.xlane.xlu0 %6781
    %v6783 = vsel %vm573, %v6777, -inf
    %6784 = vmax.xlane.f32.xlu0 %v6783
    %v6785 = vpop.xlane.xlu0 %6784
    %v6786 = vsel %vm573, %v6778, -inf
    %6787 = vmax.xlane.f32.xlu0 %v6786
    %v6788 = vpop.xlane.xlu0 %6787
    %v6789 = vsel %vm573, %v6779, -inf
    %6790 = vmax.xlane.f32.xlu0 %v6789
    %v6791 = vpop.xlane.xlu0 %6790
    %v6792 = vsub.f32 %v6776, %v6782
    %v6793 = vsub.f32 %v6777, %v6785
    %v6794 = vsub.f32 %v6778, %v6788
    %v6795 = vsub.f32 %v6779, %v6791
    %v6796 = vmul.f32 %v6792, 1.442695
    %v6797 = vpow.pop %v6796
    %v6798 = vmul.f32 %v6793, 1.442695
    %v6799 = vpow.pop %v6798
    %v6800 = vmul.f32 %v6794, 1.442695
    %v6801 = vpow.pop %v6800
    %v6802 = vmul.f32 %v6795, 1.442695
    %v6803 = vpow.pop %v6802
    %v6804 = vsel %vm573, %v6797, 0.0
    %6805 = vadd.xlane.f32.xlu0 %v6804
    %v6806 = vpop.xlane.xlu0 %6805
    %v6807 = vsel %vm573, %v6799, 0.0
    %6808 = vadd.xlane.f32.xlu0 %v6807
    %v6809 = vpop.xlane.xlu0 %6808
    %v6810 = vsel %vm573, %v6801, 0.0
    %6811 = vadd.xlane.f32.xlu0 %v6810
    %v6812 = vpop.xlane.xlu0 %6811
    %v6813 = vsel %vm573, %v6803, 0.0
    %6814 = vadd.xlane.f32.xlu0 %v6813
    %v6815 = vpop.xlane.xlu0 %6814
    %v6816 = vrcp.pop %v6806
    %v6817 = vrcp.pop %v6809
    %v6818 = vrcp.pop %v6812
    %v6819 = vrcp.pop %v6815
    %v6820 = vmul.f32 %v6797, %v6816
    %v6821 = vmul.f32 %v6799, %v6817
    %v6822 = vmul.f32 %v6801, %v6818
    %v6823 = vmul.f32 %v6803, %v6819
    %v6824 = vadd.f32 %v6019, %v6820
    %v6825 = vadd.f32 %v6020, %v6821
    %v6826 = vadd.f32 %v6021, %v6822
    %v6827 = vadd.f32 %v6022, %v6823
    %v6829 = vsel %vm573, %v6820, 0
    %v6832 = vsel %vm573, %v6821, 0
    %6834 = vmatprep.subr.mxu0 0.0
    %6835 = vmatpush1.msra.mxu0 %v6580
    %6836 = vmatprep.subr.mxu0 0.0
    %6837 = vmatpush1.msra.mxu0 %v6585
    %6838 = vmatprep.subr.mxu0 0.0
    %6839 = vmatpush1.msra.mxu0 0.0
    %6840 = vmatprep.subr.mxu0 0.0
    %6841 = vmatpush1.msra.mxu0 0.0
    %6842 = vmatprep.subr.mxu0 0.0
    %6843 = vmatpush1.msra.mxu0 0.0
    %6844 = vmatprep.subr.mxu0 0.0
    %6845 = vmatpush1.msra.mxu0 0.0
    %6846 = vmatprep.subr.mxu0 0.0
    %6847 = vmatpush1.msra.mxu0 0.0
    %6848 = vmatprep.subr.mxu0 0.0
    %6849 = vmatpush1.msra.mxu0 0.0
    %6850 = vmatprep.subr.mxu0 0.0
    %6851 = vmatpush1.msra.mxu0 0.0
    %6852 = vmatprep.subr.mxu0 0.0
    %6853 = vmatpush1.msra.mxu0 0.0
    %6854 = vmatprep.subr.mxu0 0.0
    %6855 = vmatpush1.msra.mxu0 0.0
    %6856 = vmatprep.subr.mxu0 0.0
    %6857 = vmatpush1.msra.mxu0 0.0
    %6858 = vmatprep.subr.mxu0 0.0
    %6859 = vmatpush1.msra.mxu0 0.0
    %6860 = vmatprep.subr.mxu0 0.0
    %6861 = vmatpush1.msra.mxu0 0.0
    %6862 = vmatprep.subr.mxu0 0.0
    %6863 = vmatpush1.msra.mxu0 0.0
    %6864 = vmatprep.subr.mxu0 0.0
    %6865 = vmatpush1.msra.mxu0 0.0
    %6866 = vmatprep.subr.mxu0 0.0
    %6867 = vmatpush1.msra.mxu0 0.0
    %6868 = vmatprep.subr.mxu0 0.0
    %6869 = vmatpush1.msra.mxu0 0.0
    %6870 = vmatprep.subr.mxu0 0.0
    %6871 = vmatpush1.msra.mxu0 0.0
    %6872 = vmatprep.subr.mxu0 0.0
    %6873 = vmatpush1.msra.mxu0 0.0
    %6874 = vmatprep.subr.mxu0 0.0
    %6875 = vmatpush1.msra.mxu0 0.0
    %6876 = vmatprep.subr.mxu0 0.0
    %6877 = vmatpush1.msra.mxu0 0.0
    %6878 = vmatprep.subr.mxu0 0.0
    %6879 = vmatpush1.msra.mxu0 0.0
    %6880 = vmatprep.subr.mxu0 0.0
    %6881 = vmatpush1.msra.mxu0 0.0
    %6882 = vmatprep.subr.mxu0 0.0
    %6883 = vmatpush1.msra.mxu0 0.0
    %6884 = vmatprep.subr.mxu0 0.0
    %6885 = vmatpush1.msra.mxu0 0.0
    %6886 = vmatprep.subr.mxu0 0.0
    %6887 = vmatpush1.msra.mxu0 0.0
    %6888 = vmatprep.subr.mxu0 0.0
    %6889 = vmatpush1.msra.mxu0 0.0
    %6890 = vmatprep.subr.mxu0 0.0
    %6891 = vmatpush1.msra.mxu0 0.0
    %6892 = vmatprep.subr.mxu0 0.0
    %6893 = vmatpush1.msra.mxu0 0.0
    %6894 = vmatprep.subr.mxu0 0.0
    %6895 = vmatpush1.msra.mxu0 0.0
    %6896 = vmatprep.subr.mxu0 0.0
    %6897 = vmatpush1.msra.mxu0 0.0
    %6898 = vmatprep.mubr.f32.mxu0 0.0
    %6899 = vmatmul.mubr.f32.gmra.mrb[0].mxu0 %v6829
    %v6900 = vpop.f32.mrb[0].mxu0
    %v6901 = vadd.f32 0.0, %v6900
    %v6902 = vpop.f32.mrb[0].mxu0
    %6903 = vmatprep.mubr.f32.mxu0 0.0
    %6904 = vmatmul.mubr.f32.gmra.mrb[0].mxu0 %v6832
    %v6905 = vpop.f32.mrb[0].mxu0
    %v6906 = vadd.f32 0.0, %v6905
    %v6907 = vpop.f32.mrb[0].mxu0
    %6908 = vdwg.mxu0
    %v6910 = vsel %vm573, %v6822, 0
    %v6913 = vsel %vm573, %v6823, 0
    %6915 = vmatprep.subr.mxu0 0.0
    %6916 = vmatpush1.msra.mxu0 %v6590
    %6917 = vmatprep.subr.mxu0 0.0
    %6918 = vmatpush1.msra.mxu0 %v6595
    %6919 = vmatprep.subr.mxu0 0.0
    %6920 = vmatpush1.msra.mxu0 0.0
    %6921 = vmatprep.subr.mxu0 0.0
    %6922 = vmatpush1.msra.mxu0 0.0
    %6923 = vmatprep.subr.mxu0 0.0
    %6924 = vmatpush1.msra.mxu0 0.0
    %6925 = vmatprep.subr.mxu0 0.0
    %6926 = vmatpush1.msra.mxu0 0.0
    %6927 = vmatprep.subr.mxu0 0.0
    %6928 = vmatpush1.msra.mxu0 0.0
    %6929 = vmatprep.subr.mxu0 0.0
    %6930 = vmatpush1.msra.mxu0 0.0
    %6931 = vmatprep.subr.mxu0 0.0
    %6932 = vmatpush1.msra.mxu0 0.0
    %6933 = vmatprep.subr.mxu0 0.0
    %6934 = vmatpush1.msra.mxu0 0.0
    %6935 = vmatprep.subr.mxu0 0.0
    %6936 = vmatpush1.msra.mxu0 0.0
    %6937 = vmatprep.subr.mxu0 0.0
    %6938 = vmatpush1.msra.mxu0 0.0
    %6939 = vmatprep.subr.mxu0 0.0
    %6940 = vmatpush1.msra.mxu0 0.0
    %6941 = vmatprep.subr.mxu0 0.0
    %6942 = vmatpush1.msra.mxu0 0.0
    %6943 = vmatprep.subr.mxu0 0.0
    %6944 = vmatpush1.msra.mxu0 0.0
    %6945 = vmatprep.subr.mxu0 0.0
    %6946 = vmatpush1.msra.mxu0 0.0
    %6947 = vmatprep.subr.mxu0 0.0
    %6948 = vmatpush1.msra.mxu0 0.0
    %6949 = vmatprep.subr.mxu0 0.0
    %6950 = vmatpush1.msra.mxu0 0.0
    %6951 = vmatprep.subr.mxu0 0.0
    %6952 = vmatpush1.msra.mxu0 0.0
    %6953 = vmatprep.subr.mxu0 0.0
    %6954 = vmatpush1.msra.mxu0 0.0
    %6955 = vmatprep.subr.mxu0 0.0
    %6956 = vmatpush1.msra.mxu0 0.0
    %6957 = vmatprep.subr.mxu0 0.0
    %6958 = vmatpush1.msra.mxu0 0.0
    %6959 = vmatprep.subr.mxu0 0.0
    %6960 = vmatpush1.msra.mxu0 0.0
    %6961 = vmatprep.subr.mxu0 0.0
    %6962 = vmatpush1.msra.mxu0 0.0
    %6963 = vmatprep.subr.mxu0 0.0
    %6964 = vmatpush1.msra.mxu0 0.0
    %6965 = vmatprep.subr.mxu0 0.0
    %6966 = vmatpush1.msra.mxu0 0.0
    %6967 = vmatprep.subr.mxu0 0.0
    %6968 = vmatpush1.msra.mxu0 0.0
    %6969 = vmatprep.subr.mxu0 0.0
    %6970 = vmatpush1.msra.mxu0 0.0
    %6971 = vmatprep.subr.mxu0 0.0
    %6972 = vmatpush1.msra.mxu0 0.0
    %6973 = vmatprep.subr.mxu0 0.0
    %6974 = vmatpush1.msra.mxu0 0.0
    %6975 = vmatprep.subr.mxu0 0.0
    %6976 = vmatpush1.msra.mxu0 0.0
    %6977 = vmatprep.subr.mxu0 0.0
    %6978 = vmatpush1.msra.mxu0 0.0
    %6979 = vmatprep.mubr.f32.mxu0 0.0
    %6980 = vmatmul.mubr.f32.gmra.mrb[0].mxu0 %v6910
    %v6981 = vpop.f32.mrb[0].mxu0
    %v6982 = vadd.f32 0.0, %v6981
    %v6983 = vpop.f32.mrb[0].mxu0
    %6984 = vmatprep.mubr.f32.mxu0 0.0
    %6985 = vmatmul.mubr.f32.gmra.mrb[0].mxu0 %v6913
    %v6986 = vpop.f32.mrb[0].mxu0
    %v6987 = vadd.f32 0.0, %v6986
    %v6988 = vpop.f32.mrb[0].mxu0
    %6989 = vdwg.mxu0
    %s6990 = scalar_lea.vmem %s4, 112
    %v6991 = vld [vmem:[%s6990] sm:$0xff]
    %v6992 = vld [vmem:[%s6990 + $0x8] sm:$0xff]
    %v6994 = vsel %vm573, %v6901, 0
    %v6997 = vsel %vm573, %v6906, 0
    %v7000 = vsel %vm573, %v6982, 0
    %v7003 = vsel %vm573, %v6987, 0
    %7005 = vmatprep.subr.mxu0 0.0
    %7006 = vmatpush1.msra.mxu0 %v6991
    %7007 = vmatprep.subr.mxu0 0.0
    %7008 = vmatpush1.msra.mxu0 %v6992
    %7009 = vmatprep.subr.mxu0 0.0
    %7010 = vmatpush1.msra.mxu0 0.0
    %7011 = vmatprep.subr.mxu0 0.0
    %7012 = vmatpush1.msra.mxu0 0.0
    %7013 = vmatprep.subr.mxu0 0.0
    %7014 = vmatpush1.msra.mxu0 0.0
    %7015 = vmatprep.subr.mxu0 0.0
    %7016 = vmatpush1.msra.mxu0 0.0
    %7017 = vmatprep.subr.mxu0 0.0
    %7018 = vmatpush1.msra.mxu0 0.0
    %7019 = vmatprep.subr.mxu0 0.0
    %7020 = vmatpush1.msra.mxu0 0.0
    %7021 = vmatprep.subr.mxu0 0.0
    %7022 = vmatpush1.msra.mxu0 0.0
    %7023 = vmatprep.subr.mxu0 0.0
    %7024 = vmatpush1.msra.mxu0 0.0
    %7025 = vmatprep.subr.mxu0 0.0
    %7026 = vmatpush1.msra.mxu0 0.0
    %7027 = vmatprep.subr.mxu0 0.0
    %7028 = vmatpush1.msra.mxu0 0.0
    %7029 = vmatprep.subr.mxu0 0.0
    %7030 = vmatpush1.msra.mxu0 0.0
    %7031 = vmatprep.subr.mxu0 0.0
    %7032 = vmatpush1.msra.mxu0 0.0
    %7033 = vmatprep.subr.mxu0 0.0
    %7034 = vmatpush1.msra.mxu0 0.0
    %7035 = vmatprep.subr.mxu0 0.0
    %7036 = vmatpush1.msra.mxu0 0.0
    %7037 = vmatprep.subr.mxu0 0.0
    %7038 = vmatpush1.msra.mxu0 0.0
    %7039 = vmatprep.subr.mxu0 0.0
    %7040 = vmatpush1.msra.mxu0 0.0
    %7041 = vmatprep.subr.mxu0 0.0
    %7042 = vmatpush1.msra.mxu0 0.0
    %7043 = vmatprep.subr.mxu0 0.0
    %7044 = vmatpush1.msra.mxu0 0.0
    %7045 = vmatprep.subr.mxu0 0.0
    %7046 = vmatpush1.msra.mxu0 0.0
    %7047 = vmatprep.subr.mxu0 0.0
    %7048 = vmatpush1.msra.mxu0 0.0
    %7049 = vmatprep.subr.mxu0 0.0
    %7050 = vmatpush1.msra.mxu0 0.0
    %7051 = vmatprep.subr.mxu0 0.0
    %7052 = vmatpush1.msra.mxu0 0.0
    %7053 = vmatprep.subr.mxu0 0.0
    %7054 = vmatpush1.msra.mxu0 0.0
    %7055 = vmatprep.subr.mxu0 0.0
    %7056 = vmatpush1.msra.mxu0 0.0
    %7057 = vmatprep.subr.mxu0 0.0
    %7058 = vmatpush1.msra.mxu0 0.0
    %7059 = vmatprep.subr.mxu0 0.0
    %7060 = vmatpush1.msra.mxu0 0.0
    %7061 = vmatprep.subr.mxu0 0.0
    %7062 = vmatpush1.msra.mxu0 0.0
    %7063 = vmatprep.subr.mxu0 0.0
    %7064 = vmatpush1.msra.mxu0 0.0
    %7065 = vmatprep.subr.mxu0 0.0
    %7066 = vmatpush1.msra.mxu0 0.0
    %7067 = vmatprep.subr.mxu0 0.0
    %7068 = vmatpush1.msra.mxu0 0.0
    %7069 = vmatprep.mubr.f32.mxu0 0.0
    %7070 = vmatmul.mubr.f32.gmra.mrb[0].mxu0 %v6994
    %v7071 = vpop.f32.mrb[0].mxu0
    %v7072 = vadd.f32 0.0, %v7071
    %v7073 = vpop.f32.mrb[0].mxu0
    %7074 = vmatprep.mubr.f32.mxu0 0.0
    %7075 = vmatmul.mubr.f32.gmra.mrb[0].mxu0 %v6997
    %v7076 = vpop.f32.mrb[0].mxu0
    %v7077 = vadd.f32 0.0, %v7076
    %v7078 = vpop.f32.mrb[0].mxu0
    %7079 = vmatprep.mubr.f32.mxu0 0.0
    %7080 = vmatmul.mubr.f32.gmra.mrb[0].mxu0 %v7000
    %v7081 = vpop.f32.mrb[0].mxu0
    %v7082 = vadd.f32 0.0, %v7081
    %v7083 = vpop.f32.mrb[0].mxu0
    %7084 = vmatprep.mubr.f32.mxu0 0.0
    %7085 = vmatmul.mubr.f32.gmra.mrb[0].mxu0 %v7003
    %v7086 = vpop.f32.mrb[0].mxu0
    %v7087 = vadd.f32 0.0, %v7086
    %v7088 = vpop.f32.mrb[0].mxu0
    %7089 = vdwg.mxu0
    %v7090 = vadd.f32 %v6285, %v7072
    %v7091 = vadd.f32 %v6286, %v7077
    %v7092 = vadd.f32 %v6287, %v7082
    %v7093 = vadd.f32 %v6288, %v7087
    %v7094 = vld [vmem:[%s6 + $0xf] sm:$0x1]
    %v7095 = vlaneseq
    %v7096 = vshrl.u32 %v7095, 7
    %v7097 = vsub.s32 0, %v7096
    %v7098 = vrot.slane %v7094, %v7097
    %v7099 = vadd.f32 %v7090, %v7098
    %v7100 = vadd.f32 %v7091, %v7098
    %v7101 = vadd.f32 %v7092, %v7098
    %v7102 = vadd.f32 %v7093, %v7098
    %v7103 = vmul.f32 %v6824, 0.25
    %v7104 = vmul.f32 %v6825, 0.25
    %v7105 = vmul.f32 %v6826, 0.25
    %v7106 = vmul.f32 %v6827, 0.25
    %s7107 = scalar_lea.vmem %s8, 32
    %7108 = vst.msk [vmem:[%s7107] sm:$0xff] %vm573, %v7103
    %7109 = vst.msk [vmem:[%s7107 + $0x8] sm:$0xff] %vm573, %v7104
    %7110 = vst.msk [vmem:[%s7107 + $0x10] sm:$0xff] %vm573, %v7105
    %7111 = vst.msk [vmem:[%s7107 + $0x18] sm:$0xff] %vm573, %v7106
    %v7112 = vadd.f32 %v7099, %v3866
    %v7113 = vadd.f32 %v7100, %v3867
    %v7114 = vadd.f32 %v7101, %v3868
    %v7115 = vadd.f32 %v7102, %v3869
    %v7116 = vld [vmem:[%s6 + $0x10] sm:$0x1]
    %v7117 = vld [vmem:[%s6 + $0x11] sm:$0x1]
    %v7118 = vsel %vm183, %v7112, 0.0
    %7119 = vadd.xlane.f32.xlu0 %v7118
    %v7120 = vpop.xlane.xlu0 %7119
    %v7121 = vsel %vm183, %v7113, 0.0
    %7122 = vadd.xlane.f32.xlu0 %v7121
    %v7123 = vpop.xlane.xlu0 %7122
    %v7124 = vsel %vm183, %v7114, 0.0
    %7125 = vadd.xlane.f32.xlu0 %v7124
    %v7126 = vpop.xlane.xlu0 %7125
    %v7127 = vsel %vm183, %v7115, 0.0
    %7128 = vadd.xlane.f32.xlu0 %v7127
    %v7129 = vpop.xlane.xlu0 %7128
    %v7130 = vmul.f32 %v7120, %v196
    %v7131 = vmul.f32 %v7123, %v196
    %v7132 = vmul.f32 %v7126, %v196
    %v7133 = vmul.f32 %v7129, %v196
    %v7134 = vsub.f32 %v7112, %v7130
    %v7135 = vsub.f32 %v7113, %v7131
    %v7136 = vsub.f32 %v7114, %v7132
    %v7137 = vsub.f32 %v7115, %v7133
    %v7138 = vmul.f32 %v7134, %v7134
    %v7139 = vmul.f32 %v7135, %v7135
    %v7140 = vmul.f32 %v7136, %v7136
    %v7141 = vmul.f32 %v7137, %v7137
    %v7142 = vsel %vm183, %v7138, 0.0
    %7143 = vadd.xlane.f32.xlu0 %v7142
    %v7144 = vpop.xlane.xlu0 %7143
    %v7145 = vsel %vm183, %v7139, 0.0
    %7146 = vadd.xlane.f32.xlu0 %v7145
    %v7147 = vpop.xlane.xlu0 %7146
    %v7148 = vsel %vm183, %v7140, 0.0
    %7149 = vadd.xlane.f32.xlu0 %v7148
    %v7150 = vpop.xlane.xlu0 %7149
    %v7151 = vsel %vm183, %v7141, 0.0
    %7152 = vadd.xlane.f32.xlu0 %v7151
    %v7153 = vpop.xlane.xlu0 %7152
    %v7154 = vmul.f32 %v7144, %v196
    %v7155 = vmul.f32 %v7147, %v196
    %v7156 = vmul.f32 %v7150, %v196
    %v7157 = vmul.f32 %v7153, %v196
    %v7158 = vadd.f32 %v7154, 1e-05
    %v7159 = vadd.f32 %v7155, 1e-05
    %v7160 = vadd.f32 %v7156, 1e-05
    %v7161 = vadd.f32 %v7157, 1e-05
    %v7162 = vrsqrt.pop %v7158
    %v7163 = vrsqrt.pop %v7159
    %v7164 = vrsqrt.pop %v7160
    %v7165 = vrsqrt.pop %v7161
    %v7166 = vmul.f32 %v7134, %v7162
    %v7167 = vmul.f32 %v7135, %v7163
    %v7168 = vmul.f32 %v7136, %v7164
    %v7169 = vmul.f32 %v7137, %v7165
    %v7170 = vlaneseq
    %v7171 = vshrl.u32 %v7170, 7
    %v7172 = vsub.s32 0, %v7171
    %v7173 = vrot.slane %v7116, %v7172
    %v7174 = vmul.f32 %v7166, %v7173
    %v7175 = vmul.f32 %v7167, %v7173
    %v7176 = vmul.f32 %v7168, %v7173
    %v7177 = vmul.f32 %v7169, %v7173
    %v7178 = vlaneseq
    %v7179 = vshrl.u32 %v7178, 7
    %v7180 = vsub.s32 0, %v7179
    %v7181 = vrot.slane %v7117, %v7180
    %v7182 = vadd.f32 %v7174, %v7181
    %v7183 = vadd.f32 %v7175, %v7181
    %v7184 = vadd.f32 %v7176, %v7181
    %v7185 = vadd.f32 %v7177, %v7181
    %s7186 = scalar_lea.vmem %s5, 128
    %v7187 = vld [vmem:[%s7186] sm:$0xff]
    %v7188 = vld [vmem:[%s7186 + $0x8] sm:$0xff]
    %v7189 = vld [vmem:[%s7186 + $0x10] sm:$0xff]
    %v7190 = vld [vmem:[%s7186 + $0x18] sm:$0xff]
    %v7191 = vld [vmem:[%s7186 + $0x20] sm:$0xff]
    %v7192 = vld [vmem:[%s7186 + $0x28] sm:$0xff]
    %v7193 = vld [vmem:[%s7186 + $0x30] sm:$0xff]
    %v7194 = vld [vmem:[%s7186 + $0x38] sm:$0xff]
    %v7195 = vld [vmem:[%s6 + $0x12] sm:$0x1]
    %v7196 = vlaneseq
    %v7197 = vshrl.u32 %v7196, 7
    %v7198 = vsub.s32 0, %v7197
    %v7199 = vrot.slane %v7195, %v7198
    %v7201 = vsel %vm183, %v7182, 0
    %v7204 = vsel %vm183, %v7183, 0
    %v7207 = vsel %vm183, %v7184, 0
    %v7210 = vsel %vm183, %v7185, 0
    %7212 = vmatprep.subr.mxu0 0.0
    %7213 = vmatpush1.msra.mxu0 %v7187
    %7214 = vmatprep.subr.mxu0 0.0
    %7215 = vmatpush1.msra.mxu0 %v7188
    %7216 = vmatprep.subr.mxu0 0.0
    %7217 = vmatpush1.msra.mxu0 %v7189
    %7218 = vmatprep.subr.mxu0 0.0
    %7219 = vmatpush1.msra.mxu0 %v7190
    %7220 = vmatprep.subr.mxu0 0.0
    %7221 = vmatpush1.msra.mxu0 %v7191
    %7222 = vmatprep.subr.mxu0 0.0
    %7223 = vmatpush1.msra.mxu0 %v7192
    %7224 = vmatprep.subr.mxu0 0.0
    %7225 = vmatpush1.msra.mxu0 %v7193
    %7226 = vmatprep.subr.mxu0 0.0
    %7227 = vmatpush1.msra.mxu0 %v7194
    %7228 = vmatprep.subr.mxu0 0.0
    %7229 = vmatpush1.msra.mxu0 0.0
    %7230 = vmatprep.subr.mxu0 0.0
    %7231 = vmatpush1.msra.mxu0 0.0
    %7232 = vmatprep.subr.mxu0 0.0
    %7233 = vmatpush1.msra.mxu0 0.0
    %7234 = vmatprep.subr.mxu0 0.0
    %7235 = vmatpush1.msra.mxu0 0.0
    %7236 = vmatprep.subr.mxu0 0.0
    %7237 = vmatpush1.msra.mxu0 0.0
    %7238 = vmatprep.subr.mxu0 0.0
    %7239 = vmatpush1.msra.mxu0 0.0
    %7240 = vmatprep.subr.mxu0 0.0
    %7241 = vmatpush1.msra.mxu0 0.0
    %7242 = vmatprep.subr.mxu0 0.0
    %7243 = vmatpush1.msra.mxu0 0.0
    %7244 = vmatprep.subr.mxu0 0.0
    %7245 = vmatpush1.msra.mxu0 0.0
    %7246 = vmatprep.subr.mxu0 0.0
    %7247 = vmatpush1.msra.mxu0 0.0
    %7248 = vmatprep.subr.mxu0 0.0
    %7249 = vmatpush1.msra.mxu0 0.0
    %7250 = vmatprep.subr.mxu0 0.0
    %7251 = vmatpush1.msra.mxu0 0.0
    %7252 = vmatprep.subr.mxu0 0.0
    %7253 = vmatpush1.msra.mxu0 0.0
    %7254 = vmatprep.subr.mxu0 0.0
    %7255 = vmatpush1.msra.mxu0 0.0
    %7256 = vmatprep.subr.mxu0 0.0
    %7257 = vmatpush1.msra.mxu0 0.0
    %7258 = vmatprep.subr.mxu0 0.0
    %7259 = vmatpush1.msra.mxu0 0.0
    %7260 = vmatprep.subr.mxu0 0.0
    %7261 = vmatpush1.msra.mxu0 0.0
    %7262 = vmatprep.subr.mxu0 0.0
    %7263 = vmatpush1.msra.mxu0 0.0
    %7264 = vmatprep.subr.mxu0 0.0
    %7265 = vmatpush1.msra.mxu0 0.0
    %7266 = vmatprep.subr.mxu0 0.0
    %7267 = vmatpush1.msra.mxu0 0.0
    %7268 = vmatprep.subr.mxu0 0.0
    %7269 = vmatpush1.msra.mxu0 0.0
    %7270 = vmatprep.subr.mxu0 0.0
    %7271 = vmatpush1.msra.mxu0 0.0
    %7272 = vmatprep.subr.mxu0 0.0
    %7273 = vmatpush1.msra.mxu0 0.0
    %7274 = vmatprep.subr.mxu0 0.0
    %7275 = vmatpush1.msra.mxu0 0.0
    %7276 = vmatprep.mubr.f32.mxu0 0.0
    %7277 = vmatmul.mubr.f32.gmra.mrb[0].mxu0 %v7201
    %v7278 = vpop.f32.mrb[0].mxu0
    %v7279 = vadd.f32 %v7199, %v7278
    %v7280 = vpop.f32.mrb[0].mxu0
    %7281 = vmatprep.mubr.f32.mxu0 0.0
    %7282 = vmatmul.mubr.f32.gmra.mrb[0].mxu0 %v7204
    %v7283 = vpop.f32.mrb[0].mxu0
    %v7284 = vadd.f32 %v7199, %v7283
    %v7285 = vpop.f32.mrb[0].mxu0
    %7286 = vmatprep.mubr.f32.mxu0 0.0
    %7287 = vmatmul.mubr.f32.gmra.mrb[0].mxu0 %v7207
    %v7288 = vpop.f32.mrb[0].mxu0
    %v7289 = vadd.f32 %v7199, %v7288
    %v7290 = vpop.f32.mrb[0].mxu0
    %7291 = vmatprep.mubr.f32.mxu0 0.0
    %7292 = vmatmul.mubr.f32.gmra.mrb[0].mxu0 %v7210
    %v7293 = vpop.f32.mrb[0].mxu0
    %v7294 = vadd.f32 %v7199, %v7293
    %v7295 = vpop.f32.mrb[0].mxu0
    %7296 = vdwg.mxu0
    %v7297 = vmax.f32 %v7279, 0.0
    %v7298 = vmax.f32 %v7284, 0.0
    %v7299 = vmax.f32 %v7289, 0.0
    %v7300 = vmax.f32 %v7294, 0.0
    %s7301 = scalar_lea.vmem %s5, 192
    %v7302 = vld [vmem:[%s7301] sm:$0xff]
    %v7303 = vld [vmem:[%s7301 + $0x8] sm:$0xff]
    %v7304 = vld [vmem:[%s7301 + $0x10] sm:$0xff]
    %v7305 = vld [vmem:[%s7301 + $0x18] sm:$0xff]
    %v7306 = vld [vmem:[%s7301 + $0x20] sm:$0xff]
    %v7307 = vld [vmem:[%s7301 + $0x28] sm:$0xff]
    %v7308 = vld [vmem:[%s7301 + $0x30] sm:$0xff]
    %v7309 = vld [vmem:[%s7301 + $0x38] sm:$0xff]
    %v7310 = vld [vmem:[%s6 + $0x13] sm:$0x1]
    %v7311 = vlaneseq
    %v7312 = vshrl.u32 %v7311, 7
    %v7313 = vsub.s32 0, %v7312
    %v7314 = vrot.slane %v7310, %v7313
    %v7316 = vsel %vm183, %v7297, 0
    %v7319 = vsel %vm183, %v7298, 0
    %v7322 = vsel %vm183, %v7299, 0
    %v7325 = vsel %vm183, %v7300, 0
    %7327 = vmatprep.subr.mxu0 0.0
    %7328 = vmatpush1.msra.mxu0 %v7302
    %7329 = vmatprep.subr.mxu0 0.0
    %7330 = vmatpush1.msra.mxu0 %v7303
    %7331 = vmatprep.subr.mxu0 0.0
    %7332 = vmatpush1.msra.mxu0 %v7304
    %7333 = vmatprep.subr.mxu0 0.0
    %7334 = vmatpush1.msra.mxu0 %v7305
    %7335 = vmatprep.subr.mxu0 0.0
    %7336 = vmatpush1.msra.mxu0 %v7306
    %7337 = vmatprep.subr.mxu0 0.0
    %7338 = vmatpush1.msra.mxu0 %v7307
    %7339 = vmatprep.subr.mxu0 0.0
    %7340 = vmatpush1.msra.mxu0 %v7308
    %7341 = vmatprep.subr.mxu0 0.0
    %7342 = vmatpush1.msra.mxu0 %v7309
    %7343 = vmatprep.subr.mxu0 0.0
    %7344 = vmatpush1.msra.mxu0 0.0
    %7345 = vmatprep.subr.mxu0 0.0
    %7346 = vmatpush1.msra.mxu0 0.0
    %7347 = vmatprep.subr.mxu0 0.0
    %7348 = vmatpush1.msra.mxu0 0.0
    %7349 = vmatprep.subr.mxu0 0.0
    %7350 = vmatpush1.msra.mxu0 0.0
    %7351 = vmatprep.subr.mxu0 0.0
    %7352 = vmatpush1.msra.mxu0 0.0
    %7353 = vmatprep.subr.mxu0 0.0
    %7354 = vmatpush1.msra.mxu0 0.0
    %7355 = vmatprep.subr.mxu0 0.0
    %7356 = vmatpush1.msra.mxu0 0.0
    %7357 = vmatprep.subr.mxu0 0.0
    %7358 = vmatpush1.msra.mxu0 0.0
    %7359 = vmatprep.subr.mxu0 0.0
    %7360 = vmatpush1.msra.mxu0 0.0
    %7361 = vmatprep.subr.mxu0 0.0
    %7362 = vmatpush1.msra.mxu0 0.0
    %7363 = vmatprep.subr.mxu0 0.0
    %7364 = vmatpush1.msra.mxu0 0.0
    %7365 = vmatprep.subr.mxu0 0.0
    %7366 = vmatpush1.msra.mxu0 0.0
    %7367 = vmatprep.subr.mxu0 0.0
    %7368 = vmatpush1.msra.mxu0 0.0
    %7369 = vmatprep.subr.mxu0 0.0
    %7370 = vmatpush1.msra.mxu0 0.0
    %7371 = vmatprep.subr.mxu0 0.0
    %7372 = vmatpush1.msra.mxu0 0.0
    %7373 = vmatprep.subr.mxu0 0.0
    %7374 = vmatpush1.msra.mxu0 0.0
    %7375 = vmatprep.subr.mxu0 0.0
    %7376 = vmatpush1.msra.mxu0 0.0
    %7377 = vmatprep.subr.mxu0 0.0
    %7378 = vmatpush1.msra.mxu0 0.0
    %7379 = vmatprep.subr.mxu0 0.0
    %7380 = vmatpush1.msra.mxu0 0.0
    %7381 = vmatprep.subr.mxu0 0.0
    %7382 = vmatpush1.msra.mxu0 0.0
    %7383 = vmatprep.subr.mxu0 0.0
    %7384 = vmatpush1.msra.mxu0 0.0
    %7385 = vmatprep.subr.mxu0 0.0
    %7386 = vmatpush1.msra.mxu0 0.0
    %7387 = vmatprep.subr.mxu0 0.0
    %7388 = vmatpush1.msra.mxu0 0.0
    %7389 = vmatprep.subr.mxu0 0.0
    %7390 = vmatpush1.msra.mxu0 0.0
    %7391 = vmatprep.mubr.f32.mxu0 0.0
    %7392 = vmatmul.mubr.f32.gmra.mrb[0].mxu0 %v7316
    %v7393 = vpop.f32.mrb[0].mxu0
    %v7394 = vadd.f32 %v7314, %v7393
    %v7395 = vpop.f32.mrb[0].mxu0
    %7396 = vmatprep.mubr.f32.mxu0 0.0
    %7397 = vmatmul.mubr.f32.gmra.mrb[0].mxu0 %v7319
    %v7398 = vpop.f32.mrb[0].mxu0
    %v7399 = vadd.f32 %v7314, %v7398
    %v7400 = vpop.f32.mrb[0].mxu0
    %7401 = vmatprep.mubr.f32.mxu0 0.0
    %7402 = vmatmul.mubr.f32.gmra.mrb[0].mxu0 %v7322
    %v7403 = vpop.f32.mrb[0].mxu0
    %v7404 = vadd.f32 %v7314, %v7403
    %v7405 = vpop.f32.mrb[0].mxu0
    %7406 = vmatprep.mubr.f32.mxu0 0.0
    %7407 = vmatmul.mubr.f32.gmra.mrb[0].mxu0 %v7325
    %v7408 = vpop.f32.mrb[0].mxu0
    %v7409 = vadd.f32 %v7314, %v7408
    %v7410 = vpop.f32.mrb[0].mxu0
    %7411 = vdwg.mxu0
    %v7412 = vadd.f32 %v7394, %v7182
    %v7413 = vadd.f32 %v7399, %v7183
    %v7414 = vadd.f32 %v7404, %v7184
    %v7415 = vadd.f32 %v7409, %v7185
    %v7416 = vmul.f32 %v7412, %v166
    %v7417 = vmul.f32 %v7413, %v167
    %v7418 = vmul.f32 %v7414, %v168
    %v7419 = vmul.f32 %v7415, %v169
    %v7420 = vld [vmem:[%s6 + $0x14] sm:$0x1]
    %v7421 = vld [vmem:[%s6 + $0x15] sm:$0x1]
    %v7422 = vsel %vm183, %v7416, 0.0
    %7423 = vadd.xlane.f32.xlu0 %v7422
    %v7424 = vpop.xlane.xlu0 %7423
    %v7425 = vsel %vm183, %v7417, 0.0
    %7426 = vadd.xlane.f32.xlu0 %v7425
    %v7427 = vpop.xlane.xlu0 %7426
    %v7428 = vsel %vm183, %v7418, 0.0
    %7429 = vadd.xlane.f32.xlu0 %v7428
    %v7430 = vpop.xlane.xlu0 %7429
    %v7431 = vsel %vm183, %v7419, 0.0
    %7432 = vadd.xlane.f32.xlu0 %v7431
    %v7433 = vpop.xlane.xlu0 %7432
    %v7434 = vmul.f32 %v7424, %v196
    %v7435 = vmul.f32 %v7427, %v196
    %v7436 = vmul.f32 %v7430, %v196
    %v7437 = vmul.f32 %v7433, %v196
    %v7438 = vsub.f32 %v7416, %v7434
    %v7439 = vsub.f32 %v7417, %v7435
    %v7440 = vsub.f32 %v7418, %v7436
    %v7441 = vsub.f32 %v7419, %v7437
    %v7442 = vmul.f32 %v7438, %v7438
    %v7443 = vmul.f32 %v7439, %v7439
    %v7444 = vmul.f32 %v7440, %v7440
    %v7445 = vmul.f32 %v7441, %v7441
    %v7446 = vsel %vm183, %v7442, 0.0
    %7447 = vadd.xlane.f32.xlu0 %v7446
    %v7448 = vpop.xlane.xlu0 %7447
    %v7449 = vsel %vm183, %v7443, 0.0
    %7450 = vadd.xlane.f32.xlu0 %v7449
    %v7451 = vpop.xlane.xlu0 %7450
    %v7452 = vsel %vm183, %v7444, 0.0
    %7453 = vadd.xlane.f32.xlu0 %v7452
    %v7454 = vpop.xlane.xlu0 %7453
    %v7455 = vsel %vm183, %v7445, 0.0
    %7456 = vadd.xlane.f32.xlu0 %v7455
    %v7457 = vpop.xlane.xlu0 %7456
    %v7458 = vmul.f32 %v7448, %v196
    %v7459 = vmul.f32 %v7451, %v196
    %v7460 = vmul.f32 %v7454, %v196
    %v7461 = vmul.f32 %v7457, %v196
    %v7462 = vadd.f32 %v7458, 1e-05
    %v7463 = vadd.f32 %v7459, 1e-05
    %v7464 = vadd.f32 %v7460, 1e-05
    %v7465 = vadd.f32 %v7461, 1e-05
    %v7466 = vrsqrt.pop %v7462
    %v7467 = vrsqrt.pop %v7463
    %v7468 = vrsqrt.pop %v7464
    %v7469 = vrsqrt.pop %v7465
    %v7470 = vmul.f32 %v7438, %v7466
    %v7471 = vmul.f32 %v7439, %v7467
    %v7472 = vmul.f32 %v7440, %v7468
    %v7473 = vmul.f32 %v7441, %v7469
    %v7474 = vlaneseq
    %v7475 = vshrl.u32 %v7474, 7
    %v7476 = vsub.s32 0, %v7475
    %v7477 = vrot.slane %v7420, %v7476
    %v7478 = vmul.f32 %v7470, %v7477
    %v7479 = vmul.f32 %v7471, %v7477
    %v7480 = vmul.f32 %v7472, %v7477
    %v7481 = vmul.f32 %v7473, %v7477
    %v7482 = vlaneseq
    %v7483 = vshrl.u32 %v7482, 7
    %v7484 = vsub.s32 0, %v7483
    %v7485 = vrot.slane %v7421, %v7484
    %v7486 = vadd.f32 %v7478, %v7485
    %v7487 = vadd.f32 %v7479, %v7485
    %v7488 = vadd.f32 %v7480, %v7485
    %v7489 = vadd.f32 %v7481, %v7485
    %7490 = vst.msk [vmem:[#allocation2] sm:$0xff] %vm183, %v7486
    %7491 = vst.msk [vmem:[#allocation2 + $0x8] sm:$0xff] %vm183, %v7487
    %7492 = vst.msk [vmem:[#allocation2 + $0x10] sm:$0xff] %vm183, %v7488
    %7493 = vst.msk [vmem:[#allocation2 + $0x18] sm:$0xff] %vm183, %v7489
    // Predicated region
    $region30: #{gsasrec_forward.1} parent=1 // pred_check
      _
    $region31: #{gsasrec_forward.1} parent=1 // pred_check_branch
      %7495 = sbr.rel (0) target = $region33
    $region32: #{gsasrec_forward.1} parent=1 // pred_region
      %s7497 = ssub.s32 512, 512
      %7498 = vsyncadd [#allocation3], %s7497
      %s7499 = sshll.u32 [#allocation2], 4
      %s7500 = int_to_ptr.vmem [resolvable:$true] %s7499
      %7505 = dma.vmem_to_hbm [thread:$0]  %s7500, 512, %s7, [#allocation3], 128, 128, 8
    $region33: #{gsasrec_forward.1} parent=1 // pred_fallthru
      _
    // Predicated region
    $region34: #{gsasrec_forward.1} parent=1 // pred_check
      _
    $region35: #{gsasrec_forward.1} parent=1 // pred_check_branch
      %7507 = sbr.rel (0) target = $region37
    $region36: #{gsasrec_forward.1} parent=1 // pred_region
      _
    $region37: #{gsasrec_forward.1} parent=1 // pred_fallthru
      _
    // Predicated region
    $region38: #{gsasrec_forward.1} parent=1 // pred_check
      _
    $region39: #{gsasrec_forward.1} parent=1 // pred_check_branch
      %7509 = sbr.rel (0) target = $region41
    $region40: #{gsasrec_forward.1} parent=1 // pred_region
      %7510 = dma.done [#allocation3], 512
    $region41: #{gsasrec_forward.1} parent=1 // pred_fallthru
      _
    // Predicated region
    $region42: #{gsasrec_forward.1} parent=1 // pred_check
      _
    $region43: #{gsasrec_forward.1} parent=1 // pred_check_branch
      %7512 = sbr.rel (0) target = $region45
    $region44: #{gsasrec_forward.1} parent=1 // pred_region
      _
    $region45: #{gsasrec_forward.1} parent=1 // pred_fallthru
      _
    %7513 = vsyncpa [#allocation3], 1

</llo_original>
